<compile_context>
chip_gen: v5e
topology: v5e:2x2
jax: 0.10.0
libtpu: 0.0.40
codegen_flags: <defaults>
</compile_context>

<pallas_src>
import functools

import numpy as np
import jax
import jax.numpy as jnp
from jax import lax
from jax.experimental import pallas as pl
from jax.experimental.pallas import tpu as pltpu

EPS = 1e-5  # BatchNorm eps (PyTorch default)


# ------------------------------ Pallas kernels ------------------------------


def _l1_gemm_bn_relu_kernel(x_ref, b_ref, gamma_ref, beta_ref, o_ref, *,
                            groups, count):
    """Layer 1: (N, Z) @ (Z, 16*C) GEMM + fused BatchNorm (batch stats) + ReLU.

    Output columns are ordered (ky, kx, co); BN statistics reduce over the N
    rows and the 16 spatial column groups.
    """
    y = jnp.dot(x_ref[...], b_ref[...], preferred_element_type=jnp.float32)
    c = y.shape[1] // groups
    s = jnp.sum(y, axis=0, keepdims=True)            # (1, groups*C)
    sq = jnp.sum(y * y, axis=0, keepdims=True)
    s_ch = s[:, 0:c]
    sq_ch = sq[:, 0:c]
    for g in range(1, groups):
        s_ch = s_ch + s[:, g * c:(g + 1) * c]
        sq_ch = sq_ch + sq[:, g * c:(g + 1) * c]
    inv_n = 1.0 / count
    mean = s_ch * inv_n
    var = jnp.maximum(sq_ch * inv_n - mean * mean, 0.0)   # biased var (PyTorch BN)
    scale = gamma_ref[...] * lax.rsqrt(var + EPS)         # (1, C)
    shift = beta_ref[...] - mean * scale
    scale_cols = jnp.concatenate([scale] * groups, axis=1)
    shift_cols = jnp.concatenate([shift] * groups, axis=1)
    o_ref[...] = jnp.maximum(y * scale_cols + shift_cols, 0.0).astype(o_ref.dtype)


def _convt_bn_relu_kernel(xf_ref, w_ref, gamma_ref, beta_ref, mask_ref, o_ref,
                          *, wpad, m_out, count):
    """ConvT(k=4,s=2,p=1,no bias) + BatchNorm (batch stats) + ReLU, transposed.

    xf_ref : (Cin, Qin)       channel-major, spatially 1-padded, flattened input
    w_ref  : (9, 4*Cout, Cin) per-window-offset sub-pixel weight blocks
    mask_ref: (1, M_out)      1.0 on lanes that map to real (n, y, x) positions
    o_ref  : (4*Cout, M_out)  rows = (parity, channel), lanes = flat positions
    """
    xf = xf_ref[...]
    acc = jnp.zeros(o_ref.shape, jnp.float32)
    for dy in range(3):
        for dx in range(3):
            off = dy * wpad + dx
            a = xf[:, off:off + m_out]                          # (Cin, M_out)
            acc = acc + jnp.dot(w_ref[dy * 3 + dx], a,
                                preferred_element_type=jnp.float32)
    # BatchNorm statistics over the valid output lanes only.
    mask = mask_ref[...]
    s = jnp.sum(acc * mask, axis=1, keepdims=True)              # (4C, 1)
    sq = jnp.sum(acc * acc * mask, axis=1, keepdims=True)
    c = gamma_ref.shape[0]
    s_ch = s[0:c] + s[c:2 * c] + s[2 * c:3 * c] + s[3 * c:4 * c]        # (C, 1)
    sq_ch = sq[0:c] + sq[c:2 * c] + sq[2 * c:3 * c] + sq[3 * c:4 * c]
    inv_n = 1.0 / count
    mean = s_ch * inv_n
    var = jnp.maximum(sq_ch * inv_n - mean * mean, 0.0)
    scale = gamma_ref[...] * lax.rsqrt(var + EPS)               # (C, 1)
    shift = beta_ref[...] - mean * scale
    scale4 = jnp.concatenate([scale] * 4, axis=0)               # (4C, 1)
    shift4 = jnp.concatenate([shift] * 4, axis=0)
    o_ref[...] = jnp.maximum(acc * scale4 + shift4, 0.0).astype(o_ref.dtype)


def _convt_bias_tanh_kernel(xf_ref, w_ref, bias_ref, o_ref, *, wpad, m_out):
    """Final layer: ConvT(k=4,s=2,p=1,bias) + tanh, transposed layout."""
    xf = xf_ref[...]
    acc = jnp.zeros(o_ref.shape, jnp.float32)
    for dy in range(3):
        for dx in range(3):
            off = dy * wpad + dx
            a = xf[:, off:off + m_out]
            acc = acc + jnp.dot(w_ref[dy * 3 + dx], a,
                                preferred_element_type=jnp.float32)
    o_ref[...] = jnp.tanh(acc + bias_ref[...]).astype(o_ref.dtype)


# ------------------------------ call wrappers ------------------------------


def _full_spec(shape):
    rank = len(shape)
    return pl.BlockSpec(shape, lambda i, rank=rank: (0,) * rank)


def _single_block_call(kernel, out_shape, out_dtype, *inputs):
    """One grid step; every operand is a full-array VMEM block (all are tiny)."""
    return pl.pallas_call(
        kernel,
        out_shape=jax.ShapeDtypeStruct(out_shape, out_dtype),
        grid=(1,),
        in_specs=[_full_spec(x.shape) for x in inputs],
        out_specs=_full_spec(out_shape),
        compiler_params=pltpu.CompilerParams(
            dimension_semantics=("arbitrary",)),
    )(*inputs)


# --------------------------- inter-layer glue (XLA) --------------------------


def _valid_lane_mask(n, h, w):
    """(1, M_out) f32 mask of output lanes that map to real (n, y, x) positions."""
    q_img = (h + 2) * (w + 2)
    m_out = n * q_img - 2 * (w + 2) - 2
    r = np.arange(m_out)
    rem = r % q_img
    yo = rem // (w + 2)
    xo = rem % (w + 2)
    return np.asarray((yo < h) & (xo < w), dtype=np.float32).reshape(1, m_out)


def _pad_flatten(x_cnhw):
    """(C, N, H, W) -> (C, N*(H+2)*(W+2)), spatially 1-padded and flattened."""
    c, n, h, w = x_cnhw.shape
    xp = jnp.pad(x_cnhw, ((0, 0), (0, 0), (1, 1), (1, 1)))
    return xp.reshape(c, n * (h + 2) * (w + 2))


def _subpixel_glue(yt, n, h, w, cout, to_nchw):
    """(4*Cout, M_out) parity-major kernel output -> (C,N,2H,2W) or (N,C,2H,2W)."""
    # TODO(synk): parity reassembly / re-padding stays as XLA reshape+transpose glue.
    q = n * (h + 2) * (w + 2)
    yt = jnp.pad(yt, ((0, 0), (0, q - yt.shape[1])))
    t = yt.reshape(2, 2, cout, n, h + 2, w + 2)[:, :, :, :, :h, :w]
    if to_nchw:
        t = jnp.transpose(t, (3, 2, 4, 0, 5, 1))              # (N, C, H, 2, W, 2)
        return t.reshape(n, cout, 2 * h, 2 * w)
    t = jnp.transpose(t, (2, 3, 4, 0, 5, 1))                  # (C, N, H, 2, W, 2)
    return t.reshape(cout, n, 2 * h, 2 * w)


# ------------------------------- layer blocks -------------------------------


def _convt_bn_relu_block(x_cnhw, w9, gamma, beta):
    _, n, h, w = x_cnhw.shape
    cout = gamma.shape[0]
    wpad = w + 2
    qin = n * (h + 2) * (w + 2)
    m_out = qin - 2 * wpad - 2
    xf = _pad_flatten(x_cnhw)
    mask = jnp.asarray(_valid_lane_mask(n, h, w))
    yt = _single_block_call(
        functools.partial(_convt_bn_relu_kernel, wpad=wpad, m_out=m_out,
                          count=float(4 * n * h * w)),
        (4 * cout, m_out), jnp.bfloat16,
        xf, w9,
        gamma.reshape(cout, 1).astype(jnp.float32),
        beta.reshape(cout, 1).astype(jnp.float32),
        mask)
    return _subpixel_glue(yt, n, h, w, cout, to_nchw=False)


def _convt_tanh_block(x_cnhw, w9, bias_rows):
    _, n, h, w = x_cnhw.shape
    cout = bias_rows.shape[0] // 4
    wpad = w + 2
    qin = n * (h + 2) * (w + 2)
    m_out = qin - 2 * wpad - 2
    xf = _pad_flatten(x_cnhw)
    yt = _single_block_call(
        functools.partial(_convt_bias_tanh_kernel, wpad=wpad, m_out=m_out),
        (4 * cout, m_out), jnp.float32,
        xf, w9, bias_rows)
    return _subpixel_glue(yt, n, h, w, cout, to_nchw=True)


def generator_forward(x_nchw, pp):
    n = x_nchw.shape[0]
    c1 = pp["g1"].shape[0]
    a0 = x_nchw.reshape(n, -1).astype(jnp.bfloat16)
    # Layer 1: ConvT(k=4,s=1,p=0) on a 1x1 map == plain GEMM; BN + ReLU fused.
    y1 = _single_block_call(
        functools.partial(_l1_gemm_bn_relu_kernel, groups=16, count=float(16 * n)),
        (n, 16 * c1), jnp.bfloat16,
        a0, pp["B1"],
        pp["g1"].reshape(1, c1).astype(jnp.float32),
        pp["b1"].reshape(1, c1).astype(jnp.float32))
    # TODO(synk): switch to channel-major (C, N, H, W) layout stays in XLA.
    h = jnp.transpose(y1.reshape(n, 4, 4, c1), (3, 0, 1, 2))
    # Layers 2-4: fused ConvT + BN + ReLU (one pallas_call each).
    h = _convt_bn_relu_block(h, pp["W2"], pp["g2"], pp["b2"])
    h = _convt_bn_relu_block(h, pp["W3"], pp["g3"], pp["b3"])
    h = _convt_bn_relu_block(h, pp["W4"], pp["g4"], pp["b4"])
    # Layer 5: fused ConvT + bias + tanh, reassembled straight into NCHW.
    return _convt_tanh_block(h, pp["W5"], pp["bias5_rows"])


# ------------------- weight pre-packing (once, outside jit) -------------------


def _pack_convt_s2_weight(w_np):
    """ConvT(k=4,s=2,p=1) weight (Cin,Cout,4,4) -> (9, 4*Cout, Cin) f32->bf16.

    Leading index = window offset (dy*3+dx) over the 3x3 window of the 1-padded
    input; rows of each block = (py*2+px)*Cout + co (output parity, channel).
    For parity p and window offset d, the used kernel tap is k = 3 + p - 2*d
    (zero if out of range)."""
    cin, cout = int(w_np.shape[0]), int(w_np.shape[1])
    b = np.zeros((9, 4 * cout, cin), np.float32)
    for py in range(2):
        for px in range(2):
            for dy in range(3):
                ky = 3 + py - 2 * dy
                if not 0 <= ky <= 3:
                    continue
                for dx in range(3):
                    kx = 3 + px - 2 * dx
                    if not 0 <= kx <= 3:
                        continue
                    r = (py * 2 + px) * cout
                    b[dy * 3 + dx, r:r + cout, :] = w_np[:, :, ky, kx].T
    return jnp.asarray(b, dtype=jnp.bfloat16)


def init_params(key, z_dim, img_channels, fg):
    ks = jax.random.split(key, 14)

    def w_init(k, cin, cout):  # PyTorch ConvTranspose2d layout (Cin, Cout, kH, kW)
        return (0.02 * jax.random.normal(k, (cin, cout, 4, 4))).astype(jnp.float32)

    p = {}
    chans = [(z_dim, fg * 8), (fg * 8, fg * 4), (fg * 4, fg * 2), (fg * 2, fg)]
    for i, (cin, cout) in enumerate(chans, start=1):
        p[f"w{i}"] = w_init(ks[3 * (i - 1)], cin, cout)
        p[f"g{i}"] = (1.0 + 0.1 * jax.random.normal(ks[3 * (i - 1) + 1], (cout,))).astype(jnp.float32)
        p[f"b{i}"] = (0.1 * jax.random.normal(ks[3 * (i - 1) + 2], (cout,))).astype(jnp.float32)
    p["w5"] = w_init(ks[12], fg, img_channels)
    p["bias5"] = (0.1 * jax.random.normal(ks[13], (img_channels,))).astype(jnp.float32)
    return p


def pack_params(p):
    """Pre-pack all weights into kernel-ready matrices (once, outside jit)."""
    pp = {}
    w1 = np.asarray(p["w1"], np.float32)
    cin1, cout1 = w1.shape[0], w1.shape[1]
    # Layer 1 GEMM: y[n, (ky,kx,co)] = sum_ci x[n,ci] * w1[ci,co,ky,kx]
    pp["B1"] = jnp.asarray(np.transpose(w1, (0, 2, 3, 1)).reshape(cin1, 16 * cout1),
                           dtype=jnp.bfloat16)
    pp["g1"], pp["b1"] = p["g1"], p["b1"]
    for i in (2, 3, 4):
        pp[f"W{i}"] = _pack_convt_s2_weight(np.asarray(p[f"w{i}"], np.float32))
        pp[f"g{i}"], pp[f"b{i}"] = p[f"g{i}"], p[f"b{i}"]
    pp["W5"] = _pack_convt_s2_weight(np.asarray(p["w5"], np.float32))
    bias = np.asarray(p["bias5"], np.float32)
    pp["bias5_rows"] = jnp.asarray(np.tile(bias, 4).reshape(4 * bias.shape[0], 1),
                                   dtype=jnp.float32)
    return pp


if __name__ == "__main__":
    # Small config consistent with the module (class is parameterized on these).
    Z_DIM, IMG_CHANNELS, FEATURES_GEN, BATCH = 32, 3, 8, 2

    key = jax.random.PRNGKey(0)
    k_in, k_par = jax.random.split(key)
    x = jax.random.normal(k_in, (BATCH, Z_DIM, 1, 1), dtype=jnp.float32)
    raw_params = init_params(k_par, Z_DIM, IMG_CHANNELS, FEATURES_GEN)
    packed = pack_params(raw_params)   # eager, outside jit

    fwd = jax.jit(generator_forward)
    out = jax.block_until_ready(fwd(x, packed))

    assert out.shape == (BATCH, IMG_CHANNELS, 64, 64), out.shape
    assert bool(jnp.all(jnp.isfinite(out)))
    assert bool(jnp.all(jnp.abs(out) <= 1.0))  # tanh range
    print("KERNEL_OK")
</pallas_src>

<mosaic_0001>
module attributes {stable_mosaic.version = 11 : i64} {
  func.func @_l1_gemm_bn_relu_kernel(%arg0: i32, %arg1: memref<2x32xbf16, #tpu.memory_space<vmem>>, %arg2: memref<32x1024xbf16, #tpu.memory_space<vmem>>, %arg3: memref<1x64xf32, #tpu.memory_space<vmem>>, %arg4: memref<1x64xf32, #tpu.memory_space<vmem>>, %arg5: memref<2x1024xbf16, #tpu.memory_space<vmem>>) attributes {dimension_semantics = [#tpu.dimension_semantics<arbitrary>], iteration_bounds = array<i64: 1>, scalar_prefetch = 0 : i64, scratch_operands = 0 : i64, tpu.core_type = #tpu.core_type<tc>, window_params = [{pipeline_mode = #tpu.pipeline_mode<synchronous>, transform_indices = @transform_0, window_bounds = array<i64: 2, 32>}, {pipeline_mode = #tpu.pipeline_mode<synchronous>, transform_indices = @transform_1, window_bounds = array<i64: 32, 1024>}, {pipeline_mode = #tpu.pipeline_mode<synchronous>, transform_indices = @transform_2, window_bounds = array<i64: 1, 64>}, {pipeline_mode = #tpu.pipeline_mode<synchronous>, transform_indices = @transform_3, window_bounds = array<i64: 1, 64>}, {pipeline_mode = #tpu.pipeline_mode<synchronous>, transform_indices = @transform_4, window_bounds = array<i64: 2, 1024>}]} {
    %c0 = arith.constant 0 : index
    %c0_0 = arith.constant 0 : index
    %0 = vector.load %arg1[%c0, %c0_0] : memref<2x32xbf16, #tpu.memory_space<vmem>>, vector<2x32xbf16>
    %c0_1 = arith.constant 0 : index
    %c0_2 = arith.constant 0 : index
    %1 = vector.load %arg2[%c0_1, %c0_2] : memref<32x1024xbf16, #tpu.memory_space<vmem>>, vector<32x1024xbf16>
    %cst = arith.constant dense<0.000000e+00> : vector<2x1024xf32>
    %2 = tpu.matmul %0, %1, %cst {dimension_numbers = #tpu.dot_dimension_numbers<[1], [0], [0], [1], [0, 0, 1, 1], [], []>} : vector<2x32xbf16>, vector<32x1024xbf16>, vector<2x1024xf32> -> vector<2x1024xf32>
    %cst_3 = arith.constant dense<0.000000e+00> : vector<1024xf32>
    %3 = vector.multi_reduction <add>, %2, %cst_3 [0] : vector<2x1024xf32> to vector<1024xf32>
    %4 = vector.shape_cast %3 : vector<1024xf32> to vector<1x1024xf32>
    %5 = arith.mulf %2, %2 : vector<2x1024xf32>
    %cst_4 = arith.constant dense<0.000000e+00> : vector<1024xf32>
    %6 = vector.multi_reduction <add>, %5, %cst_4 [0] : vector<2x1024xf32> to vector<1024xf32>
    %7 = vector.shape_cast %6 : vector<1024xf32> to vector<1x1024xf32>
    %8 = vector.extract_strided_slice %4 {offsets = [0, 0], sizes = [1, 64], strides = [1, 1]} : vector<1x1024xf32> to vector<1x64xf32>
    %9 = vector.extract_strided_slice %7 {offsets = [0, 0], sizes = [1, 64], strides = [1, 1]} : vector<1x1024xf32> to vector<1x64xf32>
    %10 = vector.extract_strided_slice %4 {offsets = [0, 64], sizes = [1, 64], strides = [1, 1]} : vector<1x1024xf32> to vector<1x64xf32>
    %11 = arith.addf %8, %10 : vector<1x64xf32>
    %12 = vector.extract_strided_slice %7 {offsets = [0, 64], sizes = [1, 64], strides = [1, 1]} : vector<1x1024xf32> to vector<1x64xf32>
    %13 = arith.addf %9, %12 : vector<1x64xf32>
    %14 = vector.extract_strided_slice %4 {offsets = [0, 128], sizes = [1, 64], strides = [1, 1]} : vector<1x1024xf32> to vector<1x64xf32>
    %15 = arith.addf %11, %14 : vector<1x64xf32>
    %16 = vector.extract_strided_slice %7 {offsets = [0, 128], sizes = [1, 64], strides = [1, 1]} : vector<1x1024xf32> to vector<1x64xf32>
    %17 = arith.addf %13, %16 : vector<1x64xf32>
    %18 = vector.extract_strided_slice %4 {offsets = [0, 192], sizes = [1, 64], strides = [1, 1]} : vector<1x1024xf32> to vector<1x64xf32>
    %19 = arith.addf %15, %18 : vector<1x64xf32>
    %20 = vector.extract_strided_slice %7 {offsets = [0, 192], sizes = [1, 64], strides = [1, 1]} : vector<1x1024xf32> to vector<1x64xf32>
    %21 = arith.addf %17, %20 : vector<1x64xf32>
    %22 = vector.extract_strided_slice %4 {offsets = [0, 256], sizes = [1, 64], strides = [1, 1]} : vector<1x1024xf32> to vector<1x64xf32>
    %23 = arith.addf %19, %22 : vector<1x64xf32>
    %24 = vector.extract_strided_slice %7 {offsets = [0, 256], sizes = [1, 64], strides = [1, 1]} : vector<1x1024xf32> to vector<1x64xf32>
    %25 = arith.addf %21, %24 : vector<1x64xf32>
    %26 = vector.extract_strided_slice %4 {offsets = [0, 320], sizes = [1, 64], strides = [1, 1]} : vector<1x1024xf32> to vector<1x64xf32>
    %27 = arith.addf %23, %26 : vector<1x64xf32>
    %28 = vector.extract_strided_slice %7 {offsets = [0, 320], sizes = [1, 64], strides = [1, 1]} : vector<1x1024xf32> to vector<1x64xf32>
    %29 = arith.addf %25, %28 : vector<1x64xf32>
    %30 = vector.extract_strided_slice %4 {offsets = [0, 384], sizes = [1, 64], strides = [1, 1]} : vector<1x1024xf32> to vector<1x64xf32>
    %31 = arith.addf %27, %30 : vector<1x64xf32>
    %32 = vector.extract_strided_slice %7 {offsets = [0, 384], sizes = [1, 64], strides = [1, 1]} : vector<1x1024xf32> to vector<1x64xf32>
    %33 = arith.addf %29, %32 : vector<1x64xf32>
    %34 = vector.extract_strided_slice %4 {offsets = [0, 448], sizes = [1, 64], strides = [1, 1]} : vector<1x1024xf32> to vector<1x64xf32>
    %35 = arith.addf %31, %34 : vector<1x64xf32>
    %36 = vector.extract_strided_slice %7 {offsets = [0, 448], sizes = [1, 64], strides = [1, 1]} : vector<1x1024xf32> to vector<1x64xf32>
    %37 = arith.addf %33, %36 : vector<1x64xf32>
    %38 = vector.extract_strided_slice %4 {offsets = [0, 512], sizes = [1, 64], strides = [1, 1]} : vector<1x1024xf32> to vector<1x64xf32>
    %39 = arith.addf %35, %38 : vector<1x64xf32>
    %40 = vector.extract_strided_slice %7 {offsets = [0, 512], sizes = [1, 64], strides = [1, 1]} : vector<1x1024xf32> to vector<1x64xf32>
    %41 = arith.addf %37, %40 : vector<1x64xf32>
    %42 = vector.extract_strided_slice %4 {offsets = [0, 576], sizes = [1, 64], strides = [1, 1]} : vector<1x1024xf32> to vector<1x64xf32>
    %43 = arith.addf %39, %42 : vector<1x64xf32>
    %44 = vector.extract_strided_slice %7 {offsets = [0, 576], sizes = [1, 64], strides = [1, 1]} : vector<1x1024xf32> to vector<1x64xf32>
    %45 = arith.addf %41, %44 : vector<1x64xf32>
    %46 = vector.extract_strided_slice %4 {offsets = [0, 640], sizes = [1, 64], strides = [1, 1]} : vector<1x1024xf32> to vector<1x64xf32>
    %47 = arith.addf %43, %46 : vector<1x64xf32>
    %48 = vector.extract_strided_slice %7 {offsets = [0, 640], sizes = [1, 64], strides = [1, 1]} : vector<1x1024xf32> to vector<1x64xf32>
    %49 = arith.addf %45, %48 : vector<1x64xf32>
    %50 = vector.extract_strided_slice %4 {offsets = [0, 704], sizes = [1, 64], strides = [1, 1]} : vector<1x1024xf32> to vector<1x64xf32>
    %51 = arith.addf %47, %50 : vector<1x64xf32>
    %52 = vector.extract_strided_slice %7 {offsets = [0, 704], sizes = [1, 64], strides = [1, 1]} : vector<1x1024xf32> to vector<1x64xf32>
    %53 = arith.addf %49, %52 : vector<1x64xf32>
    %54 = vector.extract_strided_slice %4 {offsets = [0, 768], sizes = [1, 64], strides = [1, 1]} : vector<1x1024xf32> to vector<1x64xf32>
    %55 = arith.addf %51, %54 : vector<1x64xf32>
    %56 = vector.extract_strided_slice %7 {offsets = [0, 768], sizes = [1, 64], strides = [1, 1]} : vector<1x1024xf32> to vector<1x64xf32>
    %57 = arith.addf %53, %56 : vector<1x64xf32>
    %58 = vector.extract_strided_slice %4 {offsets = [0, 832], sizes = [1, 64], strides = [1, 1]} : vector<1x1024xf32> to vector<1x64xf32>
    %59 = arith.addf %55, %58 : vector<1x64xf32>
    %60 = vector.extract_strided_slice %7 {offsets = [0, 832], sizes = [1, 64], strides = [1, 1]} : vector<1x1024xf32> to vector<1x64xf32>
    %61 = arith.addf %57, %60 : vector<1x64xf32>
    %62 = vector.extract_strided_slice %4 {offsets = [0, 896], sizes = [1, 64], strides = [1, 1]} : vector<1x1024xf32> to vector<1x64xf32>
    %63 = arith.addf %59, %62 : vector<1x64xf32>
    %64 = vector.extract_strided_slice %7 {offsets = [0, 896], sizes = [1, 64], strides = [1, 1]} : vector<1x1024xf32> to vector<1x64xf32>
    %65 = arith.addf %61, %64 : vector<1x64xf32>
    %66 = vector.extract_strided_slice %4 {offsets = [0, 960], sizes = [1, 64], strides = [1, 1]} : vector<1x1024xf32> to vector<1x64xf32>
    %67 = arith.addf %63, %66 : vector<1x64xf32>
    %68 = vector.extract_strided_slice %7 {offsets = [0, 960], sizes = [1, 64], strides = [1, 1]} : vector<1x1024xf32> to vector<1x64xf32>
    %69 = arith.addf %65, %68 : vector<1x64xf32>
    %cst_5 = arith.constant 3.125000e-02 : f32
    %70 = vector.broadcast %cst_5 : f32 to vector<1x64xf32>
    %71 = arith.mulf %67, %70 : vector<1x64xf32>
    %cst_6 = arith.constant 3.125000e-02 : f32
    %72 = vector.broadcast %cst_6 : f32 to vector<1x64xf32>
    %73 = arith.mulf %69, %72 : vector<1x64xf32>
    %74 = arith.mulf %71, %71 : vector<1x64xf32>
    %75 = arith.subf %73, %74 : vector<1x64xf32>
    %cst_7 = arith.constant 0.000000e+00 : f32
    %76 = vector.broadcast %cst_7 : f32 to vector<1x64xf32>
    %77 = arith.maximumf %75, %76 : vector<1x64xf32>
    %c0_8 = arith.constant 0 : index
    %c0_9 = arith.constant 0 : index
    %78 = vector.load %arg3[%c0_8, %c0_9] : memref<1x64xf32, #tpu.memory_space<vmem>>, vector<1x64xf32>
    %cst_10 = arith.constant 9.99999974E-6 : f32
    %79 = vector.broadcast %cst_10 : f32 to vector<1x64xf32>
    %80 = arith.addf %77, %79 : vector<1x64xf32>
    %81 = math.rsqrt %80 : vector<1x64xf32>
    %82 = arith.mulf %78, %81 : vector<1x64xf32>
    %c0_11 = arith.constant 0 : index
    %c0_12 = arith.constant 0 : index
    %83 = vector.load %arg4[%c0_11, %c0_12] : memref<1x64xf32, #tpu.memory_space<vmem>>, vector<1x64xf32>
    %84 = arith.mulf %71, %82 : vector<1x64xf32>
    %85 = arith.subf %83, %84 : vector<1x64xf32>
    %86 = tpu.concatenate %82, %82, %82, %82, %82, %82, %82, %82, %82, %82, %82, %82, %82, %82, %82, %82 in 1 : vector<1x64xf32>, vector<1x64xf32>, vector<1x64xf32>, vector<1x64xf32>, vector<1x64xf32>, vector<1x64xf32>, vector<1x64xf32>, vector<1x64xf32>, vector<1x64xf32>, vector<1x64xf32>, vector<1x64xf32>, vector<1x64xf32>, vector<1x64xf32>, vector<1x64xf32>, vector<1x64xf32>, vector<1x64xf32> -> vector<1x1024xf32>
    %87 = tpu.concatenate %85, %85, %85, %85, %85, %85, %85, %85, %85, %85, %85, %85, %85, %85, %85, %85 in 1 : vector<1x64xf32>, vector<1x64xf32>, vector<1x64xf32>, vector<1x64xf32>, vector<1x64xf32>, vector<1x64xf32>, vector<1x64xf32>, vector<1x64xf32>, vector<1x64xf32>, vector<1x64xf32>, vector<1x64xf32>, vector<1x64xf32>, vector<1x64xf32>, vector<1x64xf32>, vector<1x64xf32>, vector<1x64xf32> -> vector<1x1024xf32>
    %88 = vector.broadcast %86 : vector<1x1024xf32> to vector<2x1024xf32>
    %89 = arith.mulf %2, %88 : vector<2x1024xf32>
    %90 = vector.broadcast %87 : vector<1x1024xf32> to vector<2x1024xf32>
    %91 = arith.addf %89, %90 : vector<2x1024xf32>
    %cst_13 = arith.constant 0.000000e+00 : f32
    %92 = vector.broadcast %cst_13 : f32 to vector<2x1024xf32>
    %93 = arith.maximumf %91, %92 : vector<2x1024xf32>
    %94 = arith.truncf %93 : vector<2x1024xf32> to vector<2x1024xbf16>
    %c0_14 = arith.constant 0 : index
    %c0_15 = arith.constant 0 : index
    %95 = vector.load %arg5[%c0_14, %c0_15] : memref<2x1024xbf16, #tpu.memory_space<vmem>>, vector<2x1024xbf16>
    tpu.vector_store %arg5[%c0_14, %c0_15], %94 {strides = array<i32>} : memref<2x1024xbf16, #tpu.memory_space<vmem>>, vector<2x1024xbf16>,
    return
  }
  func.func @transform_0(%arg0: i32) -> (i32, i32) {
    %c0_i32 = arith.constant 0 : i32
    %c0_i32_0 = arith.constant 0 : i32
    %c0_i32_1 = arith.constant 0 : i32
    return %c0_i32, %c0_i32_0 : i32, i32
  }
  func.func @transform_1(%arg0: i32) -> (i32, i32) {
    %c0_i32 = arith.constant 0 : i32
    %c0_i32_0 = arith.constant 0 : i32
    %c0_i32_1 = arith.constant 0 : i32
    return %c0_i32, %c0_i32_0 : i32, i32
  }
  func.func @transform_2(%arg0: i32) -> (i32, i32) {
    %c0_i32 = arith.constant 0 : i32
    %c0_i32_0 = arith.constant 0 : i32
    %c0_i32_1 = arith.constant 0 : i32
    return %c0_i32, %c0_i32_0 : i32, i32
  }
  func.func @transform_3(%arg0: i32) -> (i32, i32) {
    %c0_i32 = arith.constant 0 : i32
    %c0_i32_0 = arith.constant 0 : i32
    %c0_i32_1 = arith.constant 0 : i32
    return %c0_i32, %c0_i32_0 : i32, i32
  }
  func.func @transform_4(%arg0: i32) -> (i32, i32) {
    %c0_i32 = arith.constant 0 : i32
    %c0_i32_0 = arith.constant 0 : i32
    %c0_i32_1 = arith.constant 0 : i32
    return %c0_i32, %c0_i32_0 : i32, i32
  }
}

module attributes {stable_mosaic.version = 11 : i64} {
  func.func @_convt_bn_relu_kernel(%arg0: i32, %arg1: memref<64x72xbf16, #tpu.memory_space<vmem>>, %arg2: memref<9x128x64xbf16, #tpu.memory_space<vmem>>, %arg3: memref<32x1xf32, #tpu.memory_space<vmem>>, %arg4: memref<32x1xf32, #tpu.memory_space<vmem>>, %arg5: memref<1x58xf32, #tpu.memory_space<vmem>>, %arg6: memref<128x58xbf16, #tpu.memory_space<vmem>>) attributes {dimension_semantics = [#tpu.dimension_semantics<arbitrary>], iteration_bounds = array<i64: 1>, scalar_prefetch = 0 : i64, scratch_operands = 0 : i64, tpu.core_type = #tpu.core_type<tc>, window_params = [{pipeline_mode = #tpu.pipeline_mode<synchronous>, transform_indices = @transform_0, window_bounds = array<i64: 64, 72>}, {pipeline_mode = #tpu.pipeline_mode<synchronous>, transform_indices = @transform_1, window_bounds = array<i64: 9, 128, 64>}, {pipeline_mode = #tpu.pipeline_mode<synchronous>, transform_indices = @transform_2, window_bounds = array<i64: 32, 1>}, {pipeline_mode = #tpu.pipeline_mode<synchronous>, transform_indices = @transform_3, window_bounds = array<i64: 32, 1>}, {pipeline_mode = #tpu.pipeline_mode<synchronous>, transform_indices = @transform_4, window_bounds = array<i64: 1, 58>}, {pipeline_mode = #tpu.pipeline_mode<synchronous>, transform_indices = @transform_5, window_bounds = array<i64: 128, 58>}]} {
    %c0 = arith.constant 0 : index
    %c0_0 = arith.constant 0 : index
    %0 = vector.load %arg1[%c0, %c0_0] : memref<64x72xbf16, #tpu.memory_space<vmem>>, vector<64x72xbf16>
    %cst = arith.constant 0.000000e+00 : f32
    %1 = vector.broadcast %cst : f32 to vector<128x58xf32>
    %2 = vector.extract_strided_slice %0 {offsets = [0, 0], sizes = [64, 58], strides = [1, 1]} : vector<64x72xbf16> to vector<64x58xbf16>
    %c0_1 = arith.constant 0 : index
    %c0_2 = arith.constant 0 : index
    %c0_3 = arith.constant 0 : index
    %3 = vector.load %arg2[%c0_1, %c0_2, %c0_3] : memref<9x128x64xbf16, #tpu.memory_space<vmem>>, vector<1x128x64xbf16>
    %4 = vector.shape_cast %3 : vector<1x128x64xbf16> to vector<128x64xbf16>
    %cst_4 = arith.constant dense<0.000000e+00> : vector<128x58xf32>
    %5 = tpu.matmul %4, %2, %cst_4 {dimension_numbers = #tpu.dot_dimension_numbers<[1], [0], [0], [1], [0, 0, 1, 1], [], []>} : vector<128x64xbf16>, vector<64x58xbf16>, vector<128x58xf32> -> vector<128x58xf32>
    %6 = arith.addf %1, %5 : vector<128x58xf32>
    %7 = vector.extract_strided_slice %0 {offsets = [0, 1], sizes = [64, 58], strides = [1, 1]} : vector<64x72xbf16> to vector<64x58xbf16>
    %c1 = arith.constant 1 : index
    %c0_5 = arith.constant 0 : index
    %c0_6 = arith.constant 0 : index
    %8 = vector.load %arg2[%c1, %c0_5, %c0_6] : memref<9x128x64xbf16, #tpu.memory_space<vmem>>, vector<1x128x64xbf16>
    %9 = vector.shape_cast %8 : vector<1x128x64xbf16> to vector<128x64xbf16>
    %cst_7 = arith.constant dense<0.000000e+00> : vector<128x58xf32>
    %10 = tpu.matmul %9, %7, %cst_7 {dimension_numbers = #tpu.dot_dimension_numbers<[1], [0], [0], [1], [0, 0, 1, 1], [], []>} : vector<128x64xbf16>, vector<64x58xbf16>, vector<128x58xf32> -> vector<128x58xf32>
    %11 = arith.addf %6, %10 : vector<128x58xf32>
    %12 = vector.extract_strided_slice %0 {offsets = [0, 2], sizes = [64, 58], strides = [1, 1]} : vector<64x72xbf16> to vector<64x58xbf16>
    %c2 = arith.constant 2 : index
    %c0_8 = arith.constant 0 : index
    %c0_9 = arith.constant 0 : index
    %13 = vector.load %arg2[%c2, %c0_8, %c0_9] : memref<9x128x64xbf16, #tpu.memory_space<vmem>>, vector<1x128x64xbf16>
    %14 = vector.shape_cast %13 : vector<1x128x64xbf16> to vector<128x64xbf16>
    %cst_10 = arith.constant dense<0.000000e+00> : vector<128x58xf32>
    %15 = tpu.matmul %14, %12, %cst_10 {dimension_numbers = #tpu.dot_dimension_numbers<[1], [0], [0], [1], [0, 0, 1, 1], [], []>} : vector<128x64xbf16>, vector<64x58xbf16>, vector<128x58xf32> -> vector<128x58xf32>
    %16 = arith.addf %11, %15 : vector<128x58xf32>
    %17 = vector.extract_strided_slice %0 {offsets = [0, 6], sizes = [64, 58], strides = [1, 1]} : vector<64x72xbf16> to vector<64x58xbf16>
    %c3 = arith.constant 3 : index
    %c0_11 = arith.constant 0 : index
    %c0_12 = arith.constant 0 : index
    %18 = vector.load %arg2[%c3, %c0_11, %c0_12] : memref<9x128x64xbf16, #tpu.memory_space<vmem>>, vector<1x128x64xbf16>
    %19 = vector.shape_cast %18 : vector<1x128x64xbf16> to vector<128x64xbf16>
    %cst_13 = arith.constant dense<0.000000e+00> : vector<128x58xf32>
    %20 = tpu.matmul %19, %17, %cst_13 {dimension_numbers = #tpu.dot_dimension_numbers<[1], [0], [0], [1], [0, 0, 1, 1], [], []>} : vector<128x64xbf16>, vector<64x58xbf16>, vector<128x58xf32> -> vector<128x58xf32>
    %21 = arith.addf %16, %20 : vector<128x58xf32>
    %22 = vector.extract_strided_slice %0 {offsets = [0, 7], sizes = [64, 58], strides = [1, 1]} : vector<64x72xbf16> to vector<64x58xbf16>
    %c4 = arith.constant 4 : index
    %c0_14 = arith.constant 0 : index
    %c0_15 = arith.constant 0 : index
    %23 = vector.load %arg2[%c4, %c0_14, %c0_15] : memref<9x128x64xbf16, #tpu.memory_space<vmem>>, vector<1x128x64xbf16>
    %24 = vector.shape_cast %23 : vector<1x128x64xbf16> to vector<128x64xbf16>
    %cst_16 = arith.constant dense<0.000000e+00> : vector<128x58xf32>
    %25 = tpu.matmul %24, %22, %cst_16 {dimension_numbers = #tpu.dot_dimension_numbers<[1], [0], [0], [1], [0, 0, 1, 1], [], []>} : vector<128x64xbf16>, vector<64x58xbf16>, vector<128x58xf32> -> vector<128x58xf32>
    %26 = arith.addf %21, %25 : vector<128x58xf32>
    %27 = vector.extract_strided_slice %0 {offsets = [0, 8], sizes = [64, 58], strides = [1, 1]} : vector<64x72xbf16> to vector<64x58xbf16>
    %c5 = arith.constant 5 : index
    %c0_17 = arith.constant 0 : index
    %c0_18 = arith.constant 0 : index
    %28 = vector.load %arg2[%c5, %c0_17, %c0_18] : memref<9x128x64xbf16, #tpu.memory_space<vmem>>, vector<1x128x64xbf16>
    %29 = vector.shape_cast %28 : vector<1x128x64xbf16> to vector<128x64xbf16>
    %cst_19 = arith.constant dense<0.000000e+00> : vector<128x58xf32>
    %30 = tpu.matmul %29, %27, %cst_19 {dimension_numbers = #tpu.dot_dimension_numbers<[1], [0], [0], [1], [0, 0, 1, 1], [], []>} : vector<128x64xbf16>, vector<64x58xbf16>, vector<128x58xf32> -> vector<128x58xf32>
    %31 = arith.addf %26, %30 : vector<128x58xf32>
    %32 = vector.extract_strided_slice %0 {offsets = [0, 12], sizes = [64, 58], strides = [1, 1]} : vector<64x72xbf16> to vector<64x58xbf16>
    %c6 = arith.constant 6 : index
    %c0_20 = arith.constant 0 : index
    %c0_21 = arith.constant 0 : index
    %33 = vector.load %arg2[%c6, %c0_20, %c0_21] : memref<9x128x64xbf16, #tpu.memory_space<vmem>>, vector<1x128x64xbf16>
    %34 = vector.shape_cast %33 : vector<1x128x64xbf16> to vector<128x64xbf16>
    %cst_22 = arith.constant dense<0.000000e+00> : vector<128x58xf32>
    %35 = tpu.matmul %34, %32, %cst_22 {dimension_numbers = #tpu.dot_dimension_numbers<[1], [0], [0], [1], [0, 0, 1, 1], [], []>} : vector<128x64xbf16>, vector<64x58xbf16>, vector<128x58xf32> -> vector<128x58xf32>
    %36 = arith.addf %31, %35 : vector<128x58xf32>
    %37 = vector.extract_strided_slice %0 {offsets = [0, 13], sizes = [64, 58], strides = [1, 1]} : vector<64x72xbf16> to vector<64x58xbf16>
    %c7 = arith.constant 7 : index
    %c0_23 = arith.constant 0 : index
    %c0_24 = arith.constant 0 : index
    %38 = vector.load %arg2[%c7, %c0_23, %c0_24] : memref<9x128x64xbf16, #tpu.memory_space<vmem>>, vector<1x128x64xbf16>
    %39 = vector.shape_cast %38 : vector<1x128x64xbf16> to vector<128x64xbf16>
    %cst_25 = arith.constant dense<0.000000e+00> : vector<128x58xf32>
    %40 = tpu.matmul %39, %37, %cst_25 {dimension_numbers = #tpu.dot_dimension_numbers<[1], [0], [0], [1], [0, 0, 1, 1], [], []>} : vector<128x64xbf16>, vector<64x58xbf16>, vector<128x58xf32> -> vector<128x58xf32>
    %41 = arith.addf %36, %40 : vector<128x58xf32>
    %42 = vector.extract_strided_slice %0 {offsets = [0, 14], sizes = [64, 58], strides = [1, 1]} : vector<64x72xbf16> to vector<64x58xbf16>
    %c8 = arith.constant 8 : index
    %c0_26 = arith.constant 0 : index
    %c0_27 = arith.constant 0 : index
    %43 = vector.load %arg2[%c8, %c0_26, %c0_27] : memref<9x128x64xbf16, #tpu.memory_space<vmem>>, vector<1x128x64xbf16>
    %44 = vector.shape_cast %43 : vector<1x128x64xbf16> to vector<128x64xbf16>
    %cst_28 = arith.constant dense<0.000000e+00> : vector<128x58xf32>
    %45 = tpu.matmul %44, %42, %cst_28 {dimension_numbers = #tpu.dot_dimension_numbers<[1], [0], [0], [1], [0, 0, 1, 1], [], []>} : vector<128x64xbf16>, vector<64x58xbf16>, vector<128x58xf32> -> vector<128x58xf32>
    %46 = arith.addf %41, %45 : vector<128x58xf32>
    %c0_29 = arith.constant 0 : index
    %c0_30 = arith.constant 0 : index
    %47 = vector.load %arg5[%c0_29, %c0_30] : memref<1x58xf32, #tpu.memory_space<vmem>>, vector<1x58xf32>
    %48 = vector.broadcast %47 : vector<1x58xf32> to vector<128x58xf32>
    %49 = arith.mulf %46, %48 : vector<128x58xf32>
    %cst_31 = arith.constant dense<0.000000e+00> : vector<128xf32>
    %50 = vector.multi_reduction <add>, %49, %cst_31 [1] : vector<128x58xf32> to vector<128xf32>
    %51 = vector.shape_cast %50 : vector<128xf32> to vector<128x1xf32>
    %52 = arith.mulf %46, %46 : vector<128x58xf32>
    %53 = vector.broadcast %47 : vector<1x58xf32> to vector<128x58xf32>
    %54 = arith.mulf %52, %53 : vector<128x58xf32>
    %cst_32 = arith.constant dense<0.000000e+00> : vector<128xf32>
    %55 = vector.multi_reduction <add>, %54, %cst_32 [1] : vector<128x58xf32> to vector<128xf32>
    %56 = vector.shape_cast %55 : vector<128xf32> to vector<128x1xf32>
    %57 = vector.extract_strided_slice %51 {offsets = [0, 0], sizes = [32, 1], strides = [1, 1]} : vector<128x1xf32> to vector<32x1xf32>
    %58 = vector.extract_strided_slice %51 {offsets = [32, 0], sizes = [32, 1], strides = [1, 1]} : vector<128x1xf32> to vector<32x1xf32>
    %59 = arith.addf %57, %58 : vector<32x1xf32>
    %60 = vector.extract_strided_slice %51 {offsets = [64, 0], sizes = [32, 1], strides = [1, 1]} : vector<128x1xf32> to vector<32x1xf32>
    %61 = arith.addf %59, %60 : vector<32x1xf32>
    %62 = vector.extract_strided_slice %51 {offsets = [96, 0], sizes = [32, 1], strides = [1, 1]} : vector<128x1xf32> to vector<32x1xf32>
    %63 = arith.addf %61, %62 : vector<32x1xf32>
    %64 = vector.extract_strided_slice %56 {offsets = [0, 0], sizes = [32, 1], strides = [1, 1]} : vector<128x1xf32> to vector<32x1xf32>
    %65 = vector.extract_strided_slice %56 {offsets = [32, 0], sizes = [32, 1], strides = [1, 1]} : vector<128x1xf32> to vector<32x1xf32>
    %66 = arith.addf %64, %65 : vector<32x1xf32>
    %67 = vector.extract_strided_slice %56 {offsets = [64, 0], sizes = [32, 1], strides = [1, 1]} : vector<128x1xf32> to vector<32x1xf32>
    %68 = arith.addf %66, %67 : vector<32x1xf32>
    %69 = vector.extract_strided_slice %56 {offsets = [96, 0], sizes = [32, 1], strides = [1, 1]} : vector<128x1xf32> to vector<32x1xf32>
    %70 = arith.addf %68, %69 : vector<32x1xf32>
    %cst_33 = arith.constant 7.812500e-03 : f32
    %71 = vector.broadcast %cst_33 : f32 to vector<32x1xf32>
    %72 = arith.mulf %63, %71 : vector<32x1xf32>
    %cst_34 = arith.constant 7.812500e-03 : f32
    %73 = vector.broadcast %cst_34 : f32 to vector<32x1xf32>
    %74 = arith.mulf %70, %73 : vector<32x1xf32>
    %75 = arith.mulf %72, %72 : vector<32x1xf32>
    %76 = arith.subf %74, %75 : vector<32x1xf32>
    %cst_35 = arith.constant 0.000000e+00 : f32
    %77 = vector.broadcast %cst_35 : f32 to vector<32x1xf32>
    %78 = arith.maximumf %76, %77 : vector<32x1xf32>
    %c0_36 = arith.constant 0 : index
    %c0_37 = arith.constant 0 : index
    %79 = vector.load %arg3[%c0_36, %c0_37] : memref<32x1xf32, #tpu.memory_space<vmem>>, vector<32x1xf32>
    %cst_38 = arith.constant 9.99999974E-6 : f32
    %80 = vector.broadcast %cst_38 : f32 to vector<32x1xf32>
    %81 = arith.addf %78, %80 : vector<32x1xf32>
    %82 = math.rsqrt %81 : vector<32x1xf32>
    %83 = arith.mulf %79, %82 : vector<32x1xf32>
    %c0_39 = arith.constant 0 : index
    %c0_40 = arith.constant 0 : index
    %84 = vector.load %arg4[%c0_39, %c0_40] : memref<32x1xf32, #tpu.memory_space<vmem>>, vector<32x1xf32>
    %85 = arith.mulf %72, %83 : vector<32x1xf32>
    %86 = arith.subf %84, %85 : vector<32x1xf32>
    %87 = tpu.concatenate %83, %83, %83, %83 in 0 : vector<32x1xf32>, vector<32x1xf32>, vector<32x1xf32>, vector<32x1xf32> -> vector<128x1xf32>
    %88 = tpu.concatenate %86, %86, %86, %86 in 0 : vector<32x1xf32>, vector<32x1xf32>, vector<32x1xf32>, vector<32x1xf32> -> vector<128x1xf32>
    %89 = vector.broadcast %87 : vector<128x1xf32> to vector<128x58xf32>
    %90 = arith.mulf %46, %89 : vector<128x58xf32>
    %91 = vector.broadcast %88 : vector<128x1xf32> to vector<128x58xf32>
    %92 = arith.addf %90, %91 : vector<128x58xf32>
    %cst_41 = arith.constant 0.000000e+00 : f32
    %93 = vector.broadcast %cst_41 : f32 to vector<128x58xf32>
    %94 = arith.maximumf %92, %93 : vector<128x58xf32>
    %95 = arith.truncf %94 : vector<128x58xf32> to vector<128x58xbf16>
    %c0_42 = arith.constant 0 : index
    %c0_43 = arith.constant 0 : index
    %96 = vector.load %arg6[%c0_42, %c0_43] : memref<128x58xbf16, #tpu.memory_space<vmem>>, vector<128x58xbf16>
    tpu.vector_store %arg6[%c0_42, %c0_43], %95 {strides = array<i32>} : memref<128x58xbf16, #tpu.memory_space<vmem>>, vector<128x58xbf16>,
    return
  }
  func.func @transform_0(%arg0: i32) -> (i32, i32) {
    %c0_i32 = arith.constant 0 : i32
    %c0_i32_0 = arith.constant 0 : i32
    %c0_i32_1 = arith.constant 0 : i32
    return %c0_i32, %c0_i32_0 : i32, i32
  }
  func.func @transform_1(%arg0: i32) -> (i32, i32, i32) {
    %c0_i32 = arith.constant 0 : i32
    %c0_i32_0 = arith.constant 0 : i32
    %c0_i32_1 = arith.constant 0 : i32
    %c0_i32_2 = arith.constant 0 : i32
    return %c0_i32, %c0_i32_0, %c0_i32_1 : i32, i32, i32
  }
  func.func @transform_2(%arg0: i32) -> (i32, i32) {
    %c0_i32 = arith.constant 0 : i32
    %c0_i32_0 = arith.constant 0 : i32
    %c0_i32_1 = arith.constant 0 : i32
    return %c0_i32, %c0_i32_0 : i32, i32
  }
  func.func @transform_3(%arg0: i32) -> (i32, i32) {
    %c0_i32 = arith.constant 0 : i32
    %c0_i32_0 = arith.constant 0 : i32
    %c0_i32_1 = arith.constant 0 : i32
    return %c0_i32, %c0_i32_0 : i32, i32
  }
  func.func @transform_4(%arg0: i32) -> (i32, i32) {
    %c0_i32 = arith.constant 0 : i32
    %c0_i32_0 = arith.constant 0 : i32
    %c0_i32_1 = arith.constant 0 : i32
    return %c0_i32, %c0_i32_0 : i32, i32
  }
  func.func @transform_5(%arg0: i32) -> (i32, i32) {
    %c0_i32 = arith.constant 0 : i32
    %c0_i32_0 = arith.constant 0 : i32
    %c0_i32_1 = arith.constant 0 : i32
    return %c0_i32, %c0_i32_0 : i32, i32
  }
}

module attributes {stable_mosaic.version = 11 : i64} {
  func.func @_convt_bn_relu_kernel(%arg0: i32, %arg1: memref<32x200xbf16, #tpu.memory_space<vmem>>, %arg2: memref<9x64x32xbf16, #tpu.memory_space<vmem>>, %arg3: memref<16x1xf32, #tpu.memory_space<vmem>>, %arg4: memref<16x1xf32, #tpu.memory_space<vmem>>, %arg5: memref<1x178xf32, #tpu.memory_space<vmem>>, %arg6: memref<64x178xbf16, #tpu.memory_space<vmem>>) attributes {dimension_semantics = [#tpu.dimension_semantics<arbitrary>], iteration_bounds = array<i64: 1>, scalar_prefetch = 0 : i64, scratch_operands = 0 : i64, tpu.core_type = #tpu.core_type<tc>, window_params = [{pipeline_mode = #tpu.pipeline_mode<synchronous>, transform_indices = @transform_0, window_bounds = array<i64: 32, 200>}, {pipeline_mode = #tpu.pipeline_mode<synchronous>, transform_indices = @transform_1, window_bounds = array<i64: 9, 64, 32>}, {pipeline_mode = #tpu.pipeline_mode<synchronous>, transform_indices = @transform_2, window_bounds = array<i64: 16, 1>}, {pipeline_mode = #tpu.pipeline_mode<synchronous>, transform_indices = @transform_3, window_bounds = array<i64: 16, 1>}, {pipeline_mode = #tpu.pipeline_mode<synchronous>, transform_indices = @transform_4, window_bounds = array<i64: 1, 178>}, {pipeline_mode = #tpu.pipeline_mode<synchronous>, transform_indices = @transform_5, window_bounds = array<i64: 64, 178>}]} {
    %c0 = arith.constant 0 : index
    %c0_0 = arith.constant 0 : index
    %0 = vector.load %arg1[%c0, %c0_0] : memref<32x200xbf16, #tpu.memory_space<vmem>>, vector<32x200xbf16>
    %cst = arith.constant 0.000000e+00 : f32
    %1 = vector.broadcast %cst : f32 to vector<64x178xf32>
    %2 = vector.extract_strided_slice %0 {offsets = [0, 0], sizes = [32, 178], strides = [1, 1]} : vector<32x200xbf16> to vector<32x178xbf16>
    %c0_1 = arith.constant 0 : index
    %c0_2 = arith.constant 0 : index
    %c0_3 = arith.constant 0 : index
    %3 = vector.load %arg2[%c0_1, %c0_2, %c0_3] : memref<9x64x32xbf16, #tpu.memory_space<vmem>>, vector<1x64x32xbf16>
    %4 = vector.shape_cast %3 : vector<1x64x32xbf16> to vector<64x32xbf16>
    %cst_4 = arith.constant dense<0.000000e+00> : vector<64x178xf32>
    %5 = tpu.matmul %4, %2, %cst_4 {dimension_numbers = #tpu.dot_dimension_numbers<[1], [0], [0], [1], [0, 0, 1, 1], [], []>} : vector<64x32xbf16>, vector<32x178xbf16>, vector<64x178xf32> -> vector<64x178xf32>
    %6 = arith.addf %1, %5 : vector<64x178xf32>
    %7 = vector.extract_strided_slice %0 {offsets = [0, 1], sizes = [32, 178], strides = [1, 1]} : vector<32x200xbf16> to vector<32x178xbf16>
    %c1 = arith.constant 1 : index
    %c0_5 = arith.constant 0 : index
    %c0_6 = arith.constant 0 : index
    %8 = vector.load %arg2[%c1, %c0_5, %c0_6] : memref<9x64x32xbf16, #tpu.memory_space<vmem>>, vector<1x64x32xbf16>
    %9 = vector.shape_cast %8 : vector<1x64x32xbf16> to vector<64x32xbf16>
    %cst_7 = arith.constant dense<0.000000e+00> : vector<64x178xf32>
    %10 = tpu.matmul %9, %7, %cst_7 {dimension_numbers = #tpu.dot_dimension_numbers<[1], [0], [0], [1], [0, 0, 1, 1], [], []>} : vector<64x32xbf16>, vector<32x178xbf16>, vector<64x178xf32> -> vector<64x178xf32>
    %11 = arith.addf %6, %10 : vector<64x178xf32>
    %12 = vector.extract_strided_slice %0 {offsets = [0, 2], sizes = [32, 178], strides = [1, 1]} : vector<32x200xbf16> to vector<32x178xbf16>
    %c2 = arith.constant 2 : index
    %c0_8 = arith.constant 0 : index
    %c0_9 = arith.constant 0 : index
    %13 = vector.load %arg2[%c2, %c0_8, %c0_9] : memref<9x64x32xbf16, #tpu.memory_space<vmem>>, vector<1x64x32xbf16>
    %14 = vector.shape_cast %13 : vector<1x64x32xbf16> to vector<64x32xbf16>
    %cst_10 = arith.constant dense<0.000000e+00> : vector<64x178xf32>
    %15 = tpu.matmul %14, %12, %cst_10 {dimension_numbers = #tpu.dot_dimension_numbers<[1], [0], [0], [1], [0, 0, 1, 1], [], []>} : vector<64x32xbf16>, vector<32x178xbf16>, vector<64x178xf32> -> vector<64x178xf32>
    %16 = arith.addf %11, %15 : vector<64x178xf32>
    %17 = vector.extract_strided_slice %0 {offsets = [0, 10], sizes = [32, 178], strides = [1, 1]} : vector<32x200xbf16> to vector<32x178xbf16>
    %c3 = arith.constant 3 : index
    %c0_11 = arith.constant 0 : index
    %c0_12 = arith.constant 0 : index
    %18 = vector.load %arg2[%c3, %c0_11, %c0_12] : memref<9x64x32xbf16, #tpu.memory_space<vmem>>, vector<1x64x32xbf16>
    %19 = vector.shape_cast %18 : vector<1x64x32xbf16> to vector<64x32xbf16>
    %cst_13 = arith.constant dense<0.000000e+00> : vector<64x178xf32>
    %20 = tpu.matmul %19, %17, %cst_13 {dimension_numbers = #tpu.dot_dimension_numbers<[1], [0], [0], [1], [0, 0, 1, 1], [], []>} : vector<64x32xbf16>, vector<32x178xbf16>, vector<64x178xf32> -> vector<64x178xf32>
    %21 = arith.addf %16, %20 : vector<64x178xf32>
    %22 = vector.extract_strided_slice %0 {offsets = [0, 11], sizes = [32, 178], strides = [1, 1]} : vector<32x200xbf16> to vector<32x178xbf16>
    %c4 = arith.constant 4 : index
    %c0_14 = arith.constant 0 : index
    %c0_15 = arith.constant 0 : index
    %23 = vector.load %arg2[%c4, %c0_14, %c0_15] : memref<9x64x32xbf16, #tpu.memory_space<vmem>>, vector<1x64x32xbf16>
    %24 = vector.shape_cast %23 : vector<1x64x32xbf16> to vector<64x32xbf16>
    %cst_16 = arith.constant dense<0.000000e+00> : vector<64x178xf32>
    %25 = tpu.matmul %24, %22, %cst_16 {dimension_numbers = #tpu.dot_dimension_numbers<[1], [0], [0], [1], [0, 0, 1, 1], [], []>} : vector<64x32xbf16>, vector<32x178xbf16>, vector<64x178xf32> -> vector<64x178xf32>
    %26 = arith.addf %21, %25 : vector<64x178xf32>
    %27 = vector.extract_strided_slice %0 {offsets = [0, 12], sizes = [32, 178], strides = [1, 1]} : vector<32x200xbf16> to vector<32x178xbf16>
    %c5 = arith.constant 5 : index
    %c0_17 = arith.constant 0 : index
    %c0_18 = arith.constant 0 : index
    %28 = vector.load %arg2[%c5, %c0_17, %c0_18] : memref<9x64x32xbf16, #tpu.memory_space<vmem>>, vector<1x64x32xbf16>
    %29 = vector.shape_cast %28 : vector<1x64x32xbf16> to vector<64x32xbf16>
    %cst_19 = arith.constant dense<0.000000e+00> : vector<64x178xf32>
    %30 = tpu.matmul %29, %27, %cst_19 {dimension_numbers = #tpu.dot_dimension_numbers<[1], [0], [0], [1], [0, 0, 1, 1], [], []>} : vector<64x32xbf16>, vector<32x178xbf16>, vector<64x178xf32> -> vector<64x178xf32>
    %31 = arith.addf %26, %30 : vector<64x178xf32>
    %32 = vector.extract_strided_slice %0 {offsets = [0, 20], sizes = [32, 178], strides = [1, 1]} : vector<32x200xbf16> to vector<32x178xbf16>
    %c6 = arith.constant 6 : index
    %c0_20 = arith.constant 0 : index
    %c0_21 = arith.constant 0 : index
    %33 = vector.load %arg2[%c6, %c0_20, %c0_21] : memref<9x64x32xbf16, #tpu.memory_space<vmem>>, vector<1x64x32xbf16>
    %34 = vector.shape_cast %33 : vector<1x64x32xbf16> to vector<64x32xbf16>
    %cst_22 = arith.constant dense<0.000000e+00> : vector<64x178xf32>
    %35 = tpu.matmul %34, %32, %cst_22 {dimension_numbers = #tpu.dot_dimension_numbers<[1], [0], [0], [1], [0, 0, 1, 1], [], []>} : vector<64x32xbf16>, vector<32x178xbf16>, vector<64x178xf32> -> vector<64x178xf32>
    %36 = arith.addf %31, %35 : vector<64x178xf32>
    %37 = vector.extract_strided_slice %0 {offsets = [0, 21], sizes = [32, 178], strides = [1, 1]} : vector<32x200xbf16> to vector<32x178xbf16>
    %c7 = arith.constant 7 : index
    %c0_23 = arith.constant 0 : index
    %c0_24 = arith.constant 0 : index
    %38 = vector.load %arg2[%c7, %c0_23, %c0_24] : memref<9x64x32xbf16, #tpu.memory_space<vmem>>, vector<1x64x32xbf16>
    %39 = vector.shape_cast %38 : vector<1x64x32xbf16> to vector<64x32xbf16>
    %cst_25 = arith.constant dense<0.000000e+00> : vector<64x178xf32>
    %40 = tpu.matmul %39, %37, %cst_25 {dimension_numbers = #tpu.dot_dimension_numbers<[1], [0], [0], [1], [0, 0, 1, 1], [], []>} : vector<64x32xbf16>, vector<32x178xbf16>, vector<64x178xf32> -> vector<64x178xf32>
    %41 = arith.addf %36, %40 : vector<64x178xf32>
    %42 = vector.extract_strided_slice %0 {offsets = [0, 22], sizes = [32, 178], strides = [1, 1]} : vector<32x200xbf16> to vector<32x178xbf16>
    %c8 = arith.constant 8 : index
    %c0_26 = arith.constant 0 : index
    %c0_27 = arith.constant 0 : index
    %43 = vector.load %arg2[%c8, %c0_26, %c0_27] : memref<9x64x32xbf16, #tpu.memory_space<vmem>>, vector<1x64x32xbf16>
    %44 = vector.shape_cast %43 : vector<1x64x32xbf16> to vector<64x32xbf16>
    %cst_28 = arith.constant dense<0.000000e+00> : vector<64x178xf32>
    %45 = tpu.matmul %44, %42, %cst_28 {dimension_numbers = #tpu.dot_dimension_numbers<[1], [0], [0], [1], [0, 0, 1, 1], [], []>} : vector<64x32xbf16>, vector<32x178xbf16>, vector<64x178xf32> -> vector<64x178xf32>
    %46 = arith.addf %41, %45 : vector<64x178xf32>
    %c0_29 = arith.constant 0 : index
    %c0_30 = arith.constant 0 : index
    %47 = vector.load %arg5[%c0_29, %c0_30] : memref<1x178xf32, #tpu.memory_space<vmem>>, vector<1x178xf32>
    %48 = vector.broadcast %47 : vector<1x178xf32> to vector<64x178xf32>
    %49 = arith.mulf %46, %48 : vector<64x178xf32>
    %cst_31 = arith.constant dense<0.000000e+00> : vector<64xf32>
    %50 = vector.multi_reduction <add>, %49, %cst_31 [1] : vector<64x178xf32> to vector<64xf32>
    %51 = vector.shape_cast %50 : vector<64xf32> to vector<64x1xf32>
    %52 = arith.mulf %46, %46 : vector<64x178xf32>
    %53 = vector.broadcast %47 : vector<1x178xf32> to vector<64x178xf32>
    %54 = arith.mulf %52, %53 : vector<64x178xf32>
    %cst_32 = arith.constant dense<0.000000e+00> : vector<64xf32>
    %55 = vector.multi_reduction <add>, %54, %cst_32 [1] : vector<64x178xf32> to vector<64xf32>
    %56 = vector.shape_cast %55 : vector<64xf32> to vector<64x1xf32>
    %57 = vector.extract_strided_slice %51 {offsets = [0, 0], sizes = [16, 1], strides = [1, 1]} : vector<64x1xf32> to vector<16x1xf32>
    %58 = vector.extract_strided_slice %51 {offsets = [16, 0], sizes = [16, 1], strides = [1, 1]} : vector<64x1xf32> to vector<16x1xf32>
    %59 = arith.addf %57, %58 : vector<16x1xf32>
    %60 = vector.extract_strided_slice %51 {offsets = [32, 0], sizes = [16, 1], strides = [1, 1]} : vector<64x1xf32> to vector<16x1xf32>
    %61 = arith.addf %59, %60 : vector<16x1xf32>
    %62 = vector.extract_strided_slice %51 {offsets = [48, 0], sizes = [16, 1], strides = [1, 1]} : vector<64x1xf32> to vector<16x1xf32>
    %63 = arith.addf %61, %62 : vector<16x1xf32>
    %64 = vector.extract_strided_slice %56 {offsets = [0, 0], sizes = [16, 1], strides = [1, 1]} : vector<64x1xf32> to vector<16x1xf32>
    %65 = vector.extract_strided_slice %56 {offsets = [16, 0], sizes = [16, 1], strides = [1, 1]} : vector<64x1xf32> to vector<16x1xf32>
    %66 = arith.addf %64, %65 : vector<16x1xf32>
    %67 = vector.extract_strided_slice %56 {offsets = [32, 0], sizes = [16, 1], strides = [1, 1]} : vector<64x1xf32> to vector<16x1xf32>
    %68 = arith.addf %66, %67 : vector<16x1xf32>
    %69 = vector.extract_strided_slice %56 {offsets = [48, 0], sizes = [16, 1], strides = [1, 1]} : vector<64x1xf32> to vector<16x1xf32>
    %70 = arith.addf %68, %69 : vector<16x1xf32>
    %cst_33 = arith.constant 0.001953125 : f32
    %71 = vector.broadcast %cst_33 : f32 to vector<16x1xf32>
    %72 = arith.mulf %63, %71 : vector<16x1xf32>
    %cst_34 = arith.constant 0.001953125 : f32
    %73 = vector.broadcast %cst_34 : f32 to vector<16x1xf32>
    %74 = arith.mulf %70, %73 : vector<16x1xf32>
    %75 = arith.mulf %72, %72 : vector<16x1xf32>
    %76 = arith.subf %74, %75 : vector<16x1xf32>
    %cst_35 = arith.constant 0.000000e+00 : f32
    %77 = vector.broadcast %cst_35 : f32 to vector<16x1xf32>
    %78 = arith.maximumf %76, %77 : vector<16x1xf32>
    %c0_36 = arith.constant 0 : index
    %c0_37 = arith.constant 0 : index
    %79 = vector.load %arg3[%c0_36, %c0_37] : memref<16x1xf32, #tpu.memory_space<vmem>>, vector<16x1xf32>
    %cst_38 = arith.constant 9.99999974E-6 : f32
    %80 = vector.broadcast %cst_38 : f32 to vector<16x1xf32>
    %81 = arith.addf %78, %80 : vector<16x1xf32>
    %82 = math.rsqrt %81 : vector<16x1xf32>
    %83 = arith.mulf %79, %82 : vector<16x1xf32>
    %c0_39 = arith.constant 0 : index
    %c0_40 = arith.constant 0 : index
    %84 = vector.load %arg4[%c0_39, %c0_40] : memref<16x1xf32, #tpu.memory_space<vmem>>, vector<16x1xf32>
    %85 = arith.mulf %72, %83 : vector<16x1xf32>
    %86 = arith.subf %84, %85 : vector<16x1xf32>
    %87 = tpu.concatenate %83, %83, %83, %83 in 0 : vector<16x1xf32>, vector<16x1xf32>, vector<16x1xf32>, vector<16x1xf32> -> vector<64x1xf32>
    %88 = tpu.concatenate %86, %86, %86, %86 in 0 : vector<16x1xf32>, vector<16x1xf32>, vector<16x1xf32>, vector<16x1xf32> -> vector<64x1xf32>
    %89 = vector.broadcast %87 : vector<64x1xf32> to vector<64x178xf32>
    %90 = arith.mulf %46, %89 : vector<64x178xf32>
    %91 = vector.broadcast %88 : vector<64x1xf32> to vector<64x178xf32>
    %92 = arith.addf %90, %91 : vector<64x178xf32>
    %cst_41 = arith.constant 0.000000e+00 : f32
    %93 = vector.broadcast %cst_41 : f32 to vector<64x178xf32>
    %94 = arith.maximumf %92, %93 : vector<64x178xf32>
    %95 = arith.truncf %94 : vector<64x178xf32> to vector<64x178xbf16>
    %c0_42 = arith.constant 0 : index
    %c0_43 = arith.constant 0 : index
    %96 = vector.load %arg6[%c0_42, %c0_43] : memref<64x178xbf16, #tpu.memory_space<vmem>>, vector<64x178xbf16>
    tpu.vector_store %arg6[%c0_42, %c0_43], %95 {strides = array<i32>} : memref<64x178xbf16, #tpu.memory_space<vmem>>, vector<64x178xbf16>,
    return
  }
  func.func @transform_0(%arg0: i32) -> (i32, i32) {
    %c0_i32 = arith.constant 0 : i32
    %c0_i32_0 = arith.constant 0 : i32
    %c0_i32_1 = arith.constant 0 : i32
    return %c0_i32, %c0_i32_0 : i32, i32
  }
  func.func @transform_1(%arg0: i32) -> (i32, i32, i32) {
    %c0_i32 = arith.constant 0 : i32
    %c0_i32_0 = arith.constant 0 : i32
    %c0_i32_1 = arith.constant 0 : i32
    %c0_i32_2 = arith.constant 0 : i32
    return %c0_i32, %c0_i32_0, %c0_i32_1 : i32, i32, i32
  }
  func.func @transform_2(%arg0: i32) -> (i32, i32) {
    %c0_i32 = arith.constant 0 : i32
    %c0_i32_0 = arith.constant 0 : i32
    %c0_i32_1 = arith.constant 0 : i32
    return %c0_i32, %c0_i32_0 : i32, i32
  }
  func.func @transform_3(%arg0: i32) -> (i32, i32) {
    %c0_i32 = arith.constant 0 : i32
    %c0_i32_0 = arith.constant 0 : i32
    %c0_i32_1 = arith.constant 0 : i32
    return %c0_i32, %c0_i32_0 : i32, i32
  }
  func.func @transform_4(%arg0: i32) -> (i32, i32) {
    %c0_i32 = arith.constant 0 : i32
    %c0_i32_0 = arith.constant 0 : i32
    %c0_i32_1 = arith.constant 0 : i32
    return %c0_i32, %c0_i32_0 : i32, i32
  }
  func.func @transform_5(%arg0: i32) -> (i32, i32) {
    %c0_i32 = arith.constant 0 : i32
    %c0_i32_0 = arith.constant 0 : i32
    %c0_i32_1 = arith.constant 0 : i32
    return %c0_i32, %c0_i32_0 : i32, i32
  }
}

module attributes {stable_mosaic.version = 11 : i64} {
  func.func @_convt_bn_relu_kernel(%arg0: i32, %arg1: memref<16x648xbf16, #tpu.memory_space<vmem>>, %arg2: memref<9x32x16xbf16, #tpu.memory_space<vmem>>, %arg3: memref<8x1xf32, #tpu.memory_space<vmem>>, %arg4: memref<8x1xf32, #tpu.memory_space<vmem>>, %arg5: memref<1x610xf32, #tpu.memory_space<vmem>>, %arg6: memref<32x610xbf16, #tpu.memory_space<vmem>>) attributes {dimension_semantics = [#tpu.dimension_semantics<arbitrary>], iteration_bounds = array<i64: 1>, scalar_prefetch = 0 : i64, scratch_operands = 0 : i64, tpu.core_type = #tpu.core_type<tc>, window_params = [{pipeline_mode = #tpu.pipeline_mode<synchronous>, transform_indices = @transform_0, window_bounds = array<i64: 16, 648>}, {pipeline_mode = #tpu.pipeline_mode<synchronous>, transform_indices = @transform_1, window_bounds = array<i64: 9, 32, 16>}, {pipeline_mode = #tpu.pipeline_mode<synchronous>, transform_indices = @transform_2, window_bounds = array<i64: 8, 1>}, {pipeline_mode = #tpu.pipeline_mode<synchronous>, transform_indices = @transform_3, window_bounds = array<i64: 8, 1>}, {pipeline_mode = #tpu.pipeline_mode<synchronous>, transform_indices = @transform_4, window_bounds = array<i64: 1, 610>}, {pipeline_mode = #tpu.pipeline_mode<synchronous>, transform_indices = @transform_5, window_bounds = array<i64: 32, 610>}]} {
    %c0 = arith.constant 0 : index
    %c0_0 = arith.constant 0 : index
    %0 = vector.load %arg1[%c0, %c0_0] : memref<16x648xbf16, #tpu.memory_space<vmem>>, vector<16x648xbf16>
    %cst = arith.constant 0.000000e+00 : f32
    %1 = vector.broadcast %cst : f32 to vector<32x610xf32>
    %2 = vector.extract_strided_slice %0 {offsets = [0, 0], sizes = [16, 610], strides = [1, 1]} : vector<16x648xbf16> to vector<16x610xbf16>
    %c0_1 = arith.constant 0 : index
    %c0_2 = arith.constant 0 : index
    %c0_3 = arith.constant 0 : index
    %3 = vector.load %arg2[%c0_1, %c0_2, %c0_3] : memref<9x32x16xbf16, #tpu.memory_space<vmem>>, vector<1x32x16xbf16>
    %4 = vector.shape_cast %3 : vector<1x32x16xbf16> to vector<32x16xbf16>
    %cst_4 = arith.constant dense<0.000000e+00> : vector<32x610xf32>
    %5 = tpu.matmul %4, %2, %cst_4 {dimension_numbers = #tpu.dot_dimension_numbers<[1], [0], [0], [1], [0, 0, 1, 1], [], []>} : vector<32x16xbf16>, vector<16x610xbf16>, vector<32x610xf32> -> vector<32x610xf32>
    %6 = arith.addf %1, %5 : vector<32x610xf32>
    %7 = vector.extract_strided_slice %0 {offsets = [0, 1], sizes = [16, 610], strides = [1, 1]} : vector<16x648xbf16> to vector<16x610xbf16>
    %c1 = arith.constant 1 : index
    %c0_5 = arith.constant 0 : index
    %c0_6 = arith.constant 0 : index
    %8 = vector.load %arg2[%c1, %c0_5, %c0_6] : memref<9x32x16xbf16, #tpu.memory_space<vmem>>, vector<1x32x16xbf16>
    %9 = vector.shape_cast %8 : vector<1x32x16xbf16> to vector<32x16xbf16>
    %cst_7 = arith.constant dense<0.000000e+00> : vector<32x610xf32>
    %10 = tpu.matmul %9, %7, %cst_7 {dimension_numbers = #tpu.dot_dimension_numbers<[1], [0], [0], [1], [0, 0, 1, 1], [], []>} : vector<32x16xbf16>, vector<16x610xbf16>, vector<32x610xf32> -> vector<32x610xf32>
    %11 = arith.addf %6, %10 : vector<32x610xf32>
    %12 = vector.extract_strided_slice %0 {offsets = [0, 2], sizes = [16, 610], strides = [1, 1]} : vector<16x648xbf16> to vector<16x610xbf16>
    %c2 = arith.constant 2 : index
    %c0_8 = arith.constant 0 : index
    %c0_9 = arith.constant 0 : index
    %13 = vector.load %arg2[%c2, %c0_8, %c0_9] : memref<9x32x16xbf16, #tpu.memory_space<vmem>>, vector<1x32x16xbf16>
    %14 = vector.shape_cast %13 : vector<1x32x16xbf16> to vector<32x16xbf16>
    %cst_10 = arith.constant dense<0.000000e+00> : vector<32x610xf32>
    %15 = tpu.matmul %14, %12, %cst_10 {dimension_numbers = #tpu.dot_dimension_numbers<[1], [0], [0], [1], [0, 0, 1, 1], [], []>} : vector<32x16xbf16>, vector<16x610xbf16>, vector<32x610xf32> -> vector<32x610xf32>
    %16 = arith.addf %11, %15 : vector<32x610xf32>
    %17 = vector.extract_strided_slice %0 {offsets = [0, 18], sizes = [16, 610], strides = [1, 1]} : vector<16x648xbf16> to vector<16x610xbf16>
    %c3 = arith.constant 3 : index
    %c0_11 = arith.constant 0 : index
    %c0_12 = arith.constant 0 : index
    %18 = vector.load %arg2[%c3, %c0_11, %c0_12] : memref<9x32x16xbf16, #tpu.memory_space<vmem>>, vector<1x32x16xbf16>
    %19 = vector.shape_cast %18 : vector<1x32x16xbf16> to vector<32x16xbf16>
    %cst_13 = arith.constant dense<0.000000e+00> : vector<32x610xf32>
    %20 = tpu.matmul %19, %17, %cst_13 {dimension_numbers = #tpu.dot_dimension_numbers<[1], [0], [0], [1], [0, 0, 1, 1], [], []>} : vector<32x16xbf16>, vector<16x610xbf16>, vector<32x610xf32> -> vector<32x610xf32>
    %21 = arith.addf %16, %20 : vector<32x610xf32>
    %22 = vector.extract_strided_slice %0 {offsets = [0, 19], sizes = [16, 610], strides = [1, 1]} : vector<16x648xbf16> to vector<16x610xbf16>
    %c4 = arith.constant 4 : index
    %c0_14 = arith.constant 0 : index
    %c0_15 = arith.constant 0 : index
    %23 = vector.load %arg2[%c4, %c0_14, %c0_15] : memref<9x32x16xbf16, #tpu.memory_space<vmem>>, vector<1x32x16xbf16>
    %24 = vector.shape_cast %23 : vector<1x32x16xbf16> to vector<32x16xbf16>
    %cst_16 = arith.constant dense<0.000000e+00> : vector<32x610xf32>
    %25 = tpu.matmul %24, %22, %cst_16 {dimension_numbers = #tpu.dot_dimension_numbers<[1], [0], [0], [1], [0, 0, 1, 1], [], []>} : vector<32x16xbf16>, vector<16x610xbf16>, vector<32x610xf32> -> vector<32x610xf32>
    %26 = arith.addf %21, %25 : vector<32x610xf32>
    %27 = vector.extract_strided_slice %0 {offsets = [0, 20], sizes = [16, 610], strides = [1, 1]} : vector<16x648xbf16> to vector<16x610xbf16>
    %c5 = arith.constant 5 : index
    %c0_17 = arith.constant 0 : index
    %c0_18 = arith.constant 0 : index
    %28 = vector.load %arg2[%c5, %c0_17, %c0_18] : memref<9x32x16xbf16, #tpu.memory_space<vmem>>, vector<1x32x16xbf16>
    %29 = vector.shape_cast %28 : vector<1x32x16xbf16> to vector<32x16xbf16>
    %cst_19 = arith.constant dense<0.000000e+00> : vector<32x610xf32>
    %30 = tpu.matmul %29, %27, %cst_19 {dimension_numbers = #tpu.dot_dimension_numbers<[1], [0], [0], [1], [0, 0, 1, 1], [], []>} : vector<32x16xbf16>, vector<16x610xbf16>, vector<32x610xf32> -> vector<32x610xf32>
    %31 = arith.addf %26, %30 : vector<32x610xf32>
    %32 = vector.extract_strided_slice %0 {offsets = [0, 36], sizes = [16, 610], strides = [1, 1]} : vector<16x648xbf16> to vector<16x610xbf16>
    %c6 = arith.constant 6 : index
    %c0_20 = arith.constant 0 : index
    %c0_21 = arith.constant 0 : index
    %33 = vector.load %arg2[%c6, %c0_20, %c0_21] : memref<9x32x16xbf16, #tpu.memory_space<vmem>>, vector<1x32x16xbf16>
    %34 = vector.shape_cast %33 : vector<1x32x16xbf16> to vector<32x16xbf16>
    %cst_22 = arith.constant dense<0.000000e+00> : vector<32x610xf32>
    %35 = tpu.matmul %34, %32, %cst_22 {dimension_numbers = #tpu.dot_dimension_numbers<[1], [0], [0], [1], [0, 0, 1, 1], [], []>} : vector<32x16xbf16>, vector<16x610xbf16>, vector<32x610xf32> -> vector<32x610xf32>
    %36 = arith.addf %31, %35 : vector<32x610xf32>
    %37 = vector.extract_strided_slice %0 {offsets = [0, 37], sizes = [16, 610], strides = [1, 1]} : vector<16x648xbf16> to vector<16x610xbf16>
    %c7 = arith.constant 7 : index
    %c0_23 = arith.constant 0 : index
    %c0_24 = arith.constant 0 : index
    %38 = vector.load %arg2[%c7, %c0_23, %c0_24] : memref<9x32x16xbf16, #tpu.memory_space<vmem>>, vector<1x32x16xbf16>
    %39 = vector.shape_cast %38 : vector<1x32x16xbf16> to vector<32x16xbf16>
    %cst_25 = arith.constant dense<0.000000e+00> : vector<32x610xf32>
    %40 = tpu.matmul %39, %37, %cst_25 {dimension_numbers = #tpu.dot_dimension_numbers<[1], [0], [0], [1], [0, 0, 1, 1], [], []>} : vector<32x16xbf16>, vector<16x610xbf16>, vector<32x610xf32> -> vector<32x610xf32>
    %41 = arith.addf %36, %40 : vector<32x610xf32>
    %42 = vector.extract_strided_slice %0 {offsets = [0, 38], sizes = [16, 610], strides = [1, 1]} : vector<16x648xbf16> to vector<16x610xbf16>
    %c8 = arith.constant 8 : index
    %c0_26 = arith.constant 0 : index
    %c0_27 = arith.constant 0 : index
    %43 = vector.load %arg2[%c8, %c0_26, %c0_27] : memref<9x32x16xbf16, #tpu.memory_space<vmem>>, vector<1x32x16xbf16>
    %44 = vector.shape_cast %43 : vector<1x32x16xbf16> to vector<32x16xbf16>
    %cst_28 = arith.constant dense<0.000000e+00> : vector<32x610xf32>
    %45 = tpu.matmul %44, %42, %cst_28 {dimension_numbers = #tpu.dot_dimension_numbers<[1], [0], [0], [1], [0, 0, 1, 1], [], []>} : vector<32x16xbf16>, vector<16x610xbf16>, vector<32x610xf32> -> vector<32x610xf32>
    %46 = arith.addf %41, %45 : vector<32x610xf32>
    %c0_29 = arith.constant 0 : index
    %c0_30 = arith.constant 0 : index
    %47 = vector.load %arg5[%c0_29, %c0_30] : memref<1x610xf32, #tpu.memory_space<vmem>>, vector<1x610xf32>
    %48 = vector.broadcast %47 : vector<1x610xf32> to vector<32x610xf32>
    %49 = arith.mulf %46, %48 : vector<32x610xf32>
    %cst_31 = arith.constant dense<0.000000e+00> : vector<32xf32>
    %50 = vector.multi_reduction <add>, %49, %cst_31 [1] : vector<32x610xf32> to vector<32xf32>
    %51 = vector.shape_cast %50 : vector<32xf32> to vector<32x1xf32>
    %52 = arith.mulf %46, %46 : vector<32x610xf32>
    %53 = vector.broadcast %47 : vector<1x610xf32> to vector<32x610xf32>
    %54 = arith.mulf %52, %53 : vector<32x610xf32>
    %cst_32 = arith.constant dense<0.000000e+00> : vector<32xf32>
    %55 = vector.multi_reduction <add>, %54, %cst_32 [1] : vector<32x610xf32> to vector<32xf32>
    %56 = vector.shape_cast %55 : vector<32xf32> to vector<32x1xf32>
    %57 = vector.extract_strided_slice %51 {offsets = [0, 0], sizes = [8, 1], strides = [1, 1]} : vector<32x1xf32> to vector<8x1xf32>
    %58 = vector.extract_strided_slice %51 {offsets = [8, 0], sizes = [8, 1], strides = [1, 1]} : vector<32x1xf32> to vector<8x1xf32>
    %59 = arith.addf %57, %58 : vector<8x1xf32>
    %60 = vector.extract_strided_slice %51 {offsets = [16, 0], sizes = [8, 1], strides = [1, 1]} : vector<32x1xf32> to vector<8x1xf32>
    %61 = arith.addf %59, %60 : vector<8x1xf32>
    %62 = vector.extract_strided_slice %51 {offsets = [24, 0], sizes = [8, 1], strides = [1, 1]} : vector<32x1xf32> to vector<8x1xf32>
    %63 = arith.addf %61, %62 : vector<8x1xf32>
    %64 = vector.extract_strided_slice %56 {offsets = [0, 0], sizes = [8, 1], strides = [1, 1]} : vector<32x1xf32> to vector<8x1xf32>
    %65 = vector.extract_strided_slice %56 {offsets = [8, 0], sizes = [8, 1], strides = [1, 1]} : vector<32x1xf32> to vector<8x1xf32>
    %66 = arith.addf %64, %65 : vector<8x1xf32>
    %67 = vector.extract_strided_slice %56 {offsets = [16, 0], sizes = [8, 1], strides = [1, 1]} : vector<32x1xf32> to vector<8x1xf32>
    %68 = arith.addf %66, %67 : vector<8x1xf32>
    %69 = vector.extract_strided_slice %56 {offsets = [24, 0], sizes = [8, 1], strides = [1, 1]} : vector<32x1xf32> to vector<8x1xf32>
    %70 = arith.addf %68, %69 : vector<8x1xf32>
    %cst_33 = arith.constant 4.8828125E-4 : f32
    %71 = vector.broadcast %cst_33 : f32 to vector<8x1xf32>
    %72 = arith.mulf %63, %71 : vector<8x1xf32>
    %cst_34 = arith.constant 4.8828125E-4 : f32
    %73 = vector.broadcast %cst_34 : f32 to vector<8x1xf32>
    %74 = arith.mulf %70, %73 : vector<8x1xf32>
    %75 = arith.mulf %72, %72 : vector<8x1xf32>
    %76 = arith.subf %74, %75 : vector<8x1xf32>
    %cst_35 = arith.constant 0.000000e+00 : f32
    %77 = vector.broadcast %cst_35 : f32 to vector<8x1xf32>
    %78 = arith.maximumf %76, %77 : vector<8x1xf32>
    %c0_36 = arith.constant 0 : index
    %c0_37 = arith.constant 0 : index
    %79 = vector.load %arg3[%c0_36, %c0_37] : memref<8x1xf32, #tpu.memory_space<vmem>>, vector<8x1xf32>
    %cst_38 = arith.constant 9.99999974E-6 : f32
    %80 = vector.broadcast %cst_38 : f32 to vector<8x1xf32>
    %81 = arith.addf %78, %80 : vector<8x1xf32>
    %82 = math.rsqrt %81 : vector<8x1xf32>
    %83 = arith.mulf %79, %82 : vector<8x1xf32>
    %c0_39 = arith.constant 0 : index
    %c0_40 = arith.constant 0 : index
    %84 = vector.load %arg4[%c0_39, %c0_40] : memref<8x1xf32, #tpu.memory_space<vmem>>, vector<8x1xf32>
    %85 = arith.mulf %72, %83 : vector<8x1xf32>
    %86 = arith.subf %84, %85 : vector<8x1xf32>
    %87 = tpu.concatenate %83, %83, %83, %83 in 0 : vector<8x1xf32>, vector<8x1xf32>, vector<8x1xf32>, vector<8x1xf32> -> vector<32x1xf32>
    %88 = tpu.concatenate %86, %86, %86, %86 in 0 : vector<8x1xf32>, vector<8x1xf32>, vector<8x1xf32>, vector<8x1xf32> -> vector<32x1xf32>
    %89 = vector.broadcast %87 : vector<32x1xf32> to vector<32x610xf32>
    %90 = arith.mulf %46, %89 : vector<32x610xf32>
    %91 = vector.broadcast %88 : vector<32x1xf32> to vector<32x610xf32>
    %92 = arith.addf %90, %91 : vector<32x610xf32>
    %cst_41 = arith.constant 0.000000e+00 : f32
    %93 = vector.broadcast %cst_41 : f32 to vector<32x610xf32>
    %94 = arith.maximumf %92, %93 : vector<32x610xf32>
    %95 = arith.truncf %94 : vector<32x610xf32> to vector<32x610xbf16>
    %c0_42 = arith.constant 0 : index
    %c0_43 = arith.constant 0 : index
    %96 = vector.load %arg6[%c0_42, %c0_43] : memref<32x610xbf16, #tpu.memory_space<vmem>>, vector<32x610xbf16>
    tpu.vector_store %arg6[%c0_42, %c0_43], %95 {strides = array<i32>} : memref<32x610xbf16, #tpu.memory_space<vmem>>, vector<32x610xbf16>,
    return
  }
  func.func @transform_0(%arg0: i32) -> (i32, i32) {
    %c0_i32 = arith.constant 0 : i32
    %c0_i32_0 = arith.constant 0 : i32
    %c0_i32_1 = arith.constant 0 : i32
    return %c0_i32, %c0_i32_0 : i32, i32
  }
  func.func @transform_1(%arg0: i32) -> (i32, i32, i32) {
    %c0_i32 = arith.constant 0 : i32
    %c0_i32_0 = arith.constant 0 : i32
    %c0_i32_1 = arith.constant 0 : i32
    %c0_i32_2 = arith.constant 0 : i32
    return %c0_i32, %c0_i32_0, %c0_i32_1 : i32, i32, i32
  }
  func.func @transform_2(%arg0: i32) -> (i32, i32) {
    %c0_i32 = arith.constant 0 : i32
    %c0_i32_0 = arith.constant 0 : i32
    %c0_i32_1 = arith.constant 0 : i32
    return %c0_i32, %c0_i32_0 : i32, i32
  }
  func.func @transform_3(%arg0: i32) -> (i32, i32) {
    %c0_i32 = arith.constant 0 : i32
    %c0_i32_0 = arith.constant 0 : i32
    %c0_i32_1 = arith.constant 0 : i32
    return %c0_i32, %c0_i32_0 : i32, i32
  }
  func.func @transform_4(%arg0: i32) -> (i32, i32) {
    %c0_i32 = arith.constant 0 : i32
    %c0_i32_0 = arith.constant 0 : i32
    %c0_i32_1 = arith.constant 0 : i32
    return %c0_i32, %c0_i32_0 : i32, i32
  }
  func.func @transform_5(%arg0: i32) -> (i32, i32) {
    %c0_i32 = arith.constant 0 : i32
    %c0_i32_0 = arith.constant 0 : i32
    %c0_i32_1 = arith.constant 0 : i32
    return %c0_i32, %c0_i32_0 : i32, i32
  }
}

module attributes {stable_mosaic.version = 11 : i64} {
  func.func @_convt_bias_tanh_kernel(%arg0: i32, %arg1: memref<8x2312xbf16, #tpu.memory_space<vmem>>, %arg2: memref<9x12x8xbf16, #tpu.memory_space<vmem>>, %arg3: memref<12x1xf32, #tpu.memory_space<vmem>>, %arg4: memref<12x2242xf32, #tpu.memory_space<vmem>>) attributes {dimension_semantics = [#tpu.dimension_semantics<arbitrary>], iteration_bounds = array<i64: 1>, scalar_prefetch = 0 : i64, scratch_operands = 0 : i64, tpu.core_type = #tpu.core_type<tc>, window_params = [{pipeline_mode = #tpu.pipeline_mode<synchronous>, transform_indices = @transform_0, window_bounds = array<i64: 8, 2312>}, {pipeline_mode = #tpu.pipeline_mode<synchronous>, transform_indices = @transform_1, window_bounds = array<i64: 9, 12, 8>}, {pipeline_mode = #tpu.pipeline_mode<synchronous>, transform_indices = @transform_2, window_bounds = array<i64: 12, 1>}, {pipeline_mode = #tpu.pipeline_mode<synchronous>, transform_indices = @transform_3, window_bounds = array<i64: 12, 2242>}]} {
    %c0 = arith.constant 0 : index
    %c0_0 = arith.constant 0 : index
    %0 = vector.load %arg1[%c0, %c0_0] : memref<8x2312xbf16, #tpu.memory_space<vmem>>, vector<8x2312xbf16>
    %cst = arith.constant 0.000000e+00 : f32
    %1 = vector.broadcast %cst : f32 to vector<12x2242xf32>
    %2 = vector.extract_strided_slice %0 {offsets = [0, 0], sizes = [8, 2242], strides = [1, 1]} : vector<8x2312xbf16> to vector<8x2242xbf16>
    %c0_1 = arith.constant 0 : index
    %c0_2 = arith.constant 0 : index
    %c0_3 = arith.constant 0 : index
    %3 = vector.load %arg2[%c0_1, %c0_2, %c0_3] : memref<9x12x8xbf16, #tpu.memory_space<vmem>>, vector<1x12x8xbf16>
    %4 = vector.shape_cast %3 : vector<1x12x8xbf16> to vector<12x8xbf16>
    %cst_4 = arith.constant dense<0.000000e+00> : vector<12x2242xf32>
    %5 = tpu.matmul %4, %2, %cst_4 {dimension_numbers = #tpu.dot_dimension_numbers<[1], [0], [0], [1], [0, 0, 1, 1], [], []>} : vector<12x8xbf16>, vector<8x2242xbf16>, vector<12x2242xf32> -> vector<12x2242xf32>
    %6 = arith.addf %1, %5 : vector<12x2242xf32>
    %7 = vector.extract_strided_slice %0 {offsets = [0, 1], sizes = [8, 2242], strides = [1, 1]} : vector<8x2312xbf16> to vector<8x2242xbf16>
    %c1 = arith.constant 1 : index
    %c0_5 = arith.constant 0 : index
    %c0_6 = arith.constant 0 : index
    %8 = vector.load %arg2[%c1, %c0_5, %c0_6] : memref<9x12x8xbf16, #tpu.memory_space<vmem>>, vector<1x12x8xbf16>
    %9 = vector.shape_cast %8 : vector<1x12x8xbf16> to vector<12x8xbf16>
    %cst_7 = arith.constant dense<0.000000e+00> : vector<12x2242xf32>
    %10 = tpu.matmul %9, %7, %cst_7 {dimension_numbers = #tpu.dot_dimension_numbers<[1], [0], [0], [1], [0, 0, 1, 1], [], []>} : vector<12x8xbf16>, vector<8x2242xbf16>, vector<12x2242xf32> -> vector<12x2242xf32>
    %11 = arith.addf %6, %10 : vector<12x2242xf32>
    %12 = vector.extract_strided_slice %0 {offsets = [0, 2], sizes = [8, 2242], strides = [1, 1]} : vector<8x2312xbf16> to vector<8x2242xbf16>
    %c2 = arith.constant 2 : index
    %c0_8 = arith.constant 0 : index
    %c0_9 = arith.constant 0 : index
    %13 = vector.load %arg2[%c2, %c0_8, %c0_9] : memref<9x12x8xbf16, #tpu.memory_space<vmem>>, vector<1x12x8xbf16>
    %14 = vector.shape_cast %13 : vector<1x12x8xbf16> to vector<12x8xbf16>
    %cst_10 = arith.constant dense<0.000000e+00> : vector<12x2242xf32>
    %15 = tpu.matmul %14, %12, %cst_10 {dimension_numbers = #tpu.dot_dimension_numbers<[1], [0], [0], [1], [0, 0, 1, 1], [], []>} : vector<12x8xbf16>, vector<8x2242xbf16>, vector<12x2242xf32> -> vector<12x2242xf32>
    %16 = arith.addf %11, %15 : vector<12x2242xf32>
    %17 = vector.extract_strided_slice %0 {offsets = [0, 34], sizes = [8, 2242], strides = [1, 1]} : vector<8x2312xbf16> to vector<8x2242xbf16>
    %c3 = arith.constant 3 : index
    %c0_11 = arith.constant 0 : index
    %c0_12 = arith.constant 0 : index
    %18 = vector.load %arg2[%c3, %c0_11, %c0_12] : memref<9x12x8xbf16, #tpu.memory_space<vmem>>, vector<1x12x8xbf16>
    %19 = vector.shape_cast %18 : vector<1x12x8xbf16> to vector<12x8xbf16>
    %cst_13 = arith.constant dense<0.000000e+00> : vector<12x2242xf32>
    %20 = tpu.matmul %19, %17, %cst_13 {dimension_numbers = #tpu.dot_dimension_numbers<[1], [0], [0], [1], [0, 0, 1, 1], [], []>} : vector<12x8xbf16>, vector<8x2242xbf16>, vector<12x2242xf32> -> vector<12x2242xf32>
    %21 = arith.addf %16, %20 : vector<12x2242xf32>
    %22 = vector.extract_strided_slice %0 {offsets = [0, 35], sizes = [8, 2242], strides = [1, 1]} : vector<8x2312xbf16> to vector<8x2242xbf16>
    %c4 = arith.constant 4 : index
    %c0_14 = arith.constant 0 : index
    %c0_15 = arith.constant 0 : index
    %23 = vector.load %arg2[%c4, %c0_14, %c0_15] : memref<9x12x8xbf16, #tpu.memory_space<vmem>>, vector<1x12x8xbf16>
    %24 = vector.shape_cast %23 : vector<1x12x8xbf16> to vector<12x8xbf16>
    %cst_16 = arith.constant dense<0.000000e+00> : vector<12x2242xf32>
    %25 = tpu.matmul %24, %22, %cst_16 {dimension_numbers = #tpu.dot_dimension_numbers<[1], [0], [0], [1], [0, 0, 1, 1], [], []>} : vector<12x8xbf16>, vector<8x2242xbf16>, vector<12x2242xf32> -> vector<12x2242xf32>
    %26 = arith.addf %21, %25 : vector<12x2242xf32>
    %27 = vector.extract_strided_slice %0 {offsets = [0, 36], sizes = [8, 2242], strides = [1, 1]} : vector<8x2312xbf16> to vector<8x2242xbf16>
    %c5 = arith.constant 5 : index
    %c0_17 = arith.constant 0 : index
    %c0_18 = arith.constant 0 : index
    %28 = vector.load %arg2[%c5, %c0_17, %c0_18] : memref<9x12x8xbf16, #tpu.memory_space<vmem>>, vector<1x12x8xbf16>
    %29 = vector.shape_cast %28 : vector<1x12x8xbf16> to vector<12x8xbf16>
    %cst_19 = arith.constant dense<0.000000e+00> : vector<12x2242xf32>
    %30 = tpu.matmul %29, %27, %cst_19 {dimension_numbers = #tpu.dot_dimension_numbers<[1], [0], [0], [1], [0, 0, 1, 1], [], []>} : vector<12x8xbf16>, vector<8x2242xbf16>, vector<12x2242xf32> -> vector<12x2242xf32>
    %31 = arith.addf %26, %30 : vector<12x2242xf32>
    %32 = vector.extract_strided_slice %0 {offsets = [0, 68], sizes = [8, 2242], strides = [1, 1]} : vector<8x2312xbf16> to vector<8x2242xbf16>
    %c6 = arith.constant 6 : index
    %c0_20 = arith.constant 0 : index
    %c0_21 = arith.constant 0 : index
    %33 = vector.load %arg2[%c6, %c0_20, %c0_21] : memref<9x12x8xbf16, #tpu.memory_space<vmem>>, vector<1x12x8xbf16>
    %34 = vector.shape_cast %33 : vector<1x12x8xbf16> to vector<12x8xbf16>
    %cst_22 = arith.constant dense<0.000000e+00> : vector<12x2242xf32>
    %35 = tpu.matmul %34, %32, %cst_22 {dimension_numbers = #tpu.dot_dimension_numbers<[1], [0], [0], [1], [0, 0, 1, 1], [], []>} : vector<12x8xbf16>, vector<8x2242xbf16>, vector<12x2242xf32> -> vector<12x2242xf32>
    %36 = arith.addf %31, %35 : vector<12x2242xf32>
    %37 = vector.extract_strided_slice %0 {offsets = [0, 69], sizes = [8, 2242], strides = [1, 1]} : vector<8x2312xbf16> to vector<8x2242xbf16>
    %c7 = arith.constant 7 : index
    %c0_23 = arith.constant 0 : index
    %c0_24 = arith.constant 0 : index
    %38 = vector.load %arg2[%c7, %c0_23, %c0_24] : memref<9x12x8xbf16, #tpu.memory_space<vmem>>, vector<1x12x8xbf16>
    %39 = vector.shape_cast %38 : vector<1x12x8xbf16> to vector<12x8xbf16>
    %cst_25 = arith.constant dense<0.000000e+00> : vector<12x2242xf32>
    %40 = tpu.matmul %39, %37, %cst_25 {dimension_numbers = #tpu.dot_dimension_numbers<[1], [0], [0], [1], [0, 0, 1, 1], [], []>} : vector<12x8xbf16>, vector<8x2242xbf16>, vector<12x2242xf32> -> vector<12x2242xf32>
    %41 = arith.addf %36, %40 : vector<12x2242xf32>
    %42 = vector.extract_strided_slice %0 {offsets = [0, 70], sizes = [8, 2242], strides = [1, 1]} : vector<8x2312xbf16> to vector<8x2242xbf16>
    %c8 = arith.constant 8 : index
    %c0_26 = arith.constant 0 : index
    %c0_27 = arith.constant 0 : index
    %43 = vector.load %arg2[%c8, %c0_26, %c0_27] : memref<9x12x8xbf16, #tpu.memory_space<vmem>>, vector<1x12x8xbf16>
    %44 = vector.shape_cast %43 : vector<1x12x8xbf16> to vector<12x8xbf16>
    %cst_28 = arith.constant dense<0.000000e+00> : vector<12x2242xf32>
    %45 = tpu.matmul %44, %42, %cst_28 {dimension_numbers = #tpu.dot_dimension_numbers<[1], [0], [0], [1], [0, 0, 1, 1], [], []>} : vector<12x8xbf16>, vector<8x2242xbf16>, vector<12x2242xf32> -> vector<12x2242xf32>
    %46 = arith.addf %41, %45 : vector<12x2242xf32>
    %c0_29 = arith.constant 0 : index
    %c0_30 = arith.constant 0 : index
    %47 = vector.load %arg3[%c0_29, %c0_30] : memref<12x1xf32, #tpu.memory_space<vmem>>, vector<12x1xf32>
    %48 = vector.broadcast %47 : vector<12x1xf32> to vector<12x2242xf32>
    %49 = arith.addf %46, %48 : vector<12x2242xf32>
    %50 = math.tanh %49 : vector<12x2242xf32>
    %c0_31 = arith.constant 0 : index
    %c0_32 = arith.constant 0 : index
    %51 = vector.load %arg4[%c0_31, %c0_32] : memref<12x2242xf32, #tpu.memory_space<vmem>>, vector<12x2242xf32>
    tpu.vector_store %arg4[%c0_31, %c0_32], %50 {strides = array<i32>} : memref<12x2242xf32, #tpu.memory_space<vmem>>, vector<12x2242xf32>,
    return
  }
  func.func @transform_0(%arg0: i32) -> (i32, i32) {
    %c0_i32 = arith.constant 0 : i32
    %c0_i32_0 = arith.constant 0 : i32
    %c0_i32_1 = arith.constant 0 : i32
    return %c0_i32, %c0_i32_0 : i32, i32
  }
  func.func @transform_1(%arg0: i32) -> (i32, i32, i32) {
    %c0_i32 = arith.constant 0 : i32
    %c0_i32_0 = arith.constant 0 : i32
    %c0_i32_1 = arith.constant 0 : i32
    %c0_i32_2 = arith.constant 0 : i32
    return %c0_i32, %c0_i32_0, %c0_i32_1 : i32, i32, i32
  }
  func.func @transform_2(%arg0: i32) -> (i32, i32) {
    %c0_i32 = arith.constant 0 : i32
    %c0_i32_0 = arith.constant 0 : i32
    %c0_i32_1 = arith.constant 0 : i32
    return %c0_i32, %c0_i32_0 : i32, i32
  }
  func.func @transform_3(%arg0: i32) -> (i32, i32) {
    %c0_i32 = arith.constant 0 : i32
    %c0_i32_0 = arith.constant 0 : i32
    %c0_i32_1 = arith.constant 0 : i32
    return %c0_i32, %c0_i32_0 : i32, i32
  }
}

</mosaic_0001>

<llo_original>
// kernel: generator_forward.5
$region0: #{generator_forward.5}
  #allocation0 [shape = 'u32[]', space=smem, size = 0x4, offset = 0x4, fixed_abs, tag = 'smem constant byte address 0x4 - core index']
  #allocation1 [shape = 'u32[72,128]{1,0:T(1,128)}', space=vmem, size = 0x9000, scoped, tag = 'internal scratch']
  %s0 = inlined_call_operand.vmem [shape: bf16[2,32], index: 0, kind: input, shape index: {}]
  %s1 = inlined_call_operand.hbm [shape: bf16[32,1024], index: 1, kind: input, shape index: {}]
  %s2 = inlined_call_operand.hbm [shape: f32[1,64], index: 2, kind: input, shape index: {}]
  %s3 = inlined_call_operand.hbm [shape: f32[1,64], index: 3, kind: input, shape index: {}]
  %s4 = inlined_call_operand.vmem [shape: bf16[2,1024], index: 4, kind: output, shape index: {}]
  %s5 = sld [smem:[#allocation0]]
  $region38: #{generator_forward.5} parent=0
    _
  %s7 = ssub.s32 1, %s5
  %s8 = scalar_select 0, %s7, %s5
  $region1: #{generator_forward.5} parent=0
    #allocation2 [shape = 'u8[65536]{0}', space=vmem, size = 0x10000, scoped, tag = 'input window, operand 1, single buffered']
    #allocation3 [shape = 's32[1]{0}', space=sflag, size = 0x4, scoped, tag = 'scoped memory for generator_forward.5']
    #allocation4 [shape = 'u8[512]{0}', space=vmem, size = 0x400, scoped, tag = 'input window, operand 2, single buffered']
    #allocation5 [shape = 's32[1]{0}', space=sflag, size = 0x4, scoped, tag = 'scoped memory for generator_forward.5']
    #allocation6 [shape = 'u8[512]{0}', space=vmem, size = 0x400, scoped, tag = 'input window, operand 3, single buffered']
    %9 = vsyncpa [#allocation3], 0
    %10 = vsyncpa [#allocation5], 0
    // Predicated region
    $region2: #{generator_forward.5} parent=1 // pred_check
      _
    $region3: #{generator_forward.5} parent=1 // pred_check_branch
      %12 = sbr.rel (0) target = $region5
    $region4: #{generator_forward.5} parent=1 // pred_region
      _
    $region5: #{generator_forward.5} parent=1 // pred_fallthru
      _
    // Predicated region
    $region6: #{generator_forward.5} parent=1 // pred_check
      _
    $region7: #{generator_forward.5} parent=1 // pred_check_branch
      %14 = sbr.rel (0) target = $region9
    $region8: #{generator_forward.5} parent=1 // pred_region
      %16 = vsyncadd [#allocation3], 0
      %s17 = sshll.u32 %s1, 4
      %s18 = int_to_ptr.hbm [resolvable:$true] %s17
      %s19 = sshll.u32 [#allocation2], 4
      %s20 = int_to_ptr.vmem [resolvable:$true] %s19
      %25 = dma.hbm_to_vmem [thread:$0]  %s18, 2048, %s20, [#allocation3], 512, 512, 32
    $region9: #{generator_forward.5} parent=1 // pred_fallthru
      _
    // Predicated region
    $region10: #{generator_forward.5} parent=1 // pred_check
      _
    $region11: #{generator_forward.5} parent=1 // pred_check_branch
      %27 = sbr.rel (0) target = $region13
    $region12: #{generator_forward.5} parent=1 // pred_region
      %29 = vsyncadd [#allocation5], 0
      %s31 = sshll.u32 %s2, 4
      %s32 = int_to_ptr.hbm [resolvable:$true] %s31
      %s33 = sshll.u32 [#allocation4], 4
      %s34 = int_to_ptr.vmem [resolvable:$true] %s33
      %36 = dma.hbm_to_vmem [thread:$0]  %s32, 16, %s34, [#allocation5]
    $region13: #{generator_forward.5} parent=1 // pred_fallthru
      _
    // Predicated region
    $region14: #{generator_forward.5} parent=1 // pred_check
      _
    $region15: #{generator_forward.5} parent=1 // pred_check_branch
      %38 = sbr.rel (0) target = $region17
    $region16: #{generator_forward.5} parent=1 // pred_region
      %40 = vsyncadd [#allocation5], 0
      %s42 = sshll.u32 %s3, 4
      %s43 = int_to_ptr.hbm [resolvable:$true] %s42
      %s44 = sshll.u32 [#allocation6], 4
      %s45 = int_to_ptr.vmem [resolvable:$true] %s44
      %47 = dma.hbm_to_vmem [thread:$0]  %s43, 16, %s45, [#allocation5]
    $region17: #{generator_forward.5} parent=1 // pred_fallthru
      _
    // Predicated region
    $region18: #{generator_forward.5} parent=1 // pred_check
      _
    $region19: #{generator_forward.5} parent=1 // pred_check_branch
      %49 = sbr.rel (0) target = $region21
    $region20: #{generator_forward.5} parent=1 // pred_region
      %51 = dma.done [#allocation3], 2048
    $region21: #{generator_forward.5} parent=1 // pred_fallthru
      _
    // Predicated region
    $region22: #{generator_forward.5} parent=1 // pred_check
      _
    $region23: #{generator_forward.5} parent=1 // pred_check_branch
      %53 = sbr.rel (0) target = $region25
    $region24: #{generator_forward.5} parent=1 // pred_region
      %55 = dma.done [#allocation5], 16
    $region25: #{generator_forward.5} parent=1 // pred_fallthru
      _
    // Predicated region
    $region26: #{generator_forward.5} parent=1 // pred_check
      _
    $region27: #{generator_forward.5} parent=1 // pred_check_branch
      %57 = sbr.rel (0) target = $region29
    $region28: #{generator_forward.5} parent=1 // pred_region
      %59 = dma.done [#allocation5], 16
    $region29: #{generator_forward.5} parent=1 // pred_fallthru
      _
    %v61 = vld [vmem:[%s0] sm:$0x1]
    %v62 = vld [vmem:[#allocation2] sm:$0xff]
    %v63 = vld [vmem:[#allocation2 + $0x8] sm:$0xff]
    %v64 = vld [vmem:[#allocation2 + $0x10] sm:$0xff]
    %v65 = vld [vmem:[#allocation2 + $0x18] sm:$0xff]
    %v66 = vld [vmem:[#allocation2 + $0x20] sm:$0xff]
    %v67 = vld [vmem:[#allocation2 + $0x28] sm:$0xff]
    %v68 = vld [vmem:[#allocation2 + $0x30] sm:$0xff]
    %v69 = vld [vmem:[#allocation2 + $0x38] sm:$0xff]
    %v70 = vld [vmem:[#allocation2 + $0x40] sm:$0xff]
    %v71 = vld [vmem:[#allocation2 + $0x48] sm:$0xff]
    %v72 = vld [vmem:[#allocation2 + $0x50] sm:$0xff]
    %v73 = vld [vmem:[#allocation2 + $0x58] sm:$0xff]
    %v74 = vld [vmem:[#allocation2 + $0x60] sm:$0xff]
    %v75 = vld [vmem:[#allocation2 + $0x68] sm:$0xff]
    %v76 = vld [vmem:[#allocation2 + $0x70] sm:$0xff]
    %v77 = vld [vmem:[#allocation2 + $0x78] sm:$0xff]
    %v94 = vunpack.c.l.b16 %v62
    %v95 = vunpack.c.h.b16 %v62
    %v96 = vunpack.c.l.b16 %v63
    %v97 = vunpack.c.h.b16 %v63
    %v98 = vunpack.c.l.b16 %v64
    %v99 = vunpack.c.h.b16 %v64
    %v100 = vunpack.c.l.b16 %v65
    %v101 = vunpack.c.h.b16 %v65
    %v102 = vunpack.c.l.b16 %v66
    %v103 = vunpack.c.h.b16 %v66
    %v104 = vunpack.c.l.b16 %v67
    %v105 = vunpack.c.h.b16 %v67
    %v106 = vunpack.c.l.b16 %v68
    %v107 = vunpack.c.h.b16 %v68
    %v108 = vunpack.c.l.b16 %v69
    %v109 = vunpack.c.h.b16 %v69
    %v110 = vunpack.c.l.b16 %v70
    %v111 = vunpack.c.h.b16 %v70
    %v112 = vunpack.c.l.b16 %v71
    %v113 = vunpack.c.h.b16 %v71
    %v114 = vunpack.c.l.b16 %v72
    %v115 = vunpack.c.h.b16 %v72
    %v116 = vunpack.c.l.b16 %v73
    %v117 = vunpack.c.h.b16 %v73
    %v118 = vunpack.c.l.b16 %v74
    %v119 = vunpack.c.h.b16 %v74
    %v120 = vunpack.c.l.b16 %v75
    %v121 = vunpack.c.h.b16 %v75
    %v122 = vunpack.c.l.b16 %v76
    %v123 = vunpack.c.h.b16 %v76
    %v124 = vunpack.c.l.b16 %v77
    %v125 = vunpack.c.h.b16 %v77
    %v126 = vpack.c.b16 %v102, %v94
    %v127 = vpack.c.b16 %v103, %v95
    %v128 = vpack.c.b16 %v104, %v96
    %v129 = vpack.c.b16 %v105, %v97
    %v130 = vpack.c.b16 %v106, %v98
    %v131 = vpack.c.b16 %v107, %v99
    %v132 = vpack.c.b16 %v108, %v100
    %v133 = vpack.c.b16 %v109, %v101
    %v134 = vpack.c.b16 %v118, %v110
    %v135 = vpack.c.b16 %v119, %v111
    %v136 = vpack.c.b16 %v120, %v112
    %v137 = vpack.c.b16 %v121, %v113
    %v138 = vpack.c.b16 %v122, %v114
    %v139 = vpack.c.b16 %v123, %v115
    %v140 = vpack.c.b16 %v124, %v116
    %v141 = vpack.c.b16 %v125, %v117
    %vm158 = vcmask 261120
    %v160 = vsel %vm158, %v61, 0
    %162 = vmatpush.bf16.msra.mxu0 0
    %163 = vmatpush.bf16.msra.mxu0 0
    %164 = vmatpush.bf16.msra.mxu0 0
    %165 = vmatpush.bf16.msra.mxu0 0
    %166 = vmatpush.bf16.msra.mxu0 0
    %167 = vmatpush.bf16.msra.mxu0 0
    %168 = vmatpush.bf16.msra.mxu0 %v134
    %169 = vmatpush.bf16.msra.mxu0 %v126
    %170 = vmatmul.bf16.gmra.mxu0 %v160
    %v171 = vpop.f32.mrf.mxu0
    %v172 = vadd.f32 0.0, %v171
    %v173 = vpop.f32.mrf.mxu0
    %174 = vdwg.mxu0
    %175 = vmatpush.bf16.msra.mxu0 0
    %176 = vmatpush.bf16.msra.mxu0 0
    %177 = vmatpush.bf16.msra.mxu0 0
    %178 = vmatpush.bf16.msra.mxu0 0
    %179 = vmatpush.bf16.msra.mxu0 0
    %180 = vmatpush.bf16.msra.mxu0 0
    %181 = vmatpush.bf16.msra.mxu0 %v135
    %182 = vmatpush.bf16.msra.mxu0 %v127
    %183 = vmatmul.bf16.gmra.mxu0 %v160
    %v184 = vpop.f32.mrf.mxu0
    %v185 = vadd.f32 0.0, %v184
    %v186 = vpop.f32.mrf.mxu0
    %187 = vdwg.mxu0
    %188 = vmatpush.bf16.msra.mxu0 0
    %189 = vmatpush.bf16.msra.mxu0 0
    %190 = vmatpush.bf16.msra.mxu0 0
    %191 = vmatpush.bf16.msra.mxu0 0
    %192 = vmatpush.bf16.msra.mxu0 0
    %193 = vmatpush.bf16.msra.mxu0 0
    %194 = vmatpush.bf16.msra.mxu0 %v136
    %195 = vmatpush.bf16.msra.mxu0 %v128
    %196 = vmatmul.bf16.gmra.mxu0 %v160
    %v197 = vpop.f32.mrf.mxu0
    %v198 = vadd.f32 0.0, %v197
    %v199 = vpop.f32.mrf.mxu0
    %200 = vdwg.mxu0
    %201 = vmatpush.bf16.msra.mxu0 0
    %202 = vmatpush.bf16.msra.mxu0 0
    %203 = vmatpush.bf16.msra.mxu0 0
    %204 = vmatpush.bf16.msra.mxu0 0
    %205 = vmatpush.bf16.msra.mxu0 0
    %206 = vmatpush.bf16.msra.mxu0 0
    %207 = vmatpush.bf16.msra.mxu0 %v137
    %208 = vmatpush.bf16.msra.mxu0 %v129
    %209 = vmatmul.bf16.gmra.mxu0 %v160
    %v210 = vpop.f32.mrf.mxu0
    %v211 = vadd.f32 0.0, %v210
    %v212 = vpop.f32.mrf.mxu0
    %213 = vdwg.mxu0
    %214 = vmatpush.bf16.msra.mxu0 0
    %215 = vmatpush.bf16.msra.mxu0 0
    %216 = vmatpush.bf16.msra.mxu0 0
    %217 = vmatpush.bf16.msra.mxu0 0
    %218 = vmatpush.bf16.msra.mxu0 0
    %219 = vmatpush.bf16.msra.mxu0 0
    %220 = vmatpush.bf16.msra.mxu0 %v138
    %221 = vmatpush.bf16.msra.mxu0 %v130
    %222 = vmatmul.bf16.gmra.mxu0 %v160
    %v223 = vpop.f32.mrf.mxu0
    %v224 = vadd.f32 0.0, %v223
    %v225 = vpop.f32.mrf.mxu0
    %226 = vdwg.mxu0
    %227 = vmatpush.bf16.msra.mxu0 0
    %228 = vmatpush.bf16.msra.mxu0 0
    %229 = vmatpush.bf16.msra.mxu0 0
    %230 = vmatpush.bf16.msra.mxu0 0
    %231 = vmatpush.bf16.msra.mxu0 0
    %232 = vmatpush.bf16.msra.mxu0 0
    %233 = vmatpush.bf16.msra.mxu0 %v139
    %234 = vmatpush.bf16.msra.mxu0 %v131
    %235 = vmatmul.bf16.gmra.mxu0 %v160
    %v236 = vpop.f32.mrf.mxu0
    %v237 = vadd.f32 0.0, %v236
    %v238 = vpop.f32.mrf.mxu0
    %239 = vdwg.mxu0
    %240 = vmatpush.bf16.msra.mxu0 0
    %241 = vmatpush.bf16.msra.mxu0 0
    %242 = vmatpush.bf16.msra.mxu0 0
    %243 = vmatpush.bf16.msra.mxu0 0
    %244 = vmatpush.bf16.msra.mxu0 0
    %245 = vmatpush.bf16.msra.mxu0 0
    %246 = vmatpush.bf16.msra.mxu0 %v140
    %247 = vmatpush.bf16.msra.mxu0 %v132
    %248 = vmatmul.bf16.gmra.mxu0 %v160
    %v249 = vpop.f32.mrf.mxu0
    %v250 = vadd.f32 0.0, %v249
    %v251 = vpop.f32.mrf.mxu0
    %252 = vdwg.mxu0
    %253 = vmatpush.bf16.msra.mxu0 0
    %254 = vmatpush.bf16.msra.mxu0 0
    %255 = vmatpush.bf16.msra.mxu0 0
    %256 = vmatpush.bf16.msra.mxu0 0
    %257 = vmatpush.bf16.msra.mxu0 0
    %258 = vmatpush.bf16.msra.mxu0 0
    %259 = vmatpush.bf16.msra.mxu0 %v141
    %260 = vmatpush.bf16.msra.mxu0 %v133
    %261 = vmatmul.bf16.gmra.mxu0 %v160
    %v262 = vpop.f32.mrf.mxu0
    %v263 = vadd.f32 0.0, %v262
    %v264 = vpop.f32.mrf.mxu0
    %265 = vdwg.mxu0
    %vm266 = vcmask 1041408
    %v267 = vsel %vm266, %v172, 0.0
    %v268 = vrot.slane %v267, 4
    %v269 = vadd.f32 %v267, %v268
    %v270 = vrot.slane %v269, 2
    %v271 = vadd.f32 %v269, %v270
    %v272 = vrot.slane %v271, 1
    %v273 = vadd.f32 %v271, %v272
    %v274 = vsel %vm266, %v185, 0.0
    %v275 = vrot.slane %v274, 4
    %v276 = vadd.f32 %v274, %v275
    %v277 = vrot.slane %v276, 2
    %v278 = vadd.f32 %v276, %v277
    %v279 = vrot.slane %v278, 1
    %v280 = vadd.f32 %v278, %v279
    %v281 = vsel %vm266, %v198, 0.0
    %v282 = vrot.slane %v281, 4
    %v283 = vadd.f32 %v281, %v282
    %v284 = vrot.slane %v283, 2
    %v285 = vadd.f32 %v283, %v284
    %v286 = vrot.slane %v285, 1
    %v287 = vadd.f32 %v285, %v286
    %v288 = vsel %vm266, %v211, 0.0
    %v289 = vrot.slane %v288, 4
    %v290 = vadd.f32 %v288, %v289
    %v291 = vrot.slane %v290, 2
    %v292 = vadd.f32 %v290, %v291
    %v293 = vrot.slane %v292, 1
    %v294 = vadd.f32 %v292, %v293
    %v295 = vsel %vm266, %v224, 0.0
    %v296 = vrot.slane %v295, 4
    %v297 = vadd.f32 %v295, %v296
    %v298 = vrot.slane %v297, 2
    %v299 = vadd.f32 %v297, %v298
    %v300 = vrot.slane %v299, 1
    %v301 = vadd.f32 %v299, %v300
    %v302 = vsel %vm266, %v237, 0.0
    %v303 = vrot.slane %v302, 4
    %v304 = vadd.f32 %v302, %v303
    %v305 = vrot.slane %v304, 2
    %v306 = vadd.f32 %v304, %v305
    %v307 = vrot.slane %v306, 1
    %v308 = vadd.f32 %v306, %v307
    %v309 = vsel %vm266, %v250, 0.0
    %v310 = vrot.slane %v309, 4
    %v311 = vadd.f32 %v309, %v310
    %v312 = vrot.slane %v311, 2
    %v313 = vadd.f32 %v311, %v312
    %v314 = vrot.slane %v313, 1
    %v315 = vadd.f32 %v313, %v314
    %v316 = vsel %vm266, %v263, 0.0
    %v317 = vrot.slane %v316, 4
    %v318 = vadd.f32 %v316, %v317
    %v319 = vrot.slane %v318, 2
    %v320 = vadd.f32 %v318, %v319
    %v321 = vrot.slane %v320, 1
    %v322 = vadd.f32 %v320, %v321
    %v323 = vmul.f32 %v172, %v172
    %v324 = vmul.f32 %v185, %v185
    %v325 = vmul.f32 %v198, %v198
    %v326 = vmul.f32 %v211, %v211
    %v327 = vmul.f32 %v224, %v224
    %v328 = vmul.f32 %v237, %v237
    %v329 = vmul.f32 %v250, %v250
    %v330 = vmul.f32 %v263, %v263
    %v331 = vsel %vm266, %v323, 0.0
    %v332 = vrot.slane %v331, 4
    %v333 = vadd.f32 %v331, %v332
    %v334 = vrot.slane %v333, 2
    %v335 = vadd.f32 %v333, %v334
    %v336 = vrot.slane %v335, 1
    %v337 = vadd.f32 %v335, %v336
    %v338 = vsel %vm266, %v324, 0.0
    %v339 = vrot.slane %v338, 4
    %v340 = vadd.f32 %v338, %v339
    %v341 = vrot.slane %v340, 2
    %v342 = vadd.f32 %v340, %v341
    %v343 = vrot.slane %v342, 1
    %v344 = vadd.f32 %v342, %v343
    %v345 = vsel %vm266, %v325, 0.0
    %v346 = vrot.slane %v345, 4
    %v347 = vadd.f32 %v345, %v346
    %v348 = vrot.slane %v347, 2
    %v349 = vadd.f32 %v347, %v348
    %v350 = vrot.slane %v349, 1
    %v351 = vadd.f32 %v349, %v350
    %v352 = vsel %vm266, %v326, 0.0
    %v353 = vrot.slane %v352, 4
    %v354 = vadd.f32 %v352, %v353
    %v355 = vrot.slane %v354, 2
    %v356 = vadd.f32 %v354, %v355
    %v357 = vrot.slane %v356, 1
    %v358 = vadd.f32 %v356, %v357
    %v359 = vsel %vm266, %v327, 0.0
    %v360 = vrot.slane %v359, 4
    %v361 = vadd.f32 %v359, %v360
    %v362 = vrot.slane %v361, 2
    %v363 = vadd.f32 %v361, %v362
    %v364 = vrot.slane %v363, 1
    %v365 = vadd.f32 %v363, %v364
    %v366 = vsel %vm266, %v328, 0.0
    %v367 = vrot.slane %v366, 4
    %v368 = vadd.f32 %v366, %v367
    %v369 = vrot.slane %v368, 2
    %v370 = vadd.f32 %v368, %v369
    %v371 = vrot.slane %v370, 1
    %v372 = vadd.f32 %v370, %v371
    %v373 = vsel %vm266, %v329, 0.0
    %v374 = vrot.slane %v373, 4
    %v375 = vadd.f32 %v373, %v374
    %v376 = vrot.slane %v375, 2
    %v377 = vadd.f32 %v375, %v376
    %v378 = vrot.slane %v377, 1
    %v379 = vadd.f32 %v377, %v378
    %v380 = vsel %vm266, %v330, 0.0
    %v381 = vrot.slane %v380, 4
    %v382 = vadd.f32 %v380, %v381
    %v383 = vrot.slane %v382, 2
    %v384 = vadd.f32 %v382, %v383
    %v385 = vrot.slane %v384, 1
    %v386 = vadd.f32 %v384, %v385
    %388 = vrot.lane.b32.xlu0 %v273, 64
    %v389 = vpop.permute.xlu0 %388
    %v391 = vadd.f32 %v273, %v389
    %393 = vrot.lane.b32.xlu0 %v337, 64
    %v394 = vpop.permute.xlu0 %393
    %v396 = vadd.f32 %v337, %v394
    %v397 = vadd.f32 %v391, %v280
    %v398 = vadd.f32 %v396, %v344
    %400 = vrot.lane.b32.xlu0 %v280, 64
    %v401 = vpop.permute.xlu0 %400
    %v403 = vadd.f32 %v397, %v401
    %405 = vrot.lane.b32.xlu0 %v344, 64
    %v406 = vpop.permute.xlu0 %405
    %v408 = vadd.f32 %v398, %v406
    %v409 = vadd.f32 %v403, %v287
    %v410 = vadd.f32 %v408, %v351
    %412 = vrot.lane.b32.xlu0 %v287, 64
    %v413 = vpop.permute.xlu0 %412
    %v415 = vadd.f32 %v409, %v413
    %417 = vrot.lane.b32.xlu0 %v351, 64
    %v418 = vpop.permute.xlu0 %417
    %v420 = vadd.f32 %v410, %v418
    %v421 = vadd.f32 %v415, %v294
    %v422 = vadd.f32 %v420, %v358
    %424 = vrot.lane.b32.xlu0 %v294, 64
    %v425 = vpop.permute.xlu0 %424
    %v427 = vadd.f32 %v421, %v425
    %429 = vrot.lane.b32.xlu0 %v358, 64
    %v430 = vpop.permute.xlu0 %429
    %v432 = vadd.f32 %v422, %v430
    %v433 = vadd.f32 %v427, %v301
    %v434 = vadd.f32 %v432, %v365
    %436 = vrot.lane.b32.xlu0 %v301, 64
    %v437 = vpop.permute.xlu0 %436
    %v439 = vadd.f32 %v433, %v437
    %441 = vrot.lane.b32.xlu0 %v365, 64
    %v442 = vpop.permute.xlu0 %441
    %v444 = vadd.f32 %v434, %v442
    %v445 = vadd.f32 %v439, %v308
    %v446 = vadd.f32 %v444, %v372
    %448 = vrot.lane.b32.xlu0 %v308, 64
    %v449 = vpop.permute.xlu0 %448
    %v451 = vadd.f32 %v445, %v449
    %453 = vrot.lane.b32.xlu0 %v372, 64
    %v454 = vpop.permute.xlu0 %453
    %v456 = vadd.f32 %v446, %v454
    %v457 = vadd.f32 %v451, %v315
    %v458 = vadd.f32 %v456, %v379
    %460 = vrot.lane.b32.xlu0 %v315, 64
    %v461 = vpop.permute.xlu0 %460
    %v463 = vadd.f32 %v457, %v461
    %465 = vrot.lane.b32.xlu0 %v379, 64
    %v466 = vpop.permute.xlu0 %465
    %v468 = vadd.f32 %v458, %v466
    %v469 = vadd.f32 %v463, %v322
    %v470 = vadd.f32 %v468, %v386
    %472 = vrot.lane.b32.xlu0 %v322, 64
    %v473 = vpop.permute.xlu0 %472
    %v475 = vadd.f32 %v469, %v473
    %477 = vrot.lane.b32.xlu0 %v386, 64
    %v478 = vpop.permute.xlu0 %477
    %v480 = vadd.f32 %v470, %v478
    %v481 = vmul.f32 %v475, 0.03125
    %v482 = vmul.f32 %v480, 0.03125
    %v483 = vmul.f32 %v481, %v481
    %v484 = vsub.f32 %v482, %v483
    %v485 = vmax.f32 %v484, 0.0
    %v486 = vld [vmem:[#allocation4] sm:$0x1]
    %v487 = vadd.f32 %v485, 1e-05
    %v488 = vrsqrt.pop %v487
    %v489 = vmul.f32 %v488, %v487
    %v490 = vmul.f32 %v489, %v488
    %v491 = vmul.f32 0.5, %v490
    %v492 = vsub.f32 1.5, %v491
    %v493 = vmul.f32 %v488, %v492
    %vm494 = vweird.f32 %v487
    %vm495 = vweird.f32 %v488
    %vm496 = vmor %vm494, %vm495
    %v497 = vsel %vm496, %v488, %v493
    %v498 = vmul.f32 %v486, %v497
    %v499 = vld [vmem:[#allocation6] sm:$0x1]
    %v500 = vmul.f32 %v481, %v498
    %v501 = vsub.f32 %v499, %v500
    %v503 = vperm.slane %v498, 0
    %504 = vrot.lane.b32.xlu0 %v503, 64
    %v505 = vpop.permute.xlu0 %504
    %vm507 = vcmask 523264
    %v508 = vsel %vm507, %v498, %v505
    %v510 = vperm.slane %v501, 0
    %511 = vrot.lane.b32.xlu0 %v510, 64
    %v512 = vpop.permute.xlu0 %511
    %v514 = vsel %vm507, %v501, %v512
    %v515 = vperm.slane %v508, 0
    %v516 = vmul.f32 %v172, %v515
    %v517 = vmul.f32 %v185, %v515
    %v518 = vmul.f32 %v198, %v515
    %v519 = vmul.f32 %v211, %v515
    %v520 = vmul.f32 %v224, %v515
    %v521 = vmul.f32 %v237, %v515
    %v522 = vmul.f32 %v250, %v515
    %v523 = vmul.f32 %v263, %v515
    %v524 = vperm.slane %v514, 0
    %v525 = vadd.f32 %v516, %v524
    %v526 = vadd.f32 %v517, %v524
    %v527 = vadd.f32 %v518, %v524
    %v528 = vadd.f32 %v519, %v524
    %v529 = vadd.f32 %v520, %v524
    %v530 = vadd.f32 %v521, %v524
    %v531 = vadd.f32 %v522, %v524
    %v532 = vadd.f32 %v523, %v524
    %v533 = vmax.f32 %v525, 0.0
    %v534 = vmax.f32 %v526, 0.0
    %v535 = vmax.f32 %v527, 0.0
    %v536 = vmax.f32 %v528, 0.0
    %v537 = vmax.f32 %v529, 0.0
    %v538 = vmax.f32 %v530, 0.0
    %v539 = vmax.f32 %v531, 0.0
    %v540 = vmax.f32 %v532, 0.0
    %v541 = vpack.c.bf16 %v534, %v533
    %v542 = vpack.c.bf16 %v536, %v535
    %v543 = vpack.c.bf16 %v538, %v537
    %v544 = vpack.c.bf16 %v540, %v539
    %v549 = vrot.slane %v541, 3
    %v550 = vrot.slane %v542, 6
    %v551 = vrot.slane %v542, 1
    %v552 = vrot.slane %v543, 4
    %v553 = vrot.slane %v543, 7
    %v554 = vrot.slane %v544, 2
    %v555 = vrot.slane %v544, 5
    %vm556 = vcmask 1040384
    %v559 = vsel %vm556, %v541, %v549
    %vm560 = vcmask 1042434
    %v563 = vsel %vm560, %v550, %v551
    %v564 = vsel %vm266, %v559, %v563
    %vm565 = vcmask 1044484
    %v568 = vsel %vm565, %v552, %v553
    %vm569 = vcmask 1046534
    %v572 = vsel %vm569, %v554, %v555
    %vm573 = vcmask 1045508
    %v574 = vsel %vm573, %v568, %v572
    %vm575 = vcmask 1043456
    %v576 = vsel %vm575, %v564, %v574
    %578 = vst [vmem:[%s4] sm:$0xff] %v576
    // Predicated region
    $region30: #{generator_forward.5} parent=1 // pred_check
      _
    $region31: #{generator_forward.5} parent=1 // pred_check_branch
      %580 = sbr.rel (0) target = $region33
    $region32: #{generator_forward.5} parent=1 // pred_region
      _
    $region33: #{generator_forward.5} parent=1 // pred_fallthru
      _
    // Predicated region
    $region34: #{generator_forward.5} parent=1 // pred_check
      _
    $region35: #{generator_forward.5} parent=1 // pred_check_branch
      %582 = sbr.rel (0) target = $region37
    $region36: #{generator_forward.5} parent=1 // pred_region
      _
    $region37: #{generator_forward.5} parent=1 // pred_fallthru
      _
    %583 = vsyncpa [#allocation3], 1
    %584 = vsyncpa [#allocation5], 1

// kernel: generator_forward.6
$region0: #{generator_forward.6}
  #allocation0 [shape = 'u32[]', space=smem, size = 0x4, offset = 0x4, fixed_abs, tag = 'smem constant byte address 0x4 - core index']
  #allocation1 [shape = 'u32[72,128]{1,0:T(1,128)}', space=vmem, size = 0x9000, scoped, tag = 'internal scratch']
  %s0 = inlined_call_operand.vmem [shape: bf16[64,72], index: 0, kind: input, shape index: {}]
  %s1 = inlined_call_operand.vmem [shape: bf16[9,128,64], index: 1, kind: input, shape index: {}]
  %s2 = inlined_call_operand.vmem [shape: f32[32,1], index: 2, kind: input, shape index: {}]
  %s3 = inlined_call_operand.vmem [shape: f32[32,1], index: 3, kind: input, shape index: {}]
  %s4 = inlined_call_operand.hbm [shape: f32[1,58], index: 4, kind: input, shape index: {}]
  %s5 = inlined_call_operand.vmem [shape: bf16[128,58], index: 5, kind: output, shape index: {}]
  %s6 = sld [smem:[#allocation0]]
  $region34: #{generator_forward.6} parent=0
    _
  %s8 = ssub.s32 1, %s6
  %s9 = scalar_select 0, %s8, %s6
  $region1: #{generator_forward.6} parent=0
    #allocation2 [shape = 'u8[512]{0}', space=vmem, size = 0x400, scoped, tag = 'input window, operand 4, single buffered']
    #allocation3 [shape = 's32[1]{0}', space=sflag, size = 0x4, scoped, tag = 'scoped memory for generator_forward.6']
    %10 = vsyncpa [#allocation3], 0
    // Predicated region
    $region2: #{generator_forward.6} parent=1 // pred_check
      _
    $region3: #{generator_forward.6} parent=1 // pred_check_branch
      %12 = sbr.rel (0) target = $region5
    $region4: #{generator_forward.6} parent=1 // pred_region
      _
    $region5: #{generator_forward.6} parent=1 // pred_fallthru
      _
    // Predicated region
    $region6: #{generator_forward.6} parent=1 // pred_check
      _
    $region7: #{generator_forward.6} parent=1 // pred_check_branch
      %14 = sbr.rel (0) target = $region9
    $region8: #{generator_forward.6} parent=1 // pred_region
      _
    $region9: #{generator_forward.6} parent=1 // pred_fallthru
      _
    // Predicated region
    $region10: #{generator_forward.6} parent=1 // pred_check
      _
    $region11: #{generator_forward.6} parent=1 // pred_check_branch
      %16 = sbr.rel (0) target = $region13
    $region12: #{generator_forward.6} parent=1 // pred_region
      _
    $region13: #{generator_forward.6} parent=1 // pred_fallthru
      _
    // Predicated region
    $region14: #{generator_forward.6} parent=1 // pred_check
      _
    $region15: #{generator_forward.6} parent=1 // pred_check_branch
      %18 = sbr.rel (0) target = $region17
    $region16: #{generator_forward.6} parent=1 // pred_region
      _
    $region17: #{generator_forward.6} parent=1 // pred_fallthru
      _
    // Predicated region
    $region18: #{generator_forward.6} parent=1 // pred_check
      _
    $region19: #{generator_forward.6} parent=1 // pred_check_branch
      %20 = sbr.rel (0) target = $region21
    $region20: #{generator_forward.6} parent=1 // pred_region
      %22 = vsyncadd [#allocation3], 0
      %s24 = sshll.u32 %s4, 4
      %s25 = int_to_ptr.hbm [resolvable:$true] %s24
      %s26 = sshll.u32 [#allocation2], 4
      %s27 = int_to_ptr.vmem [resolvable:$true] %s26
      %29 = dma.hbm_to_vmem [thread:$0]  %s25, 16, %s27, [#allocation3]
    $region21: #{generator_forward.6} parent=1 // pred_fallthru
      _
    // Predicated region
    $region22: #{generator_forward.6} parent=1 // pred_check
      _
    $region23: #{generator_forward.6} parent=1 // pred_check_branch
      %31 = sbr.rel (0) target = $region25
    $region24: #{generator_forward.6} parent=1 // pred_region
      %33 = dma.done [#allocation3], 16
    $region25: #{generator_forward.6} parent=1 // pred_fallthru
      _
    %v35 = vld [vmem:[%s0] sm:$0xf]
    %v36 = vld [vmem:[%s0 + $0x4] sm:$0xf]
    %v37 = vld [vmem:[%s0 + $0x8] sm:$0xf]
    %v38 = vld [vmem:[%s0 + $0xc] sm:$0xf]
    %v39 = vld [vmem:[%s0 + $0x10] sm:$0xf]
    %v40 = vld [vmem:[%s0 + $0x14] sm:$0xf]
    %v41 = vld [vmem:[%s0 + $0x18] sm:$0xf]
    %v42 = vld [vmem:[%s0 + $0x1c] sm:$0xf]
    %v43 = vld [vmem:[%s1] sm:$0xf]
    %v44 = vld [vmem:[%s1 + $0x4] sm:$0xf]
    %v45 = vld [vmem:[%s1 + $0x8] sm:$0xf]
    %v46 = vld [vmem:[%s1 + $0xc] sm:$0xf]
    %v47 = vld [vmem:[%s1 + $0x10] sm:$0xf]
    %v48 = vld [vmem:[%s1 + $0x14] sm:$0xf]
    %v49 = vld [vmem:[%s1 + $0x18] sm:$0xf]
    %v50 = vld [vmem:[%s1 + $0x1c] sm:$0xf]
    %v51 = vld [vmem:[%s1 + $0x20] sm:$0xf]
    %v52 = vld [vmem:[%s1 + $0x24] sm:$0xf]
    %v53 = vld [vmem:[%s1 + $0x28] sm:$0xf]
    %v54 = vld [vmem:[%s1 + $0x2c] sm:$0xf]
    %v55 = vld [vmem:[%s1 + $0x30] sm:$0xf]
    %v56 = vld [vmem:[%s1 + $0x34] sm:$0xf]
    %v57 = vld [vmem:[%s1 + $0x38] sm:$0xf]
    %v58 = vld [vmem:[%s1 + $0x3c] sm:$0xf]
    %s59 = scalar_lea.vmem %s1, 64
    %v60 = vld [vmem:[%s59] sm:$0xf]
    %v61 = vld [vmem:[%s59 + $0x4] sm:$0xf]
    %v62 = vld [vmem:[%s59 + $0x8] sm:$0xf]
    %v63 = vld [vmem:[%s59 + $0xc] sm:$0xf]
    %v64 = vld [vmem:[%s59 + $0x10] sm:$0xf]
    %v65 = vld [vmem:[%s59 + $0x14] sm:$0xf]
    %v66 = vld [vmem:[%s59 + $0x18] sm:$0xf]
    %v67 = vld [vmem:[%s59 + $0x1c] sm:$0xf]
    %v68 = vld [vmem:[%s59 + $0x20] sm:$0xf]
    %v69 = vld [vmem:[%s59 + $0x24] sm:$0xf]
    %v70 = vld [vmem:[%s59 + $0x28] sm:$0xf]
    %v71 = vld [vmem:[%s59 + $0x2c] sm:$0xf]
    %v72 = vld [vmem:[%s59 + $0x30] sm:$0xf]
    %v73 = vld [vmem:[%s59 + $0x34] sm:$0xf]
    %v74 = vld [vmem:[%s59 + $0x38] sm:$0xf]
    %v75 = vld [vmem:[%s59 + $0x3c] sm:$0xf]
    %v92 = vunpack.c.l.b16 %v60
    %v93 = vunpack.c.l.b16 %v61
    %v94 = vunpack.c.l.b16 %v62
    %v95 = vunpack.c.l.b16 %v63
    %v96 = vunpack.c.l.b16 %v64
    %v97 = vunpack.c.l.b16 %v65
    %v98 = vunpack.c.l.b16 %v66
    %v99 = vunpack.c.l.b16 %v67
    %v100 = vunpack.c.l.b16 %v68
    %v101 = vunpack.c.l.b16 %v69
    %v102 = vunpack.c.l.b16 %v70
    %v103 = vunpack.c.l.b16 %v71
    %v104 = vunpack.c.l.b16 %v72
    %v105 = vunpack.c.l.b16 %v73
    %v106 = vunpack.c.l.b16 %v74
    %v107 = vunpack.c.l.b16 %v75
    %v108 = vpack.c.b16 %v93, %v92
    %v109 = vpack.c.b16 %v95, %v94
    %v110 = vpack.c.b16 %v97, %v96
    %v111 = vpack.c.b16 %v99, %v98
    %v112 = vpack.c.b16 %v101, %v100
    %v113 = vpack.c.b16 %v103, %v102
    %v114 = vpack.c.b16 %v105, %v104
    %v115 = vpack.c.b16 %v107, %v106
    %v124 = vunpack.c.l.b16 %v35
    %v125 = vunpack.c.l.b16 %v36
    %v126 = vunpack.c.l.b16 %v37
    %v127 = vunpack.c.l.b16 %v38
    %v128 = vunpack.c.l.b16 %v39
    %v129 = vunpack.c.l.b16 %v40
    %v130 = vunpack.c.l.b16 %v41
    %v131 = vunpack.c.l.b16 %v42
    %v132 = vpack.c.b16 %v125, %v124
    %v133 = vpack.c.b16 %v127, %v126
    %v134 = vpack.c.b16 %v129, %v128
    %v135 = vpack.c.b16 %v131, %v130
    %136 = vrot.lane.b32.xlu0 %v132, 127
    %v137 = vpop.permute.xlu0 %136
    %138 = vrot.lane.b32.xlu0 %v133, 127
    %v139 = vpop.permute.xlu0 %138
    %140 = vrot.lane.b32.xlu0 %v134, 127
    %v141 = vpop.permute.xlu0 %140
    %142 = vrot.lane.b32.xlu0 %v135, 127
    %v143 = vpop.permute.xlu0 %142
    %vm148 = vcmask 523264
    %v150 = vsel %vm148, %v108, 0
    %v153 = vsel %vm148, %v109, 0
    %v156 = vsel %vm148, %v110, 0
    %v159 = vsel %vm148, %v111, 0
    %v162 = vsel %vm148, %v112, 0
    %v165 = vsel %vm148, %v113, 0
    %v168 = vsel %vm148, %v114, 0
    %v171 = vsel %vm148, %v115, 0
    %173 = vmatpush.bf16.msra.mxu0 0
    %174 = vmatpush.bf16.msra.mxu0 0
    %175 = vmatpush.bf16.msra.mxu0 0
    %176 = vmatpush.bf16.msra.mxu0 0
    %177 = vmatpush.bf16.msra.mxu0 %v143
    %178 = vmatpush.bf16.msra.mxu0 %v141
    %179 = vmatpush.bf16.msra.mxu0 %v139
    %180 = vmatpush.bf16.msra.mxu0 %v137
    %181 = vmatmul.bf16.gmra.mxu0 %v150
    %v182 = vpop.f32.mrf.mxu0
    %v183 = vadd.f32 0.0, %v182
    %v184 = vpop.f32.mrf.mxu0
    %v185 = vadd.f32 0.0, %v184
    %186 = vmatmul.bf16.gmra.mxu0 %v153
    %v187 = vpop.f32.mrf.mxu0
    %v188 = vadd.f32 0.0, %v187
    %v189 = vpop.f32.mrf.mxu0
    %v190 = vadd.f32 0.0, %v189
    %191 = vmatmul.bf16.gmra.mxu0 %v156
    %v192 = vpop.f32.mrf.mxu0
    %v193 = vadd.f32 0.0, %v192
    %v194 = vpop.f32.mrf.mxu0
    %v195 = vadd.f32 0.0, %v194
    %196 = vmatmul.bf16.gmra.mxu0 %v159
    %v197 = vpop.f32.mrf.mxu0
    %v198 = vadd.f32 0.0, %v197
    %v199 = vpop.f32.mrf.mxu0
    %v200 = vadd.f32 0.0, %v199
    %201 = vmatmul.bf16.gmra.mxu0 %v162
    %v202 = vpop.f32.mrf.mxu0
    %v203 = vadd.f32 0.0, %v202
    %v204 = vpop.f32.mrf.mxu0
    %v205 = vadd.f32 0.0, %v204
    %206 = vmatmul.bf16.gmra.mxu0 %v165
    %v207 = vpop.f32.mrf.mxu0
    %v208 = vadd.f32 0.0, %v207
    %v209 = vpop.f32.mrf.mxu0
    %v210 = vadd.f32 0.0, %v209
    %211 = vmatmul.bf16.gmra.mxu0 %v168
    %v212 = vpop.f32.mrf.mxu0
    %v213 = vadd.f32 0.0, %v212
    %v214 = vpop.f32.mrf.mxu0
    %v215 = vadd.f32 0.0, %v214
    %216 = vmatmul.bf16.gmra.mxu0 %v171
    %v217 = vpop.f32.mrf.mxu0
    %v218 = vadd.f32 0.0, %v217
    %v219 = vpop.f32.mrf.mxu0
    %v220 = vadd.f32 0.0, %v219
    %221 = vdwg.mxu0
    %v238 = vunpack.c.l.b16 %v43
    %v239 = vunpack.c.l.b16 %v44
    %v240 = vunpack.c.l.b16 %v45
    %v241 = vunpack.c.l.b16 %v46
    %v242 = vunpack.c.l.b16 %v47
    %v243 = vunpack.c.l.b16 %v48
    %v244 = vunpack.c.l.b16 %v49
    %v245 = vunpack.c.l.b16 %v50
    %v246 = vunpack.c.l.b16 %v51
    %v247 = vunpack.c.l.b16 %v52
    %v248 = vunpack.c.l.b16 %v53
    %v249 = vunpack.c.l.b16 %v54
    %v250 = vunpack.c.l.b16 %v55
    %v251 = vunpack.c.l.b16 %v56
    %v252 = vunpack.c.l.b16 %v57
    %v253 = vunpack.c.l.b16 %v58
    %v254 = vpack.c.b16 %v239, %v238
    %v255 = vpack.c.b16 %v241, %v240
    %v256 = vpack.c.b16 %v243, %v242
    %v257 = vpack.c.b16 %v245, %v244
    %v258 = vpack.c.b16 %v247, %v246
    %v259 = vpack.c.b16 %v249, %v248
    %v260 = vpack.c.b16 %v251, %v250
    %v261 = vpack.c.b16 %v253, %v252
    %v267 = vsel %vm148, %v254, 0
    %v270 = vsel %vm148, %v255, 0
    %v273 = vsel %vm148, %v256, 0
    %v276 = vsel %vm148, %v257, 0
    %v279 = vsel %vm148, %v258, 0
    %v282 = vsel %vm148, %v259, 0
    %v285 = vsel %vm148, %v260, 0
    %v288 = vsel %vm148, %v261, 0
    %290 = vmatpush.bf16.msra.mxu0 0
    %291 = vmatpush.bf16.msra.mxu0 0
    %292 = vmatpush.bf16.msra.mxu0 0
    %293 = vmatpush.bf16.msra.mxu0 0
    %294 = vmatpush.bf16.msra.mxu0 %v135
    %295 = vmatpush.bf16.msra.mxu0 %v134
    %296 = vmatpush.bf16.msra.mxu0 %v133
    %297 = vmatpush.bf16.msra.mxu0 %v132
    %298 = vmatmul.bf16.gmra.mxu0 %v267
    %v299 = vpop.f32.mrf.mxu0
    %v300 = vadd.f32 %v183, %v299
    %v301 = vpop.f32.mrf.mxu0
    %v302 = vadd.f32 %v185, %v301
    %303 = vmatmul.bf16.gmra.mxu0 %v270
    %v304 = vpop.f32.mrf.mxu0
    %v305 = vadd.f32 %v188, %v304
    %v306 = vpop.f32.mrf.mxu0
    %v307 = vadd.f32 %v190, %v306
    %308 = vmatmul.bf16.gmra.mxu0 %v273
    %v309 = vpop.f32.mrf.mxu0
    %v310 = vadd.f32 %v193, %v309
    %v311 = vpop.f32.mrf.mxu0
    %v312 = vadd.f32 %v195, %v311
    %313 = vmatmul.bf16.gmra.mxu0 %v276
    %v314 = vpop.f32.mrf.mxu0
    %v315 = vadd.f32 %v198, %v314
    %v316 = vpop.f32.mrf.mxu0
    %v317 = vadd.f32 %v200, %v316
    %318 = vmatmul.bf16.gmra.mxu0 %v279
    %v319 = vpop.f32.mrf.mxu0
    %v320 = vadd.f32 %v203, %v319
    %v321 = vpop.f32.mrf.mxu0
    %v322 = vadd.f32 %v205, %v321
    %323 = vmatmul.bf16.gmra.mxu0 %v282
    %v324 = vpop.f32.mrf.mxu0
    %v325 = vadd.f32 %v208, %v324
    %v326 = vpop.f32.mrf.mxu0
    %v327 = vadd.f32 %v210, %v326
    %328 = vmatmul.bf16.gmra.mxu0 %v285
    %v329 = vpop.f32.mrf.mxu0
    %v330 = vadd.f32 %v213, %v329
    %v331 = vpop.f32.mrf.mxu0
    %v332 = vadd.f32 %v215, %v331
    %333 = vmatmul.bf16.gmra.mxu0 %v288
    %v334 = vpop.f32.mrf.mxu0
    %v335 = vadd.f32 %v218, %v334
    %v336 = vpop.f32.mrf.mxu0
    %v337 = vadd.f32 %v220, %v336
    %338 = vdwg.mxu0
    %s339 = scalar_lea.vmem %s1, 128
    %v340 = vld [vmem:[%s339] sm:$0xf]
    %v341 = vld [vmem:[%s339 + $0x4] sm:$0xf]
    %v342 = vld [vmem:[%s339 + $0x8] sm:$0xf]
    %v343 = vld [vmem:[%s339 + $0xc] sm:$0xf]
    %v344 = vld [vmem:[%s339 + $0x10] sm:$0xf]
    %v345 = vld [vmem:[%s339 + $0x14] sm:$0xf]
    %v346 = vld [vmem:[%s339 + $0x18] sm:$0xf]
    %v347 = vld [vmem:[%s339 + $0x1c] sm:$0xf]
    %v348 = vld [vmem:[%s339 + $0x20] sm:$0xf]
    %v349 = vld [vmem:[%s339 + $0x24] sm:$0xf]
    %v350 = vld [vmem:[%s339 + $0x28] sm:$0xf]
    %v351 = vld [vmem:[%s339 + $0x2c] sm:$0xf]
    %v352 = vld [vmem:[%s339 + $0x30] sm:$0xf]
    %v353 = vld [vmem:[%s339 + $0x34] sm:$0xf]
    %v354 = vld [vmem:[%s339 + $0x38] sm:$0xf]
    %v355 = vld [vmem:[%s339 + $0x3c] sm:$0xf]
    %v372 = vunpack.c.l.b16 %v340
    %v373 = vunpack.c.l.b16 %v341
    %v374 = vunpack.c.l.b16 %v342
    %v375 = vunpack.c.l.b16 %v343
    %v376 = vunpack.c.l.b16 %v344
    %v377 = vunpack.c.l.b16 %v345
    %v378 = vunpack.c.l.b16 %v346
    %v379 = vunpack.c.l.b16 %v347
    %v380 = vunpack.c.l.b16 %v348
    %v381 = vunpack.c.l.b16 %v349
    %v382 = vunpack.c.l.b16 %v350
    %v383 = vunpack.c.l.b16 %v351
    %v384 = vunpack.c.l.b16 %v352
    %v385 = vunpack.c.l.b16 %v353
    %v386 = vunpack.c.l.b16 %v354
    %v387 = vunpack.c.l.b16 %v355
    %v388 = vpack.c.b16 %v373, %v372
    %v389 = vpack.c.b16 %v375, %v374
    %v390 = vpack.c.b16 %v377, %v376
    %v391 = vpack.c.b16 %v379, %v378
    %v392 = vpack.c.b16 %v381, %v380
    %v393 = vpack.c.b16 %v383, %v382
    %v394 = vpack.c.b16 %v385, %v384
    %v395 = vpack.c.b16 %v387, %v386
    %396 = vrot.lane.b32.xlu0 %v132, 126
    %v397 = vpop.permute.xlu0 %396
    %398 = vrot.lane.b32.xlu0 %v133, 126
    %v399 = vpop.permute.xlu0 %398
    %400 = vrot.lane.b32.xlu0 %v134, 126
    %v401 = vpop.permute.xlu0 %400
    %402 = vrot.lane.b32.xlu0 %v135, 126
    %v403 = vpop.permute.xlu0 %402
    %v409 = vsel %vm148, %v388, 0
    %v412 = vsel %vm148, %v389, 0
    %v415 = vsel %vm148, %v390, 0
    %v418 = vsel %vm148, %v391, 0
    %v421 = vsel %vm148, %v392, 0
    %v424 = vsel %vm148, %v393, 0
    %v427 = vsel %vm148, %v394, 0
    %v430 = vsel %vm148, %v395, 0
    %432 = vmatpush.bf16.msra.mxu0 0
    %433 = vmatpush.bf16.msra.mxu0 0
    %434 = vmatpush.bf16.msra.mxu0 0
    %435 = vmatpush.bf16.msra.mxu0 0
    %436 = vmatpush.bf16.msra.mxu0 %v403
    %437 = vmatpush.bf16.msra.mxu0 %v401
    %438 = vmatpush.bf16.msra.mxu0 %v399
    %439 = vmatpush.bf16.msra.mxu0 %v397
    %440 = vmatmul.bf16.gmra.mxu0 %v409
    %v441 = vpop.f32.mrf.mxu0
    %v442 = vadd.f32 0.0, %v441
    %v443 = vpop.f32.mrf.mxu0
    %v444 = vadd.f32 0.0, %v443
    %445 = vmatmul.bf16.gmra.mxu0 %v412
    %v446 = vpop.f32.mrf.mxu0
    %v447 = vadd.f32 0.0, %v446
    %v448 = vpop.f32.mrf.mxu0
    %v449 = vadd.f32 0.0, %v448
    %450 = vmatmul.bf16.gmra.mxu0 %v415
    %v451 = vpop.f32.mrf.mxu0
    %v452 = vadd.f32 0.0, %v451
    %v453 = vpop.f32.mrf.mxu0
    %v454 = vadd.f32 0.0, %v453
    %455 = vmatmul.bf16.gmra.mxu0 %v418
    %v456 = vpop.f32.mrf.mxu0
    %v457 = vadd.f32 0.0, %v456
    %v458 = vpop.f32.mrf.mxu0
    %v459 = vadd.f32 0.0, %v458
    %460 = vmatmul.bf16.gmra.mxu0 %v421
    %v461 = vpop.f32.mrf.mxu0
    %v462 = vadd.f32 0.0, %v461
    %v463 = vpop.f32.mrf.mxu0
    %v464 = vadd.f32 0.0, %v463
    %465 = vmatmul.bf16.gmra.mxu0 %v424
    %v466 = vpop.f32.mrf.mxu0
    %v467 = vadd.f32 0.0, %v466
    %v468 = vpop.f32.mrf.mxu0
    %v469 = vadd.f32 0.0, %v468
    %470 = vmatmul.bf16.gmra.mxu0 %v427
    %v471 = vpop.f32.mrf.mxu0
    %v472 = vadd.f32 0.0, %v471
    %v473 = vpop.f32.mrf.mxu0
    %v474 = vadd.f32 0.0, %v473
    %475 = vmatmul.bf16.gmra.mxu0 %v430
    %v476 = vpop.f32.mrf.mxu0
    %v477 = vadd.f32 0.0, %v476
    %v478 = vpop.f32.mrf.mxu0
    %v479 = vadd.f32 0.0, %v478
    %480 = vdwg.mxu0
    %v481 = vadd.f32 %v300, %v442
    %v482 = vadd.f32 %v302, %v444
    %v483 = vadd.f32 %v305, %v447
    %v484 = vadd.f32 %v307, %v449
    %v485 = vadd.f32 %v310, %v452
    %v486 = vadd.f32 %v312, %v454
    %v487 = vadd.f32 %v315, %v457
    %v488 = vadd.f32 %v317, %v459
    %v489 = vadd.f32 %v320, %v462
    %v490 = vadd.f32 %v322, %v464
    %v491 = vadd.f32 %v325, %v467
    %v492 = vadd.f32 %v327, %v469
    %v493 = vadd.f32 %v330, %v472
    %v494 = vadd.f32 %v332, %v474
    %v495 = vadd.f32 %v335, %v477
    %v496 = vadd.f32 %v337, %v479
    %s497 = scalar_lea.vmem %s1, 192
    %v498 = vld [vmem:[%s497] sm:$0xf]
    %v499 = vld [vmem:[%s497 + $0x4] sm:$0xf]
    %v500 = vld [vmem:[%s497 + $0x8] sm:$0xf]
    %v501 = vld [vmem:[%s497 + $0xc] sm:$0xf]
    %v502 = vld [vmem:[%s497 + $0x10] sm:$0xf]
    %v503 = vld [vmem:[%s497 + $0x14] sm:$0xf]
    %v504 = vld [vmem:[%s497 + $0x18] sm:$0xf]
    %v505 = vld [vmem:[%s497 + $0x1c] sm:$0xf]
    %v506 = vld [vmem:[%s497 + $0x20] sm:$0xf]
    %v507 = vld [vmem:[%s497 + $0x24] sm:$0xf]
    %v508 = vld [vmem:[%s497 + $0x28] sm:$0xf]
    %v509 = vld [vmem:[%s497 + $0x2c] sm:$0xf]
    %v510 = vld [vmem:[%s497 + $0x30] sm:$0xf]
    %v511 = vld [vmem:[%s497 + $0x34] sm:$0xf]
    %v512 = vld [vmem:[%s497 + $0x38] sm:$0xf]
    %v513 = vld [vmem:[%s497 + $0x3c] sm:$0xf]
    %v530 = vunpack.c.l.b16 %v498
    %v531 = vunpack.c.l.b16 %v499
    %v532 = vunpack.c.l.b16 %v500
    %v533 = vunpack.c.l.b16 %v501
    %v534 = vunpack.c.l.b16 %v502
    %v535 = vunpack.c.l.b16 %v503
    %v536 = vunpack.c.l.b16 %v504
    %v537 = vunpack.c.l.b16 %v505
    %v538 = vunpack.c.l.b16 %v506
    %v539 = vunpack.c.l.b16 %v507
    %v540 = vunpack.c.l.b16 %v508
    %v541 = vunpack.c.l.b16 %v509
    %v542 = vunpack.c.l.b16 %v510
    %v543 = vunpack.c.l.b16 %v511
    %v544 = vunpack.c.l.b16 %v512
    %v545 = vunpack.c.l.b16 %v513
    %v546 = vpack.c.b16 %v531, %v530
    %v547 = vpack.c.b16 %v533, %v532
    %v548 = vpack.c.b16 %v535, %v534
    %v549 = vpack.c.b16 %v537, %v536
    %v550 = vpack.c.b16 %v539, %v538
    %v551 = vpack.c.b16 %v541, %v540
    %v552 = vpack.c.b16 %v543, %v542
    %v553 = vpack.c.b16 %v545, %v544
    %554 = vrot.lane.b32.xlu0 %v132, 122
    %v555 = vpop.permute.xlu0 %554
    %556 = vrot.lane.b32.xlu0 %v133, 122
    %v557 = vpop.permute.xlu0 %556
    %558 = vrot.lane.b32.xlu0 %v134, 122
    %v559 = vpop.permute.xlu0 %558
    %560 = vrot.lane.b32.xlu0 %v135, 122
    %v561 = vpop.permute.xlu0 %560
    %v567 = vsel %vm148, %v546, 0
    %v570 = vsel %vm148, %v547, 0
    %v573 = vsel %vm148, %v548, 0
    %v576 = vsel %vm148, %v549, 0
    %v579 = vsel %vm148, %v550, 0
    %v582 = vsel %vm148, %v551, 0
    %v585 = vsel %vm148, %v552, 0
    %v588 = vsel %vm148, %v553, 0
    %590 = vmatpush.bf16.msra.mxu0 0
    %591 = vmatpush.bf16.msra.mxu0 0
    %592 = vmatpush.bf16.msra.mxu0 0
    %593 = vmatpush.bf16.msra.mxu0 0
    %594 = vmatpush.bf16.msra.mxu0 %v561
    %595 = vmatpush.bf16.msra.mxu0 %v559
    %596 = vmatpush.bf16.msra.mxu0 %v557
    %597 = vmatpush.bf16.msra.mxu0 %v555
    %598 = vmatmul.bf16.gmra.mxu0 %v567
    %v599 = vpop.f32.mrf.mxu0
    %v600 = vadd.f32 0.0, %v599
    %v601 = vpop.f32.mrf.mxu0
    %v602 = vadd.f32 0.0, %v601
    %603 = vmatmul.bf16.gmra.mxu0 %v570
    %v604 = vpop.f32.mrf.mxu0
    %v605 = vadd.f32 0.0, %v604
    %v606 = vpop.f32.mrf.mxu0
    %v607 = vadd.f32 0.0, %v606
    %608 = vmatmul.bf16.gmra.mxu0 %v573
    %v609 = vpop.f32.mrf.mxu0
    %v610 = vadd.f32 0.0, %v609
    %v611 = vpop.f32.mrf.mxu0
    %v612 = vadd.f32 0.0, %v611
    %613 = vmatmul.bf16.gmra.mxu0 %v576
    %v614 = vpop.f32.mrf.mxu0
    %v615 = vadd.f32 0.0, %v614
    %v616 = vpop.f32.mrf.mxu0
    %v617 = vadd.f32 0.0, %v616
    %618 = vmatmul.bf16.gmra.mxu0 %v579
    %v619 = vpop.f32.mrf.mxu0
    %v620 = vadd.f32 0.0, %v619
    %v621 = vpop.f32.mrf.mxu0
    %v622 = vadd.f32 0.0, %v621
    %623 = vmatmul.bf16.gmra.mxu0 %v582
    %v624 = vpop.f32.mrf.mxu0
    %v625 = vadd.f32 0.0, %v624
    %v626 = vpop.f32.mrf.mxu0
    %v627 = vadd.f32 0.0, %v626
    %628 = vmatmul.bf16.gmra.mxu0 %v585
    %v629 = vpop.f32.mrf.mxu0
    %v630 = vadd.f32 0.0, %v629
    %v631 = vpop.f32.mrf.mxu0
    %v632 = vadd.f32 0.0, %v631
    %633 = vmatmul.bf16.gmra.mxu0 %v588
    %v634 = vpop.f32.mrf.mxu0
    %v635 = vadd.f32 0.0, %v634
    %v636 = vpop.f32.mrf.mxu0
    %v637 = vadd.f32 0.0, %v636
    %638 = vdwg.mxu0
    %v639 = vadd.f32 %v481, %v600
    %v640 = vadd.f32 %v482, %v602
    %v641 = vadd.f32 %v483, %v605
    %v642 = vadd.f32 %v484, %v607
    %v643 = vadd.f32 %v485, %v610
    %v644 = vadd.f32 %v486, %v612
    %v645 = vadd.f32 %v487, %v615
    %v646 = vadd.f32 %v488, %v617
    %v647 = vadd.f32 %v489, %v620
    %v648 = vadd.f32 %v490, %v622
    %v649 = vadd.f32 %v491, %v625
    %v650 = vadd.f32 %v492, %v627
    %v651 = vadd.f32 %v493, %v630
    %v652 = vadd.f32 %v494, %v632
    %v653 = vadd.f32 %v495, %v635
    %v654 = vadd.f32 %v496, %v637
    %s655 = scalar_lea.vmem %s1, 256
    %v656 = vld [vmem:[%s655] sm:$0xf]
    %v657 = vld [vmem:[%s655 + $0x4] sm:$0xf]
    %v658 = vld [vmem:[%s655 + $0x8] sm:$0xf]
    %v659 = vld [vmem:[%s655 + $0xc] sm:$0xf]
    %v660 = vld [vmem:[%s655 + $0x10] sm:$0xf]
    %v661 = vld [vmem:[%s655 + $0x14] sm:$0xf]
    %v662 = vld [vmem:[%s655 + $0x18] sm:$0xf]
    %v663 = vld [vmem:[%s655 + $0x1c] sm:$0xf]
    %v664 = vld [vmem:[%s655 + $0x20] sm:$0xf]
    %v665 = vld [vmem:[%s655 + $0x24] sm:$0xf]
    %v666 = vld [vmem:[%s655 + $0x28] sm:$0xf]
    %v667 = vld [vmem:[%s655 + $0x2c] sm:$0xf]
    %v668 = vld [vmem:[%s655 + $0x30] sm:$0xf]
    %v669 = vld [vmem:[%s655 + $0x34] sm:$0xf]
    %v670 = vld [vmem:[%s655 + $0x38] sm:$0xf]
    %v671 = vld [vmem:[%s655 + $0x3c] sm:$0xf]
    %v688 = vunpack.c.l.b16 %v656
    %v689 = vunpack.c.l.b16 %v657
    %v690 = vunpack.c.l.b16 %v658
    %v691 = vunpack.c.l.b16 %v659
    %v692 = vunpack.c.l.b16 %v660
    %v693 = vunpack.c.l.b16 %v661
    %v694 = vunpack.c.l.b16 %v662
    %v695 = vunpack.c.l.b16 %v663
    %v696 = vunpack.c.l.b16 %v664
    %v697 = vunpack.c.l.b16 %v665
    %v698 = vunpack.c.l.b16 %v666
    %v699 = vunpack.c.l.b16 %v667
    %v700 = vunpack.c.l.b16 %v668
    %v701 = vunpack.c.l.b16 %v669
    %v702 = vunpack.c.l.b16 %v670
    %v703 = vunpack.c.l.b16 %v671
    %v704 = vpack.c.b16 %v689, %v688
    %v705 = vpack.c.b16 %v691, %v690
    %v706 = vpack.c.b16 %v693, %v692
    %v707 = vpack.c.b16 %v695, %v694
    %v708 = vpack.c.b16 %v697, %v696
    %v709 = vpack.c.b16 %v699, %v698
    %v710 = vpack.c.b16 %v701, %v700
    %v711 = vpack.c.b16 %v703, %v702
    %712 = vrot.lane.b32.xlu0 %v132, 121
    %v713 = vpop.permute.xlu0 %712
    %714 = vrot.lane.b32.xlu0 %v133, 121
    %v715 = vpop.permute.xlu0 %714
    %716 = vrot.lane.b32.xlu0 %v134, 121
    %v717 = vpop.permute.xlu0 %716
    %718 = vrot.lane.b32.xlu0 %v135, 121
    %v719 = vpop.permute.xlu0 %718
    %v725 = vsel %vm148, %v704, 0
    %v728 = vsel %vm148, %v705, 0
    %v731 = vsel %vm148, %v706, 0
    %v734 = vsel %vm148, %v707, 0
    %v737 = vsel %vm148, %v708, 0
    %v740 = vsel %vm148, %v709, 0
    %v743 = vsel %vm148, %v710, 0
    %v746 = vsel %vm148, %v711, 0
    %748 = vmatpush.bf16.msra.mxu0 0
    %749 = vmatpush.bf16.msra.mxu0 0
    %750 = vmatpush.bf16.msra.mxu0 0
    %751 = vmatpush.bf16.msra.mxu0 0
    %752 = vmatpush.bf16.msra.mxu0 %v719
    %753 = vmatpush.bf16.msra.mxu0 %v717
    %754 = vmatpush.bf16.msra.mxu0 %v715
    %755 = vmatpush.bf16.msra.mxu0 %v713
    %756 = vmatmul.bf16.gmra.mxu0 %v725
    %v757 = vpop.f32.mrf.mxu0
    %v758 = vadd.f32 0.0, %v757
    %v759 = vpop.f32.mrf.mxu0
    %v760 = vadd.f32 0.0, %v759
    %761 = vmatmul.bf16.gmra.mxu0 %v728
    %v762 = vpop.f32.mrf.mxu0
    %v763 = vadd.f32 0.0, %v762
    %v764 = vpop.f32.mrf.mxu0
    %v765 = vadd.f32 0.0, %v764
    %766 = vmatmul.bf16.gmra.mxu0 %v731
    %v767 = vpop.f32.mrf.mxu0
    %v768 = vadd.f32 0.0, %v767
    %v769 = vpop.f32.mrf.mxu0
    %v770 = vadd.f32 0.0, %v769
    %771 = vmatmul.bf16.gmra.mxu0 %v734
    %v772 = vpop.f32.mrf.mxu0
    %v773 = vadd.f32 0.0, %v772
    %v774 = vpop.f32.mrf.mxu0
    %v775 = vadd.f32 0.0, %v774
    %776 = vmatmul.bf16.gmra.mxu0 %v737
    %v777 = vpop.f32.mrf.mxu0
    %v778 = vadd.f32 0.0, %v777
    %v779 = vpop.f32.mrf.mxu0
    %v780 = vadd.f32 0.0, %v779
    %781 = vmatmul.bf16.gmra.mxu0 %v740
    %v782 = vpop.f32.mrf.mxu0
    %v783 = vadd.f32 0.0, %v782
    %v784 = vpop.f32.mrf.mxu0
    %v785 = vadd.f32 0.0, %v784
    %786 = vmatmul.bf16.gmra.mxu0 %v743
    %v787 = vpop.f32.mrf.mxu0
    %v788 = vadd.f32 0.0, %v787
    %v789 = vpop.f32.mrf.mxu0
    %v790 = vadd.f32 0.0, %v789
    %791 = vmatmul.bf16.gmra.mxu0 %v746
    %v792 = vpop.f32.mrf.mxu0
    %v793 = vadd.f32 0.0, %v792
    %v794 = vpop.f32.mrf.mxu0
    %v795 = vadd.f32 0.0, %v794
    %796 = vdwg.mxu0
    %v797 = vadd.f32 %v639, %v758
    %v798 = vadd.f32 %v640, %v760
    %v799 = vadd.f32 %v641, %v763
    %v800 = vadd.f32 %v642, %v765
    %v801 = vadd.f32 %v643, %v768
    %v802 = vadd.f32 %v644, %v770
    %v803 = vadd.f32 %v645, %v773
    %v804 = vadd.f32 %v646, %v775
    %v805 = vadd.f32 %v647, %v778
    %v806 = vadd.f32 %v648, %v780
    %v807 = vadd.f32 %v649, %v783
    %v808 = vadd.f32 %v650, %v785
    %v809 = vadd.f32 %v651, %v788
    %v810 = vadd.f32 %v652, %v790
    %v811 = vadd.f32 %v653, %v793
    %v812 = vadd.f32 %v654, %v795
    %s813 = scalar_lea.vmem %s1, 320
    %v814 = vld [vmem:[%s813] sm:$0xf]
    %v815 = vld [vmem:[%s813 + $0x4] sm:$0xf]
    %v816 = vld [vmem:[%s813 + $0x8] sm:$0xf]
    %v817 = vld [vmem:[%s813 + $0xc] sm:$0xf]
    %v818 = vld [vmem:[%s813 + $0x10] sm:$0xf]
    %v819 = vld [vmem:[%s813 + $0x14] sm:$0xf]
    %v820 = vld [vmem:[%s813 + $0x18] sm:$0xf]
    %v821 = vld [vmem:[%s813 + $0x1c] sm:$0xf]
    %v822 = vld [vmem:[%s813 + $0x20] sm:$0xf]
    %v823 = vld [vmem:[%s813 + $0x24] sm:$0xf]
    %v824 = vld [vmem:[%s813 + $0x28] sm:$0xf]
    %v825 = vld [vmem:[%s813 + $0x2c] sm:$0xf]
    %v826 = vld [vmem:[%s813 + $0x30] sm:$0xf]
    %v827 = vld [vmem:[%s813 + $0x34] sm:$0xf]
    %v828 = vld [vmem:[%s813 + $0x38] sm:$0xf]
    %v829 = vld [vmem:[%s813 + $0x3c] sm:$0xf]
    %v846 = vunpack.c.l.b16 %v814
    %v847 = vunpack.c.l.b16 %v815
    %v848 = vunpack.c.l.b16 %v816
    %v849 = vunpack.c.l.b16 %v817
    %v850 = vunpack.c.l.b16 %v818
    %v851 = vunpack.c.l.b16 %v819
    %v852 = vunpack.c.l.b16 %v820
    %v853 = vunpack.c.l.b16 %v821
    %v854 = vunpack.c.l.b16 %v822
    %v855 = vunpack.c.l.b16 %v823
    %v856 = vunpack.c.l.b16 %v824
    %v857 = vunpack.c.l.b16 %v825
    %v858 = vunpack.c.l.b16 %v826
    %v859 = vunpack.c.l.b16 %v827
    %v860 = vunpack.c.l.b16 %v828
    %v861 = vunpack.c.l.b16 %v829
    %v862 = vpack.c.b16 %v847, %v846
    %v863 = vpack.c.b16 %v849, %v848
    %v864 = vpack.c.b16 %v851, %v850
    %v865 = vpack.c.b16 %v853, %v852
    %v866 = vpack.c.b16 %v855, %v854
    %v867 = vpack.c.b16 %v857, %v856
    %v868 = vpack.c.b16 %v859, %v858
    %v869 = vpack.c.b16 %v861, %v860
    %870 = vrot.lane.b32.xlu0 %v132, 120
    %v871 = vpop.permute.xlu0 %870
    %872 = vrot.lane.b32.xlu0 %v133, 120
    %v873 = vpop.permute.xlu0 %872
    %874 = vrot.lane.b32.xlu0 %v134, 120
    %v875 = vpop.permute.xlu0 %874
    %876 = vrot.lane.b32.xlu0 %v135, 120
    %v877 = vpop.permute.xlu0 %876
    %v883 = vsel %vm148, %v862, 0
    %v886 = vsel %vm148, %v863, 0
    %v889 = vsel %vm148, %v864, 0
    %v892 = vsel %vm148, %v865, 0
    %v895 = vsel %vm148, %v866, 0
    %v898 = vsel %vm148, %v867, 0
    %v901 = vsel %vm148, %v868, 0
    %v904 = vsel %vm148, %v869, 0
    %906 = vmatpush.bf16.msra.mxu0 0
    %907 = vmatpush.bf16.msra.mxu0 0
    %908 = vmatpush.bf16.msra.mxu0 0
    %909 = vmatpush.bf16.msra.mxu0 0
    %910 = vmatpush.bf16.msra.mxu0 %v877
    %911 = vmatpush.bf16.msra.mxu0 %v875
    %912 = vmatpush.bf16.msra.mxu0 %v873
    %913 = vmatpush.bf16.msra.mxu0 %v871
    %914 = vmatmul.bf16.gmra.mxu0 %v883
    %v915 = vpop.f32.mrf.mxu0
    %v916 = vadd.f32 0.0, %v915
    %v917 = vpop.f32.mrf.mxu0
    %v918 = vadd.f32 0.0, %v917
    %919 = vmatmul.bf16.gmra.mxu0 %v886
    %v920 = vpop.f32.mrf.mxu0
    %v921 = vadd.f32 0.0, %v920
    %v922 = vpop.f32.mrf.mxu0
    %v923 = vadd.f32 0.0, %v922
    %924 = vmatmul.bf16.gmra.mxu0 %v889
    %v925 = vpop.f32.mrf.mxu0
    %v926 = vadd.f32 0.0, %v925
    %v927 = vpop.f32.mrf.mxu0
    %v928 = vadd.f32 0.0, %v927
    %929 = vmatmul.bf16.gmra.mxu0 %v892
    %v930 = vpop.f32.mrf.mxu0
    %v931 = vadd.f32 0.0, %v930
    %v932 = vpop.f32.mrf.mxu0
    %v933 = vadd.f32 0.0, %v932
    %934 = vmatmul.bf16.gmra.mxu0 %v895
    %v935 = vpop.f32.mrf.mxu0
    %v936 = vadd.f32 0.0, %v935
    %v937 = vpop.f32.mrf.mxu0
    %v938 = vadd.f32 0.0, %v937
    %939 = vmatmul.bf16.gmra.mxu0 %v898
    %v940 = vpop.f32.mrf.mxu0
    %v941 = vadd.f32 0.0, %v940
    %v942 = vpop.f32.mrf.mxu0
    %v943 = vadd.f32 0.0, %v942
    %944 = vmatmul.bf16.gmra.mxu0 %v901
    %v945 = vpop.f32.mrf.mxu0
    %v946 = vadd.f32 0.0, %v945
    %v947 = vpop.f32.mrf.mxu0
    %v948 = vadd.f32 0.0, %v947
    %949 = vmatmul.bf16.gmra.mxu0 %v904
    %v950 = vpop.f32.mrf.mxu0
    %v951 = vadd.f32 0.0, %v950
    %v952 = vpop.f32.mrf.mxu0
    %v953 = vadd.f32 0.0, %v952
    %954 = vdwg.mxu0
    %v955 = vadd.f32 %v797, %v916
    %v956 = vadd.f32 %v798, %v918
    %v957 = vadd.f32 %v799, %v921
    %v958 = vadd.f32 %v800, %v923
    %v959 = vadd.f32 %v801, %v926
    %v960 = vadd.f32 %v802, %v928
    %v961 = vadd.f32 %v803, %v931
    %v962 = vadd.f32 %v804, %v933
    %v963 = vadd.f32 %v805, %v936
    %v964 = vadd.f32 %v806, %v938
    %v965 = vadd.f32 %v807, %v941
    %v966 = vadd.f32 %v808, %v943
    %v967 = vadd.f32 %v809, %v946
    %v968 = vadd.f32 %v810, %v948
    %v969 = vadd.f32 %v811, %v951
    %v970 = vadd.f32 %v812, %v953
    %s971 = scalar_lea.vmem %s1, 384
    %v972 = vld [vmem:[%s971] sm:$0xf]
    %v973 = vld [vmem:[%s971 + $0x4] sm:$0xf]
    %v974 = vld [vmem:[%s971 + $0x8] sm:$0xf]
    %v975 = vld [vmem:[%s971 + $0xc] sm:$0xf]
    %v976 = vld [vmem:[%s971 + $0x10] sm:$0xf]
    %v977 = vld [vmem:[%s971 + $0x14] sm:$0xf]
    %v978 = vld [vmem:[%s971 + $0x18] sm:$0xf]
    %v979 = vld [vmem:[%s971 + $0x1c] sm:$0xf]
    %v980 = vld [vmem:[%s971 + $0x20] sm:$0xf]
    %v981 = vld [vmem:[%s971 + $0x24] sm:$0xf]
    %v982 = vld [vmem:[%s971 + $0x28] sm:$0xf]
    %v983 = vld [vmem:[%s971 + $0x2c] sm:$0xf]
    %v984 = vld [vmem:[%s971 + $0x30] sm:$0xf]
    %v985 = vld [vmem:[%s971 + $0x34] sm:$0xf]
    %v986 = vld [vmem:[%s971 + $0x38] sm:$0xf]
    %v987 = vld [vmem:[%s971 + $0x3c] sm:$0xf]
    %v1004 = vunpack.c.l.b16 %v972
    %v1005 = vunpack.c.l.b16 %v973
    %v1006 = vunpack.c.l.b16 %v974
    %v1007 = vunpack.c.l.b16 %v975
    %v1008 = vunpack.c.l.b16 %v976
    %v1009 = vunpack.c.l.b16 %v977
    %v1010 = vunpack.c.l.b16 %v978
    %v1011 = vunpack.c.l.b16 %v979
    %v1012 = vunpack.c.l.b16 %v980
    %v1013 = vunpack.c.l.b16 %v981
    %v1014 = vunpack.c.l.b16 %v982
    %v1015 = vunpack.c.l.b16 %v983
    %v1016 = vunpack.c.l.b16 %v984
    %v1017 = vunpack.c.l.b16 %v985
    %v1018 = vunpack.c.l.b16 %v986
    %v1019 = vunpack.c.l.b16 %v987
    %v1020 = vpack.c.b16 %v1005, %v1004
    %v1021 = vpack.c.b16 %v1007, %v1006
    %v1022 = vpack.c.b16 %v1009, %v1008
    %v1023 = vpack.c.b16 %v1011, %v1010
    %v1024 = vpack.c.b16 %v1013, %v1012
    %v1025 = vpack.c.b16 %v1015, %v1014
    %v1026 = vpack.c.b16 %v1017, %v1016
    %v1027 = vpack.c.b16 %v1019, %v1018
    %1028 = vrot.lane.b32.xlu0 %v132, 116
    %v1029 = vpop.permute.xlu0 %1028
    %1030 = vrot.lane.b32.xlu0 %v133, 116
    %v1031 = vpop.permute.xlu0 %1030
    %1032 = vrot.lane.b32.xlu0 %v134, 116
    %v1033 = vpop.permute.xlu0 %1032
    %1034 = vrot.lane.b32.xlu0 %v135, 116
    %v1035 = vpop.permute.xlu0 %1034
    %v1041 = vsel %vm148, %v1020, 0
    %v1044 = vsel %vm148, %v1021, 0
    %v1047 = vsel %vm148, %v1022, 0
    %v1050 = vsel %vm148, %v1023, 0
    %v1053 = vsel %vm148, %v1024, 0
    %v1056 = vsel %vm148, %v1025, 0
    %v1059 = vsel %vm148, %v1026, 0
    %v1062 = vsel %vm148, %v1027, 0
    %1064 = vmatpush.bf16.msra.mxu0 0
    %1065 = vmatpush.bf16.msra.mxu0 0
    %1066 = vmatpush.bf16.msra.mxu0 0
    %1067 = vmatpush.bf16.msra.mxu0 0
    %1068 = vmatpush.bf16.msra.mxu0 %v1035
    %1069 = vmatpush.bf16.msra.mxu0 %v1033
    %1070 = vmatpush.bf16.msra.mxu0 %v1031
    %1071 = vmatpush.bf16.msra.mxu0 %v1029
    %1072 = vmatmul.bf16.gmra.mxu0 %v1041
    %v1073 = vpop.f32.mrf.mxu0
    %v1074 = vadd.f32 0.0, %v1073
    %v1075 = vpop.f32.mrf.mxu0
    %v1076 = vadd.f32 0.0, %v1075
    %1077 = vmatmul.bf16.gmra.mxu0 %v1044
    %v1078 = vpop.f32.mrf.mxu0
    %v1079 = vadd.f32 0.0, %v1078
    %v1080 = vpop.f32.mrf.mxu0
    %v1081 = vadd.f32 0.0, %v1080
    %1082 = vmatmul.bf16.gmra.mxu0 %v1047
    %v1083 = vpop.f32.mrf.mxu0
    %v1084 = vadd.f32 0.0, %v1083
    %v1085 = vpop.f32.mrf.mxu0
    %v1086 = vadd.f32 0.0, %v1085
    %1087 = vmatmul.bf16.gmra.mxu0 %v1050
    %v1088 = vpop.f32.mrf.mxu0
    %v1089 = vadd.f32 0.0, %v1088
    %v1090 = vpop.f32.mrf.mxu0
    %v1091 = vadd.f32 0.0, %v1090
    %1092 = vmatmul.bf16.gmra.mxu0 %v1053
    %v1093 = vpop.f32.mrf.mxu0
    %v1094 = vadd.f32 0.0, %v1093
    %v1095 = vpop.f32.mrf.mxu0
    %v1096 = vadd.f32 0.0, %v1095
    %1097 = vmatmul.bf16.gmra.mxu0 %v1056
    %v1098 = vpop.f32.mrf.mxu0
    %v1099 = vadd.f32 0.0, %v1098
    %v1100 = vpop.f32.mrf.mxu0
    %v1101 = vadd.f32 0.0, %v1100
    %1102 = vmatmul.bf16.gmra.mxu0 %v1059
    %v1103 = vpop.f32.mrf.mxu0
    %v1104 = vadd.f32 0.0, %v1103
    %v1105 = vpop.f32.mrf.mxu0
    %v1106 = vadd.f32 0.0, %v1105
    %1107 = vmatmul.bf16.gmra.mxu0 %v1062
    %v1108 = vpop.f32.mrf.mxu0
    %v1109 = vadd.f32 0.0, %v1108
    %v1110 = vpop.f32.mrf.mxu0
    %v1111 = vadd.f32 0.0, %v1110
    %1112 = vdwg.mxu0
    %v1113 = vadd.f32 %v955, %v1074
    %v1114 = vadd.f32 %v956, %v1076
    %v1115 = vadd.f32 %v957, %v1079
    %v1116 = vadd.f32 %v958, %v1081
    %v1117 = vadd.f32 %v959, %v1084
    %v1118 = vadd.f32 %v960, %v1086
    %v1119 = vadd.f32 %v961, %v1089
    %v1120 = vadd.f32 %v962, %v1091
    %v1121 = vadd.f32 %v963, %v1094
    %v1122 = vadd.f32 %v964, %v1096
    %v1123 = vadd.f32 %v965, %v1099
    %v1124 = vadd.f32 %v966, %v1101
    %v1125 = vadd.f32 %v967, %v1104
    %v1126 = vadd.f32 %v968, %v1106
    %v1127 = vadd.f32 %v969, %v1109
    %v1128 = vadd.f32 %v970, %v1111
    %s1129 = scalar_lea.vmem %s1, 448
    %v1130 = vld [vmem:[%s1129] sm:$0xf]
    %v1131 = vld [vmem:[%s1129 + $0x4] sm:$0xf]
    %v1132 = vld [vmem:[%s1129 + $0x8] sm:$0xf]
    %v1133 = vld [vmem:[%s1129 + $0xc] sm:$0xf]
    %v1134 = vld [vmem:[%s1129 + $0x10] sm:$0xf]
    %v1135 = vld [vmem:[%s1129 + $0x14] sm:$0xf]
    %v1136 = vld [vmem:[%s1129 + $0x18] sm:$0xf]
    %v1137 = vld [vmem:[%s1129 + $0x1c] sm:$0xf]
    %v1138 = vld [vmem:[%s1129 + $0x20] sm:$0xf]
    %v1139 = vld [vmem:[%s1129 + $0x24] sm:$0xf]
    %v1140 = vld [vmem:[%s1129 + $0x28] sm:$0xf]
    %v1141 = vld [vmem:[%s1129 + $0x2c] sm:$0xf]
    %v1142 = vld [vmem:[%s1129 + $0x30] sm:$0xf]
    %v1143 = vld [vmem:[%s1129 + $0x34] sm:$0xf]
    %v1144 = vld [vmem:[%s1129 + $0x38] sm:$0xf]
    %v1145 = vld [vmem:[%s1129 + $0x3c] sm:$0xf]
    %v1162 = vunpack.c.l.b16 %v1130
    %v1163 = vunpack.c.l.b16 %v1131
    %v1164 = vunpack.c.l.b16 %v1132
    %v1165 = vunpack.c.l.b16 %v1133
    %v1166 = vunpack.c.l.b16 %v1134
    %v1167 = vunpack.c.l.b16 %v1135
    %v1168 = vunpack.c.l.b16 %v1136
    %v1169 = vunpack.c.l.b16 %v1137
    %v1170 = vunpack.c.l.b16 %v1138
    %v1171 = vunpack.c.l.b16 %v1139
    %v1172 = vunpack.c.l.b16 %v1140
    %v1173 = vunpack.c.l.b16 %v1141
    %v1174 = vunpack.c.l.b16 %v1142
    %v1175 = vunpack.c.l.b16 %v1143
    %v1176 = vunpack.c.l.b16 %v1144
    %v1177 = vunpack.c.l.b16 %v1145
    %v1178 = vpack.c.b16 %v1163, %v1162
    %v1179 = vpack.c.b16 %v1165, %v1164
    %v1180 = vpack.c.b16 %v1167, %v1166
    %v1181 = vpack.c.b16 %v1169, %v1168
    %v1182 = vpack.c.b16 %v1171, %v1170
    %v1183 = vpack.c.b16 %v1173, %v1172
    %v1184 = vpack.c.b16 %v1175, %v1174
    %v1185 = vpack.c.b16 %v1177, %v1176
    %1186 = vrot.lane.b32.xlu0 %v132, 115
    %v1187 = vpop.permute.xlu0 %1186
    %1188 = vrot.lane.b32.xlu0 %v133, 115
    %v1189 = vpop.permute.xlu0 %1188
    %1190 = vrot.lane.b32.xlu0 %v134, 115
    %v1191 = vpop.permute.xlu0 %1190
    %1192 = vrot.lane.b32.xlu0 %v135, 115
    %v1193 = vpop.permute.xlu0 %1192
    %v1199 = vsel %vm148, %v1178, 0
    %v1202 = vsel %vm148, %v1179, 0
    %v1205 = vsel %vm148, %v1180, 0
    %v1208 = vsel %vm148, %v1181, 0
    %v1211 = vsel %vm148, %v1182, 0
    %v1214 = vsel %vm148, %v1183, 0
    %v1217 = vsel %vm148, %v1184, 0
    %v1220 = vsel %vm148, %v1185, 0
    %1222 = vmatpush.bf16.msra.mxu0 0
    %1223 = vmatpush.bf16.msra.mxu0 0
    %1224 = vmatpush.bf16.msra.mxu0 0
    %1225 = vmatpush.bf16.msra.mxu0 0
    %1226 = vmatpush.bf16.msra.mxu0 %v1193
    %1227 = vmatpush.bf16.msra.mxu0 %v1191
    %1228 = vmatpush.bf16.msra.mxu0 %v1189
    %1229 = vmatpush.bf16.msra.mxu0 %v1187
    %1230 = vmatmul.bf16.gmra.mxu0 %v1199
    %v1231 = vpop.f32.mrf.mxu0
    %v1232 = vadd.f32 0.0, %v1231
    %v1233 = vpop.f32.mrf.mxu0
    %v1234 = vadd.f32 0.0, %v1233
    %1235 = vmatmul.bf16.gmra.mxu0 %v1202
    %v1236 = vpop.f32.mrf.mxu0
    %v1237 = vadd.f32 0.0, %v1236
    %v1238 = vpop.f32.mrf.mxu0
    %v1239 = vadd.f32 0.0, %v1238
    %1240 = vmatmul.bf16.gmra.mxu0 %v1205
    %v1241 = vpop.f32.mrf.mxu0
    %v1242 = vadd.f32 0.0, %v1241
    %v1243 = vpop.f32.mrf.mxu0
    %v1244 = vadd.f32 0.0, %v1243
    %1245 = vmatmul.bf16.gmra.mxu0 %v1208
    %v1246 = vpop.f32.mrf.mxu0
    %v1247 = vadd.f32 0.0, %v1246
    %v1248 = vpop.f32.mrf.mxu0
    %v1249 = vadd.f32 0.0, %v1248
    %1250 = vmatmul.bf16.gmra.mxu0 %v1211
    %v1251 = vpop.f32.mrf.mxu0
    %v1252 = vadd.f32 0.0, %v1251
    %v1253 = vpop.f32.mrf.mxu0
    %v1254 = vadd.f32 0.0, %v1253
    %1255 = vmatmul.bf16.gmra.mxu0 %v1214
    %v1256 = vpop.f32.mrf.mxu0
    %v1257 = vadd.f32 0.0, %v1256
    %v1258 = vpop.f32.mrf.mxu0
    %v1259 = vadd.f32 0.0, %v1258
    %1260 = vmatmul.bf16.gmra.mxu0 %v1217
    %v1261 = vpop.f32.mrf.mxu0
    %v1262 = vadd.f32 0.0, %v1261
    %v1263 = vpop.f32.mrf.mxu0
    %v1264 = vadd.f32 0.0, %v1263
    %1265 = vmatmul.bf16.gmra.mxu0 %v1220
    %v1266 = vpop.f32.mrf.mxu0
    %v1267 = vadd.f32 0.0, %v1266
    %v1268 = vpop.f32.mrf.mxu0
    %v1269 = vadd.f32 0.0, %v1268
    %1270 = vdwg.mxu0
    %v1271 = vadd.f32 %v1113, %v1232
    %v1272 = vadd.f32 %v1114, %v1234
    %v1273 = vadd.f32 %v1115, %v1237
    %v1274 = vadd.f32 %v1116, %v1239
    %v1275 = vadd.f32 %v1117, %v1242
    %v1276 = vadd.f32 %v1118, %v1244
    %v1277 = vadd.f32 %v1119, %v1247
    %v1278 = vadd.f32 %v1120, %v1249
    %v1279 = vadd.f32 %v1121, %v1252
    %v1280 = vadd.f32 %v1122, %v1254
    %v1281 = vadd.f32 %v1123, %v1257
    %v1282 = vadd.f32 %v1124, %v1259
    %v1283 = vadd.f32 %v1125, %v1262
    %v1284 = vadd.f32 %v1126, %v1264
    %v1285 = vadd.f32 %v1127, %v1267
    %v1286 = vadd.f32 %v1128, %v1269
    %s1287 = scalar_lea.vmem %s1, 512
    %v1288 = vld [vmem:[%s1287] sm:$0xf]
    %v1289 = vld [vmem:[%s1287 + $0x4] sm:$0xf]
    %v1290 = vld [vmem:[%s1287 + $0x8] sm:$0xf]
    %v1291 = vld [vmem:[%s1287 + $0xc] sm:$0xf]
    %v1292 = vld [vmem:[%s1287 + $0x10] sm:$0xf]
    %v1293 = vld [vmem:[%s1287 + $0x14] sm:$0xf]
    %v1294 = vld [vmem:[%s1287 + $0x18] sm:$0xf]
    %v1295 = vld [vmem:[%s1287 + $0x1c] sm:$0xf]
    %v1296 = vld [vmem:[%s1287 + $0x20] sm:$0xf]
    %v1297 = vld [vmem:[%s1287 + $0x24] sm:$0xf]
    %v1298 = vld [vmem:[%s1287 + $0x28] sm:$0xf]
    %v1299 = vld [vmem:[%s1287 + $0x2c] sm:$0xf]
    %v1300 = vld [vmem:[%s1287 + $0x30] sm:$0xf]
    %v1301 = vld [vmem:[%s1287 + $0x34] sm:$0xf]
    %v1302 = vld [vmem:[%s1287 + $0x38] sm:$0xf]
    %v1303 = vld [vmem:[%s1287 + $0x3c] sm:$0xf]
    %v1320 = vunpack.c.l.b16 %v1288
    %v1321 = vunpack.c.l.b16 %v1289
    %v1322 = vunpack.c.l.b16 %v1290
    %v1323 = vunpack.c.l.b16 %v1291
    %v1324 = vunpack.c.l.b16 %v1292
    %v1325 = vunpack.c.l.b16 %v1293
    %v1326 = vunpack.c.l.b16 %v1294
    %v1327 = vunpack.c.l.b16 %v1295
    %v1328 = vunpack.c.l.b16 %v1296
    %v1329 = vunpack.c.l.b16 %v1297
    %v1330 = vunpack.c.l.b16 %v1298
    %v1331 = vunpack.c.l.b16 %v1299
    %v1332 = vunpack.c.l.b16 %v1300
    %v1333 = vunpack.c.l.b16 %v1301
    %v1334 = vunpack.c.l.b16 %v1302
    %v1335 = vunpack.c.l.b16 %v1303
    %v1336 = vpack.c.b16 %v1321, %v1320
    %v1337 = vpack.c.b16 %v1323, %v1322
    %v1338 = vpack.c.b16 %v1325, %v1324
    %v1339 = vpack.c.b16 %v1327, %v1326
    %v1340 = vpack.c.b16 %v1329, %v1328
    %v1341 = vpack.c.b16 %v1331, %v1330
    %v1342 = vpack.c.b16 %v1333, %v1332
    %v1343 = vpack.c.b16 %v1335, %v1334
    %1344 = vrot.lane.b32.xlu0 %v132, 114
    %v1345 = vpop.permute.xlu0 %1344
    %1346 = vrot.lane.b32.xlu0 %v133, 114
    %v1347 = vpop.permute.xlu0 %1346
    %1348 = vrot.lane.b32.xlu0 %v134, 114
    %v1349 = vpop.permute.xlu0 %1348
    %1350 = vrot.lane.b32.xlu0 %v135, 114
    %v1351 = vpop.permute.xlu0 %1350
    %v1357 = vsel %vm148, %v1336, 0
    %v1360 = vsel %vm148, %v1337, 0
    %v1363 = vsel %vm148, %v1338, 0
    %v1366 = vsel %vm148, %v1339, 0
    %v1369 = vsel %vm148, %v1340, 0
    %v1372 = vsel %vm148, %v1341, 0
    %v1375 = vsel %vm148, %v1342, 0
    %v1378 = vsel %vm148, %v1343, 0
    %1380 = vmatpush.bf16.msra.mxu0 0
    %1381 = vmatpush.bf16.msra.mxu0 0
    %1382 = vmatpush.bf16.msra.mxu0 0
    %1383 = vmatpush.bf16.msra.mxu0 0
    %1384 = vmatpush.bf16.msra.mxu0 %v1351
    %1385 = vmatpush.bf16.msra.mxu0 %v1349
    %1386 = vmatpush.bf16.msra.mxu0 %v1347
    %1387 = vmatpush.bf16.msra.mxu0 %v1345
    %1388 = vmatmul.bf16.gmra.mxu0 %v1357
    %v1389 = vpop.f32.mrf.mxu0
    %v1390 = vadd.f32 0.0, %v1389
    %v1391 = vpop.f32.mrf.mxu0
    %v1392 = vadd.f32 0.0, %v1391
    %1393 = vmatmul.bf16.gmra.mxu0 %v1360
    %v1394 = vpop.f32.mrf.mxu0
    %v1395 = vadd.f32 0.0, %v1394
    %v1396 = vpop.f32.mrf.mxu0
    %v1397 = vadd.f32 0.0, %v1396
    %1398 = vmatmul.bf16.gmra.mxu0 %v1363
    %v1399 = vpop.f32.mrf.mxu0
    %v1400 = vadd.f32 0.0, %v1399
    %v1401 = vpop.f32.mrf.mxu0
    %v1402 = vadd.f32 0.0, %v1401
    %1403 = vmatmul.bf16.gmra.mxu0 %v1366
    %v1404 = vpop.f32.mrf.mxu0
    %v1405 = vadd.f32 0.0, %v1404
    %v1406 = vpop.f32.mrf.mxu0
    %v1407 = vadd.f32 0.0, %v1406
    %1408 = vmatmul.bf16.gmra.mxu0 %v1369
    %v1409 = vpop.f32.mrf.mxu0
    %v1410 = vadd.f32 0.0, %v1409
    %v1411 = vpop.f32.mrf.mxu0
    %v1412 = vadd.f32 0.0, %v1411
    %1413 = vmatmul.bf16.gmra.mxu0 %v1372
    %v1414 = vpop.f32.mrf.mxu0
    %v1415 = vadd.f32 0.0, %v1414
    %v1416 = vpop.f32.mrf.mxu0
    %v1417 = vadd.f32 0.0, %v1416
    %1418 = vmatmul.bf16.gmra.mxu0 %v1375
    %v1419 = vpop.f32.mrf.mxu0
    %v1420 = vadd.f32 0.0, %v1419
    %v1421 = vpop.f32.mrf.mxu0
    %v1422 = vadd.f32 0.0, %v1421
    %1423 = vmatmul.bf16.gmra.mxu0 %v1378
    %v1424 = vpop.f32.mrf.mxu0
    %v1425 = vadd.f32 0.0, %v1424
    %v1426 = vpop.f32.mrf.mxu0
    %v1427 = vadd.f32 0.0, %v1426
    %1428 = vdwg.mxu0
    %v1429 = vadd.f32 %v1271, %v1390
    %v1430 = vadd.f32 %v1272, %v1392
    %v1431 = vadd.f32 %v1273, %v1395
    %v1432 = vadd.f32 %v1274, %v1397
    %v1433 = vadd.f32 %v1275, %v1400
    %v1434 = vadd.f32 %v1276, %v1402
    %v1435 = vadd.f32 %v1277, %v1405
    %v1436 = vadd.f32 %v1278, %v1407
    %v1437 = vadd.f32 %v1279, %v1410
    %v1438 = vadd.f32 %v1280, %v1412
    %v1439 = vadd.f32 %v1281, %v1415
    %v1440 = vadd.f32 %v1282, %v1417
    %v1441 = vadd.f32 %v1283, %v1420
    %v1442 = vadd.f32 %v1284, %v1422
    %v1443 = vadd.f32 %v1285, %v1425
    %v1444 = vadd.f32 %v1286, %v1427
    %v1445 = vld [vmem:[#allocation2] sm:$0x1]
    %v1447 = vperm.slane %v1445, 0
    %v1449 = vmul.f32 %v1429, %v1447
    %v1450 = vmul.f32 %v1430, %v1447
    %v1451 = vmul.f32 %v1431, %v1447
    %v1452 = vmul.f32 %v1432, %v1447
    %v1453 = vmul.f32 %v1433, %v1447
    %v1454 = vmul.f32 %v1434, %v1447
    %v1455 = vmul.f32 %v1435, %v1447
    %v1456 = vmul.f32 %v1436, %v1447
    %v1457 = vmul.f32 %v1437, %v1447
    %v1458 = vmul.f32 %v1438, %v1447
    %v1459 = vmul.f32 %v1439, %v1447
    %v1460 = vmul.f32 %v1440, %v1447
    %v1461 = vmul.f32 %v1441, %v1447
    %v1462 = vmul.f32 %v1442, %v1447
    %v1463 = vmul.f32 %v1443, %v1447
    %v1464 = vmul.f32 %v1444, %v1447
    %vm1465 = vcmask 474112
    %v1466 = vsel %vm1465, %v1449, 0.0
    %1467 = vadd.xlane.f32.xlu0 %v1466
    %v1468 = vpop.xlane.xlu0 %1467
    %v1469 = vsel %vm1465, %v1450, 0.0
    %1470 = vadd.xlane.f32.xlu0 %v1469
    %v1471 = vpop.xlane.xlu0 %1470
    %v1472 = vsel %vm1465, %v1451, 0.0
    %1473 = vadd.xlane.f32.xlu0 %v1472
    %v1474 = vpop.xlane.xlu0 %1473
    %v1475 = vsel %vm1465, %v1452, 0.0
    %1476 = vadd.xlane.f32.xlu0 %v1475
    %v1477 = vpop.xlane.xlu0 %1476
    %v1478 = vsel %vm1465, %v1453, 0.0
    %1479 = vadd.xlane.f32.xlu0 %v1478
    %v1480 = vpop.xlane.xlu0 %1479
    %v1481 = vsel %vm1465, %v1454, 0.0
    %1482 = vadd.xlane.f32.xlu0 %v1481
    %v1483 = vpop.xlane.xlu0 %1482
    %v1484 = vsel %vm1465, %v1455, 0.0
    %1485 = vadd.xlane.f32.xlu0 %v1484
    %v1486 = vpop.xlane.xlu0 %1485
    %v1487 = vsel %vm1465, %v1456, 0.0
    %1488 = vadd.xlane.f32.xlu0 %v1487
    %v1489 = vpop.xlane.xlu0 %1488
    %v1490 = vsel %vm1465, %v1457, 0.0
    %1491 = vadd.xlane.f32.xlu0 %v1490
    %v1492 = vpop.xlane.xlu0 %1491
    %v1493 = vsel %vm1465, %v1458, 0.0
    %1494 = vadd.xlane.f32.xlu0 %v1493
    %v1495 = vpop.xlane.xlu0 %1494
    %v1496 = vsel %vm1465, %v1459, 0.0
    %1497 = vadd.xlane.f32.xlu0 %v1496
    %v1498 = vpop.xlane.xlu0 %1497
    %v1499 = vsel %vm1465, %v1460, 0.0
    %1500 = vadd.xlane.f32.xlu0 %v1499
    %v1501 = vpop.xlane.xlu0 %1500
    %v1502 = vsel %vm1465, %v1461, 0.0
    %1503 = vadd.xlane.f32.xlu0 %v1502
    %v1504 = vpop.xlane.xlu0 %1503
    %v1505 = vsel %vm1465, %v1462, 0.0
    %1506 = vadd.xlane.f32.xlu0 %v1505
    %v1507 = vpop.xlane.xlu0 %1506
    %v1508 = vsel %vm1465, %v1463, 0.0
    %1509 = vadd.xlane.f32.xlu0 %v1508
    %v1510 = vpop.xlane.xlu0 %1509
    %v1511 = vsel %vm1465, %v1464, 0.0
    %1512 = vadd.xlane.f32.xlu0 %v1511
    %v1513 = vpop.xlane.xlu0 %1512
    %v1514 = vmul.f32 %v1429, %v1429
    %v1515 = vmul.f32 %v1430, %v1430
    %v1516 = vmul.f32 %v1431, %v1431
    %v1517 = vmul.f32 %v1432, %v1432
    %v1518 = vmul.f32 %v1433, %v1433
    %v1519 = vmul.f32 %v1434, %v1434
    %v1520 = vmul.f32 %v1435, %v1435
    %v1521 = vmul.f32 %v1436, %v1436
    %v1522 = vmul.f32 %v1437, %v1437
    %v1523 = vmul.f32 %v1438, %v1438
    %v1524 = vmul.f32 %v1439, %v1439
    %v1525 = vmul.f32 %v1440, %v1440
    %v1526 = vmul.f32 %v1441, %v1441
    %v1527 = vmul.f32 %v1442, %v1442
    %v1528 = vmul.f32 %v1443, %v1443
    %v1529 = vmul.f32 %v1444, %v1444
    %v1530 = vmul.f32 %v1514, %v1447
    %v1531 = vmul.f32 %v1515, %v1447
    %v1532 = vmul.f32 %v1516, %v1447
    %v1533 = vmul.f32 %v1517, %v1447
    %v1534 = vmul.f32 %v1518, %v1447
    %v1535 = vmul.f32 %v1519, %v1447
    %v1536 = vmul.f32 %v1520, %v1447
    %v1537 = vmul.f32 %v1521, %v1447
    %v1538 = vmul.f32 %v1522, %v1447
    %v1539 = vmul.f32 %v1523, %v1447
    %v1540 = vmul.f32 %v1524, %v1447
    %v1541 = vmul.f32 %v1525, %v1447
    %v1542 = vmul.f32 %v1526, %v1447
    %v1543 = vmul.f32 %v1527, %v1447
    %v1544 = vmul.f32 %v1528, %v1447
    %v1545 = vmul.f32 %v1529, %v1447
    %v1546 = vsel %vm1465, %v1530, 0.0
    %1547 = vadd.xlane.f32.xlu0 %v1546
    %v1548 = vpop.xlane.xlu0 %1547
    %v1549 = vsel %vm1465, %v1531, 0.0
    %1550 = vadd.xlane.f32.xlu0 %v1549
    %v1551 = vpop.xlane.xlu0 %1550
    %v1552 = vsel %vm1465, %v1532, 0.0
    %1553 = vadd.xlane.f32.xlu0 %v1552
    %v1554 = vpop.xlane.xlu0 %1553
    %v1555 = vsel %vm1465, %v1533, 0.0
    %1556 = vadd.xlane.f32.xlu0 %v1555
    %v1557 = vpop.xlane.xlu0 %1556
    %v1558 = vsel %vm1465, %v1534, 0.0
    %1559 = vadd.xlane.f32.xlu0 %v1558
    %v1560 = vpop.xlane.xlu0 %1559
    %v1561 = vsel %vm1465, %v1535, 0.0
    %1562 = vadd.xlane.f32.xlu0 %v1561
    %v1563 = vpop.xlane.xlu0 %1562
    %v1564 = vsel %vm1465, %v1536, 0.0
    %1565 = vadd.xlane.f32.xlu0 %v1564
    %v1566 = vpop.xlane.xlu0 %1565
    %v1567 = vsel %vm1465, %v1537, 0.0
    %1568 = vadd.xlane.f32.xlu0 %v1567
    %v1569 = vpop.xlane.xlu0 %1568
    %v1570 = vsel %vm1465, %v1538, 0.0
    %1571 = vadd.xlane.f32.xlu0 %v1570
    %v1572 = vpop.xlane.xlu0 %1571
    %v1573 = vsel %vm1465, %v1539, 0.0
    %1574 = vadd.xlane.f32.xlu0 %v1573
    %v1575 = vpop.xlane.xlu0 %1574
    %v1576 = vsel %vm1465, %v1540, 0.0
    %1577 = vadd.xlane.f32.xlu0 %v1576
    %v1578 = vpop.xlane.xlu0 %1577
    %v1579 = vsel %vm1465, %v1541, 0.0
    %1580 = vadd.xlane.f32.xlu0 %v1579
    %v1581 = vpop.xlane.xlu0 %1580
    %v1582 = vsel %vm1465, %v1542, 0.0
    %1583 = vadd.xlane.f32.xlu0 %v1582
    %v1584 = vpop.xlane.xlu0 %1583
    %v1585 = vsel %vm1465, %v1543, 0.0
    %1586 = vadd.xlane.f32.xlu0 %v1585
    %v1587 = vpop.xlane.xlu0 %1586
    %v1588 = vsel %vm1465, %v1544, 0.0
    %1589 = vadd.xlane.f32.xlu0 %v1588
    %v1590 = vpop.xlane.xlu0 %1589
    %v1591 = vsel %vm1465, %v1545, 0.0
    %1592 = vadd.xlane.f32.xlu0 %v1591
    %v1593 = vpop.xlane.xlu0 %1592
    %v1594 = vadd.f32 %v1468, %v1480
    %v1595 = vadd.f32 %v1471, %v1483
    %v1596 = vadd.f32 %v1474, %v1486
    %v1597 = vadd.f32 %v1477, %v1489
    %v1598 = vadd.f32 %v1594, %v1492
    %v1599 = vadd.f32 %v1595, %v1495
    %v1600 = vadd.f32 %v1596, %v1498
    %v1601 = vadd.f32 %v1597, %v1501
    %v1602 = vadd.f32 %v1598, %v1504
    %v1603 = vadd.f32 %v1599, %v1507
    %v1604 = vadd.f32 %v1600, %v1510
    %v1605 = vadd.f32 %v1601, %v1513
    %v1606 = vadd.f32 %v1548, %v1560
    %v1607 = vadd.f32 %v1551, %v1563
    %v1608 = vadd.f32 %v1554, %v1566
    %v1609 = vadd.f32 %v1557, %v1569
    %v1610 = vadd.f32 %v1606, %v1572
    %v1611 = vadd.f32 %v1607, %v1575
    %v1612 = vadd.f32 %v1608, %v1578
    %v1613 = vadd.f32 %v1609, %v1581
    %v1614 = vadd.f32 %v1610, %v1584
    %v1615 = vadd.f32 %v1611, %v1587
    %v1616 = vadd.f32 %v1612, %v1590
    %v1617 = vadd.f32 %v1613, %v1593
    %v1618 = vmul.f32 %v1602, 0.0078125
    %v1619 = vmul.f32 %v1603, 0.0078125
    %v1620 = vmul.f32 %v1604, 0.0078125
    %v1621 = vmul.f32 %v1605, 0.0078125
    %v1622 = vmul.f32 %v1614, 0.0078125
    %v1623 = vmul.f32 %v1615, 0.0078125
    %v1624 = vmul.f32 %v1616, 0.0078125
    %v1625 = vmul.f32 %v1617, 0.0078125
    %v1626 = vmul.f32 %v1618, %v1618
    %v1627 = vmul.f32 %v1619, %v1619
    %v1628 = vmul.f32 %v1620, %v1620
    %v1629 = vmul.f32 %v1621, %v1621
    %v1630 = vsub.f32 %v1622, %v1626
    %v1631 = vsub.f32 %v1623, %v1627
    %v1632 = vsub.f32 %v1624, %v1628
    %v1633 = vsub.f32 %v1625, %v1629
    %v1634 = vmax.f32 %v1630, 0.0
    %v1635 = vmax.f32 %v1631, 0.0
    %v1636 = vmax.f32 %v1632, 0.0
    %v1637 = vmax.f32 %v1633, 0.0
    %v1638 = vld [vmem:[%s2] sm:$0xff]
    %v1639 = vld [vmem:[%s2 + $0x8] sm:$0xff]
    %v1640 = vld [vmem:[%s2 + $0x10] sm:$0xff]
    %v1641 = vld [vmem:[%s2 + $0x18] sm:$0xff]
    %v1642 = vadd.f32 %v1634, 1e-05
    %v1643 = vadd.f32 %v1635, 1e-05
    %v1644 = vadd.f32 %v1636, 1e-05
    %v1645 = vadd.f32 %v1637, 1e-05
    %v1646 = vrsqrt.pop %v1642
    %v1647 = vmul.f32 %v1646, %v1642
    %v1648 = vmul.f32 %v1647, %v1646
    %v1649 = vmul.f32 0.5, %v1648
    %v1650 = vsub.f32 1.5, %v1649
    %v1651 = vmul.f32 %v1646, %v1650
    %vm1652 = vweird.f32 %v1642
    %vm1653 = vweird.f32 %v1646
    %vm1654 = vmor %vm1652, %vm1653
    %v1655 = vsel %vm1654, %v1646, %v1651
    %v1656 = vrsqrt.pop %v1643
    %v1657 = vmul.f32 %v1656, %v1643
    %v1658 = vmul.f32 %v1657, %v1656
    %v1659 = vmul.f32 0.5, %v1658
    %v1660 = vsub.f32 1.5, %v1659
    %v1661 = vmul.f32 %v1656, %v1660
    %vm1662 = vweird.f32 %v1643
    %vm1663 = vweird.f32 %v1656
    %vm1664 = vmor %vm1662, %vm1663
    %v1665 = vsel %vm1664, %v1656, %v1661
    %v1666 = vrsqrt.pop %v1644
    %v1667 = vmul.f32 %v1666, %v1644
    %v1668 = vmul.f32 %v1667, %v1666
    %v1669 = vmul.f32 0.5, %v1668
    %v1670 = vsub.f32 1.5, %v1669
    %v1671 = vmul.f32 %v1666, %v1670
    %vm1672 = vweird.f32 %v1644
    %vm1673 = vweird.f32 %v1666
    %vm1674 = vmor %vm1672, %vm1673
    %v1675 = vsel %vm1674, %v1666, %v1671
    %v1676 = vrsqrt.pop %v1645
    %v1677 = vmul.f32 %v1676, %v1645
    %v1678 = vmul.f32 %v1677, %v1676
    %v1679 = vmul.f32 0.5, %v1678
    %v1680 = vsub.f32 1.5, %v1679
    %v1681 = vmul.f32 %v1676, %v1680
    %vm1682 = vweird.f32 %v1645
    %vm1683 = vweird.f32 %v1676
    %vm1684 = vmor %vm1682, %vm1683
    %v1685 = vsel %vm1684, %v1676, %v1681
    %v1686 = vmul.f32 %v1638, %v1655
    %v1687 = vmul.f32 %v1639, %v1665
    %v1688 = vmul.f32 %v1640, %v1675
    %v1689 = vmul.f32 %v1641, %v1685
    %v1690 = vld [vmem:[%s3] sm:$0xff]
    %v1691 = vld [vmem:[%s3 + $0x8] sm:$0xff]
    %v1692 = vld [vmem:[%s3 + $0x10] sm:$0xff]
    %v1693 = vld [vmem:[%s3 + $0x18] sm:$0xff]
    %v1694 = vmul.f32 %v1618, %v1686
    %v1695 = vmul.f32 %v1619, %v1687
    %v1696 = vmul.f32 %v1620, %v1688
    %v1697 = vmul.f32 %v1621, %v1689
    %v1698 = vsub.f32 %v1690, %v1694
    %v1699 = vsub.f32 %v1691, %v1695
    %v1700 = vsub.f32 %v1692, %v1696
    %v1701 = vsub.f32 %v1693, %v1697
    %1703 = vset.pattern.permute.xlu0 0
    %1704 = vperm.xlu0 %1703, %v1686
    %v1705 = vpop.permute.xlu0 %1704
    %1708 = vset.pattern.permute.xlu0 0
    %1709 = vperm.xlu0 %1708, %v1687
    %v1710 = vpop.permute.xlu0 %1709
    %1713 = vset.pattern.permute.xlu0 0
    %1714 = vperm.xlu0 %1713, %v1688
    %v1715 = vpop.permute.xlu0 %1714
    %1718 = vset.pattern.permute.xlu0 0
    %1719 = vperm.xlu0 %1718, %v1689
    %v1720 = vpop.permute.xlu0 %1719
    %v1722 = vmul.f32 %v1429, %v1705
    %v1723 = vmul.f32 %v1430, %v1710
    %v1724 = vmul.f32 %v1431, %v1715
    %v1725 = vmul.f32 %v1432, %v1720
    %v1726 = vmul.f32 %v1433, %v1705
    %v1727 = vmul.f32 %v1434, %v1710
    %v1728 = vmul.f32 %v1435, %v1715
    %v1729 = vmul.f32 %v1436, %v1720
    %v1730 = vmul.f32 %v1437, %v1705
    %v1731 = vmul.f32 %v1438, %v1710
    %v1732 = vmul.f32 %v1439, %v1715
    %v1733 = vmul.f32 %v1440, %v1720
    %v1734 = vmul.f32 %v1441, %v1705
    %v1735 = vmul.f32 %v1442, %v1710
    %v1736 = vmul.f32 %v1443, %v1715
    %v1737 = vmul.f32 %v1444, %v1720
    %1739 = vset.pattern.permute.xlu0 0
    %1740 = vperm.xlu0 %1739, %v1698
    %v1741 = vpop.permute.xlu0 %1740
    %1744 = vset.pattern.permute.xlu0 0
    %1745 = vperm.xlu0 %1744, %v1699
    %v1746 = vpop.permute.xlu0 %1745
    %1749 = vset.pattern.permute.xlu0 0
    %1750 = vperm.xlu0 %1749, %v1700
    %v1751 = vpop.permute.xlu0 %1750
    %1754 = vset.pattern.permute.xlu0 0
    %1755 = vperm.xlu0 %1754, %v1701
    %v1756 = vpop.permute.xlu0 %1755
    %v1758 = vadd.f32 %v1722, %v1741
    %v1759 = vadd.f32 %v1723, %v1746
    %v1760 = vadd.f32 %v1724, %v1751
    %v1761 = vadd.f32 %v1725, %v1756
    %v1762 = vadd.f32 %v1726, %v1741
    %v1763 = vadd.f32 %v1727, %v1746
    %v1764 = vadd.f32 %v1728, %v1751
    %v1765 = vadd.f32 %v1729, %v1756
    %v1766 = vadd.f32 %v1730, %v1741
    %v1767 = vadd.f32 %v1731, %v1746
    %v1768 = vadd.f32 %v1732, %v1751
    %v1769 = vadd.f32 %v1733, %v1756
    %v1770 = vadd.f32 %v1734, %v1741
    %v1771 = vadd.f32 %v1735, %v1746
    %v1772 = vadd.f32 %v1736, %v1751
    %v1773 = vadd.f32 %v1737, %v1756
    %v1774 = vmax.f32 %v1758, 0.0
    %v1775 = vmax.f32 %v1759, 0.0
    %v1776 = vmax.f32 %v1760, 0.0
    %v1777 = vmax.f32 %v1761, 0.0
    %v1778 = vmax.f32 %v1762, 0.0
    %v1779 = vmax.f32 %v1763, 0.0
    %v1780 = vmax.f32 %v1764, 0.0
    %v1781 = vmax.f32 %v1765, 0.0
    %v1782 = vmax.f32 %v1766, 0.0
    %v1783 = vmax.f32 %v1767, 0.0
    %v1784 = vmax.f32 %v1768, 0.0
    %v1785 = vmax.f32 %v1769, 0.0
    %v1786 = vmax.f32 %v1770, 0.0
    %v1787 = vmax.f32 %v1771, 0.0
    %v1788 = vmax.f32 %v1772, 0.0
    %v1789 = vmax.f32 %v1773, 0.0
    %v1790 = vpack.c.bf16 %v1774, %v1774
    %v1791 = vpack.c.bf16 %v1775, %v1775
    %v1792 = vpack.c.bf16 %v1776, %v1776
    %v1793 = vpack.c.bf16 %v1777, %v1777
    %v1794 = vpack.c.bf16 %v1778, %v1778
    %v1795 = vpack.c.bf16 %v1779, %v1779
    %v1796 = vpack.c.bf16 %v1780, %v1780
    %v1797 = vpack.c.bf16 %v1781, %v1781
    %v1798 = vpack.c.bf16 %v1782, %v1782
    %v1799 = vpack.c.bf16 %v1783, %v1783
    %v1800 = vpack.c.bf16 %v1784, %v1784
    %v1801 = vpack.c.bf16 %v1785, %v1785
    %v1802 = vpack.c.bf16 %v1786, %v1786
    %v1803 = vpack.c.bf16 %v1787, %v1787
    %v1804 = vpack.c.bf16 %v1788, %v1788
    %v1805 = vpack.c.bf16 %v1789, %v1789
    %vm1806 = vcmask 470016
    %1807 = vst.msk [vmem:[%s5] sm:$0xf] %vm1806, %v1790
    %1808 = vst.msk [vmem:[%s5 + $0x4] sm:$0xf] %vm1806, %v1791
    %1809 = vst.msk [vmem:[%s5 + $0x8] sm:$0xf] %vm1806, %v1792
    %1810 = vst.msk [vmem:[%s5 + $0xc] sm:$0xf] %vm1806, %v1793
    %1811 = vst.msk [vmem:[%s5 + $0x10] sm:$0xf] %vm1806, %v1794
    %1812 = vst.msk [vmem:[%s5 + $0x14] sm:$0xf] %vm1806, %v1795
    %1813 = vst.msk [vmem:[%s5 + $0x18] sm:$0xf] %vm1806, %v1796
    %1814 = vst.msk [vmem:[%s5 + $0x1c] sm:$0xf] %vm1806, %v1797
    %1815 = vst.msk [vmem:[%s5 + $0x20] sm:$0xf] %vm1806, %v1798
    %1816 = vst.msk [vmem:[%s5 + $0x24] sm:$0xf] %vm1806, %v1799
    %1817 = vst.msk [vmem:[%s5 + $0x28] sm:$0xf] %vm1806, %v1800
    %1818 = vst.msk [vmem:[%s5 + $0x2c] sm:$0xf] %vm1806, %v1801
    %1819 = vst.msk [vmem:[%s5 + $0x30] sm:$0xf] %vm1806, %v1802
    %1820 = vst.msk [vmem:[%s5 + $0x34] sm:$0xf] %vm1806, %v1803
    %1821 = vst.msk [vmem:[%s5 + $0x38] sm:$0xf] %vm1806, %v1804
    %1822 = vst.msk [vmem:[%s5 + $0x3c] sm:$0xf] %vm1806, %v1805
    // Predicated region
    $region26: #{generator_forward.6} parent=1 // pred_check
      _
    $region27: #{generator_forward.6} parent=1 // pred_check_branch
      %1824 = sbr.rel (0) target = $region29
    $region28: #{generator_forward.6} parent=1 // pred_region
      _
    $region29: #{generator_forward.6} parent=1 // pred_fallthru
      _
    // Predicated region
    $region30: #{generator_forward.6} parent=1 // pred_check
      _
    $region31: #{generator_forward.6} parent=1 // pred_check_branch
      %1826 = sbr.rel (0) target = $region33
    $region32: #{generator_forward.6} parent=1 // pred_region
      _
    $region33: #{generator_forward.6} parent=1 // pred_fallthru
      _
    %1827 = vsyncpa [#allocation3], 1

// kernel: generator_forward.7
$region0: #{generator_forward.7}
  #allocation0 [shape = 'u32[]', space=smem, size = 0x4, offset = 0x4, fixed_abs, tag = 'smem constant byte address 0x4 - core index']
  #allocation1 [shape = 'u32[72,128]{1,0:T(1,128)}', space=vmem, size = 0x9000, scoped, tag = 'internal scratch']
  %s0 = inlined_call_operand.vmem [shape: bf16[32,200], index: 0, kind: input, shape index: {}]
  %s1 = inlined_call_operand.vmem [shape: bf16[9,64,32], index: 1, kind: input, shape index: {}]
  %s2 = inlined_call_operand.vmem [shape: f32[16,1], index: 2, kind: input, shape index: {}]
  %s3 = inlined_call_operand.vmem [shape: f32[16,1], index: 3, kind: input, shape index: {}]
  %s4 = inlined_call_operand.hbm [shape: f32[1,178], index: 4, kind: input, shape index: {}]
  %s5 = inlined_call_operand.vmem [shape: bf16[64,178], index: 5, kind: output, shape index: {}]
  %s6 = sld [smem:[#allocation0]]
  $region34: #{generator_forward.7} parent=0
    _
  %s8 = ssub.s32 1, %s6
  %s9 = scalar_select 0, %s8, %s6
  $region1: #{generator_forward.7} parent=0
    #allocation2 [shape = 'u8[1024]{0}', space=vmem, size = 0x400, scoped, tag = 'input window, operand 4, single buffered']
    #allocation3 [shape = 's32[1]{0}', space=sflag, size = 0x4, scoped, tag = 'scoped memory for generator_forward.7']
    %10 = vsyncpa [#allocation3], 0
    // Predicated region
    $region2: #{generator_forward.7} parent=1 // pred_check
      _
    $region3: #{generator_forward.7} parent=1 // pred_check_branch
      %12 = sbr.rel (0) target = $region5
    $region4: #{generator_forward.7} parent=1 // pred_region
      _
    $region5: #{generator_forward.7} parent=1 // pred_fallthru
      _
    // Predicated region
    $region6: #{generator_forward.7} parent=1 // pred_check
      _
    $region7: #{generator_forward.7} parent=1 // pred_check_branch
      %14 = sbr.rel (0) target = $region9
    $region8: #{generator_forward.7} parent=1 // pred_region
      _
    $region9: #{generator_forward.7} parent=1 // pred_fallthru
      _
    // Predicated region
    $region10: #{generator_forward.7} parent=1 // pred_check
      _
    $region11: #{generator_forward.7} parent=1 // pred_check_branch
      %16 = sbr.rel (0) target = $region13
    $region12: #{generator_forward.7} parent=1 // pred_region
      _
    $region13: #{generator_forward.7} parent=1 // pred_fallthru
      _
    // Predicated region
    $region14: #{generator_forward.7} parent=1 // pred_check
      _
    $region15: #{generator_forward.7} parent=1 // pred_check_branch
      %18 = sbr.rel (0) target = $region17
    $region16: #{generator_forward.7} parent=1 // pred_region
      _
    $region17: #{generator_forward.7} parent=1 // pred_fallthru
      _
    // Predicated region
    $region18: #{generator_forward.7} parent=1 // pred_check
      _
    $region19: #{generator_forward.7} parent=1 // pred_check_branch
      %20 = sbr.rel (0) target = $region21
    $region20: #{generator_forward.7} parent=1 // pred_region
      %22 = vsyncadd [#allocation3], 0
      %s24 = sshll.u32 %s4, 4
      %s25 = int_to_ptr.hbm [resolvable:$true] %s24
      %s26 = sshll.u32 [#allocation2], 4
      %s27 = int_to_ptr.vmem [resolvable:$true] %s26
      %29 = dma.hbm_to_vmem [thread:$0]  %s25, 32, %s27, [#allocation3]
    $region21: #{generator_forward.7} parent=1 // pred_fallthru
      _
    // Predicated region
    $region22: #{generator_forward.7} parent=1 // pred_check
      _
    $region23: #{generator_forward.7} parent=1 // pred_check_branch
      %31 = sbr.rel (0) target = $region25
    $region24: #{generator_forward.7} parent=1 // pred_region
      %33 = dma.done [#allocation3], 32
    $region25: #{generator_forward.7} parent=1 // pred_fallthru
      _
    %v35 = vld [vmem:[%s0] sm:$0xff]
    %v36 = vld [vmem:[%s0 + $0x8] sm:$0xff]
    %v37 = vld [vmem:[%s0 + $0x10] sm:$0xff]
    %v38 = vld [vmem:[%s0 + $0x18] sm:$0xff]
    %v39 = vld [vmem:[%s1] sm:$0xf]
    %v40 = vld [vmem:[%s1 + $0x4] sm:$0xf]
    %v41 = vld [vmem:[%s1 + $0x8] sm:$0xf]
    %v42 = vld [vmem:[%s1 + $0xc] sm:$0xf]
    %v43 = vld [vmem:[%s1 + $0x10] sm:$0xf]
    %v44 = vld [vmem:[%s1 + $0x14] sm:$0xf]
    %v45 = vld [vmem:[%s1 + $0x18] sm:$0xf]
    %v46 = vld [vmem:[%s1 + $0x1c] sm:$0xf]
    %s47 = scalar_lea.vmem %s1, 32
    %v48 = vld [vmem:[%s47] sm:$0xf]
    %v49 = vld [vmem:[%s47 + $0x4] sm:$0xf]
    %v50 = vld [vmem:[%s47 + $0x8] sm:$0xf]
    %v51 = vld [vmem:[%s47 + $0xc] sm:$0xf]
    %v52 = vld [vmem:[%s47 + $0x10] sm:$0xf]
    %v53 = vld [vmem:[%s47 + $0x14] sm:$0xf]
    %v54 = vld [vmem:[%s47 + $0x18] sm:$0xf]
    %v55 = vld [vmem:[%s47 + $0x1c] sm:$0xf]
    %v64 = vunpack.c.l.b16 %v48
    %v65 = vunpack.c.l.b16 %v49
    %v66 = vunpack.c.l.b16 %v50
    %v67 = vunpack.c.l.b16 %v51
    %v68 = vunpack.c.l.b16 %v52
    %v69 = vunpack.c.l.b16 %v53
    %v70 = vunpack.c.l.b16 %v54
    %v71 = vunpack.c.l.b16 %v55
    %v72 = vpack.c.b16 %v65, %v64
    %v73 = vpack.c.b16 %v67, %v66
    %v74 = vpack.c.b16 %v69, %v68
    %v75 = vpack.c.b16 %v71, %v70
    %v80 = vunpack.c.l.b16 %v35
    %v81 = vunpack.c.h.b16 %v35
    %v82 = vunpack.c.l.b16 %v36
    %v83 = vunpack.c.h.b16 %v36
    %v84 = vunpack.c.l.b16 %v37
    %v85 = vunpack.c.h.b16 %v37
    %v86 = vunpack.c.l.b16 %v38
    %v87 = vunpack.c.h.b16 %v38
    %v88 = vpack.c.b16 %v82, %v80
    %v89 = vpack.c.b16 %v83, %v81
    %v90 = vpack.c.b16 %v86, %v84
    %v91 = vpack.c.b16 %v87, %v85
    %92 = vrot.lane.b32.xlu0 %v88, 127
    %v93 = vpop.permute.xlu0 %92
    %94 = vrot.lane.b32.xlu0 %v89, 127
    %v95 = vpop.permute.xlu0 %94
    %96 = vrot.lane.b32.xlu0 %v90, 127
    %v97 = vpop.permute.xlu0 %96
    %98 = vrot.lane.b32.xlu0 %v91, 127
    %v99 = vpop.permute.xlu0 %98
    %vm100 = vcmask 1039360
    %v101 = vsel %vm100, %v93, %v95
    %v102 = vsel %vm100, %v97, %v99
    %vm107 = vcmask 261120
    %v109 = vsel %vm107, %v72, 0
    %v112 = vsel %vm107, %v73, 0
    %v115 = vsel %vm107, %v74, 0
    %v118 = vsel %vm107, %v75, 0
    %120 = vmatpush.bf16.msra.mxu0 0
    %121 = vmatpush.bf16.msra.mxu0 0
    %122 = vmatpush.bf16.msra.mxu0 0
    %123 = vmatpush.bf16.msra.mxu0 0
    %124 = vmatpush.bf16.msra.mxu0 0
    %125 = vmatpush.bf16.msra.mxu0 0
    %126 = vmatpush.bf16.msra.mxu0 %v102
    %127 = vmatpush.bf16.msra.mxu0 %v101
    %128 = vmatmul.bf16.gmra.mxu0 %v109
    %v129 = vpop.f32.mrf.mxu0
    %v130 = vadd.f32 0.0, %v129
    %v131 = vpop.f32.mrf.mxu0
    %v132 = vadd.f32 0.0, %v131
    %133 = vmatmul.bf16.gmra.mxu0 %v112
    %v134 = vpop.f32.mrf.mxu0
    %v135 = vadd.f32 0.0, %v134
    %v136 = vpop.f32.mrf.mxu0
    %v137 = vadd.f32 0.0, %v136
    %138 = vmatmul.bf16.gmra.mxu0 %v115
    %v139 = vpop.f32.mrf.mxu0
    %v140 = vadd.f32 0.0, %v139
    %v141 = vpop.f32.mrf.mxu0
    %v142 = vadd.f32 0.0, %v141
    %143 = vmatmul.bf16.gmra.mxu0 %v118
    %v144 = vpop.f32.mrf.mxu0
    %v145 = vadd.f32 0.0, %v144
    %v146 = vpop.f32.mrf.mxu0
    %v147 = vadd.f32 0.0, %v146
    %148 = vdwg.mxu0
    %149 = vmatpush.bf16.msra.mxu0 0
    %150 = vmatpush.bf16.msra.mxu0 0
    %151 = vmatpush.bf16.msra.mxu0 0
    %152 = vmatpush.bf16.msra.mxu0 0
    %153 = vmatpush.bf16.msra.mxu0 0
    %154 = vmatpush.bf16.msra.mxu0 0
    %155 = vmatpush.bf16.msra.mxu0 %v99
    %156 = vmatpush.bf16.msra.mxu0 %v95
    %157 = vmatmul.bf16.gmra.mxu0 %v109
    %v158 = vpop.f32.mrf.mxu0
    %v159 = vadd.f32 0.0, %v158
    %v160 = vpop.f32.mrf.mxu0
    %v161 = vadd.f32 0.0, %v160
    %162 = vmatmul.bf16.gmra.mxu0 %v112
    %v163 = vpop.f32.mrf.mxu0
    %v164 = vadd.f32 0.0, %v163
    %v165 = vpop.f32.mrf.mxu0
    %v166 = vadd.f32 0.0, %v165
    %167 = vmatmul.bf16.gmra.mxu0 %v115
    %v168 = vpop.f32.mrf.mxu0
    %v169 = vadd.f32 0.0, %v168
    %v170 = vpop.f32.mrf.mxu0
    %v171 = vadd.f32 0.0, %v170
    %172 = vmatmul.bf16.gmra.mxu0 %v118
    %v173 = vpop.f32.mrf.mxu0
    %v174 = vadd.f32 0.0, %v173
    %v175 = vpop.f32.mrf.mxu0
    %v176 = vadd.f32 0.0, %v175
    %177 = vdwg.mxu0
    %v186 = vunpack.c.l.b16 %v39
    %v187 = vunpack.c.l.b16 %v40
    %v188 = vunpack.c.l.b16 %v41
    %v189 = vunpack.c.l.b16 %v42
    %v190 = vunpack.c.l.b16 %v43
    %v191 = vunpack.c.l.b16 %v44
    %v192 = vunpack.c.l.b16 %v45
    %v193 = vunpack.c.l.b16 %v46
    %v194 = vpack.c.b16 %v187, %v186
    %v195 = vpack.c.b16 %v189, %v188
    %v196 = vpack.c.b16 %v191, %v190
    %v197 = vpack.c.b16 %v193, %v192
    %v203 = vsel %vm107, %v194, 0
    %v206 = vsel %vm107, %v195, 0
    %v209 = vsel %vm107, %v196, 0
    %v212 = vsel %vm107, %v197, 0
    %214 = vmatpush.bf16.msra.mxu0 0
    %215 = vmatpush.bf16.msra.mxu0 0
    %216 = vmatpush.bf16.msra.mxu0 0
    %217 = vmatpush.bf16.msra.mxu0 0
    %218 = vmatpush.bf16.msra.mxu0 0
    %219 = vmatpush.bf16.msra.mxu0 0
    %220 = vmatpush.bf16.msra.mxu0 %v90
    %221 = vmatpush.bf16.msra.mxu0 %v88
    %222 = vmatmul.bf16.gmra.mxu0 %v203
    %v223 = vpop.f32.mrf.mxu0
    %v224 = vadd.f32 %v130, %v223
    %v225 = vpop.f32.mrf.mxu0
    %v226 = vadd.f32 %v132, %v225
    %227 = vmatmul.bf16.gmra.mxu0 %v206
    %v228 = vpop.f32.mrf.mxu0
    %v229 = vadd.f32 %v135, %v228
    %v230 = vpop.f32.mrf.mxu0
    %v231 = vadd.f32 %v137, %v230
    %232 = vmatmul.bf16.gmra.mxu0 %v209
    %v233 = vpop.f32.mrf.mxu0
    %v234 = vadd.f32 %v140, %v233
    %v235 = vpop.f32.mrf.mxu0
    %v236 = vadd.f32 %v142, %v235
    %237 = vmatmul.bf16.gmra.mxu0 %v212
    %v238 = vpop.f32.mrf.mxu0
    %v239 = vadd.f32 %v145, %v238
    %v240 = vpop.f32.mrf.mxu0
    %v241 = vadd.f32 %v147, %v240
    %242 = vdwg.mxu0
    %243 = vmatpush.bf16.msra.mxu0 0
    %244 = vmatpush.bf16.msra.mxu0 0
    %245 = vmatpush.bf16.msra.mxu0 0
    %246 = vmatpush.bf16.msra.mxu0 0
    %247 = vmatpush.bf16.msra.mxu0 0
    %248 = vmatpush.bf16.msra.mxu0 0
    %249 = vmatpush.bf16.msra.mxu0 %v91
    %250 = vmatpush.bf16.msra.mxu0 %v89
    %251 = vmatmul.bf16.gmra.mxu0 %v203
    %v252 = vpop.f32.mrf.mxu0
    %v253 = vadd.f32 %v159, %v252
    %v254 = vpop.f32.mrf.mxu0
    %v255 = vadd.f32 %v161, %v254
    %256 = vmatmul.bf16.gmra.mxu0 %v206
    %v257 = vpop.f32.mrf.mxu0
    %v258 = vadd.f32 %v164, %v257
    %v259 = vpop.f32.mrf.mxu0
    %v260 = vadd.f32 %v166, %v259
    %261 = vmatmul.bf16.gmra.mxu0 %v209
    %v262 = vpop.f32.mrf.mxu0
    %v263 = vadd.f32 %v169, %v262
    %v264 = vpop.f32.mrf.mxu0
    %v265 = vadd.f32 %v171, %v264
    %266 = vmatmul.bf16.gmra.mxu0 %v212
    %v267 = vpop.f32.mrf.mxu0
    %v268 = vadd.f32 %v174, %v267
    %v269 = vpop.f32.mrf.mxu0
    %v270 = vadd.f32 %v176, %v269
    %271 = vdwg.mxu0
    %s272 = scalar_lea.vmem %s1, 64
    %v273 = vld [vmem:[%s272] sm:$0xf]
    %v274 = vld [vmem:[%s272 + $0x4] sm:$0xf]
    %v275 = vld [vmem:[%s272 + $0x8] sm:$0xf]
    %v276 = vld [vmem:[%s272 + $0xc] sm:$0xf]
    %v277 = vld [vmem:[%s272 + $0x10] sm:$0xf]
    %v278 = vld [vmem:[%s272 + $0x14] sm:$0xf]
    %v279 = vld [vmem:[%s272 + $0x18] sm:$0xf]
    %v280 = vld [vmem:[%s272 + $0x1c] sm:$0xf]
    %v289 = vunpack.c.l.b16 %v273
    %v290 = vunpack.c.l.b16 %v274
    %v291 = vunpack.c.l.b16 %v275
    %v292 = vunpack.c.l.b16 %v276
    %v293 = vunpack.c.l.b16 %v277
    %v294 = vunpack.c.l.b16 %v278
    %v295 = vunpack.c.l.b16 %v279
    %v296 = vunpack.c.l.b16 %v280
    %v297 = vpack.c.b16 %v290, %v289
    %v298 = vpack.c.b16 %v292, %v291
    %v299 = vpack.c.b16 %v294, %v293
    %v300 = vpack.c.b16 %v296, %v295
    %301 = vrot.lane.b32.xlu0 %v88, 126
    %v302 = vpop.permute.xlu0 %301
    %303 = vrot.lane.b32.xlu0 %v89, 126
    %v304 = vpop.permute.xlu0 %303
    %305 = vrot.lane.b32.xlu0 %v90, 126
    %v306 = vpop.permute.xlu0 %305
    %307 = vrot.lane.b32.xlu0 %v91, 126
    %v308 = vpop.permute.xlu0 %307
    %vm309 = vcmask 1031168
    %v310 = vsel %vm309, %v302, %v304
    %v311 = vsel %vm309, %v306, %v308
    %v317 = vsel %vm107, %v297, 0
    %v320 = vsel %vm107, %v298, 0
    %v323 = vsel %vm107, %v299, 0
    %v326 = vsel %vm107, %v300, 0
    %328 = vmatpush.bf16.msra.mxu0 0
    %329 = vmatpush.bf16.msra.mxu0 0
    %330 = vmatpush.bf16.msra.mxu0 0
    %331 = vmatpush.bf16.msra.mxu0 0
    %332 = vmatpush.bf16.msra.mxu0 0
    %333 = vmatpush.bf16.msra.mxu0 0
    %334 = vmatpush.bf16.msra.mxu0 %v311
    %335 = vmatpush.bf16.msra.mxu0 %v310
    %336 = vmatmul.bf16.gmra.mxu0 %v317
    %v337 = vpop.f32.mrf.mxu0
    %v338 = vadd.f32 0.0, %v337
    %v339 = vpop.f32.mrf.mxu0
    %v340 = vadd.f32 0.0, %v339
    %341 = vmatmul.bf16.gmra.mxu0 %v320
    %v342 = vpop.f32.mrf.mxu0
    %v343 = vadd.f32 0.0, %v342
    %v344 = vpop.f32.mrf.mxu0
    %v345 = vadd.f32 0.0, %v344
    %346 = vmatmul.bf16.gmra.mxu0 %v323
    %v347 = vpop.f32.mrf.mxu0
    %v348 = vadd.f32 0.0, %v347
    %v349 = vpop.f32.mrf.mxu0
    %v350 = vadd.f32 0.0, %v349
    %351 = vmatmul.bf16.gmra.mxu0 %v326
    %v352 = vpop.f32.mrf.mxu0
    %v353 = vadd.f32 0.0, %v352
    %v354 = vpop.f32.mrf.mxu0
    %v355 = vadd.f32 0.0, %v354
    %356 = vdwg.mxu0
    %357 = vmatpush.bf16.msra.mxu0 0
    %358 = vmatpush.bf16.msra.mxu0 0
    %359 = vmatpush.bf16.msra.mxu0 0
    %360 = vmatpush.bf16.msra.mxu0 0
    %361 = vmatpush.bf16.msra.mxu0 0
    %362 = vmatpush.bf16.msra.mxu0 0
    %363 = vmatpush.bf16.msra.mxu0 %v308
    %364 = vmatpush.bf16.msra.mxu0 %v304
    %365 = vmatmul.bf16.gmra.mxu0 %v317
    %v366 = vpop.f32.mrf.mxu0
    %v367 = vadd.f32 0.0, %v366
    %v368 = vpop.f32.mrf.mxu0
    %v369 = vadd.f32 0.0, %v368
    %370 = vmatmul.bf16.gmra.mxu0 %v320
    %v371 = vpop.f32.mrf.mxu0
    %v372 = vadd.f32 0.0, %v371
    %v373 = vpop.f32.mrf.mxu0
    %v374 = vadd.f32 0.0, %v373
    %375 = vmatmul.bf16.gmra.mxu0 %v323
    %v376 = vpop.f32.mrf.mxu0
    %v377 = vadd.f32 0.0, %v376
    %v378 = vpop.f32.mrf.mxu0
    %v379 = vadd.f32 0.0, %v378
    %380 = vmatmul.bf16.gmra.mxu0 %v326
    %v381 = vpop.f32.mrf.mxu0
    %v382 = vadd.f32 0.0, %v381
    %v383 = vpop.f32.mrf.mxu0
    %v384 = vadd.f32 0.0, %v383
    %385 = vdwg.mxu0
    %v386 = vadd.f32 %v224, %v338
    %v387 = vadd.f32 %v253, %v367
    %v388 = vadd.f32 %v226, %v340
    %v389 = vadd.f32 %v255, %v369
    %v390 = vadd.f32 %v229, %v343
    %v391 = vadd.f32 %v258, %v372
    %v392 = vadd.f32 %v231, %v345
    %v393 = vadd.f32 %v260, %v374
    %v394 = vadd.f32 %v234, %v348
    %v395 = vadd.f32 %v263, %v377
    %v396 = vadd.f32 %v236, %v350
    %v397 = vadd.f32 %v265, %v379
    %v398 = vadd.f32 %v239, %v353
    %v399 = vadd.f32 %v268, %v382
    %v400 = vadd.f32 %v241, %v355
    %v401 = vadd.f32 %v270, %v384
    %s402 = scalar_lea.vmem %s1, 96
    %v403 = vld [vmem:[%s402] sm:$0xf]
    %v404 = vld [vmem:[%s402 + $0x4] sm:$0xf]
    %v405 = vld [vmem:[%s402 + $0x8] sm:$0xf]
    %v406 = vld [vmem:[%s402 + $0xc] sm:$0xf]
    %v407 = vld [vmem:[%s402 + $0x10] sm:$0xf]
    %v408 = vld [vmem:[%s402 + $0x14] sm:$0xf]
    %v409 = vld [vmem:[%s402 + $0x18] sm:$0xf]
    %v410 = vld [vmem:[%s402 + $0x1c] sm:$0xf]
    %v419 = vunpack.c.l.b16 %v403
    %v420 = vunpack.c.l.b16 %v404
    %v421 = vunpack.c.l.b16 %v405
    %v422 = vunpack.c.l.b16 %v406
    %v423 = vunpack.c.l.b16 %v407
    %v424 = vunpack.c.l.b16 %v408
    %v425 = vunpack.c.l.b16 %v409
    %v426 = vunpack.c.l.b16 %v410
    %v427 = vpack.c.b16 %v420, %v419
    %v428 = vpack.c.b16 %v422, %v421
    %v429 = vpack.c.b16 %v424, %v423
    %v430 = vpack.c.b16 %v426, %v425
    %431 = vrot.lane.b32.xlu0 %v88, 118
    %v432 = vpop.permute.xlu0 %431
    %433 = vrot.lane.b32.xlu0 %v89, 118
    %v434 = vpop.permute.xlu0 %433
    %435 = vrot.lane.b32.xlu0 %v90, 118
    %v436 = vpop.permute.xlu0 %435
    %437 = vrot.lane.b32.xlu0 %v91, 118
    %v438 = vpop.permute.xlu0 %437
    %vm439 = vcmask 965632
    %v440 = vsel %vm439, %v432, %v434
    %v441 = vsel %vm439, %v436, %v438
    %v447 = vsel %vm107, %v427, 0
    %v450 = vsel %vm107, %v428, 0
    %v453 = vsel %vm107, %v429, 0
    %v456 = vsel %vm107, %v430, 0
    %458 = vmatpush.bf16.msra.mxu0 0
    %459 = vmatpush.bf16.msra.mxu0 0
    %460 = vmatpush.bf16.msra.mxu0 0
    %461 = vmatpush.bf16.msra.mxu0 0
    %462 = vmatpush.bf16.msra.mxu0 0
    %463 = vmatpush.bf16.msra.mxu0 0
    %464 = vmatpush.bf16.msra.mxu0 %v441
    %465 = vmatpush.bf16.msra.mxu0 %v440
    %466 = vmatmul.bf16.gmra.mxu0 %v447
    %v467 = vpop.f32.mrf.mxu0
    %v468 = vadd.f32 0.0, %v467
    %v469 = vpop.f32.mrf.mxu0
    %v470 = vadd.f32 0.0, %v469
    %471 = vmatmul.bf16.gmra.mxu0 %v450
    %v472 = vpop.f32.mrf.mxu0
    %v473 = vadd.f32 0.0, %v472
    %v474 = vpop.f32.mrf.mxu0
    %v475 = vadd.f32 0.0, %v474
    %476 = vmatmul.bf16.gmra.mxu0 %v453
    %v477 = vpop.f32.mrf.mxu0
    %v478 = vadd.f32 0.0, %v477
    %v479 = vpop.f32.mrf.mxu0
    %v480 = vadd.f32 0.0, %v479
    %481 = vmatmul.bf16.gmra.mxu0 %v456
    %v482 = vpop.f32.mrf.mxu0
    %v483 = vadd.f32 0.0, %v482
    %v484 = vpop.f32.mrf.mxu0
    %v485 = vadd.f32 0.0, %v484
    %486 = vdwg.mxu0
    %487 = vmatpush.bf16.msra.mxu0 0
    %488 = vmatpush.bf16.msra.mxu0 0
    %489 = vmatpush.bf16.msra.mxu0 0
    %490 = vmatpush.bf16.msra.mxu0 0
    %491 = vmatpush.bf16.msra.mxu0 0
    %492 = vmatpush.bf16.msra.mxu0 0
    %493 = vmatpush.bf16.msra.mxu0 %v438
    %494 = vmatpush.bf16.msra.mxu0 %v434
    %495 = vmatmul.bf16.gmra.mxu0 %v447
    %v496 = vpop.f32.mrf.mxu0
    %v497 = vadd.f32 0.0, %v496
    %v498 = vpop.f32.mrf.mxu0
    %v499 = vadd.f32 0.0, %v498
    %500 = vmatmul.bf16.gmra.mxu0 %v450
    %v501 = vpop.f32.mrf.mxu0
    %v502 = vadd.f32 0.0, %v501
    %v503 = vpop.f32.mrf.mxu0
    %v504 = vadd.f32 0.0, %v503
    %505 = vmatmul.bf16.gmra.mxu0 %v453
    %v506 = vpop.f32.mrf.mxu0
    %v507 = vadd.f32 0.0, %v506
    %v508 = vpop.f32.mrf.mxu0
    %v509 = vadd.f32 0.0, %v508
    %510 = vmatmul.bf16.gmra.mxu0 %v456
    %v511 = vpop.f32.mrf.mxu0
    %v512 = vadd.f32 0.0, %v511
    %v513 = vpop.f32.mrf.mxu0
    %v514 = vadd.f32 0.0, %v513
    %515 = vdwg.mxu0
    %v516 = vadd.f32 %v386, %v468
    %v517 = vadd.f32 %v387, %v497
    %v518 = vadd.f32 %v388, %v470
    %v519 = vadd.f32 %v389, %v499
    %v520 = vadd.f32 %v390, %v473
    %v521 = vadd.f32 %v391, %v502
    %v522 = vadd.f32 %v392, %v475
    %v523 = vadd.f32 %v393, %v504
    %v524 = vadd.f32 %v394, %v478
    %v525 = vadd.f32 %v395, %v507
    %v526 = vadd.f32 %v396, %v480
    %v527 = vadd.f32 %v397, %v509
    %v528 = vadd.f32 %v398, %v483
    %v529 = vadd.f32 %v399, %v512
    %v530 = vadd.f32 %v400, %v485
    %v531 = vadd.f32 %v401, %v514
    %s532 = scalar_lea.vmem %s1, 128
    %v533 = vld [vmem:[%s532] sm:$0xf]
    %v534 = vld [vmem:[%s532 + $0x4] sm:$0xf]
    %v535 = vld [vmem:[%s532 + $0x8] sm:$0xf]
    %v536 = vld [vmem:[%s532 + $0xc] sm:$0xf]
    %v537 = vld [vmem:[%s532 + $0x10] sm:$0xf]
    %v538 = vld [vmem:[%s532 + $0x14] sm:$0xf]
    %v539 = vld [vmem:[%s532 + $0x18] sm:$0xf]
    %v540 = vld [vmem:[%s532 + $0x1c] sm:$0xf]
    %v549 = vunpack.c.l.b16 %v533
    %v550 = vunpack.c.l.b16 %v534
    %v551 = vunpack.c.l.b16 %v535
    %v552 = vunpack.c.l.b16 %v536
    %v553 = vunpack.c.l.b16 %v537
    %v554 = vunpack.c.l.b16 %v538
    %v555 = vunpack.c.l.b16 %v539
    %v556 = vunpack.c.l.b16 %v540
    %v557 = vpack.c.b16 %v550, %v549
    %v558 = vpack.c.b16 %v552, %v551
    %v559 = vpack.c.b16 %v554, %v553
    %v560 = vpack.c.b16 %v556, %v555
    %561 = vrot.lane.b32.xlu0 %v88, 117
    %v562 = vpop.permute.xlu0 %561
    %563 = vrot.lane.b32.xlu0 %v89, 117
    %v564 = vpop.permute.xlu0 %563
    %565 = vrot.lane.b32.xlu0 %v90, 117
    %v566 = vpop.permute.xlu0 %565
    %567 = vrot.lane.b32.xlu0 %v91, 117
    %v568 = vpop.permute.xlu0 %567
    %vm569 = vcmask 957440
    %v570 = vsel %vm569, %v562, %v564
    %v571 = vsel %vm569, %v566, %v568
    %v577 = vsel %vm107, %v557, 0
    %v580 = vsel %vm107, %v558, 0
    %v583 = vsel %vm107, %v559, 0
    %v586 = vsel %vm107, %v560, 0
    %588 = vmatpush.bf16.msra.mxu0 0
    %589 = vmatpush.bf16.msra.mxu0 0
    %590 = vmatpush.bf16.msra.mxu0 0
    %591 = vmatpush.bf16.msra.mxu0 0
    %592 = vmatpush.bf16.msra.mxu0 0
    %593 = vmatpush.bf16.msra.mxu0 0
    %594 = vmatpush.bf16.msra.mxu0 %v571
    %595 = vmatpush.bf16.msra.mxu0 %v570
    %596 = vmatmul.bf16.gmra.mxu0 %v577
    %v597 = vpop.f32.mrf.mxu0
    %v598 = vadd.f32 0.0, %v597
    %v599 = vpop.f32.mrf.mxu0
    %v600 = vadd.f32 0.0, %v599
    %601 = vmatmul.bf16.gmra.mxu0 %v580
    %v602 = vpop.f32.mrf.mxu0
    %v603 = vadd.f32 0.0, %v602
    %v604 = vpop.f32.mrf.mxu0
    %v605 = vadd.f32 0.0, %v604
    %606 = vmatmul.bf16.gmra.mxu0 %v583
    %v607 = vpop.f32.mrf.mxu0
    %v608 = vadd.f32 0.0, %v607
    %v609 = vpop.f32.mrf.mxu0
    %v610 = vadd.f32 0.0, %v609
    %611 = vmatmul.bf16.gmra.mxu0 %v586
    %v612 = vpop.f32.mrf.mxu0
    %v613 = vadd.f32 0.0, %v612
    %v614 = vpop.f32.mrf.mxu0
    %v615 = vadd.f32 0.0, %v614
    %616 = vdwg.mxu0
    %617 = vmatpush.bf16.msra.mxu0 0
    %618 = vmatpush.bf16.msra.mxu0 0
    %619 = vmatpush.bf16.msra.mxu0 0
    %620 = vmatpush.bf16.msra.mxu0 0
    %621 = vmatpush.bf16.msra.mxu0 0
    %622 = vmatpush.bf16.msra.mxu0 0
    %623 = vmatpush.bf16.msra.mxu0 %v568
    %624 = vmatpush.bf16.msra.mxu0 %v564
    %625 = vmatmul.bf16.gmra.mxu0 %v577
    %v626 = vpop.f32.mrf.mxu0
    %v627 = vadd.f32 0.0, %v626
    %v628 = vpop.f32.mrf.mxu0
    %v629 = vadd.f32 0.0, %v628
    %630 = vmatmul.bf16.gmra.mxu0 %v580
    %v631 = vpop.f32.mrf.mxu0
    %v632 = vadd.f32 0.0, %v631
    %v633 = vpop.f32.mrf.mxu0
    %v634 = vadd.f32 0.0, %v633
    %635 = vmatmul.bf16.gmra.mxu0 %v583
    %v636 = vpop.f32.mrf.mxu0
    %v637 = vadd.f32 0.0, %v636
    %v638 = vpop.f32.mrf.mxu0
    %v639 = vadd.f32 0.0, %v638
    %640 = vmatmul.bf16.gmra.mxu0 %v586
    %v641 = vpop.f32.mrf.mxu0
    %v642 = vadd.f32 0.0, %v641
    %v643 = vpop.f32.mrf.mxu0
    %v644 = vadd.f32 0.0, %v643
    %645 = vdwg.mxu0
    %v646 = vadd.f32 %v516, %v598
    %v647 = vadd.f32 %v517, %v627
    %v648 = vadd.f32 %v518, %v600
    %v649 = vadd.f32 %v519, %v629
    %v650 = vadd.f32 %v520, %v603
    %v651 = vadd.f32 %v521, %v632
    %v652 = vadd.f32 %v522, %v605
    %v653 = vadd.f32 %v523, %v634
    %v654 = vadd.f32 %v524, %v608
    %v655 = vadd.f32 %v525, %v637
    %v656 = vadd.f32 %v526, %v610
    %v657 = vadd.f32 %v527, %v639
    %v658 = vadd.f32 %v528, %v613
    %v659 = vadd.f32 %v529, %v642
    %v660 = vadd.f32 %v530, %v615
    %v661 = vadd.f32 %v531, %v644
    %s662 = scalar_lea.vmem %s1, 160
    %v663 = vld [vmem:[%s662] sm:$0xf]
    %v664 = vld [vmem:[%s662 + $0x4] sm:$0xf]
    %v665 = vld [vmem:[%s662 + $0x8] sm:$0xf]
    %v666 = vld [vmem:[%s662 + $0xc] sm:$0xf]
    %v667 = vld [vmem:[%s662 + $0x10] sm:$0xf]
    %v668 = vld [vmem:[%s662 + $0x14] sm:$0xf]
    %v669 = vld [vmem:[%s662 + $0x18] sm:$0xf]
    %v670 = vld [vmem:[%s662 + $0x1c] sm:$0xf]
    %v679 = vunpack.c.l.b16 %v663
    %v680 = vunpack.c.l.b16 %v664
    %v681 = vunpack.c.l.b16 %v665
    %v682 = vunpack.c.l.b16 %v666
    %v683 = vunpack.c.l.b16 %v667
    %v684 = vunpack.c.l.b16 %v668
    %v685 = vunpack.c.l.b16 %v669
    %v686 = vunpack.c.l.b16 %v670
    %v687 = vpack.c.b16 %v680, %v679
    %v688 = vpack.c.b16 %v682, %v681
    %v689 = vpack.c.b16 %v684, %v683
    %v690 = vpack.c.b16 %v686, %v685
    %691 = vrot.lane.b32.xlu0 %v88, 116
    %v692 = vpop.permute.xlu0 %691
    %693 = vrot.lane.b32.xlu0 %v89, 116
    %v694 = vpop.permute.xlu0 %693
    %695 = vrot.lane.b32.xlu0 %v90, 116
    %v696 = vpop.permute.xlu0 %695
    %697 = vrot.lane.b32.xlu0 %v91, 116
    %v698 = vpop.permute.xlu0 %697
    %vm699 = vcmask 949248
    %v700 = vsel %vm699, %v692, %v694
    %v701 = vsel %vm699, %v696, %v698
    %v707 = vsel %vm107, %v687, 0
    %v710 = vsel %vm107, %v688, 0
    %v713 = vsel %vm107, %v689, 0
    %v716 = vsel %vm107, %v690, 0
    %718 = vmatpush.bf16.msra.mxu0 0
    %719 = vmatpush.bf16.msra.mxu0 0
    %720 = vmatpush.bf16.msra.mxu0 0
    %721 = vmatpush.bf16.msra.mxu0 0
    %722 = vmatpush.bf16.msra.mxu0 0
    %723 = vmatpush.bf16.msra.mxu0 0
    %724 = vmatpush.bf16.msra.mxu0 %v701
    %725 = vmatpush.bf16.msra.mxu0 %v700
    %726 = vmatmul.bf16.gmra.mxu0 %v707
    %v727 = vpop.f32.mrf.mxu0
    %v728 = vadd.f32 0.0, %v727
    %v729 = vpop.f32.mrf.mxu0
    %v730 = vadd.f32 0.0, %v729
    %731 = vmatmul.bf16.gmra.mxu0 %v710
    %v732 = vpop.f32.mrf.mxu0
    %v733 = vadd.f32 0.0, %v732
    %v734 = vpop.f32.mrf.mxu0
    %v735 = vadd.f32 0.0, %v734
    %736 = vmatmul.bf16.gmra.mxu0 %v713
    %v737 = vpop.f32.mrf.mxu0
    %v738 = vadd.f32 0.0, %v737
    %v739 = vpop.f32.mrf.mxu0
    %v740 = vadd.f32 0.0, %v739
    %741 = vmatmul.bf16.gmra.mxu0 %v716
    %v742 = vpop.f32.mrf.mxu0
    %v743 = vadd.f32 0.0, %v742
    %v744 = vpop.f32.mrf.mxu0
    %v745 = vadd.f32 0.0, %v744
    %746 = vdwg.mxu0
    %747 = vmatpush.bf16.msra.mxu0 0
    %748 = vmatpush.bf16.msra.mxu0 0
    %749 = vmatpush.bf16.msra.mxu0 0
    %750 = vmatpush.bf16.msra.mxu0 0
    %751 = vmatpush.bf16.msra.mxu0 0
    %752 = vmatpush.bf16.msra.mxu0 0
    %753 = vmatpush.bf16.msra.mxu0 %v698
    %754 = vmatpush.bf16.msra.mxu0 %v694
    %755 = vmatmul.bf16.gmra.mxu0 %v707
    %v756 = vpop.f32.mrf.mxu0
    %v757 = vadd.f32 0.0, %v756
    %v758 = vpop.f32.mrf.mxu0
    %v759 = vadd.f32 0.0, %v758
    %760 = vmatmul.bf16.gmra.mxu0 %v710
    %v761 = vpop.f32.mrf.mxu0
    %v762 = vadd.f32 0.0, %v761
    %v763 = vpop.f32.mrf.mxu0
    %v764 = vadd.f32 0.0, %v763
    %765 = vmatmul.bf16.gmra.mxu0 %v713
    %v766 = vpop.f32.mrf.mxu0
    %v767 = vadd.f32 0.0, %v766
    %v768 = vpop.f32.mrf.mxu0
    %v769 = vadd.f32 0.0, %v768
    %770 = vmatmul.bf16.gmra.mxu0 %v716
    %v771 = vpop.f32.mrf.mxu0
    %v772 = vadd.f32 0.0, %v771
    %v773 = vpop.f32.mrf.mxu0
    %v774 = vadd.f32 0.0, %v773
    %775 = vdwg.mxu0
    %v776 = vadd.f32 %v646, %v728
    %v777 = vadd.f32 %v647, %v757
    %v778 = vadd.f32 %v648, %v730
    %v779 = vadd.f32 %v649, %v759
    %v780 = vadd.f32 %v650, %v733
    %v781 = vadd.f32 %v651, %v762
    %v782 = vadd.f32 %v652, %v735
    %v783 = vadd.f32 %v653, %v764
    %v784 = vadd.f32 %v654, %v738
    %v785 = vadd.f32 %v655, %v767
    %v786 = vadd.f32 %v656, %v740
    %v787 = vadd.f32 %v657, %v769
    %v788 = vadd.f32 %v658, %v743
    %v789 = vadd.f32 %v659, %v772
    %v790 = vadd.f32 %v660, %v745
    %v791 = vadd.f32 %v661, %v774
    %s792 = scalar_lea.vmem %s1, 192
    %v793 = vld [vmem:[%s792] sm:$0xf]
    %v794 = vld [vmem:[%s792 + $0x4] sm:$0xf]
    %v795 = vld [vmem:[%s792 + $0x8] sm:$0xf]
    %v796 = vld [vmem:[%s792 + $0xc] sm:$0xf]
    %v797 = vld [vmem:[%s792 + $0x10] sm:$0xf]
    %v798 = vld [vmem:[%s792 + $0x14] sm:$0xf]
    %v799 = vld [vmem:[%s792 + $0x18] sm:$0xf]
    %v800 = vld [vmem:[%s792 + $0x1c] sm:$0xf]
    %v809 = vunpack.c.l.b16 %v793
    %v810 = vunpack.c.l.b16 %v794
    %v811 = vunpack.c.l.b16 %v795
    %v812 = vunpack.c.l.b16 %v796
    %v813 = vunpack.c.l.b16 %v797
    %v814 = vunpack.c.l.b16 %v798
    %v815 = vunpack.c.l.b16 %v799
    %v816 = vunpack.c.l.b16 %v800
    %v817 = vpack.c.b16 %v810, %v809
    %v818 = vpack.c.b16 %v812, %v811
    %v819 = vpack.c.b16 %v814, %v813
    %v820 = vpack.c.b16 %v816, %v815
    %821 = vrot.lane.b32.xlu0 %v88, 108
    %v822 = vpop.permute.xlu0 %821
    %823 = vrot.lane.b32.xlu0 %v89, 108
    %v824 = vpop.permute.xlu0 %823
    %825 = vrot.lane.b32.xlu0 %v90, 108
    %v826 = vpop.permute.xlu0 %825
    %827 = vrot.lane.b32.xlu0 %v91, 108
    %v828 = vpop.permute.xlu0 %827
    %vm829 = vcmask 883712
    %v830 = vsel %vm829, %v822, %v824
    %v831 = vsel %vm829, %v826, %v828
    %v837 = vsel %vm107, %v817, 0
    %v840 = vsel %vm107, %v818, 0
    %v843 = vsel %vm107, %v819, 0
    %v846 = vsel %vm107, %v820, 0
    %848 = vmatpush.bf16.msra.mxu0 0
    %849 = vmatpush.bf16.msra.mxu0 0
    %850 = vmatpush.bf16.msra.mxu0 0
    %851 = vmatpush.bf16.msra.mxu0 0
    %852 = vmatpush.bf16.msra.mxu0 0
    %853 = vmatpush.bf16.msra.mxu0 0
    %854 = vmatpush.bf16.msra.mxu0 %v831
    %855 = vmatpush.bf16.msra.mxu0 %v830
    %856 = vmatmul.bf16.gmra.mxu0 %v837
    %v857 = vpop.f32.mrf.mxu0
    %v858 = vadd.f32 0.0, %v857
    %v859 = vpop.f32.mrf.mxu0
    %v860 = vadd.f32 0.0, %v859
    %861 = vmatmul.bf16.gmra.mxu0 %v840
    %v862 = vpop.f32.mrf.mxu0
    %v863 = vadd.f32 0.0, %v862
    %v864 = vpop.f32.mrf.mxu0
    %v865 = vadd.f32 0.0, %v864
    %866 = vmatmul.bf16.gmra.mxu0 %v843
    %v867 = vpop.f32.mrf.mxu0
    %v868 = vadd.f32 0.0, %v867
    %v869 = vpop.f32.mrf.mxu0
    %v870 = vadd.f32 0.0, %v869
    %871 = vmatmul.bf16.gmra.mxu0 %v846
    %v872 = vpop.f32.mrf.mxu0
    %v873 = vadd.f32 0.0, %v872
    %v874 = vpop.f32.mrf.mxu0
    %v875 = vadd.f32 0.0, %v874
    %876 = vdwg.mxu0
    %877 = vmatpush.bf16.msra.mxu0 0
    %878 = vmatpush.bf16.msra.mxu0 0
    %879 = vmatpush.bf16.msra.mxu0 0
    %880 = vmatpush.bf16.msra.mxu0 0
    %881 = vmatpush.bf16.msra.mxu0 0
    %882 = vmatpush.bf16.msra.mxu0 0
    %883 = vmatpush.bf16.msra.mxu0 %v828
    %884 = vmatpush.bf16.msra.mxu0 %v824
    %885 = vmatmul.bf16.gmra.mxu0 %v837
    %v886 = vpop.f32.mrf.mxu0
    %v887 = vadd.f32 0.0, %v886
    %v888 = vpop.f32.mrf.mxu0
    %v889 = vadd.f32 0.0, %v888
    %890 = vmatmul.bf16.gmra.mxu0 %v840
    %v891 = vpop.f32.mrf.mxu0
    %v892 = vadd.f32 0.0, %v891
    %v893 = vpop.f32.mrf.mxu0
    %v894 = vadd.f32 0.0, %v893
    %895 = vmatmul.bf16.gmra.mxu0 %v843
    %v896 = vpop.f32.mrf.mxu0
    %v897 = vadd.f32 0.0, %v896
    %v898 = vpop.f32.mrf.mxu0
    %v899 = vadd.f32 0.0, %v898
    %900 = vmatmul.bf16.gmra.mxu0 %v846
    %v901 = vpop.f32.mrf.mxu0
    %v902 = vadd.f32 0.0, %v901
    %v903 = vpop.f32.mrf.mxu0
    %v904 = vadd.f32 0.0, %v903
    %905 = vdwg.mxu0
    %v906 = vadd.f32 %v776, %v858
    %v907 = vadd.f32 %v777, %v887
    %v908 = vadd.f32 %v778, %v860
    %v909 = vadd.f32 %v779, %v889
    %v910 = vadd.f32 %v780, %v863
    %v911 = vadd.f32 %v781, %v892
    %v912 = vadd.f32 %v782, %v865
    %v913 = vadd.f32 %v783, %v894
    %v914 = vadd.f32 %v784, %v868
    %v915 = vadd.f32 %v785, %v897
    %v916 = vadd.f32 %v786, %v870
    %v917 = vadd.f32 %v787, %v899
    %v918 = vadd.f32 %v788, %v873
    %v919 = vadd.f32 %v789, %v902
    %v920 = vadd.f32 %v790, %v875
    %v921 = vadd.f32 %v791, %v904
    %s922 = scalar_lea.vmem %s1, 224
    %v923 = vld [vmem:[%s922] sm:$0xf]
    %v924 = vld [vmem:[%s922 + $0x4] sm:$0xf]
    %v925 = vld [vmem:[%s922 + $0x8] sm:$0xf]
    %v926 = vld [vmem:[%s922 + $0xc] sm:$0xf]
    %v927 = vld [vmem:[%s922 + $0x10] sm:$0xf]
    %v928 = vld [vmem:[%s922 + $0x14] sm:$0xf]
    %v929 = vld [vmem:[%s922 + $0x18] sm:$0xf]
    %v930 = vld [vmem:[%s922 + $0x1c] sm:$0xf]
    %v939 = vunpack.c.l.b16 %v923
    %v940 = vunpack.c.l.b16 %v924
    %v941 = vunpack.c.l.b16 %v925
    %v942 = vunpack.c.l.b16 %v926
    %v943 = vunpack.c.l.b16 %v927
    %v944 = vunpack.c.l.b16 %v928
    %v945 = vunpack.c.l.b16 %v929
    %v946 = vunpack.c.l.b16 %v930
    %v947 = vpack.c.b16 %v940, %v939
    %v948 = vpack.c.b16 %v942, %v941
    %v949 = vpack.c.b16 %v944, %v943
    %v950 = vpack.c.b16 %v946, %v945
    %951 = vrot.lane.b32.xlu0 %v88, 107
    %v952 = vpop.permute.xlu0 %951
    %953 = vrot.lane.b32.xlu0 %v89, 107
    %v954 = vpop.permute.xlu0 %953
    %955 = vrot.lane.b32.xlu0 %v90, 107
    %v956 = vpop.permute.xlu0 %955
    %957 = vrot.lane.b32.xlu0 %v91, 107
    %v958 = vpop.permute.xlu0 %957
    %vm959 = vcmask 875520
    %v960 = vsel %vm959, %v952, %v954
    %v961 = vsel %vm959, %v956, %v958
    %v967 = vsel %vm107, %v947, 0
    %v970 = vsel %vm107, %v948, 0
    %v973 = vsel %vm107, %v949, 0
    %v976 = vsel %vm107, %v950, 0
    %978 = vmatpush.bf16.msra.mxu0 0
    %979 = vmatpush.bf16.msra.mxu0 0
    %980 = vmatpush.bf16.msra.mxu0 0
    %981 = vmatpush.bf16.msra.mxu0 0
    %982 = vmatpush.bf16.msra.mxu0 0
    %983 = vmatpush.bf16.msra.mxu0 0
    %984 = vmatpush.bf16.msra.mxu0 %v961
    %985 = vmatpush.bf16.msra.mxu0 %v960
    %986 = vmatmul.bf16.gmra.mxu0 %v967
    %v987 = vpop.f32.mrf.mxu0
    %v988 = vadd.f32 0.0, %v987
    %v989 = vpop.f32.mrf.mxu0
    %v990 = vadd.f32 0.0, %v989
    %991 = vmatmul.bf16.gmra.mxu0 %v970
    %v992 = vpop.f32.mrf.mxu0
    %v993 = vadd.f32 0.0, %v992
    %v994 = vpop.f32.mrf.mxu0
    %v995 = vadd.f32 0.0, %v994
    %996 = vmatmul.bf16.gmra.mxu0 %v973
    %v997 = vpop.f32.mrf.mxu0
    %v998 = vadd.f32 0.0, %v997
    %v999 = vpop.f32.mrf.mxu0
    %v1000 = vadd.f32 0.0, %v999
    %1001 = vmatmul.bf16.gmra.mxu0 %v976
    %v1002 = vpop.f32.mrf.mxu0
    %v1003 = vadd.f32 0.0, %v1002
    %v1004 = vpop.f32.mrf.mxu0
    %v1005 = vadd.f32 0.0, %v1004
    %1006 = vdwg.mxu0
    %1007 = vmatpush.bf16.msra.mxu0 0
    %1008 = vmatpush.bf16.msra.mxu0 0
    %1009 = vmatpush.bf16.msra.mxu0 0
    %1010 = vmatpush.bf16.msra.mxu0 0
    %1011 = vmatpush.bf16.msra.mxu0 0
    %1012 = vmatpush.bf16.msra.mxu0 0
    %1013 = vmatpush.bf16.msra.mxu0 %v958
    %1014 = vmatpush.bf16.msra.mxu0 %v954
    %1015 = vmatmul.bf16.gmra.mxu0 %v967
    %v1016 = vpop.f32.mrf.mxu0
    %v1017 = vadd.f32 0.0, %v1016
    %v1018 = vpop.f32.mrf.mxu0
    %v1019 = vadd.f32 0.0, %v1018
    %1020 = vmatmul.bf16.gmra.mxu0 %v970
    %v1021 = vpop.f32.mrf.mxu0
    %v1022 = vadd.f32 0.0, %v1021
    %v1023 = vpop.f32.mrf.mxu0
    %v1024 = vadd.f32 0.0, %v1023
    %1025 = vmatmul.bf16.gmra.mxu0 %v973
    %v1026 = vpop.f32.mrf.mxu0
    %v1027 = vadd.f32 0.0, %v1026
    %v1028 = vpop.f32.mrf.mxu0
    %v1029 = vadd.f32 0.0, %v1028
    %1030 = vmatmul.bf16.gmra.mxu0 %v976
    %v1031 = vpop.f32.mrf.mxu0
    %v1032 = vadd.f32 0.0, %v1031
    %v1033 = vpop.f32.mrf.mxu0
    %v1034 = vadd.f32 0.0, %v1033
    %1035 = vdwg.mxu0
    %v1036 = vadd.f32 %v906, %v988
    %v1037 = vadd.f32 %v907, %v1017
    %v1038 = vadd.f32 %v908, %v990
    %v1039 = vadd.f32 %v909, %v1019
    %v1040 = vadd.f32 %v910, %v993
    %v1041 = vadd.f32 %v911, %v1022
    %v1042 = vadd.f32 %v912, %v995
    %v1043 = vadd.f32 %v913, %v1024
    %v1044 = vadd.f32 %v914, %v998
    %v1045 = vadd.f32 %v915, %v1027
    %v1046 = vadd.f32 %v916, %v1000
    %v1047 = vadd.f32 %v917, %v1029
    %v1048 = vadd.f32 %v918, %v1003
    %v1049 = vadd.f32 %v919, %v1032
    %v1050 = vadd.f32 %v920, %v1005
    %v1051 = vadd.f32 %v921, %v1034
    %s1052 = scalar_lea.vmem %s1, 256
    %v1053 = vld [vmem:[%s1052] sm:$0xf]
    %v1054 = vld [vmem:[%s1052 + $0x4] sm:$0xf]
    %v1055 = vld [vmem:[%s1052 + $0x8] sm:$0xf]
    %v1056 = vld [vmem:[%s1052 + $0xc] sm:$0xf]
    %v1057 = vld [vmem:[%s1052 + $0x10] sm:$0xf]
    %v1058 = vld [vmem:[%s1052 + $0x14] sm:$0xf]
    %v1059 = vld [vmem:[%s1052 + $0x18] sm:$0xf]
    %v1060 = vld [vmem:[%s1052 + $0x1c] sm:$0xf]
    %v1069 = vunpack.c.l.b16 %v1053
    %v1070 = vunpack.c.l.b16 %v1054
    %v1071 = vunpack.c.l.b16 %v1055
    %v1072 = vunpack.c.l.b16 %v1056
    %v1073 = vunpack.c.l.b16 %v1057
    %v1074 = vunpack.c.l.b16 %v1058
    %v1075 = vunpack.c.l.b16 %v1059
    %v1076 = vunpack.c.l.b16 %v1060
    %v1077 = vpack.c.b16 %v1070, %v1069
    %v1078 = vpack.c.b16 %v1072, %v1071
    %v1079 = vpack.c.b16 %v1074, %v1073
    %v1080 = vpack.c.b16 %v1076, %v1075
    %1081 = vrot.lane.b32.xlu0 %v88, 106
    %v1082 = vpop.permute.xlu0 %1081
    %1083 = vrot.lane.b32.xlu0 %v89, 106
    %v1084 = vpop.permute.xlu0 %1083
    %1085 = vrot.lane.b32.xlu0 %v90, 106
    %v1086 = vpop.permute.xlu0 %1085
    %1087 = vrot.lane.b32.xlu0 %v91, 106
    %v1088 = vpop.permute.xlu0 %1087
    %vm1089 = vcmask 867328
    %v1090 = vsel %vm1089, %v1082, %v1084
    %v1091 = vsel %vm1089, %v1086, %v1088
    %v1097 = vsel %vm107, %v1077, 0
    %v1100 = vsel %vm107, %v1078, 0
    %v1103 = vsel %vm107, %v1079, 0
    %v1106 = vsel %vm107, %v1080, 0
    %1108 = vmatpush.bf16.msra.mxu0 0
    %1109 = vmatpush.bf16.msra.mxu0 0
    %1110 = vmatpush.bf16.msra.mxu0 0
    %1111 = vmatpush.bf16.msra.mxu0 0
    %1112 = vmatpush.bf16.msra.mxu0 0
    %1113 = vmatpush.bf16.msra.mxu0 0
    %1114 = vmatpush.bf16.msra.mxu0 %v1091
    %1115 = vmatpush.bf16.msra.mxu0 %v1090
    %1116 = vmatmul.bf16.gmra.mxu0 %v1097
    %v1117 = vpop.f32.mrf.mxu0
    %v1118 = vadd.f32 0.0, %v1117
    %v1119 = vpop.f32.mrf.mxu0
    %v1120 = vadd.f32 0.0, %v1119
    %1121 = vmatmul.bf16.gmra.mxu0 %v1100
    %v1122 = vpop.f32.mrf.mxu0
    %v1123 = vadd.f32 0.0, %v1122
    %v1124 = vpop.f32.mrf.mxu0
    %v1125 = vadd.f32 0.0, %v1124
    %1126 = vmatmul.bf16.gmra.mxu0 %v1103
    %v1127 = vpop.f32.mrf.mxu0
    %v1128 = vadd.f32 0.0, %v1127
    %v1129 = vpop.f32.mrf.mxu0
    %v1130 = vadd.f32 0.0, %v1129
    %1131 = vmatmul.bf16.gmra.mxu0 %v1106
    %v1132 = vpop.f32.mrf.mxu0
    %v1133 = vadd.f32 0.0, %v1132
    %v1134 = vpop.f32.mrf.mxu0
    %v1135 = vadd.f32 0.0, %v1134
    %1136 = vdwg.mxu0
    %1137 = vmatpush.bf16.msra.mxu0 0
    %1138 = vmatpush.bf16.msra.mxu0 0
    %1139 = vmatpush.bf16.msra.mxu0 0
    %1140 = vmatpush.bf16.msra.mxu0 0
    %1141 = vmatpush.bf16.msra.mxu0 0
    %1142 = vmatpush.bf16.msra.mxu0 0
    %1143 = vmatpush.bf16.msra.mxu0 %v1088
    %1144 = vmatpush.bf16.msra.mxu0 %v1084
    %1145 = vmatmul.bf16.gmra.mxu0 %v1097
    %v1146 = vpop.f32.mrf.mxu0
    %v1147 = vadd.f32 0.0, %v1146
    %v1148 = vpop.f32.mrf.mxu0
    %v1149 = vadd.f32 0.0, %v1148
    %1150 = vmatmul.bf16.gmra.mxu0 %v1100
    %v1151 = vpop.f32.mrf.mxu0
    %v1152 = vadd.f32 0.0, %v1151
    %v1153 = vpop.f32.mrf.mxu0
    %v1154 = vadd.f32 0.0, %v1153
    %1155 = vmatmul.bf16.gmra.mxu0 %v1103
    %v1156 = vpop.f32.mrf.mxu0
    %v1157 = vadd.f32 0.0, %v1156
    %v1158 = vpop.f32.mrf.mxu0
    %v1159 = vadd.f32 0.0, %v1158
    %1160 = vmatmul.bf16.gmra.mxu0 %v1106
    %v1161 = vpop.f32.mrf.mxu0
    %v1162 = vadd.f32 0.0, %v1161
    %v1163 = vpop.f32.mrf.mxu0
    %v1164 = vadd.f32 0.0, %v1163
    %1165 = vdwg.mxu0
    %v1166 = vadd.f32 %v1036, %v1118
    %v1167 = vadd.f32 %v1037, %v1147
    %v1168 = vadd.f32 %v1038, %v1120
    %v1169 = vadd.f32 %v1039, %v1149
    %v1170 = vadd.f32 %v1040, %v1123
    %v1171 = vadd.f32 %v1041, %v1152
    %v1172 = vadd.f32 %v1042, %v1125
    %v1173 = vadd.f32 %v1043, %v1154
    %v1174 = vadd.f32 %v1044, %v1128
    %v1175 = vadd.f32 %v1045, %v1157
    %v1176 = vadd.f32 %v1046, %v1130
    %v1177 = vadd.f32 %v1047, %v1159
    %v1178 = vadd.f32 %v1048, %v1133
    %v1179 = vadd.f32 %v1049, %v1162
    %v1180 = vadd.f32 %v1050, %v1135
    %v1181 = vadd.f32 %v1051, %v1164
    %v1182 = vld [vmem:[#allocation2] sm:$0x3]
    %v1184 = vperm.slane %v1182, 0
    %v1185 = vperm.slane %v1182, 1
    %v1188 = vmul.f32 %v1166, %v1184
    %v1189 = vmul.f32 %v1167, %v1185
    %v1190 = vmul.f32 %v1168, %v1184
    %v1191 = vmul.f32 %v1169, %v1185
    %v1192 = vmul.f32 %v1170, %v1184
    %v1193 = vmul.f32 %v1171, %v1185
    %v1194 = vmul.f32 %v1172, %v1184
    %v1195 = vmul.f32 %v1173, %v1185
    %v1196 = vmul.f32 %v1174, %v1184
    %v1197 = vmul.f32 %v1175, %v1185
    %v1198 = vmul.f32 %v1176, %v1184
    %v1199 = vmul.f32 %v1177, %v1185
    %v1200 = vmul.f32 %v1178, %v1184
    %v1201 = vmul.f32 %v1179, %v1185
    %v1202 = vmul.f32 %v1180, %v1184
    %v1203 = vmul.f32 %v1181, %v1185
    %vm1204 = vcmask 408576
    %v1205 = vsel %vm1204, %v1189, 0.0
    %v1206 = vadd.f32 %v1188, %v1205
    %1207 = vadd.xlane.f32.xlu0 %v1206
    %v1208 = vpop.xlane.xlu0 %1207
    %v1209 = vsel %vm1204, %v1191, 0.0
    %v1210 = vadd.f32 %v1190, %v1209
    %1211 = vadd.xlane.f32.xlu0 %v1210
    %v1212 = vpop.xlane.xlu0 %1211
    %v1213 = vsel %vm1204, %v1193, 0.0
    %v1214 = vadd.f32 %v1192, %v1213
    %1215 = vadd.xlane.f32.xlu0 %v1214
    %v1216 = vpop.xlane.xlu0 %1215
    %v1217 = vsel %vm1204, %v1195, 0.0
    %v1218 = vadd.f32 %v1194, %v1217
    %1219 = vadd.xlane.f32.xlu0 %v1218
    %v1220 = vpop.xlane.xlu0 %1219
    %v1221 = vsel %vm1204, %v1197, 0.0
    %v1222 = vadd.f32 %v1196, %v1221
    %1223 = vadd.xlane.f32.xlu0 %v1222
    %v1224 = vpop.xlane.xlu0 %1223
    %v1225 = vsel %vm1204, %v1199, 0.0
    %v1226 = vadd.f32 %v1198, %v1225
    %1227 = vadd.xlane.f32.xlu0 %v1226
    %v1228 = vpop.xlane.xlu0 %1227
    %v1229 = vsel %vm1204, %v1201, 0.0
    %v1230 = vadd.f32 %v1200, %v1229
    %1231 = vadd.xlane.f32.xlu0 %v1230
    %v1232 = vpop.xlane.xlu0 %1231
    %v1233 = vsel %vm1204, %v1203, 0.0
    %v1234 = vadd.f32 %v1202, %v1233
    %1235 = vadd.xlane.f32.xlu0 %v1234
    %v1236 = vpop.xlane.xlu0 %1235
    %v1237 = vmul.f32 %v1166, %v1166
    %v1238 = vmul.f32 %v1167, %v1167
    %v1239 = vmul.f32 %v1168, %v1168
    %v1240 = vmul.f32 %v1169, %v1169
    %v1241 = vmul.f32 %v1170, %v1170
    %v1242 = vmul.f32 %v1171, %v1171
    %v1243 = vmul.f32 %v1172, %v1172
    %v1244 = vmul.f32 %v1173, %v1173
    %v1245 = vmul.f32 %v1174, %v1174
    %v1246 = vmul.f32 %v1175, %v1175
    %v1247 = vmul.f32 %v1176, %v1176
    %v1248 = vmul.f32 %v1177, %v1177
    %v1249 = vmul.f32 %v1178, %v1178
    %v1250 = vmul.f32 %v1179, %v1179
    %v1251 = vmul.f32 %v1180, %v1180
    %v1252 = vmul.f32 %v1181, %v1181
    %v1253 = vmul.f32 %v1237, %v1184
    %v1254 = vmul.f32 %v1238, %v1185
    %v1255 = vmul.f32 %v1239, %v1184
    %v1256 = vmul.f32 %v1240, %v1185
    %v1257 = vmul.f32 %v1241, %v1184
    %v1258 = vmul.f32 %v1242, %v1185
    %v1259 = vmul.f32 %v1243, %v1184
    %v1260 = vmul.f32 %v1244, %v1185
    %v1261 = vmul.f32 %v1245, %v1184
    %v1262 = vmul.f32 %v1246, %v1185
    %v1263 = vmul.f32 %v1247, %v1184
    %v1264 = vmul.f32 %v1248, %v1185
    %v1265 = vmul.f32 %v1249, %v1184
    %v1266 = vmul.f32 %v1250, %v1185
    %v1267 = vmul.f32 %v1251, %v1184
    %v1268 = vmul.f32 %v1252, %v1185
    %v1269 = vsel %vm1204, %v1254, 0.0
    %v1270 = vadd.f32 %v1253, %v1269
    %1271 = vadd.xlane.f32.xlu0 %v1270
    %v1272 = vpop.xlane.xlu0 %1271
    %v1273 = vsel %vm1204, %v1256, 0.0
    %v1274 = vadd.f32 %v1255, %v1273
    %1275 = vadd.xlane.f32.xlu0 %v1274
    %v1276 = vpop.xlane.xlu0 %1275
    %v1277 = vsel %vm1204, %v1258, 0.0
    %v1278 = vadd.f32 %v1257, %v1277
    %1279 = vadd.xlane.f32.xlu0 %v1278
    %v1280 = vpop.xlane.xlu0 %1279
    %v1281 = vsel %vm1204, %v1260, 0.0
    %v1282 = vadd.f32 %v1259, %v1281
    %1283 = vadd.xlane.f32.xlu0 %v1282
    %v1284 = vpop.xlane.xlu0 %1283
    %v1285 = vsel %vm1204, %v1262, 0.0
    %v1286 = vadd.f32 %v1261, %v1285
    %1287 = vadd.xlane.f32.xlu0 %v1286
    %v1288 = vpop.xlane.xlu0 %1287
    %v1289 = vsel %vm1204, %v1264, 0.0
    %v1290 = vadd.f32 %v1263, %v1289
    %1291 = vadd.xlane.f32.xlu0 %v1290
    %v1292 = vpop.xlane.xlu0 %1291
    %v1293 = vsel %vm1204, %v1266, 0.0
    %v1294 = vadd.f32 %v1265, %v1293
    %1295 = vadd.xlane.f32.xlu0 %v1294
    %v1296 = vpop.xlane.xlu0 %1295
    %v1297 = vsel %vm1204, %v1268, 0.0
    %v1298 = vadd.f32 %v1267, %v1297
    %1299 = vadd.xlane.f32.xlu0 %v1298
    %v1300 = vpop.xlane.xlu0 %1299
    %v1301 = vadd.f32 %v1208, %v1216
    %v1302 = vadd.f32 %v1212, %v1220
    %v1303 = vadd.f32 %v1301, %v1224
    %v1304 = vadd.f32 %v1302, %v1228
    %v1305 = vadd.f32 %v1303, %v1232
    %v1306 = vadd.f32 %v1304, %v1236
    %v1307 = vadd.f32 %v1272, %v1280
    %v1308 = vadd.f32 %v1276, %v1284
    %v1309 = vadd.f32 %v1307, %v1288
    %v1310 = vadd.f32 %v1308, %v1292
    %v1311 = vadd.f32 %v1309, %v1296
    %v1312 = vadd.f32 %v1310, %v1300
    %v1313 = vmul.f32 %v1305, 0.001953125
    %v1314 = vmul.f32 %v1306, 0.001953125
    %v1315 = vmul.f32 %v1311, 0.001953125
    %v1316 = vmul.f32 %v1312, 0.001953125
    %v1317 = vmul.f32 %v1313, %v1313
    %v1318 = vmul.f32 %v1314, %v1314
    %v1319 = vsub.f32 %v1315, %v1317
    %v1320 = vsub.f32 %v1316, %v1318
    %v1321 = vmax.f32 %v1319, 0.0
    %v1322 = vmax.f32 %v1320, 0.0
    %v1323 = vld [vmem:[%s2] sm:$0xff]
    %v1324 = vld [vmem:[%s2 + $0x8] sm:$0xff]
    %v1325 = vadd.f32 %v1321, 1e-05
    %v1326 = vadd.f32 %v1322, 1e-05
    %v1327 = vrsqrt.pop %v1325
    %v1328 = vmul.f32 %v1327, %v1325
    %v1329 = vmul.f32 %v1328, %v1327
    %v1330 = vmul.f32 0.5, %v1329
    %v1331 = vsub.f32 1.5, %v1330
    %v1332 = vmul.f32 %v1327, %v1331
    %vm1333 = vweird.f32 %v1325
    %vm1334 = vweird.f32 %v1327
    %vm1335 = vmor %vm1333, %vm1334
    %v1336 = vsel %vm1335, %v1327, %v1332
    %v1337 = vrsqrt.pop %v1326
    %v1338 = vmul.f32 %v1337, %v1326
    %v1339 = vmul.f32 %v1338, %v1337
    %v1340 = vmul.f32 0.5, %v1339
    %v1341 = vsub.f32 1.5, %v1340
    %v1342 = vmul.f32 %v1337, %v1341
    %vm1343 = vweird.f32 %v1326
    %vm1344 = vweird.f32 %v1337
    %vm1345 = vmor %vm1343, %vm1344
    %v1346 = vsel %vm1345, %v1337, %v1342
    %v1347 = vmul.f32 %v1323, %v1336
    %v1348 = vmul.f32 %v1324, %v1346
    %v1349 = vld [vmem:[%s3] sm:$0xff]
    %v1350 = vld [vmem:[%s3 + $0x8] sm:$0xff]
    %v1351 = vmul.f32 %v1313, %v1347
    %v1352 = vmul.f32 %v1314, %v1348
    %v1353 = vsub.f32 %v1349, %v1351
    %v1354 = vsub.f32 %v1350, %v1352
    %1356 = vset.pattern.permute.xlu0 0
    %1357 = vperm.xlu0 %1356, %v1347
    %v1358 = vpop.permute.xlu0 %1357
    %1361 = vset.pattern.permute.xlu0 0
    %1362 = vperm.xlu0 %1361, %v1348
    %v1363 = vpop.permute.xlu0 %1362
    %v1365 = vmul.f32 %v1166, %v1358
    %v1366 = vmul.f32 %v1167, %v1358
    %v1367 = vmul.f32 %v1168, %v1363
    %v1368 = vmul.f32 %v1169, %v1363
    %v1369 = vmul.f32 %v1170, %v1358
    %v1370 = vmul.f32 %v1171, %v1358
    %v1371 = vmul.f32 %v1172, %v1363
    %v1372 = vmul.f32 %v1173, %v1363
    %v1373 = vmul.f32 %v1174, %v1358
    %v1374 = vmul.f32 %v1175, %v1358
    %v1375 = vmul.f32 %v1176, %v1363
    %v1376 = vmul.f32 %v1177, %v1363
    %v1377 = vmul.f32 %v1178, %v1358
    %v1378 = vmul.f32 %v1179, %v1358
    %v1379 = vmul.f32 %v1180, %v1363
    %v1380 = vmul.f32 %v1181, %v1363
    %1382 = vset.pattern.permute.xlu0 0
    %1383 = vperm.xlu0 %1382, %v1353
    %v1384 = vpop.permute.xlu0 %1383
    %1387 = vset.pattern.permute.xlu0 0
    %1388 = vperm.xlu0 %1387, %v1354
    %v1389 = vpop.permute.xlu0 %1388
    %v1391 = vadd.f32 %v1365, %v1384
    %v1392 = vadd.f32 %v1366, %v1384
    %v1393 = vadd.f32 %v1367, %v1389
    %v1394 = vadd.f32 %v1368, %v1389
    %v1395 = vadd.f32 %v1369, %v1384
    %v1396 = vadd.f32 %v1370, %v1384
    %v1397 = vadd.f32 %v1371, %v1389
    %v1398 = vadd.f32 %v1372, %v1389
    %v1399 = vadd.f32 %v1373, %v1384
    %v1400 = vadd.f32 %v1374, %v1384
    %v1401 = vadd.f32 %v1375, %v1389
    %v1402 = vadd.f32 %v1376, %v1389
    %v1403 = vadd.f32 %v1377, %v1384
    %v1404 = vadd.f32 %v1378, %v1384
    %v1405 = vadd.f32 %v1379, %v1389
    %v1406 = vadd.f32 %v1380, %v1389
    %v1407 = vmax.f32 %v1391, 0.0
    %v1408 = vmax.f32 %v1392, 0.0
    %v1409 = vmax.f32 %v1393, 0.0
    %v1410 = vmax.f32 %v1394, 0.0
    %v1411 = vmax.f32 %v1395, 0.0
    %v1412 = vmax.f32 %v1396, 0.0
    %v1413 = vmax.f32 %v1397, 0.0
    %v1414 = vmax.f32 %v1398, 0.0
    %v1415 = vmax.f32 %v1399, 0.0
    %v1416 = vmax.f32 %v1400, 0.0
    %v1417 = vmax.f32 %v1401, 0.0
    %v1418 = vmax.f32 %v1402, 0.0
    %v1419 = vmax.f32 %v1403, 0.0
    %v1420 = vmax.f32 %v1404, 0.0
    %v1421 = vmax.f32 %v1405, 0.0
    %v1422 = vmax.f32 %v1406, 0.0
    %v1423 = vpack.c.bf16 %v1408, %v1407
    %v1424 = vpack.c.bf16 %v1410, %v1409
    %v1425 = vpack.c.bf16 %v1412, %v1411
    %v1426 = vpack.c.bf16 %v1414, %v1413
    %v1427 = vpack.c.bf16 %v1416, %v1415
    %v1428 = vpack.c.bf16 %v1418, %v1417
    %v1429 = vpack.c.bf16 %v1420, %v1419
    %v1430 = vpack.c.bf16 %v1422, %v1421
    %vm1431 = vcmask 1043456
    %vm1432 = vcmask 408580
    %vm1433 = vmor %vm1432, %vm1431
    %1434 = vst.msk [vmem:[%s5] sm:$0xff] %vm1433, %v1423
    %1435 = vst.msk [vmem:[%s5 + $0x8] sm:$0xff] %vm1433, %v1424
    %1436 = vst.msk [vmem:[%s5 + $0x10] sm:$0xff] %vm1433, %v1425
    %1437 = vst.msk [vmem:[%s5 + $0x18] sm:$0xff] %vm1433, %v1426
    %1438 = vst.msk [vmem:[%s5 + $0x20] sm:$0xff] %vm1433, %v1427
    %1439 = vst.msk [vmem:[%s5 + $0x28] sm:$0xff] %vm1433, %v1428
    %1440 = vst.msk [vmem:[%s5 + $0x30] sm:$0xff] %vm1433, %v1429
    %1441 = vst.msk [vmem:[%s5 + $0x38] sm:$0xff] %vm1433, %v1430
    // Predicated region
    $region26: #{generator_forward.7} parent=1 // pred_check
      _
    $region27: #{generator_forward.7} parent=1 // pred_check_branch
      %1443 = sbr.rel (0) target = $region29
    $region28: #{generator_forward.7} parent=1 // pred_region
      _
    $region29: #{generator_forward.7} parent=1 // pred_fallthru
      _
    // Predicated region
    $region30: #{generator_forward.7} parent=1 // pred_check
      _
    $region31: #{generator_forward.7} parent=1 // pred_check_branch
      %1445 = sbr.rel (0) target = $region33
    $region32: #{generator_forward.7} parent=1 // pred_region
      _
    $region33: #{generator_forward.7} parent=1 // pred_fallthru
      _
    %1446 = vsyncpa [#allocation3], 1

// kernel: generator_forward.8
$region0: #{generator_forward.8}
  #allocation0 [shape = 'u32[]', space=smem, size = 0x4, offset = 0x4, fixed_abs, tag = 'smem constant byte address 0x4 - core index']
  #allocation1 [shape = 'u32[72,128]{1,0:T(1,128)}', space=vmem, size = 0x9000, scoped, tag = 'internal scratch']
  %s0 = inlined_call_operand.vmem [shape: bf16[16,648], index: 0, kind: input, shape index: {}]
  %s1 = inlined_call_operand.vmem [shape: bf16[9,32,16], index: 1, kind: input, shape index: {}]
  %s2 = inlined_call_operand.vmem [shape: f32[8,1], index: 2, kind: input, shape index: {}]
  %s3 = inlined_call_operand.vmem [shape: f32[8,1], index: 3, kind: input, shape index: {}]
  %s4 = inlined_call_operand.hbm [shape: f32[1,610], index: 4, kind: input, shape index: {}]
  %s5 = inlined_call_operand.vmem [shape: bf16[32,610], index: 5, kind: output, shape index: {}]
  %s6 = sld [smem:[#allocation0]]
  $region34: #{generator_forward.8} parent=0
    _
  %s8 = ssub.s32 1, %s6
  %s9 = scalar_select 0, %s8, %s6
  $region1: #{generator_forward.8} parent=0
    #allocation2 [shape = 'u8[2560]{0}', space=vmem, size = 0xc00, scoped, tag = 'input window, operand 4, single buffered']
    #allocation3 [shape = 's32[1]{0}', space=sflag, size = 0x4, scoped, tag = 'scoped memory for generator_forward.8']
    %10 = vsyncpa [#allocation3], 0
    // Predicated region
    $region2: #{generator_forward.8} parent=1 // pred_check
      _
    $region3: #{generator_forward.8} parent=1 // pred_check_branch
      %12 = sbr.rel (0) target = $region5
    $region4: #{generator_forward.8} parent=1 // pred_region
      _
    $region5: #{generator_forward.8} parent=1 // pred_fallthru
      _
    // Predicated region
    $region6: #{generator_forward.8} parent=1 // pred_check
      _
    $region7: #{generator_forward.8} parent=1 // pred_check_branch
      %14 = sbr.rel (0) target = $region9
    $region8: #{generator_forward.8} parent=1 // pred_region
      _
    $region9: #{generator_forward.8} parent=1 // pred_fallthru
      _
    // Predicated region
    $region10: #{generator_forward.8} parent=1 // pred_check
      _
    $region11: #{generator_forward.8} parent=1 // pred_check_branch
      %16 = sbr.rel (0) target = $region13
    $region12: #{generator_forward.8} parent=1 // pred_region
      _
    $region13: #{generator_forward.8} parent=1 // pred_fallthru
      _
    // Predicated region
    $region14: #{generator_forward.8} parent=1 // pred_check
      _
    $region15: #{generator_forward.8} parent=1 // pred_check_branch
      %18 = sbr.rel (0) target = $region17
    $region16: #{generator_forward.8} parent=1 // pred_region
      _
    $region17: #{generator_forward.8} parent=1 // pred_fallthru
      _
    // Predicated region
    $region18: #{generator_forward.8} parent=1 // pred_check
      _
    $region19: #{generator_forward.8} parent=1 // pred_check_branch
      %20 = sbr.rel (0) target = $region21
    $region20: #{generator_forward.8} parent=1 // pred_region
      %22 = vsyncadd [#allocation3], 0
      %s24 = sshll.u32 %s4, 4
      %s25 = int_to_ptr.hbm [resolvable:$true] %s24
      %s26 = sshll.u32 [#allocation2], 4
      %s27 = int_to_ptr.vmem [resolvable:$true] %s26
      %29 = dma.hbm_to_vmem [thread:$0]  %s25, 80, %s27, [#allocation3]
    $region21: #{generator_forward.8} parent=1 // pred_fallthru
      _
    // Predicated region
    $region22: #{generator_forward.8} parent=1 // pred_check
      _
    $region23: #{generator_forward.8} parent=1 // pred_check_branch
      %31 = sbr.rel (0) target = $region25
    $region24: #{generator_forward.8} parent=1 // pred_region
      %33 = dma.done [#allocation3], 80
    $region25: #{generator_forward.8} parent=1 // pred_fallthru
      _
    %v35 = vld [vmem:[%s0] sm:$0xff]
    %v36 = vld [vmem:[%s0 + $0x8] sm:$0xff]
    %v37 = vld [vmem:[%s0 + $0x10] sm:$0xff]
    %v38 = vld [vmem:[%s0 + $0x18] sm:$0xff]
    %v39 = vld [vmem:[%s0 + $0x20] sm:$0xff]
    %v40 = vld [vmem:[%s0 + $0x28] sm:$0xff]
    %v41 = vld [vmem:[%s1] sm:$0xf]
    %v42 = vld [vmem:[%s1 + $0x4] sm:$0xf]
    %v43 = vld [vmem:[%s1 + $0x8] sm:$0xf]
    %v44 = vld [vmem:[%s1 + $0xc] sm:$0xf]
    %s45 = scalar_lea.vmem %s1, 16
    %v46 = vld [vmem:[%s45] sm:$0xf]
    %v47 = vld [vmem:[%s45 + $0x4] sm:$0xf]
    %v48 = vld [vmem:[%s45 + $0x8] sm:$0xf]
    %v49 = vld [vmem:[%s45 + $0xc] sm:$0xf]
    %v54 = vunpack.c.l.b16 %v46
    %v55 = vunpack.c.l.b16 %v47
    %v56 = vunpack.c.l.b16 %v48
    %v57 = vunpack.c.l.b16 %v49
    %v58 = vpack.c.b16 %v55, %v54
    %v59 = vpack.c.b16 %v57, %v56
    %v66 = vunpack.c.l.b16 %v35
    %v67 = vunpack.c.h.b16 %v35
    %v68 = vunpack.c.l.b16 %v36
    %v69 = vunpack.c.h.b16 %v36
    %v70 = vunpack.c.l.b16 %v37
    %v71 = vunpack.c.l.b16 %v38
    %v72 = vunpack.c.h.b16 %v38
    %v73 = vunpack.c.l.b16 %v39
    %v74 = vunpack.c.h.b16 %v39
    %v75 = vunpack.c.l.b16 %v40
    %v76 = vpack.c.b16 %v71, %v66
    %v77 = vpack.c.b16 %v72, %v67
    %v78 = vpack.c.b16 %v73, %v68
    %v79 = vpack.c.b16 %v74, %v69
    %v80 = vpack.c.b16 %v75, %v70
    %81 = vrot.lane.b32.xlu0 %v76, 127
    %v82 = vpop.permute.xlu0 %81
    %83 = vrot.lane.b32.xlu0 %v77, 127
    %v84 = vpop.permute.xlu0 %83
    %85 = vrot.lane.b32.xlu0 %v78, 127
    %v86 = vpop.permute.xlu0 %85
    %87 = vrot.lane.b32.xlu0 %v79, 127
    %v88 = vpop.permute.xlu0 %87
    %89 = vrot.lane.b32.xlu0 %v80, 127
    %v90 = vpop.permute.xlu0 %89
    %vm91 = vcmask 1039360
    %v92 = vsel %vm91, %v82, %v84
    %v93 = vsel %vm91, %v84, %v86
    %v94 = vsel %vm91, %v86, %v88
    %v95 = vsel %vm91, %v88, %v90
    %vm101 = vcmask 130048
    %v103 = vsel %vm101, %v58, 0
    %v106 = vsel %vm101, %v59, 0
    %108 = vmatpush.bf16.msra.mxu0 0
    %109 = vmatpush.bf16.msra.mxu0 0
    %110 = vmatpush.bf16.msra.mxu0 0
    %111 = vmatpush.bf16.msra.mxu0 0
    %112 = vmatpush.bf16.msra.mxu0 0
    %113 = vmatpush.bf16.msra.mxu0 0
    %114 = vmatpush.bf16.msra.mxu0 0
    %115 = vmatpush.bf16.msra.mxu0 %v92
    %116 = vmatmul.bf16.gmra.mxu0 %v103
    %v117 = vpop.f32.mrf.mxu0
    %v118 = vadd.f32 0.0, %v117
    %v119 = vpop.f32.mrf.mxu0
    %v120 = vadd.f32 0.0, %v119
    %121 = vmatmul.bf16.gmra.mxu0 %v106
    %v122 = vpop.f32.mrf.mxu0
    %v123 = vadd.f32 0.0, %v122
    %v124 = vpop.f32.mrf.mxu0
    %v125 = vadd.f32 0.0, %v124
    %126 = vdwg.mxu0
    %127 = vmatpush.bf16.msra.mxu0 0
    %128 = vmatpush.bf16.msra.mxu0 0
    %129 = vmatpush.bf16.msra.mxu0 0
    %130 = vmatpush.bf16.msra.mxu0 0
    %131 = vmatpush.bf16.msra.mxu0 0
    %132 = vmatpush.bf16.msra.mxu0 0
    %133 = vmatpush.bf16.msra.mxu0 0
    %134 = vmatpush.bf16.msra.mxu0 %v93
    %135 = vmatmul.bf16.gmra.mxu0 %v103
    %v136 = vpop.f32.mrf.mxu0
    %v137 = vadd.f32 0.0, %v136
    %v138 = vpop.f32.mrf.mxu0
    %v139 = vadd.f32 0.0, %v138
    %140 = vmatmul.bf16.gmra.mxu0 %v106
    %v141 = vpop.f32.mrf.mxu0
    %v142 = vadd.f32 0.0, %v141
    %v143 = vpop.f32.mrf.mxu0
    %v144 = vadd.f32 0.0, %v143
    %145 = vdwg.mxu0
    %146 = vmatpush.bf16.msra.mxu0 0
    %147 = vmatpush.bf16.msra.mxu0 0
    %148 = vmatpush.bf16.msra.mxu0 0
    %149 = vmatpush.bf16.msra.mxu0 0
    %150 = vmatpush.bf16.msra.mxu0 0
    %151 = vmatpush.bf16.msra.mxu0 0
    %152 = vmatpush.bf16.msra.mxu0 0
    %153 = vmatpush.bf16.msra.mxu0 %v94
    %154 = vmatmul.bf16.gmra.mxu0 %v103
    %v155 = vpop.f32.mrf.mxu0
    %v156 = vadd.f32 0.0, %v155
    %v157 = vpop.f32.mrf.mxu0
    %v158 = vadd.f32 0.0, %v157
    %159 = vmatmul.bf16.gmra.mxu0 %v106
    %v160 = vpop.f32.mrf.mxu0
    %v161 = vadd.f32 0.0, %v160
    %v162 = vpop.f32.mrf.mxu0
    %v163 = vadd.f32 0.0, %v162
    %164 = vdwg.mxu0
    %165 = vmatpush.bf16.msra.mxu0 0
    %166 = vmatpush.bf16.msra.mxu0 0
    %167 = vmatpush.bf16.msra.mxu0 0
    %168 = vmatpush.bf16.msra.mxu0 0
    %169 = vmatpush.bf16.msra.mxu0 0
    %170 = vmatpush.bf16.msra.mxu0 0
    %171 = vmatpush.bf16.msra.mxu0 0
    %172 = vmatpush.bf16.msra.mxu0 %v95
    %173 = vmatmul.bf16.gmra.mxu0 %v103
    %v174 = vpop.f32.mrf.mxu0
    %v175 = vadd.f32 0.0, %v174
    %v176 = vpop.f32.mrf.mxu0
    %v177 = vadd.f32 0.0, %v176
    %178 = vmatmul.bf16.gmra.mxu0 %v106
    %v179 = vpop.f32.mrf.mxu0
    %v180 = vadd.f32 0.0, %v179
    %v181 = vpop.f32.mrf.mxu0
    %v182 = vadd.f32 0.0, %v181
    %183 = vdwg.mxu0
    %184 = vmatpush.bf16.msra.mxu0 0
    %185 = vmatpush.bf16.msra.mxu0 0
    %186 = vmatpush.bf16.msra.mxu0 0
    %187 = vmatpush.bf16.msra.mxu0 0
    %188 = vmatpush.bf16.msra.mxu0 0
    %189 = vmatpush.bf16.msra.mxu0 0
    %190 = vmatpush.bf16.msra.mxu0 0
    %191 = vmatpush.bf16.msra.mxu0 %v90
    %192 = vmatmul.bf16.gmra.mxu0 %v103
    %v193 = vpop.f32.mrf.mxu0
    %v194 = vadd.f32 0.0, %v193
    %v195 = vpop.f32.mrf.mxu0
    %v196 = vadd.f32 0.0, %v195
    %197 = vmatmul.bf16.gmra.mxu0 %v106
    %v198 = vpop.f32.mrf.mxu0
    %v199 = vadd.f32 0.0, %v198
    %v200 = vpop.f32.mrf.mxu0
    %v201 = vadd.f32 0.0, %v200
    %202 = vdwg.mxu0
    %v207 = vunpack.c.l.b16 %v41
    %v208 = vunpack.c.l.b16 %v42
    %v209 = vunpack.c.l.b16 %v43
    %v210 = vunpack.c.l.b16 %v44
    %v211 = vpack.c.b16 %v208, %v207
    %v212 = vpack.c.b16 %v210, %v209
    %v219 = vsel %vm101, %v211, 0
    %v222 = vsel %vm101, %v212, 0
    %224 = vmatpush.bf16.msra.mxu0 0
    %225 = vmatpush.bf16.msra.mxu0 0
    %226 = vmatpush.bf16.msra.mxu0 0
    %227 = vmatpush.bf16.msra.mxu0 0
    %228 = vmatpush.bf16.msra.mxu0 0
    %229 = vmatpush.bf16.msra.mxu0 0
    %230 = vmatpush.bf16.msra.mxu0 0
    %231 = vmatpush.bf16.msra.mxu0 %v76
    %232 = vmatmul.bf16.gmra.mxu0 %v219
    %v233 = vpop.f32.mrf.mxu0
    %v234 = vadd.f32 %v118, %v233
    %v235 = vpop.f32.mrf.mxu0
    %v236 = vadd.f32 %v120, %v235
    %237 = vmatmul.bf16.gmra.mxu0 %v222
    %v238 = vpop.f32.mrf.mxu0
    %v239 = vadd.f32 %v123, %v238
    %v240 = vpop.f32.mrf.mxu0
    %v241 = vadd.f32 %v125, %v240
    %242 = vdwg.mxu0
    %243 = vmatpush.bf16.msra.mxu0 0
    %244 = vmatpush.bf16.msra.mxu0 0
    %245 = vmatpush.bf16.msra.mxu0 0
    %246 = vmatpush.bf16.msra.mxu0 0
    %247 = vmatpush.bf16.msra.mxu0 0
    %248 = vmatpush.bf16.msra.mxu0 0
    %249 = vmatpush.bf16.msra.mxu0 0
    %250 = vmatpush.bf16.msra.mxu0 %v77
    %251 = vmatmul.bf16.gmra.mxu0 %v219
    %v252 = vpop.f32.mrf.mxu0
    %v253 = vadd.f32 %v137, %v252
    %v254 = vpop.f32.mrf.mxu0
    %v255 = vadd.f32 %v139, %v254
    %256 = vmatmul.bf16.gmra.mxu0 %v222
    %v257 = vpop.f32.mrf.mxu0
    %v258 = vadd.f32 %v142, %v257
    %v259 = vpop.f32.mrf.mxu0
    %v260 = vadd.f32 %v144, %v259
    %261 = vdwg.mxu0
    %262 = vmatpush.bf16.msra.mxu0 0
    %263 = vmatpush.bf16.msra.mxu0 0
    %264 = vmatpush.bf16.msra.mxu0 0
    %265 = vmatpush.bf16.msra.mxu0 0
    %266 = vmatpush.bf16.msra.mxu0 0
    %267 = vmatpush.bf16.msra.mxu0 0
    %268 = vmatpush.bf16.msra.mxu0 0
    %269 = vmatpush.bf16.msra.mxu0 %v78
    %270 = vmatmul.bf16.gmra.mxu0 %v219
    %v271 = vpop.f32.mrf.mxu0
    %v272 = vadd.f32 %v156, %v271
    %v273 = vpop.f32.mrf.mxu0
    %v274 = vadd.f32 %v158, %v273
    %275 = vmatmul.bf16.gmra.mxu0 %v222
    %v276 = vpop.f32.mrf.mxu0
    %v277 = vadd.f32 %v161, %v276
    %v278 = vpop.f32.mrf.mxu0
    %v279 = vadd.f32 %v163, %v278
    %280 = vdwg.mxu0
    %281 = vmatpush.bf16.msra.mxu0 0
    %282 = vmatpush.bf16.msra.mxu0 0
    %283 = vmatpush.bf16.msra.mxu0 0
    %284 = vmatpush.bf16.msra.mxu0 0
    %285 = vmatpush.bf16.msra.mxu0 0
    %286 = vmatpush.bf16.msra.mxu0 0
    %287 = vmatpush.bf16.msra.mxu0 0
    %288 = vmatpush.bf16.msra.mxu0 %v79
    %289 = vmatmul.bf16.gmra.mxu0 %v219
    %v290 = vpop.f32.mrf.mxu0
    %v291 = vadd.f32 %v175, %v290
    %v292 = vpop.f32.mrf.mxu0
    %v293 = vadd.f32 %v177, %v292
    %294 = vmatmul.bf16.gmra.mxu0 %v222
    %v295 = vpop.f32.mrf.mxu0
    %v296 = vadd.f32 %v180, %v295
    %v297 = vpop.f32.mrf.mxu0
    %v298 = vadd.f32 %v182, %v297
    %299 = vdwg.mxu0
    %300 = vmatpush.bf16.msra.mxu0 0
    %301 = vmatpush.bf16.msra.mxu0 0
    %302 = vmatpush.bf16.msra.mxu0 0
    %303 = vmatpush.bf16.msra.mxu0 0
    %304 = vmatpush.bf16.msra.mxu0 0
    %305 = vmatpush.bf16.msra.mxu0 0
    %306 = vmatpush.bf16.msra.mxu0 0
    %307 = vmatpush.bf16.msra.mxu0 %v80
    %308 = vmatmul.bf16.gmra.mxu0 %v219
    %v309 = vpop.f32.mrf.mxu0
    %v310 = vadd.f32 %v194, %v309
    %v311 = vpop.f32.mrf.mxu0
    %v312 = vadd.f32 %v196, %v311
    %313 = vmatmul.bf16.gmra.mxu0 %v222
    %v314 = vpop.f32.mrf.mxu0
    %v315 = vadd.f32 %v199, %v314
    %v316 = vpop.f32.mrf.mxu0
    %v317 = vadd.f32 %v201, %v316
    %318 = vdwg.mxu0
    %s319 = scalar_lea.vmem %s1, 32
    %v320 = vld [vmem:[%s319] sm:$0xf]
    %v321 = vld [vmem:[%s319 + $0x4] sm:$0xf]
    %v322 = vld [vmem:[%s319 + $0x8] sm:$0xf]
    %v323 = vld [vmem:[%s319 + $0xc] sm:$0xf]
    %v328 = vunpack.c.l.b16 %v320
    %v329 = vunpack.c.l.b16 %v321
    %v330 = vunpack.c.l.b16 %v322
    %v331 = vunpack.c.l.b16 %v323
    %v332 = vpack.c.b16 %v329, %v328
    %v333 = vpack.c.b16 %v331, %v330
    %334 = vrot.lane.b32.xlu0 %v76, 126
    %v335 = vpop.permute.xlu0 %334
    %336 = vrot.lane.b32.xlu0 %v77, 126
    %v337 = vpop.permute.xlu0 %336
    %338 = vrot.lane.b32.xlu0 %v78, 126
    %v339 = vpop.permute.xlu0 %338
    %340 = vrot.lane.b32.xlu0 %v79, 126
    %v341 = vpop.permute.xlu0 %340
    %342 = vrot.lane.b32.xlu0 %v80, 126
    %v343 = vpop.permute.xlu0 %342
    %vm344 = vcmask 1031168
    %v345 = vsel %vm344, %v335, %v337
    %v346 = vsel %vm344, %v337, %v339
    %v347 = vsel %vm344, %v339, %v341
    %v348 = vsel %vm344, %v341, %v343
    %v355 = vsel %vm101, %v332, 0
    %v358 = vsel %vm101, %v333, 0
    %360 = vmatpush.bf16.msra.mxu0 0
    %361 = vmatpush.bf16.msra.mxu0 0
    %362 = vmatpush.bf16.msra.mxu0 0
    %363 = vmatpush.bf16.msra.mxu0 0
    %364 = vmatpush.bf16.msra.mxu0 0
    %365 = vmatpush.bf16.msra.mxu0 0
    %366 = vmatpush.bf16.msra.mxu0 0
    %367 = vmatpush.bf16.msra.mxu0 %v345
    %368 = vmatmul.bf16.gmra.mxu0 %v355
    %v369 = vpop.f32.mrf.mxu0
    %v370 = vadd.f32 0.0, %v369
    %v371 = vpop.f32.mrf.mxu0
    %v372 = vadd.f32 0.0, %v371
    %373 = vmatmul.bf16.gmra.mxu0 %v358
    %v374 = vpop.f32.mrf.mxu0
    %v375 = vadd.f32 0.0, %v374
    %v376 = vpop.f32.mrf.mxu0
    %v377 = vadd.f32 0.0, %v376
    %378 = vdwg.mxu0
    %379 = vmatpush.bf16.msra.mxu0 0
    %380 = vmatpush.bf16.msra.mxu0 0
    %381 = vmatpush.bf16.msra.mxu0 0
    %382 = vmatpush.bf16.msra.mxu0 0
    %383 = vmatpush.bf16.msra.mxu0 0
    %384 = vmatpush.bf16.msra.mxu0 0
    %385 = vmatpush.bf16.msra.mxu0 0
    %386 = vmatpush.bf16.msra.mxu0 %v346
    %387 = vmatmul.bf16.gmra.mxu0 %v355
    %v388 = vpop.f32.mrf.mxu0
    %v389 = vadd.f32 0.0, %v388
    %v390 = vpop.f32.mrf.mxu0
    %v391 = vadd.f32 0.0, %v390
    %392 = vmatmul.bf16.gmra.mxu0 %v358
    %v393 = vpop.f32.mrf.mxu0
    %v394 = vadd.f32 0.0, %v393
    %v395 = vpop.f32.mrf.mxu0
    %v396 = vadd.f32 0.0, %v395
    %397 = vdwg.mxu0
    %398 = vmatpush.bf16.msra.mxu0 0
    %399 = vmatpush.bf16.msra.mxu0 0
    %400 = vmatpush.bf16.msra.mxu0 0
    %401 = vmatpush.bf16.msra.mxu0 0
    %402 = vmatpush.bf16.msra.mxu0 0
    %403 = vmatpush.bf16.msra.mxu0 0
    %404 = vmatpush.bf16.msra.mxu0 0
    %405 = vmatpush.bf16.msra.mxu0 %v347
    %406 = vmatmul.bf16.gmra.mxu0 %v355
    %v407 = vpop.f32.mrf.mxu0
    %v408 = vadd.f32 0.0, %v407
    %v409 = vpop.f32.mrf.mxu0
    %v410 = vadd.f32 0.0, %v409
    %411 = vmatmul.bf16.gmra.mxu0 %v358
    %v412 = vpop.f32.mrf.mxu0
    %v413 = vadd.f32 0.0, %v412
    %v414 = vpop.f32.mrf.mxu0
    %v415 = vadd.f32 0.0, %v414
    %416 = vdwg.mxu0
    %417 = vmatpush.bf16.msra.mxu0 0
    %418 = vmatpush.bf16.msra.mxu0 0
    %419 = vmatpush.bf16.msra.mxu0 0
    %420 = vmatpush.bf16.msra.mxu0 0
    %421 = vmatpush.bf16.msra.mxu0 0
    %422 = vmatpush.bf16.msra.mxu0 0
    %423 = vmatpush.bf16.msra.mxu0 0
    %424 = vmatpush.bf16.msra.mxu0 %v348
    %425 = vmatmul.bf16.gmra.mxu0 %v355
    %v426 = vpop.f32.mrf.mxu0
    %v427 = vadd.f32 0.0, %v426
    %v428 = vpop.f32.mrf.mxu0
    %v429 = vadd.f32 0.0, %v428
    %430 = vmatmul.bf16.gmra.mxu0 %v358
    %v431 = vpop.f32.mrf.mxu0
    %v432 = vadd.f32 0.0, %v431
    %v433 = vpop.f32.mrf.mxu0
    %v434 = vadd.f32 0.0, %v433
    %435 = vdwg.mxu0
    %436 = vmatpush.bf16.msra.mxu0 0
    %437 = vmatpush.bf16.msra.mxu0 0
    %438 = vmatpush.bf16.msra.mxu0 0
    %439 = vmatpush.bf16.msra.mxu0 0
    %440 = vmatpush.bf16.msra.mxu0 0
    %441 = vmatpush.bf16.msra.mxu0 0
    %442 = vmatpush.bf16.msra.mxu0 0
    %443 = vmatpush.bf16.msra.mxu0 %v343
    %444 = vmatmul.bf16.gmra.mxu0 %v355
    %v445 = vpop.f32.mrf.mxu0
    %v446 = vadd.f32 0.0, %v445
    %v447 = vpop.f32.mrf.mxu0
    %v448 = vadd.f32 0.0, %v447
    %449 = vmatmul.bf16.gmra.mxu0 %v358
    %v450 = vpop.f32.mrf.mxu0
    %v451 = vadd.f32 0.0, %v450
    %v452 = vpop.f32.mrf.mxu0
    %v453 = vadd.f32 0.0, %v452
    %454 = vdwg.mxu0
    %v455 = vadd.f32 %v234, %v370
    %v456 = vadd.f32 %v253, %v389
    %v457 = vadd.f32 %v272, %v408
    %v458 = vadd.f32 %v291, %v427
    %v459 = vadd.f32 %v310, %v446
    %v460 = vadd.f32 %v236, %v372
    %v461 = vadd.f32 %v255, %v391
    %v462 = vadd.f32 %v274, %v410
    %v463 = vadd.f32 %v293, %v429
    %v464 = vadd.f32 %v312, %v448
    %v465 = vadd.f32 %v239, %v375
    %v466 = vadd.f32 %v258, %v394
    %v467 = vadd.f32 %v277, %v413
    %v468 = vadd.f32 %v296, %v432
    %v469 = vadd.f32 %v315, %v451
    %v470 = vadd.f32 %v241, %v377
    %v471 = vadd.f32 %v260, %v396
    %v472 = vadd.f32 %v279, %v415
    %v473 = vadd.f32 %v298, %v434
    %v474 = vadd.f32 %v317, %v453
    %s475 = scalar_lea.vmem %s1, 48
    %v476 = vld [vmem:[%s475] sm:$0xf]
    %v477 = vld [vmem:[%s475 + $0x4] sm:$0xf]
    %v478 = vld [vmem:[%s475 + $0x8] sm:$0xf]
    %v479 = vld [vmem:[%s475 + $0xc] sm:$0xf]
    %v484 = vunpack.c.l.b16 %v476
    %v485 = vunpack.c.l.b16 %v477
    %v486 = vunpack.c.l.b16 %v478
    %v487 = vunpack.c.l.b16 %v479
    %v488 = vpack.c.b16 %v485, %v484
    %v489 = vpack.c.b16 %v487, %v486
    %490 = vrot.lane.b32.xlu0 %v76, 110
    %v491 = vpop.permute.xlu0 %490
    %492 = vrot.lane.b32.xlu0 %v77, 110
    %v493 = vpop.permute.xlu0 %492
    %494 = vrot.lane.b32.xlu0 %v78, 110
    %v495 = vpop.permute.xlu0 %494
    %496 = vrot.lane.b32.xlu0 %v79, 110
    %v497 = vpop.permute.xlu0 %496
    %498 = vrot.lane.b32.xlu0 %v80, 110
    %v499 = vpop.permute.xlu0 %498
    %vm500 = vcmask 900096
    %v501 = vsel %vm500, %v491, %v493
    %v502 = vsel %vm500, %v493, %v495
    %v503 = vsel %vm500, %v495, %v497
    %v504 = vsel %vm500, %v497, %v499
    %v511 = vsel %vm101, %v488, 0
    %v514 = vsel %vm101, %v489, 0
    %516 = vmatpush.bf16.msra.mxu0 0
    %517 = vmatpush.bf16.msra.mxu0 0
    %518 = vmatpush.bf16.msra.mxu0 0
    %519 = vmatpush.bf16.msra.mxu0 0
    %520 = vmatpush.bf16.msra.mxu0 0
    %521 = vmatpush.bf16.msra.mxu0 0
    %522 = vmatpush.bf16.msra.mxu0 0
    %523 = vmatpush.bf16.msra.mxu0 %v501
    %524 = vmatmul.bf16.gmra.mxu0 %v511
    %v525 = vpop.f32.mrf.mxu0
    %v526 = vadd.f32 0.0, %v525
    %v527 = vpop.f32.mrf.mxu0
    %v528 = vadd.f32 0.0, %v527
    %529 = vmatmul.bf16.gmra.mxu0 %v514
    %v530 = vpop.f32.mrf.mxu0
    %v531 = vadd.f32 0.0, %v530
    %v532 = vpop.f32.mrf.mxu0
    %v533 = vadd.f32 0.0, %v532
    %534 = vdwg.mxu0
    %535 = vmatpush.bf16.msra.mxu0 0
    %536 = vmatpush.bf16.msra.mxu0 0
    %537 = vmatpush.bf16.msra.mxu0 0
    %538 = vmatpush.bf16.msra.mxu0 0
    %539 = vmatpush.bf16.msra.mxu0 0
    %540 = vmatpush.bf16.msra.mxu0 0
    %541 = vmatpush.bf16.msra.mxu0 0
    %542 = vmatpush.bf16.msra.mxu0 %v502
    %543 = vmatmul.bf16.gmra.mxu0 %v511
    %v544 = vpop.f32.mrf.mxu0
    %v545 = vadd.f32 0.0, %v544
    %v546 = vpop.f32.mrf.mxu0
    %v547 = vadd.f32 0.0, %v546
    %548 = vmatmul.bf16.gmra.mxu0 %v514
    %v549 = vpop.f32.mrf.mxu0
    %v550 = vadd.f32 0.0, %v549
    %v551 = vpop.f32.mrf.mxu0
    %v552 = vadd.f32 0.0, %v551
    %553 = vdwg.mxu0
    %554 = vmatpush.bf16.msra.mxu0 0
    %555 = vmatpush.bf16.msra.mxu0 0
    %556 = vmatpush.bf16.msra.mxu0 0
    %557 = vmatpush.bf16.msra.mxu0 0
    %558 = vmatpush.bf16.msra.mxu0 0
    %559 = vmatpush.bf16.msra.mxu0 0
    %560 = vmatpush.bf16.msra.mxu0 0
    %561 = vmatpush.bf16.msra.mxu0 %v503
    %562 = vmatmul.bf16.gmra.mxu0 %v511
    %v563 = vpop.f32.mrf.mxu0
    %v564 = vadd.f32 0.0, %v563
    %v565 = vpop.f32.mrf.mxu0
    %v566 = vadd.f32 0.0, %v565
    %567 = vmatmul.bf16.gmra.mxu0 %v514
    %v568 = vpop.f32.mrf.mxu0
    %v569 = vadd.f32 0.0, %v568
    %v570 = vpop.f32.mrf.mxu0
    %v571 = vadd.f32 0.0, %v570
    %572 = vdwg.mxu0
    %573 = vmatpush.bf16.msra.mxu0 0
    %574 = vmatpush.bf16.msra.mxu0 0
    %575 = vmatpush.bf16.msra.mxu0 0
    %576 = vmatpush.bf16.msra.mxu0 0
    %577 = vmatpush.bf16.msra.mxu0 0
    %578 = vmatpush.bf16.msra.mxu0 0
    %579 = vmatpush.bf16.msra.mxu0 0
    %580 = vmatpush.bf16.msra.mxu0 %v504
    %581 = vmatmul.bf16.gmra.mxu0 %v511
    %v582 = vpop.f32.mrf.mxu0
    %v583 = vadd.f32 0.0, %v582
    %v584 = vpop.f32.mrf.mxu0
    %v585 = vadd.f32 0.0, %v584
    %586 = vmatmul.bf16.gmra.mxu0 %v514
    %v587 = vpop.f32.mrf.mxu0
    %v588 = vadd.f32 0.0, %v587
    %v589 = vpop.f32.mrf.mxu0
    %v590 = vadd.f32 0.0, %v589
    %591 = vdwg.mxu0
    %592 = vmatpush.bf16.msra.mxu0 0
    %593 = vmatpush.bf16.msra.mxu0 0
    %594 = vmatpush.bf16.msra.mxu0 0
    %595 = vmatpush.bf16.msra.mxu0 0
    %596 = vmatpush.bf16.msra.mxu0 0
    %597 = vmatpush.bf16.msra.mxu0 0
    %598 = vmatpush.bf16.msra.mxu0 0
    %599 = vmatpush.bf16.msra.mxu0 %v499
    %600 = vmatmul.bf16.gmra.mxu0 %v511
    %v601 = vpop.f32.mrf.mxu0
    %v602 = vadd.f32 0.0, %v601
    %v603 = vpop.f32.mrf.mxu0
    %v604 = vadd.f32 0.0, %v603
    %605 = vmatmul.bf16.gmra.mxu0 %v514
    %v606 = vpop.f32.mrf.mxu0
    %v607 = vadd.f32 0.0, %v606
    %v608 = vpop.f32.mrf.mxu0
    %v609 = vadd.f32 0.0, %v608
    %610 = vdwg.mxu0
    %v611 = vadd.f32 %v455, %v526
    %v612 = vadd.f32 %v456, %v545
    %v613 = vadd.f32 %v457, %v564
    %v614 = vadd.f32 %v458, %v583
    %v615 = vadd.f32 %v459, %v602
    %v616 = vadd.f32 %v460, %v528
    %v617 = vadd.f32 %v461, %v547
    %v618 = vadd.f32 %v462, %v566
    %v619 = vadd.f32 %v463, %v585
    %v620 = vadd.f32 %v464, %v604
    %v621 = vadd.f32 %v465, %v531
    %v622 = vadd.f32 %v466, %v550
    %v623 = vadd.f32 %v467, %v569
    %v624 = vadd.f32 %v468, %v588
    %v625 = vadd.f32 %v469, %v607
    %v626 = vadd.f32 %v470, %v533
    %v627 = vadd.f32 %v471, %v552
    %v628 = vadd.f32 %v472, %v571
    %v629 = vadd.f32 %v473, %v590
    %v630 = vadd.f32 %v474, %v609
    %s631 = scalar_lea.vmem %s1, 64
    %v632 = vld [vmem:[%s631] sm:$0xf]
    %v633 = vld [vmem:[%s631 + $0x4] sm:$0xf]
    %v634 = vld [vmem:[%s631 + $0x8] sm:$0xf]
    %v635 = vld [vmem:[%s631 + $0xc] sm:$0xf]
    %v640 = vunpack.c.l.b16 %v632
    %v641 = vunpack.c.l.b16 %v633
    %v642 = vunpack.c.l.b16 %v634
    %v643 = vunpack.c.l.b16 %v635
    %v644 = vpack.c.b16 %v641, %v640
    %v645 = vpack.c.b16 %v643, %v642
    %646 = vrot.lane.b32.xlu0 %v76, 109
    %v647 = vpop.permute.xlu0 %646
    %648 = vrot.lane.b32.xlu0 %v77, 109
    %v649 = vpop.permute.xlu0 %648
    %650 = vrot.lane.b32.xlu0 %v78, 109
    %v651 = vpop.permute.xlu0 %650
    %652 = vrot.lane.b32.xlu0 %v79, 109
    %v653 = vpop.permute.xlu0 %652
    %654 = vrot.lane.b32.xlu0 %v80, 109
    %v655 = vpop.permute.xlu0 %654
    %vm656 = vcmask 891904
    %v657 = vsel %vm656, %v647, %v649
    %v658 = vsel %vm656, %v649, %v651
    %v659 = vsel %vm656, %v651, %v653
    %v660 = vsel %vm656, %v653, %v655
    %v667 = vsel %vm101, %v644, 0
    %v670 = vsel %vm101, %v645, 0
    %672 = vmatpush.bf16.msra.mxu0 0
    %673 = vmatpush.bf16.msra.mxu0 0
    %674 = vmatpush.bf16.msra.mxu0 0
    %675 = vmatpush.bf16.msra.mxu0 0
    %676 = vmatpush.bf16.msra.mxu0 0
    %677 = vmatpush.bf16.msra.mxu0 0
    %678 = vmatpush.bf16.msra.mxu0 0
    %679 = vmatpush.bf16.msra.mxu0 %v657
    %680 = vmatmul.bf16.gmra.mxu0 %v667
    %v681 = vpop.f32.mrf.mxu0
    %v682 = vadd.f32 0.0, %v681
    %v683 = vpop.f32.mrf.mxu0
    %v684 = vadd.f32 0.0, %v683
    %685 = vmatmul.bf16.gmra.mxu0 %v670
    %v686 = vpop.f32.mrf.mxu0
    %v687 = vadd.f32 0.0, %v686
    %v688 = vpop.f32.mrf.mxu0
    %v689 = vadd.f32 0.0, %v688
    %690 = vdwg.mxu0
    %691 = vmatpush.bf16.msra.mxu0 0
    %692 = vmatpush.bf16.msra.mxu0 0
    %693 = vmatpush.bf16.msra.mxu0 0
    %694 = vmatpush.bf16.msra.mxu0 0
    %695 = vmatpush.bf16.msra.mxu0 0
    %696 = vmatpush.bf16.msra.mxu0 0
    %697 = vmatpush.bf16.msra.mxu0 0
    %698 = vmatpush.bf16.msra.mxu0 %v658
    %699 = vmatmul.bf16.gmra.mxu0 %v667
    %v700 = vpop.f32.mrf.mxu0
    %v701 = vadd.f32 0.0, %v700
    %v702 = vpop.f32.mrf.mxu0
    %v703 = vadd.f32 0.0, %v702
    %704 = vmatmul.bf16.gmra.mxu0 %v670
    %v705 = vpop.f32.mrf.mxu0
    %v706 = vadd.f32 0.0, %v705
    %v707 = vpop.f32.mrf.mxu0
    %v708 = vadd.f32 0.0, %v707
    %709 = vdwg.mxu0
    %710 = vmatpush.bf16.msra.mxu0 0
    %711 = vmatpush.bf16.msra.mxu0 0
    %712 = vmatpush.bf16.msra.mxu0 0
    %713 = vmatpush.bf16.msra.mxu0 0
    %714 = vmatpush.bf16.msra.mxu0 0
    %715 = vmatpush.bf16.msra.mxu0 0
    %716 = vmatpush.bf16.msra.mxu0 0
    %717 = vmatpush.bf16.msra.mxu0 %v659
    %718 = vmatmul.bf16.gmra.mxu0 %v667
    %v719 = vpop.f32.mrf.mxu0
    %v720 = vadd.f32 0.0, %v719
    %v721 = vpop.f32.mrf.mxu0
    %v722 = vadd.f32 0.0, %v721
    %723 = vmatmul.bf16.gmra.mxu0 %v670
    %v724 = vpop.f32.mrf.mxu0
    %v725 = vadd.f32 0.0, %v724
    %v726 = vpop.f32.mrf.mxu0
    %v727 = vadd.f32 0.0, %v726
    %728 = vdwg.mxu0
    %729 = vmatpush.bf16.msra.mxu0 0
    %730 = vmatpush.bf16.msra.mxu0 0
    %731 = vmatpush.bf16.msra.mxu0 0
    %732 = vmatpush.bf16.msra.mxu0 0
    %733 = vmatpush.bf16.msra.mxu0 0
    %734 = vmatpush.bf16.msra.mxu0 0
    %735 = vmatpush.bf16.msra.mxu0 0
    %736 = vmatpush.bf16.msra.mxu0 %v660
    %737 = vmatmul.bf16.gmra.mxu0 %v667
    %v738 = vpop.f32.mrf.mxu0
    %v739 = vadd.f32 0.0, %v738
    %v740 = vpop.f32.mrf.mxu0
    %v741 = vadd.f32 0.0, %v740
    %742 = vmatmul.bf16.gmra.mxu0 %v670
    %v743 = vpop.f32.mrf.mxu0
    %v744 = vadd.f32 0.0, %v743
    %v745 = vpop.f32.mrf.mxu0
    %v746 = vadd.f32 0.0, %v745
    %747 = vdwg.mxu0
    %748 = vmatpush.bf16.msra.mxu0 0
    %749 = vmatpush.bf16.msra.mxu0 0
    %750 = vmatpush.bf16.msra.mxu0 0
    %751 = vmatpush.bf16.msra.mxu0 0
    %752 = vmatpush.bf16.msra.mxu0 0
    %753 = vmatpush.bf16.msra.mxu0 0
    %754 = vmatpush.bf16.msra.mxu0 0
    %755 = vmatpush.bf16.msra.mxu0 %v655
    %756 = vmatmul.bf16.gmra.mxu0 %v667
    %v757 = vpop.f32.mrf.mxu0
    %v758 = vadd.f32 0.0, %v757
    %v759 = vpop.f32.mrf.mxu0
    %v760 = vadd.f32 0.0, %v759
    %761 = vmatmul.bf16.gmra.mxu0 %v670
    %v762 = vpop.f32.mrf.mxu0
    %v763 = vadd.f32 0.0, %v762
    %v764 = vpop.f32.mrf.mxu0
    %v765 = vadd.f32 0.0, %v764
    %766 = vdwg.mxu0
    %v767 = vadd.f32 %v611, %v682
    %v768 = vadd.f32 %v612, %v701
    %v769 = vadd.f32 %v613, %v720
    %v770 = vadd.f32 %v614, %v739
    %v771 = vadd.f32 %v615, %v758
    %v772 = vadd.f32 %v616, %v684
    %v773 = vadd.f32 %v617, %v703
    %v774 = vadd.f32 %v618, %v722
    %v775 = vadd.f32 %v619, %v741
    %v776 = vadd.f32 %v620, %v760
    %v777 = vadd.f32 %v621, %v687
    %v778 = vadd.f32 %v622, %v706
    %v779 = vadd.f32 %v623, %v725
    %v780 = vadd.f32 %v624, %v744
    %v781 = vadd.f32 %v625, %v763
    %v782 = vadd.f32 %v626, %v689
    %v783 = vadd.f32 %v627, %v708
    %v784 = vadd.f32 %v628, %v727
    %v785 = vadd.f32 %v629, %v746
    %v786 = vadd.f32 %v630, %v765
    %s787 = scalar_lea.vmem %s1, 80
    %v788 = vld [vmem:[%s787] sm:$0xf]
    %v789 = vld [vmem:[%s787 + $0x4] sm:$0xf]
    %v790 = vld [vmem:[%s787 + $0x8] sm:$0xf]
    %v791 = vld [vmem:[%s787 + $0xc] sm:$0xf]
    %v796 = vunpack.c.l.b16 %v788
    %v797 = vunpack.c.l.b16 %v789
    %v798 = vunpack.c.l.b16 %v790
    %v799 = vunpack.c.l.b16 %v791
    %v800 = vpack.c.b16 %v797, %v796
    %v801 = vpack.c.b16 %v799, %v798
    %802 = vrot.lane.b32.xlu0 %v76, 108
    %v803 = vpop.permute.xlu0 %802
    %804 = vrot.lane.b32.xlu0 %v77, 108
    %v805 = vpop.permute.xlu0 %804
    %806 = vrot.lane.b32.xlu0 %v78, 108
    %v807 = vpop.permute.xlu0 %806
    %808 = vrot.lane.b32.xlu0 %v79, 108
    %v809 = vpop.permute.xlu0 %808
    %810 = vrot.lane.b32.xlu0 %v80, 108
    %v811 = vpop.permute.xlu0 %810
    %vm812 = vcmask 883712
    %v813 = vsel %vm812, %v803, %v805
    %v814 = vsel %vm812, %v805, %v807
    %v815 = vsel %vm812, %v807, %v809
    %v816 = vsel %vm812, %v809, %v811
    %v823 = vsel %vm101, %v800, 0
    %v826 = vsel %vm101, %v801, 0
    %828 = vmatpush.bf16.msra.mxu0 0
    %829 = vmatpush.bf16.msra.mxu0 0
    %830 = vmatpush.bf16.msra.mxu0 0
    %831 = vmatpush.bf16.msra.mxu0 0
    %832 = vmatpush.bf16.msra.mxu0 0
    %833 = vmatpush.bf16.msra.mxu0 0
    %834 = vmatpush.bf16.msra.mxu0 0
    %835 = vmatpush.bf16.msra.mxu0 %v813
    %836 = vmatmul.bf16.gmra.mxu0 %v823
    %v837 = vpop.f32.mrf.mxu0
    %v838 = vadd.f32 0.0, %v837
    %v839 = vpop.f32.mrf.mxu0
    %v840 = vadd.f32 0.0, %v839
    %841 = vmatmul.bf16.gmra.mxu0 %v826
    %v842 = vpop.f32.mrf.mxu0
    %v843 = vadd.f32 0.0, %v842
    %v844 = vpop.f32.mrf.mxu0
    %v845 = vadd.f32 0.0, %v844
    %846 = vdwg.mxu0
    %847 = vmatpush.bf16.msra.mxu0 0
    %848 = vmatpush.bf16.msra.mxu0 0
    %849 = vmatpush.bf16.msra.mxu0 0
    %850 = vmatpush.bf16.msra.mxu0 0
    %851 = vmatpush.bf16.msra.mxu0 0
    %852 = vmatpush.bf16.msra.mxu0 0
    %853 = vmatpush.bf16.msra.mxu0 0
    %854 = vmatpush.bf16.msra.mxu0 %v814
    %855 = vmatmul.bf16.gmra.mxu0 %v823
    %v856 = vpop.f32.mrf.mxu0
    %v857 = vadd.f32 0.0, %v856
    %v858 = vpop.f32.mrf.mxu0
    %v859 = vadd.f32 0.0, %v858
    %860 = vmatmul.bf16.gmra.mxu0 %v826
    %v861 = vpop.f32.mrf.mxu0
    %v862 = vadd.f32 0.0, %v861
    %v863 = vpop.f32.mrf.mxu0
    %v864 = vadd.f32 0.0, %v863
    %865 = vdwg.mxu0
    %866 = vmatpush.bf16.msra.mxu0 0
    %867 = vmatpush.bf16.msra.mxu0 0
    %868 = vmatpush.bf16.msra.mxu0 0
    %869 = vmatpush.bf16.msra.mxu0 0
    %870 = vmatpush.bf16.msra.mxu0 0
    %871 = vmatpush.bf16.msra.mxu0 0
    %872 = vmatpush.bf16.msra.mxu0 0
    %873 = vmatpush.bf16.msra.mxu0 %v815
    %874 = vmatmul.bf16.gmra.mxu0 %v823
    %v875 = vpop.f32.mrf.mxu0
    %v876 = vadd.f32 0.0, %v875
    %v877 = vpop.f32.mrf.mxu0
    %v878 = vadd.f32 0.0, %v877
    %879 = vmatmul.bf16.gmra.mxu0 %v826
    %v880 = vpop.f32.mrf.mxu0
    %v881 = vadd.f32 0.0, %v880
    %v882 = vpop.f32.mrf.mxu0
    %v883 = vadd.f32 0.0, %v882
    %884 = vdwg.mxu0
    %885 = vmatpush.bf16.msra.mxu0 0
    %886 = vmatpush.bf16.msra.mxu0 0
    %887 = vmatpush.bf16.msra.mxu0 0
    %888 = vmatpush.bf16.msra.mxu0 0
    %889 = vmatpush.bf16.msra.mxu0 0
    %890 = vmatpush.bf16.msra.mxu0 0
    %891 = vmatpush.bf16.msra.mxu0 0
    %892 = vmatpush.bf16.msra.mxu0 %v816
    %893 = vmatmul.bf16.gmra.mxu0 %v823
    %v894 = vpop.f32.mrf.mxu0
    %v895 = vadd.f32 0.0, %v894
    %v896 = vpop.f32.mrf.mxu0
    %v897 = vadd.f32 0.0, %v896
    %898 = vmatmul.bf16.gmra.mxu0 %v826
    %v899 = vpop.f32.mrf.mxu0
    %v900 = vadd.f32 0.0, %v899
    %v901 = vpop.f32.mrf.mxu0
    %v902 = vadd.f32 0.0, %v901
    %903 = vdwg.mxu0
    %904 = vmatpush.bf16.msra.mxu0 0
    %905 = vmatpush.bf16.msra.mxu0 0
    %906 = vmatpush.bf16.msra.mxu0 0
    %907 = vmatpush.bf16.msra.mxu0 0
    %908 = vmatpush.bf16.msra.mxu0 0
    %909 = vmatpush.bf16.msra.mxu0 0
    %910 = vmatpush.bf16.msra.mxu0 0
    %911 = vmatpush.bf16.msra.mxu0 %v811
    %912 = vmatmul.bf16.gmra.mxu0 %v823
    %v913 = vpop.f32.mrf.mxu0
    %v914 = vadd.f32 0.0, %v913
    %v915 = vpop.f32.mrf.mxu0
    %v916 = vadd.f32 0.0, %v915
    %917 = vmatmul.bf16.gmra.mxu0 %v826
    %v918 = vpop.f32.mrf.mxu0
    %v919 = vadd.f32 0.0, %v918
    %v920 = vpop.f32.mrf.mxu0
    %v921 = vadd.f32 0.0, %v920
    %922 = vdwg.mxu0
    %v923 = vadd.f32 %v767, %v838
    %v924 = vadd.f32 %v768, %v857
    %v925 = vadd.f32 %v769, %v876
    %v926 = vadd.f32 %v770, %v895
    %v927 = vadd.f32 %v771, %v914
    %v928 = vadd.f32 %v772, %v840
    %v929 = vadd.f32 %v773, %v859
    %v930 = vadd.f32 %v774, %v878
    %v931 = vadd.f32 %v775, %v897
    %v932 = vadd.f32 %v776, %v916
    %v933 = vadd.f32 %v777, %v843
    %v934 = vadd.f32 %v778, %v862
    %v935 = vadd.f32 %v779, %v881
    %v936 = vadd.f32 %v780, %v900
    %v937 = vadd.f32 %v781, %v919
    %v938 = vadd.f32 %v782, %v845
    %v939 = vadd.f32 %v783, %v864
    %v940 = vadd.f32 %v784, %v883
    %v941 = vadd.f32 %v785, %v902
    %v942 = vadd.f32 %v786, %v921
    %s943 = scalar_lea.vmem %s1, 96
    %v944 = vld [vmem:[%s943] sm:$0xf]
    %v945 = vld [vmem:[%s943 + $0x4] sm:$0xf]
    %v946 = vld [vmem:[%s943 + $0x8] sm:$0xf]
    %v947 = vld [vmem:[%s943 + $0xc] sm:$0xf]
    %v952 = vunpack.c.l.b16 %v944
    %v953 = vunpack.c.l.b16 %v945
    %v954 = vunpack.c.l.b16 %v946
    %v955 = vunpack.c.l.b16 %v947
    %v956 = vpack.c.b16 %v953, %v952
    %v957 = vpack.c.b16 %v955, %v954
    %v958 = vunpack.c.h.b16 %v37
    %v959 = vunpack.c.h.b16 %v40
    %v960 = vpack.c.b16 %v959, %v958
    %961 = vrot.lane.b32.xlu0 %v76, 92
    %v962 = vpop.permute.xlu0 %961
    %963 = vrot.lane.b32.xlu0 %v77, 92
    %v964 = vpop.permute.xlu0 %963
    %965 = vrot.lane.b32.xlu0 %v78, 92
    %v966 = vpop.permute.xlu0 %965
    %967 = vrot.lane.b32.xlu0 %v79, 92
    %v968 = vpop.permute.xlu0 %967
    %969 = vrot.lane.b32.xlu0 %v80, 92
    %v970 = vpop.permute.xlu0 %969
    %971 = vrot.lane.b32.xlu0 %v960, 92
    %v972 = vpop.permute.xlu0 %971
    %vm973 = vcmask 752640
    %v974 = vsel %vm973, %v962, %v964
    %v975 = vsel %vm973, %v964, %v966
    %v976 = vsel %vm973, %v966, %v968
    %v977 = vsel %vm973, %v968, %v970
    %v978 = vsel %vm973, %v970, %v972
    %v985 = vsel %vm101, %v956, 0
    %v988 = vsel %vm101, %v957, 0
    %990 = vmatpush.bf16.msra.mxu0 0
    %991 = vmatpush.bf16.msra.mxu0 0
    %992 = vmatpush.bf16.msra.mxu0 0
    %993 = vmatpush.bf16.msra.mxu0 0
    %994 = vmatpush.bf16.msra.mxu0 0
    %995 = vmatpush.bf16.msra.mxu0 0
    %996 = vmatpush.bf16.msra.mxu0 0
    %997 = vmatpush.bf16.msra.mxu0 %v974
    %998 = vmatmul.bf16.gmra.mxu0 %v985
    %v999 = vpop.f32.mrf.mxu0
    %v1000 = vadd.f32 0.0, %v999
    %v1001 = vpop.f32.mrf.mxu0
    %v1002 = vadd.f32 0.0, %v1001
    %1003 = vmatmul.bf16.gmra.mxu0 %v988
    %v1004 = vpop.f32.mrf.mxu0
    %v1005 = vadd.f32 0.0, %v1004
    %v1006 = vpop.f32.mrf.mxu0
    %v1007 = vadd.f32 0.0, %v1006
    %1008 = vdwg.mxu0
    %1009 = vmatpush.bf16.msra.mxu0 0
    %1010 = vmatpush.bf16.msra.mxu0 0
    %1011 = vmatpush.bf16.msra.mxu0 0
    %1012 = vmatpush.bf16.msra.mxu0 0
    %1013 = vmatpush.bf16.msra.mxu0 0
    %1014 = vmatpush.bf16.msra.mxu0 0
    %1015 = vmatpush.bf16.msra.mxu0 0
    %1016 = vmatpush.bf16.msra.mxu0 %v975
    %1017 = vmatmul.bf16.gmra.mxu0 %v985
    %v1018 = vpop.f32.mrf.mxu0
    %v1019 = vadd.f32 0.0, %v1018
    %v1020 = vpop.f32.mrf.mxu0
    %v1021 = vadd.f32 0.0, %v1020
    %1022 = vmatmul.bf16.gmra.mxu0 %v988
    %v1023 = vpop.f32.mrf.mxu0
    %v1024 = vadd.f32 0.0, %v1023
    %v1025 = vpop.f32.mrf.mxu0
    %v1026 = vadd.f32 0.0, %v1025
    %1027 = vdwg.mxu0
    %1028 = vmatpush.bf16.msra.mxu0 0
    %1029 = vmatpush.bf16.msra.mxu0 0
    %1030 = vmatpush.bf16.msra.mxu0 0
    %1031 = vmatpush.bf16.msra.mxu0 0
    %1032 = vmatpush.bf16.msra.mxu0 0
    %1033 = vmatpush.bf16.msra.mxu0 0
    %1034 = vmatpush.bf16.msra.mxu0 0
    %1035 = vmatpush.bf16.msra.mxu0 %v976
    %1036 = vmatmul.bf16.gmra.mxu0 %v985
    %v1037 = vpop.f32.mrf.mxu0
    %v1038 = vadd.f32 0.0, %v1037
    %v1039 = vpop.f32.mrf.mxu0
    %v1040 = vadd.f32 0.0, %v1039
    %1041 = vmatmul.bf16.gmra.mxu0 %v988
    %v1042 = vpop.f32.mrf.mxu0
    %v1043 = vadd.f32 0.0, %v1042
    %v1044 = vpop.f32.mrf.mxu0
    %v1045 = vadd.f32 0.0, %v1044
    %1046 = vdwg.mxu0
    %1047 = vmatpush.bf16.msra.mxu0 0
    %1048 = vmatpush.bf16.msra.mxu0 0
    %1049 = vmatpush.bf16.msra.mxu0 0
    %1050 = vmatpush.bf16.msra.mxu0 0
    %1051 = vmatpush.bf16.msra.mxu0 0
    %1052 = vmatpush.bf16.msra.mxu0 0
    %1053 = vmatpush.bf16.msra.mxu0 0
    %1054 = vmatpush.bf16.msra.mxu0 %v977
    %1055 = vmatmul.bf16.gmra.mxu0 %v985
    %v1056 = vpop.f32.mrf.mxu0
    %v1057 = vadd.f32 0.0, %v1056
    %v1058 = vpop.f32.mrf.mxu0
    %v1059 = vadd.f32 0.0, %v1058
    %1060 = vmatmul.bf16.gmra.mxu0 %v988
    %v1061 = vpop.f32.mrf.mxu0
    %v1062 = vadd.f32 0.0, %v1061
    %v1063 = vpop.f32.mrf.mxu0
    %v1064 = vadd.f32 0.0, %v1063
    %1065 = vdwg.mxu0
    %1066 = vmatpush.bf16.msra.mxu0 0
    %1067 = vmatpush.bf16.msra.mxu0 0
    %1068 = vmatpush.bf16.msra.mxu0 0
    %1069 = vmatpush.bf16.msra.mxu0 0
    %1070 = vmatpush.bf16.msra.mxu0 0
    %1071 = vmatpush.bf16.msra.mxu0 0
    %1072 = vmatpush.bf16.msra.mxu0 0
    %1073 = vmatpush.bf16.msra.mxu0 %v978
    %1074 = vmatmul.bf16.gmra.mxu0 %v985
    %v1075 = vpop.f32.mrf.mxu0
    %v1076 = vadd.f32 0.0, %v1075
    %v1077 = vpop.f32.mrf.mxu0
    %v1078 = vadd.f32 0.0, %v1077
    %1079 = vmatmul.bf16.gmra.mxu0 %v988
    %v1080 = vpop.f32.mrf.mxu0
    %v1081 = vadd.f32 0.0, %v1080
    %v1082 = vpop.f32.mrf.mxu0
    %v1083 = vadd.f32 0.0, %v1082
    %1084 = vdwg.mxu0
    %v1085 = vadd.f32 %v923, %v1000
    %v1086 = vadd.f32 %v924, %v1019
    %v1087 = vadd.f32 %v925, %v1038
    %v1088 = vadd.f32 %v926, %v1057
    %v1089 = vadd.f32 %v927, %v1076
    %v1090 = vadd.f32 %v928, %v1002
    %v1091 = vadd.f32 %v929, %v1021
    %v1092 = vadd.f32 %v930, %v1040
    %v1093 = vadd.f32 %v931, %v1059
    %v1094 = vadd.f32 %v932, %v1078
    %v1095 = vadd.f32 %v933, %v1005
    %v1096 = vadd.f32 %v934, %v1024
    %v1097 = vadd.f32 %v935, %v1043
    %v1098 = vadd.f32 %v936, %v1062
    %v1099 = vadd.f32 %v937, %v1081
    %v1100 = vadd.f32 %v938, %v1007
    %v1101 = vadd.f32 %v939, %v1026
    %v1102 = vadd.f32 %v940, %v1045
    %v1103 = vadd.f32 %v941, %v1064
    %v1104 = vadd.f32 %v942, %v1083
    %s1105 = scalar_lea.vmem %s1, 112
    %v1106 = vld [vmem:[%s1105] sm:$0xf]
    %v1107 = vld [vmem:[%s1105 + $0x4] sm:$0xf]
    %v1108 = vld [vmem:[%s1105 + $0x8] sm:$0xf]
    %v1109 = vld [vmem:[%s1105 + $0xc] sm:$0xf]
    %v1114 = vunpack.c.l.b16 %v1106
    %v1115 = vunpack.c.l.b16 %v1107
    %v1116 = vunpack.c.l.b16 %v1108
    %v1117 = vunpack.c.l.b16 %v1109
    %v1118 = vpack.c.b16 %v1115, %v1114
    %v1119 = vpack.c.b16 %v1117, %v1116
    %1120 = vrot.lane.b32.xlu0 %v76, 91
    %v1121 = vpop.permute.xlu0 %1120
    %1122 = vrot.lane.b32.xlu0 %v77, 91
    %v1123 = vpop.permute.xlu0 %1122
    %1124 = vrot.lane.b32.xlu0 %v78, 91
    %v1125 = vpop.permute.xlu0 %1124
    %1126 = vrot.lane.b32.xlu0 %v79, 91
    %v1127 = vpop.permute.xlu0 %1126
    %1128 = vrot.lane.b32.xlu0 %v80, 91
    %v1129 = vpop.permute.xlu0 %1128
    %1130 = vrot.lane.b32.xlu0 %v960, 91
    %v1131 = vpop.permute.xlu0 %1130
    %vm1132 = vcmask 744448
    %v1133 = vsel %vm1132, %v1121, %v1123
    %v1134 = vsel %vm1132, %v1123, %v1125
    %v1135 = vsel %vm1132, %v1125, %v1127
    %v1136 = vsel %vm1132, %v1127, %v1129
    %v1137 = vsel %vm1132, %v1129, %v1131
    %v1144 = vsel %vm101, %v1118, 0
    %v1147 = vsel %vm101, %v1119, 0
    %1149 = vmatpush.bf16.msra.mxu0 0
    %1150 = vmatpush.bf16.msra.mxu0 0
    %1151 = vmatpush.bf16.msra.mxu0 0
    %1152 = vmatpush.bf16.msra.mxu0 0
    %1153 = vmatpush.bf16.msra.mxu0 0
    %1154 = vmatpush.bf16.msra.mxu0 0
    %1155 = vmatpush.bf16.msra.mxu0 0
    %1156 = vmatpush.bf16.msra.mxu0 %v1133
    %1157 = vmatmul.bf16.gmra.mxu0 %v1144
    %v1158 = vpop.f32.mrf.mxu0
    %v1159 = vadd.f32 0.0, %v1158
    %v1160 = vpop.f32.mrf.mxu0
    %v1161 = vadd.f32 0.0, %v1160
    %1162 = vmatmul.bf16.gmra.mxu0 %v1147
    %v1163 = vpop.f32.mrf.mxu0
    %v1164 = vadd.f32 0.0, %v1163
    %v1165 = vpop.f32.mrf.mxu0
    %v1166 = vadd.f32 0.0, %v1165
    %1167 = vdwg.mxu0
    %1168 = vmatpush.bf16.msra.mxu0 0
    %1169 = vmatpush.bf16.msra.mxu0 0
    %1170 = vmatpush.bf16.msra.mxu0 0
    %1171 = vmatpush.bf16.msra.mxu0 0
    %1172 = vmatpush.bf16.msra.mxu0 0
    %1173 = vmatpush.bf16.msra.mxu0 0
    %1174 = vmatpush.bf16.msra.mxu0 0
    %1175 = vmatpush.bf16.msra.mxu0 %v1134
    %1176 = vmatmul.bf16.gmra.mxu0 %v1144
    %v1177 = vpop.f32.mrf.mxu0
    %v1178 = vadd.f32 0.0, %v1177
    %v1179 = vpop.f32.mrf.mxu0
    %v1180 = vadd.f32 0.0, %v1179
    %1181 = vmatmul.bf16.gmra.mxu0 %v1147
    %v1182 = vpop.f32.mrf.mxu0
    %v1183 = vadd.f32 0.0, %v1182
    %v1184 = vpop.f32.mrf.mxu0
    %v1185 = vadd.f32 0.0, %v1184
    %1186 = vdwg.mxu0
    %1187 = vmatpush.bf16.msra.mxu0 0
    %1188 = vmatpush.bf16.msra.mxu0 0
    %1189 = vmatpush.bf16.msra.mxu0 0
    %1190 = vmatpush.bf16.msra.mxu0 0
    %1191 = vmatpush.bf16.msra.mxu0 0
    %1192 = vmatpush.bf16.msra.mxu0 0
    %1193 = vmatpush.bf16.msra.mxu0 0
    %1194 = vmatpush.bf16.msra.mxu0 %v1135
    %1195 = vmatmul.bf16.gmra.mxu0 %v1144
    %v1196 = vpop.f32.mrf.mxu0
    %v1197 = vadd.f32 0.0, %v1196
    %v1198 = vpop.f32.mrf.mxu0
    %v1199 = vadd.f32 0.0, %v1198
    %1200 = vmatmul.bf16.gmra.mxu0 %v1147
    %v1201 = vpop.f32.mrf.mxu0
    %v1202 = vadd.f32 0.0, %v1201
    %v1203 = vpop.f32.mrf.mxu0
    %v1204 = vadd.f32 0.0, %v1203
    %1205 = vdwg.mxu0
    %1206 = vmatpush.bf16.msra.mxu0 0
    %1207 = vmatpush.bf16.msra.mxu0 0
    %1208 = vmatpush.bf16.msra.mxu0 0
    %1209 = vmatpush.bf16.msra.mxu0 0
    %1210 = vmatpush.bf16.msra.mxu0 0
    %1211 = vmatpush.bf16.msra.mxu0 0
    %1212 = vmatpush.bf16.msra.mxu0 0
    %1213 = vmatpush.bf16.msra.mxu0 %v1136
    %1214 = vmatmul.bf16.gmra.mxu0 %v1144
    %v1215 = vpop.f32.mrf.mxu0
    %v1216 = vadd.f32 0.0, %v1215
    %v1217 = vpop.f32.mrf.mxu0
    %v1218 = vadd.f32 0.0, %v1217
    %1219 = vmatmul.bf16.gmra.mxu0 %v1147
    %v1220 = vpop.f32.mrf.mxu0
    %v1221 = vadd.f32 0.0, %v1220
    %v1222 = vpop.f32.mrf.mxu0
    %v1223 = vadd.f32 0.0, %v1222
    %1224 = vdwg.mxu0
    %1225 = vmatpush.bf16.msra.mxu0 0
    %1226 = vmatpush.bf16.msra.mxu0 0
    %1227 = vmatpush.bf16.msra.mxu0 0
    %1228 = vmatpush.bf16.msra.mxu0 0
    %1229 = vmatpush.bf16.msra.mxu0 0
    %1230 = vmatpush.bf16.msra.mxu0 0
    %1231 = vmatpush.bf16.msra.mxu0 0
    %1232 = vmatpush.bf16.msra.mxu0 %v1137
    %1233 = vmatmul.bf16.gmra.mxu0 %v1144
    %v1234 = vpop.f32.mrf.mxu0
    %v1235 = vadd.f32 0.0, %v1234
    %v1236 = vpop.f32.mrf.mxu0
    %v1237 = vadd.f32 0.0, %v1236
    %1238 = vmatmul.bf16.gmra.mxu0 %v1147
    %v1239 = vpop.f32.mrf.mxu0
    %v1240 = vadd.f32 0.0, %v1239
    %v1241 = vpop.f32.mrf.mxu0
    %v1242 = vadd.f32 0.0, %v1241
    %1243 = vdwg.mxu0
    %v1244 = vadd.f32 %v1085, %v1159
    %v1245 = vadd.f32 %v1086, %v1178
    %v1246 = vadd.f32 %v1087, %v1197
    %v1247 = vadd.f32 %v1088, %v1216
    %v1248 = vadd.f32 %v1089, %v1235
    %v1249 = vadd.f32 %v1090, %v1161
    %v1250 = vadd.f32 %v1091, %v1180
    %v1251 = vadd.f32 %v1092, %v1199
    %v1252 = vadd.f32 %v1093, %v1218
    %v1253 = vadd.f32 %v1094, %v1237
    %v1254 = vadd.f32 %v1095, %v1164
    %v1255 = vadd.f32 %v1096, %v1183
    %v1256 = vadd.f32 %v1097, %v1202
    %v1257 = vadd.f32 %v1098, %v1221
    %v1258 = vadd.f32 %v1099, %v1240
    %v1259 = vadd.f32 %v1100, %v1166
    %v1260 = vadd.f32 %v1101, %v1185
    %v1261 = vadd.f32 %v1102, %v1204
    %v1262 = vadd.f32 %v1103, %v1223
    %v1263 = vadd.f32 %v1104, %v1242
    %s1264 = scalar_lea.vmem %s1, 128
    %v1265 = vld [vmem:[%s1264] sm:$0xf]
    %v1266 = vld [vmem:[%s1264 + $0x4] sm:$0xf]
    %v1267 = vld [vmem:[%s1264 + $0x8] sm:$0xf]
    %v1268 = vld [vmem:[%s1264 + $0xc] sm:$0xf]
    %v1273 = vunpack.c.l.b16 %v1265
    %v1274 = vunpack.c.l.b16 %v1266
    %v1275 = vunpack.c.l.b16 %v1267
    %v1276 = vunpack.c.l.b16 %v1268
    %v1277 = vpack.c.b16 %v1274, %v1273
    %v1278 = vpack.c.b16 %v1276, %v1275
    %1279 = vrot.lane.b32.xlu0 %v76, 90
    %v1280 = vpop.permute.xlu0 %1279
    %1281 = vrot.lane.b32.xlu0 %v77, 90
    %v1282 = vpop.permute.xlu0 %1281
    %1283 = vrot.lane.b32.xlu0 %v78, 90
    %v1284 = vpop.permute.xlu0 %1283
    %1285 = vrot.lane.b32.xlu0 %v79, 90
    %v1286 = vpop.permute.xlu0 %1285
    %1287 = vrot.lane.b32.xlu0 %v80, 90
    %v1288 = vpop.permute.xlu0 %1287
    %1289 = vrot.lane.b32.xlu0 %v960, 90
    %v1290 = vpop.permute.xlu0 %1289
    %vm1291 = vcmask 736256
    %v1292 = vsel %vm1291, %v1280, %v1282
    %v1293 = vsel %vm1291, %v1282, %v1284
    %v1294 = vsel %vm1291, %v1284, %v1286
    %v1295 = vsel %vm1291, %v1286, %v1288
    %v1296 = vsel %vm1291, %v1288, %v1290
    %v1303 = vsel %vm101, %v1277, 0
    %v1306 = vsel %vm101, %v1278, 0
    %1308 = vmatpush.bf16.msra.mxu0 0
    %1309 = vmatpush.bf16.msra.mxu0 0
    %1310 = vmatpush.bf16.msra.mxu0 0
    %1311 = vmatpush.bf16.msra.mxu0 0
    %1312 = vmatpush.bf16.msra.mxu0 0
    %1313 = vmatpush.bf16.msra.mxu0 0
    %1314 = vmatpush.bf16.msra.mxu0 0
    %1315 = vmatpush.bf16.msra.mxu0 %v1292
    %1316 = vmatmul.bf16.gmra.mxu0 %v1303
    %v1317 = vpop.f32.mrf.mxu0
    %v1318 = vadd.f32 0.0, %v1317
    %v1319 = vpop.f32.mrf.mxu0
    %v1320 = vadd.f32 0.0, %v1319
    %1321 = vmatmul.bf16.gmra.mxu0 %v1306
    %v1322 = vpop.f32.mrf.mxu0
    %v1323 = vadd.f32 0.0, %v1322
    %v1324 = vpop.f32.mrf.mxu0
    %v1325 = vadd.f32 0.0, %v1324
    %1326 = vdwg.mxu0
    %1327 = vmatpush.bf16.msra.mxu0 0
    %1328 = vmatpush.bf16.msra.mxu0 0
    %1329 = vmatpush.bf16.msra.mxu0 0
    %1330 = vmatpush.bf16.msra.mxu0 0
    %1331 = vmatpush.bf16.msra.mxu0 0
    %1332 = vmatpush.bf16.msra.mxu0 0
    %1333 = vmatpush.bf16.msra.mxu0 0
    %1334 = vmatpush.bf16.msra.mxu0 %v1293
    %1335 = vmatmul.bf16.gmra.mxu0 %v1303
    %v1336 = vpop.f32.mrf.mxu0
    %v1337 = vadd.f32 0.0, %v1336
    %v1338 = vpop.f32.mrf.mxu0
    %v1339 = vadd.f32 0.0, %v1338
    %1340 = vmatmul.bf16.gmra.mxu0 %v1306
    %v1341 = vpop.f32.mrf.mxu0
    %v1342 = vadd.f32 0.0, %v1341
    %v1343 = vpop.f32.mrf.mxu0
    %v1344 = vadd.f32 0.0, %v1343
    %1345 = vdwg.mxu0
    %1346 = vmatpush.bf16.msra.mxu0 0
    %1347 = vmatpush.bf16.msra.mxu0 0
    %1348 = vmatpush.bf16.msra.mxu0 0
    %1349 = vmatpush.bf16.msra.mxu0 0
    %1350 = vmatpush.bf16.msra.mxu0 0
    %1351 = vmatpush.bf16.msra.mxu0 0
    %1352 = vmatpush.bf16.msra.mxu0 0
    %1353 = vmatpush.bf16.msra.mxu0 %v1294
    %1354 = vmatmul.bf16.gmra.mxu0 %v1303
    %v1355 = vpop.f32.mrf.mxu0
    %v1356 = vadd.f32 0.0, %v1355
    %v1357 = vpop.f32.mrf.mxu0
    %v1358 = vadd.f32 0.0, %v1357
    %1359 = vmatmul.bf16.gmra.mxu0 %v1306
    %v1360 = vpop.f32.mrf.mxu0
    %v1361 = vadd.f32 0.0, %v1360
    %v1362 = vpop.f32.mrf.mxu0
    %v1363 = vadd.f32 0.0, %v1362
    %1364 = vdwg.mxu0
    %1365 = vmatpush.bf16.msra.mxu0 0
    %1366 = vmatpush.bf16.msra.mxu0 0
    %1367 = vmatpush.bf16.msra.mxu0 0
    %1368 = vmatpush.bf16.msra.mxu0 0
    %1369 = vmatpush.bf16.msra.mxu0 0
    %1370 = vmatpush.bf16.msra.mxu0 0
    %1371 = vmatpush.bf16.msra.mxu0 0
    %1372 = vmatpush.bf16.msra.mxu0 %v1295
    %1373 = vmatmul.bf16.gmra.mxu0 %v1303
    %v1374 = vpop.f32.mrf.mxu0
    %v1375 = vadd.f32 0.0, %v1374
    %v1376 = vpop.f32.mrf.mxu0
    %v1377 = vadd.f32 0.0, %v1376
    %1378 = vmatmul.bf16.gmra.mxu0 %v1306
    %v1379 = vpop.f32.mrf.mxu0
    %v1380 = vadd.f32 0.0, %v1379
    %v1381 = vpop.f32.mrf.mxu0
    %v1382 = vadd.f32 0.0, %v1381
    %1383 = vdwg.mxu0
    %1384 = vmatpush.bf16.msra.mxu0 0
    %1385 = vmatpush.bf16.msra.mxu0 0
    %1386 = vmatpush.bf16.msra.mxu0 0
    %1387 = vmatpush.bf16.msra.mxu0 0
    %1388 = vmatpush.bf16.msra.mxu0 0
    %1389 = vmatpush.bf16.msra.mxu0 0
    %1390 = vmatpush.bf16.msra.mxu0 0
    %1391 = vmatpush.bf16.msra.mxu0 %v1296
    %1392 = vmatmul.bf16.gmra.mxu0 %v1303
    %v1393 = vpop.f32.mrf.mxu0
    %v1394 = vadd.f32 0.0, %v1393
    %v1395 = vpop.f32.mrf.mxu0
    %v1396 = vadd.f32 0.0, %v1395
    %1397 = vmatmul.bf16.gmra.mxu0 %v1306
    %v1398 = vpop.f32.mrf.mxu0
    %v1399 = vadd.f32 0.0, %v1398
    %v1400 = vpop.f32.mrf.mxu0
    %v1401 = vadd.f32 0.0, %v1400
    %1402 = vdwg.mxu0
    %v1403 = vadd.f32 %v1244, %v1318
    %v1404 = vadd.f32 %v1245, %v1337
    %v1405 = vadd.f32 %v1246, %v1356
    %v1406 = vadd.f32 %v1247, %v1375
    %v1407 = vadd.f32 %v1248, %v1394
    %v1408 = vadd.f32 %v1249, %v1320
    %v1409 = vadd.f32 %v1250, %v1339
    %v1410 = vadd.f32 %v1251, %v1358
    %v1411 = vadd.f32 %v1252, %v1377
    %v1412 = vadd.f32 %v1253, %v1396
    %v1413 = vadd.f32 %v1254, %v1323
    %v1414 = vadd.f32 %v1255, %v1342
    %v1415 = vadd.f32 %v1256, %v1361
    %v1416 = vadd.f32 %v1257, %v1380
    %v1417 = vadd.f32 %v1258, %v1399
    %v1418 = vadd.f32 %v1259, %v1325
    %v1419 = vadd.f32 %v1260, %v1344
    %v1420 = vadd.f32 %v1261, %v1363
    %v1421 = vadd.f32 %v1262, %v1382
    %v1422 = vadd.f32 %v1263, %v1401
    %v1423 = vld [vmem:[#allocation2] sm:$0x1f]
    %v1425 = vperm.slane %v1423, 0
    %v1426 = vperm.slane %v1423, 1
    %v1427 = vperm.slane %v1423, 2
    %v1428 = vperm.slane %v1423, 3
    %v1429 = vperm.slane %v1423, 4
    %v1435 = vmul.f32 %v1403, %v1425
    %v1436 = vmul.f32 %v1404, %v1426
    %v1437 = vmul.f32 %v1405, %v1427
    %v1438 = vmul.f32 %v1406, %v1428
    %v1439 = vmul.f32 %v1407, %v1429
    %v1440 = vmul.f32 %v1408, %v1425
    %v1441 = vmul.f32 %v1409, %v1426
    %v1442 = vmul.f32 %v1410, %v1427
    %v1443 = vmul.f32 %v1411, %v1428
    %v1444 = vmul.f32 %v1412, %v1429
    %v1445 = vmul.f32 %v1413, %v1425
    %v1446 = vmul.f32 %v1414, %v1426
    %v1447 = vmul.f32 %v1415, %v1427
    %v1448 = vmul.f32 %v1416, %v1428
    %v1449 = vmul.f32 %v1417, %v1429
    %v1450 = vmul.f32 %v1418, %v1425
    %v1451 = vmul.f32 %v1419, %v1426
    %v1452 = vmul.f32 %v1420, %v1427
    %v1453 = vmul.f32 %v1421, %v1428
    %v1454 = vmul.f32 %v1422, %v1429
    %v1455 = vadd.f32 %v1435, %v1436
    %v1456 = vadd.f32 %v1455, %v1437
    %v1457 = vadd.f32 %v1456, %v1438
    %vm1458 = vcmask 801792
    %v1459 = vsel %vm1458, %v1439, 0.0
    %v1460 = vadd.f32 %v1457, %v1459
    %1461 = vadd.xlane.f32.xlu0 %v1460
    %v1462 = vpop.xlane.xlu0 %1461
    %v1463 = vadd.f32 %v1440, %v1441
    %v1464 = vadd.f32 %v1463, %v1442
    %v1465 = vadd.f32 %v1464, %v1443
    %v1466 = vsel %vm1458, %v1444, 0.0
    %v1467 = vadd.f32 %v1465, %v1466
    %1468 = vadd.xlane.f32.xlu0 %v1467
    %v1469 = vpop.xlane.xlu0 %1468
    %v1470 = vadd.f32 %v1445, %v1446
    %v1471 = vadd.f32 %v1470, %v1447
    %v1472 = vadd.f32 %v1471, %v1448
    %v1473 = vsel %vm1458, %v1449, 0.0
    %v1474 = vadd.f32 %v1472, %v1473
    %1475 = vadd.xlane.f32.xlu0 %v1474
    %v1476 = vpop.xlane.xlu0 %1475
    %v1477 = vadd.f32 %v1450, %v1451
    %v1478 = vadd.f32 %v1477, %v1452
    %v1479 = vadd.f32 %v1478, %v1453
    %v1480 = vsel %vm1458, %v1454, 0.0
    %v1481 = vadd.f32 %v1479, %v1480
    %1482 = vadd.xlane.f32.xlu0 %v1481
    %v1483 = vpop.xlane.xlu0 %1482
    %v1484 = vmul.f32 %v1403, %v1403
    %v1485 = vmul.f32 %v1404, %v1404
    %v1486 = vmul.f32 %v1405, %v1405
    %v1487 = vmul.f32 %v1406, %v1406
    %v1488 = vmul.f32 %v1407, %v1407
    %v1489 = vmul.f32 %v1408, %v1408
    %v1490 = vmul.f32 %v1409, %v1409
    %v1491 = vmul.f32 %v1410, %v1410
    %v1492 = vmul.f32 %v1411, %v1411
    %v1493 = vmul.f32 %v1412, %v1412
    %v1494 = vmul.f32 %v1413, %v1413
    %v1495 = vmul.f32 %v1414, %v1414
    %v1496 = vmul.f32 %v1415, %v1415
    %v1497 = vmul.f32 %v1416, %v1416
    %v1498 = vmul.f32 %v1417, %v1417
    %v1499 = vmul.f32 %v1418, %v1418
    %v1500 = vmul.f32 %v1419, %v1419
    %v1501 = vmul.f32 %v1420, %v1420
    %v1502 = vmul.f32 %v1421, %v1421
    %v1503 = vmul.f32 %v1422, %v1422
    %v1504 = vmul.f32 %v1484, %v1425
    %v1505 = vmul.f32 %v1485, %v1426
    %v1506 = vmul.f32 %v1486, %v1427
    %v1507 = vmul.f32 %v1487, %v1428
    %v1508 = vmul.f32 %v1488, %v1429
    %v1509 = vmul.f32 %v1489, %v1425
    %v1510 = vmul.f32 %v1490, %v1426
    %v1511 = vmul.f32 %v1491, %v1427
    %v1512 = vmul.f32 %v1492, %v1428
    %v1513 = vmul.f32 %v1493, %v1429
    %v1514 = vmul.f32 %v1494, %v1425
    %v1515 = vmul.f32 %v1495, %v1426
    %v1516 = vmul.f32 %v1496, %v1427
    %v1517 = vmul.f32 %v1497, %v1428
    %v1518 = vmul.f32 %v1498, %v1429
    %v1519 = vmul.f32 %v1499, %v1425
    %v1520 = vmul.f32 %v1500, %v1426
    %v1521 = vmul.f32 %v1501, %v1427
    %v1522 = vmul.f32 %v1502, %v1428
    %v1523 = vmul.f32 %v1503, %v1429
    %v1524 = vadd.f32 %v1504, %v1505
    %v1525 = vadd.f32 %v1524, %v1506
    %v1526 = vadd.f32 %v1525, %v1507
    %v1527 = vsel %vm1458, %v1508, 0.0
    %v1528 = vadd.f32 %v1526, %v1527
    %1529 = vadd.xlane.f32.xlu0 %v1528
    %v1530 = vpop.xlane.xlu0 %1529
    %v1531 = vadd.f32 %v1509, %v1510
    %v1532 = vadd.f32 %v1531, %v1511
    %v1533 = vadd.f32 %v1532, %v1512
    %v1534 = vsel %vm1458, %v1513, 0.0
    %v1535 = vadd.f32 %v1533, %v1534
    %1536 = vadd.xlane.f32.xlu0 %v1535
    %v1537 = vpop.xlane.xlu0 %1536
    %v1538 = vadd.f32 %v1514, %v1515
    %v1539 = vadd.f32 %v1538, %v1516
    %v1540 = vadd.f32 %v1539, %v1517
    %v1541 = vsel %vm1458, %v1518, 0.0
    %v1542 = vadd.f32 %v1540, %v1541
    %1543 = vadd.xlane.f32.xlu0 %v1542
    %v1544 = vpop.xlane.xlu0 %1543
    %v1545 = vadd.f32 %v1519, %v1520
    %v1546 = vadd.f32 %v1545, %v1521
    %v1547 = vadd.f32 %v1546, %v1522
    %v1548 = vsel %vm1458, %v1523, 0.0
    %v1549 = vadd.f32 %v1547, %v1548
    %1550 = vadd.xlane.f32.xlu0 %v1549
    %v1551 = vpop.xlane.xlu0 %1550
    %v1552 = vadd.f32 %v1462, %v1469
    %v1553 = vadd.f32 %v1552, %v1476
    %v1554 = vadd.f32 %v1553, %v1483
    %v1555 = vadd.f32 %v1530, %v1537
    %v1556 = vadd.f32 %v1555, %v1544
    %v1557 = vadd.f32 %v1556, %v1551
    %v1558 = vmul.f32 %v1554, 0.00048828125
    %v1559 = vmul.f32 %v1557, 0.00048828125
    %v1560 = vmul.f32 %v1558, %v1558
    %v1561 = vsub.f32 %v1559, %v1560
    %v1562 = vmax.f32 %v1561, 0.0
    %v1563 = vld [vmem:[%s2] sm:$0xff]
    %v1564 = vadd.f32 %v1562, 1e-05
    %v1565 = vrsqrt.pop %v1564
    %v1566 = vmul.f32 %v1565, %v1564
    %v1567 = vmul.f32 %v1566, %v1565
    %v1568 = vmul.f32 0.5, %v1567
    %v1569 = vsub.f32 1.5, %v1568
    %v1570 = vmul.f32 %v1565, %v1569
    %vm1571 = vweird.f32 %v1564
    %vm1572 = vweird.f32 %v1565
    %vm1573 = vmor %vm1571, %vm1572
    %v1574 = vsel %vm1573, %v1565, %v1570
    %v1575 = vmul.f32 %v1563, %v1574
    %v1576 = vld [vmem:[%s3] sm:$0xff]
    %v1577 = vmul.f32 %v1558, %v1575
    %v1578 = vsub.f32 %v1576, %v1577
    %1580 = vset.pattern.permute.xlu0 0
    %1581 = vperm.xlu0 %1580, %v1575
    %v1582 = vpop.permute.xlu0 %1581
    %v1584 = vmul.f32 %v1403, %v1582
    %v1585 = vmul.f32 %v1404, %v1582
    %v1586 = vmul.f32 %v1405, %v1582
    %v1587 = vmul.f32 %v1406, %v1582
    %v1588 = vmul.f32 %v1407, %v1582
    %v1589 = vmul.f32 %v1408, %v1582
    %v1590 = vmul.f32 %v1409, %v1582
    %v1591 = vmul.f32 %v1410, %v1582
    %v1592 = vmul.f32 %v1411, %v1582
    %v1593 = vmul.f32 %v1412, %v1582
    %v1594 = vmul.f32 %v1413, %v1582
    %v1595 = vmul.f32 %v1414, %v1582
    %v1596 = vmul.f32 %v1415, %v1582
    %v1597 = vmul.f32 %v1416, %v1582
    %v1598 = vmul.f32 %v1417, %v1582
    %v1599 = vmul.f32 %v1418, %v1582
    %v1600 = vmul.f32 %v1419, %v1582
    %v1601 = vmul.f32 %v1420, %v1582
    %v1602 = vmul.f32 %v1421, %v1582
    %v1603 = vmul.f32 %v1422, %v1582
    %1605 = vset.pattern.permute.xlu0 0
    %1606 = vperm.xlu0 %1605, %v1578
    %v1607 = vpop.permute.xlu0 %1606
    %v1609 = vadd.f32 %v1584, %v1607
    %v1610 = vadd.f32 %v1585, %v1607
    %v1611 = vadd.f32 %v1586, %v1607
    %v1612 = vadd.f32 %v1587, %v1607
    %v1613 = vadd.f32 %v1588, %v1607
    %v1614 = vadd.f32 %v1589, %v1607
    %v1615 = vadd.f32 %v1590, %v1607
    %v1616 = vadd.f32 %v1591, %v1607
    %v1617 = vadd.f32 %v1592, %v1607
    %v1618 = vadd.f32 %v1593, %v1607
    %v1619 = vadd.f32 %v1594, %v1607
    %v1620 = vadd.f32 %v1595, %v1607
    %v1621 = vadd.f32 %v1596, %v1607
    %v1622 = vadd.f32 %v1597, %v1607
    %v1623 = vadd.f32 %v1598, %v1607
    %v1624 = vadd.f32 %v1599, %v1607
    %v1625 = vadd.f32 %v1600, %v1607
    %v1626 = vadd.f32 %v1601, %v1607
    %v1627 = vadd.f32 %v1602, %v1607
    %v1628 = vadd.f32 %v1603, %v1607
    %v1629 = vmax.f32 %v1609, 0.0
    %v1630 = vmax.f32 %v1610, 0.0
    %v1631 = vmax.f32 %v1611, 0.0
    %v1632 = vmax.f32 %v1612, 0.0
    %v1633 = vmax.f32 %v1613, 0.0
    %v1634 = vmax.f32 %v1614, 0.0
    %v1635 = vmax.f32 %v1615, 0.0
    %v1636 = vmax.f32 %v1616, 0.0
    %v1637 = vmax.f32 %v1617, 0.0
    %v1638 = vmax.f32 %v1618, 0.0
    %v1639 = vmax.f32 %v1619, 0.0
    %v1640 = vmax.f32 %v1620, 0.0
    %v1641 = vmax.f32 %v1621, 0.0
    %v1642 = vmax.f32 %v1622, 0.0
    %v1643 = vmax.f32 %v1623, 0.0
    %v1644 = vmax.f32 %v1624, 0.0
    %v1645 = vmax.f32 %v1625, 0.0
    %v1646 = vmax.f32 %v1626, 0.0
    %v1647 = vmax.f32 %v1627, 0.0
    %v1648 = vmax.f32 %v1628, 0.0
    %v1649 = vpack.c.bf16 %v1630, %v1629
    %v1650 = vpack.c.bf16 %v1632, %v1631
    %v1651 = vpack.c.bf16 %v1633, %v1633
    %v1652 = vpack.c.bf16 %v1635, %v1634
    %v1653 = vpack.c.bf16 %v1637, %v1636
    %v1654 = vpack.c.bf16 %v1638, %v1638
    %v1655 = vpack.c.bf16 %v1640, %v1639
    %v1656 = vpack.c.bf16 %v1642, %v1641
    %v1657 = vpack.c.bf16 %v1643, %v1643
    %v1658 = vpack.c.bf16 %v1645, %v1644
    %v1659 = vpack.c.bf16 %v1647, %v1646
    %v1660 = vpack.c.bf16 %v1648, %v1648
    %1661 = vst [vmem:[%s5] sm:$0xff] %v1649
    %1662 = vst [vmem:[%s5 + $0x8] sm:$0xff] %v1650
    %vm1663 = vcmask 797696
    %1664 = vst.msk [vmem:[%s5 + $0x10] sm:$0xf] %vm1663, %v1651
    %1665 = vst [vmem:[%s5 + $0x14] sm:$0xff] %v1652
    %1666 = vst [vmem:[%s5 + $0x1c] sm:$0xff] %v1653
    %1667 = vst.msk [vmem:[%s5 + $0x24] sm:$0xf] %vm1663, %v1654
    %1668 = vst [vmem:[%s5 + $0x28] sm:$0xff] %v1655
    %1669 = vst [vmem:[%s5 + $0x30] sm:$0xff] %v1656
    %1670 = vst.msk [vmem:[%s5 + $0x38] sm:$0xf] %vm1663, %v1657
    %1671 = vst [vmem:[%s5 + $0x3c] sm:$0xff] %v1658
    %1672 = vst [vmem:[%s5 + $0x44] sm:$0xff] %v1659
    %1673 = vst.msk [vmem:[%s5 + $0x4c] sm:$0xf] %vm1663, %v1660
    // Predicated region
    $region26: #{generator_forward.8} parent=1 // pred_check
      _
    $region27: #{generator_forward.8} parent=1 // pred_check_branch
      %1675 = sbr.rel (0) target = $region29
    $region28: #{generator_forward.8} parent=1 // pred_region
      _
    $region29: #{generator_forward.8} parent=1 // pred_fallthru
      _
    // Predicated region
    $region30: #{generator_forward.8} parent=1 // pred_check
      _
    $region31: #{generator_forward.8} parent=1 // pred_check_branch
      %1677 = sbr.rel (0) target = $region33
    $region32: #{generator_forward.8} parent=1 // pred_region
      _
    $region33: #{generator_forward.8} parent=1 // pred_fallthru
      _
    %1678 = vsyncpa [#allocation3], 1

// kernel: generator_forward.9
$region0: #{generator_forward.9}
  #allocation0 [shape = 'u32[]', space=smem, size = 0x4, offset = 0x4, fixed_abs, tag = 'smem constant byte address 0x4 - core index']
  #allocation1 [shape = 'u32[72,128]{1,0:T(1,128)}', space=vmem, size = 0x9000, scoped, tag = 'internal scratch']
  %s0 = inlined_call_operand.vmem [shape: bf16[8,2312], index: 0, kind: input, shape index: {}]
  %s1 = inlined_call_operand.vmem [shape: bf16[9,12,8], index: 1, kind: input, shape index: {}]
  %s2 = inlined_call_operand.vmem [shape: f32[12,1], index: 2, kind: input, shape index: {}]
  %s3 = inlined_call_operand.vmem [shape: f32[12,2242], index: 3, kind: output, shape index: {}]
  %s4 = sld [smem:[#allocation0]]
  $region22: #{generator_forward.9} parent=0
    _
  %s6 = ssub.s32 1, %s4
  %s7 = scalar_select 0, %s6, %s4
  // Predicated region
  $region2: #{generator_forward.9} parent=0 // pred_check
    _
  $region3: #{generator_forward.9} parent=0 // pred_check_branch
    %9 = sbr.rel (0) target = $region5
  $region4: #{generator_forward.9} parent=0 // pred_region
    _
  $region5: #{generator_forward.9} parent=0 // pred_fallthru
    _
  // Predicated region
  $region6: #{generator_forward.9} parent=0 // pred_check
    _
  $region7: #{generator_forward.9} parent=0 // pred_check_branch
    %11 = sbr.rel (0) target = $region9
  $region8: #{generator_forward.9} parent=0 // pred_region
    _
  $region9: #{generator_forward.9} parent=0 // pred_fallthru
    _
  // Predicated region
  $region10: #{generator_forward.9} parent=0 // pred_check
    _
  $region11: #{generator_forward.9} parent=0 // pred_check_branch
    %13 = sbr.rel (0) target = $region13
  $region12: #{generator_forward.9} parent=0 // pred_region
    _
  $region13: #{generator_forward.9} parent=0 // pred_fallthru
    _
  %v15 = vld [vmem:[%s0] sm:$0xff]
  %v16 = vld [vmem:[%s0 + $0x8] sm:$0xff]
  %v17 = vld [vmem:[%s0 + $0x10] sm:$0xff]
  %v18 = vld [vmem:[%s0 + $0x18] sm:$0xff]
  %v19 = vld [vmem:[%s0 + $0x20] sm:$0xff]
  %v20 = vld [vmem:[%s0 + $0x28] sm:$0xff]
  %v21 = vld [vmem:[%s0 + $0x30] sm:$0xff]
  %v22 = vld [vmem:[%s0 + $0x38] sm:$0xff]
  %v23 = vld [vmem:[%s0 + $0x40] sm:$0xff]
  %v24 = vld [vmem:[%s0 + $0x48] sm:$0xf]
  %v25 = vld [vmem:[%s1] sm:$0xf]
  %v26 = vld [vmem:[%s1 + $0x4] sm:$0x3]
  %s27 = scalar_lea.vmem %s1, 8
  %v28 = vld [vmem:[%s27] sm:$0xf]
  %v29 = vld [vmem:[%s27 + $0x4] sm:$0x3]
  %v32 = vunpack.c.l.b16 %v28
  %v33 = vunpack.c.l.b16 %v29
  %v34 = vpack.c.b16 %v33, %v32
  %v44 = vunpack.c.l.b16 %v15
  %v45 = vunpack.c.h.b16 %v15
  %v46 = vunpack.c.l.b16 %v16
  %v47 = vunpack.c.h.b16 %v16
  %v48 = vunpack.c.l.b16 %v17
  %v49 = vunpack.c.h.b16 %v17
  %v50 = vunpack.c.l.b16 %v18
  %v51 = vunpack.c.h.b16 %v18
  %v52 = vunpack.c.l.b16 %v19
  %v53 = vunpack.c.h.b16 %v19
  %v54 = vunpack.c.l.b16 %v20
  %v55 = vunpack.c.h.b16 %v20
  %v56 = vunpack.c.l.b16 %v21
  %v57 = vunpack.c.h.b16 %v21
  %v58 = vunpack.c.l.b16 %v22
  %v59 = vunpack.c.h.b16 %v22
  %v60 = vunpack.c.l.b16 %v23
  %v61 = vunpack.c.h.b16 %v23
  %v62 = vpack.c.b16 %v44, %v44
  %v63 = vpack.c.b16 %v45, %v45
  %v64 = vpack.c.b16 %v46, %v46
  %v65 = vpack.c.b16 %v47, %v47
  %v66 = vpack.c.b16 %v48, %v48
  %v67 = vpack.c.b16 %v49, %v49
  %v68 = vpack.c.b16 %v50, %v50
  %v69 = vpack.c.b16 %v51, %v51
  %v70 = vpack.c.b16 %v52, %v52
  %v71 = vpack.c.b16 %v53, %v53
  %v72 = vpack.c.b16 %v54, %v54
  %v73 = vpack.c.b16 %v55, %v55
  %v74 = vpack.c.b16 %v56, %v56
  %v75 = vpack.c.b16 %v57, %v57
  %v76 = vpack.c.b16 %v58, %v58
  %v77 = vpack.c.b16 %v59, %v59
  %v78 = vpack.c.b16 %v60, %v60
  %v79 = vpack.c.b16 %v61, %v61
  %80 = vrot.lane.b32.xlu0 %v62, 127
  %v81 = vpop.permute.xlu0 %80
  %82 = vrot.lane.b32.xlu0 %v63, 127
  %v83 = vpop.permute.xlu0 %82
  %84 = vrot.lane.b32.xlu0 %v64, 127
  %v85 = vpop.permute.xlu0 %84
  %86 = vrot.lane.b32.xlu0 %v65, 127
  %v87 = vpop.permute.xlu0 %86
  %88 = vrot.lane.b32.xlu0 %v66, 127
  %v89 = vpop.permute.xlu0 %88
  %90 = vrot.lane.b32.xlu0 %v67, 127
  %v91 = vpop.permute.xlu0 %90
  %92 = vrot.lane.b32.xlu0 %v68, 127
  %v93 = vpop.permute.xlu0 %92
  %94 = vrot.lane.b32.xlu0 %v69, 127
  %v95 = vpop.permute.xlu0 %94
  %96 = vrot.lane.b32.xlu0 %v70, 127
  %v97 = vpop.permute.xlu0 %96
  %98 = vrot.lane.b32.xlu0 %v71, 127
  %v99 = vpop.permute.xlu0 %98
  %100 = vrot.lane.b32.xlu0 %v72, 127
  %v101 = vpop.permute.xlu0 %100
  %102 = vrot.lane.b32.xlu0 %v73, 127
  %v103 = vpop.permute.xlu0 %102
  %104 = vrot.lane.b32.xlu0 %v74, 127
  %v105 = vpop.permute.xlu0 %104
  %106 = vrot.lane.b32.xlu0 %v75, 127
  %v107 = vpop.permute.xlu0 %106
  %108 = vrot.lane.b32.xlu0 %v76, 127
  %v109 = vpop.permute.xlu0 %108
  %110 = vrot.lane.b32.xlu0 %v77, 127
  %v111 = vpop.permute.xlu0 %110
  %112 = vrot.lane.b32.xlu0 %v78, 127
  %v113 = vpop.permute.xlu0 %112
  %114 = vrot.lane.b32.xlu0 %v79, 127
  %v115 = vpop.permute.xlu0 %114
  %vm116 = vcmask 1039360
  %v117 = vsel %vm116, %v81, %v83
  %v118 = vsel %vm116, %v83, %v85
  %v119 = vsel %vm116, %v85, %v87
  %v120 = vsel %vm116, %v87, %v89
  %v121 = vsel %vm116, %v89, %v91
  %v122 = vsel %vm116, %v91, %v93
  %v123 = vsel %vm116, %v93, %v95
  %v124 = vsel %vm116, %v95, %v97
  %v125 = vsel %vm116, %v97, %v99
  %v126 = vsel %vm116, %v99, %v101
  %v127 = vsel %vm116, %v101, %v103
  %v128 = vsel %vm116, %v103, %v105
  %v129 = vsel %vm116, %v105, %v107
  %v130 = vsel %vm116, %v107, %v109
  %v131 = vsel %vm116, %v109, %v111
  %v132 = vsel %vm116, %v111, %v113
  %v133 = vsel %vm116, %v113, %v115
  %vm134 = vcmask 64512
  %v136 = vsel %vm134, %v34, 0
  %vm138 = vcmask 1043456
  %v140 = vsel %vm138, %v117, 0
  %v143 = vsel %vm138, %v118, 0
  %v146 = vsel %vm138, %v119, 0
  %v149 = vsel %vm138, %v120, 0
  %v152 = vsel %vm138, %v121, 0
  %v155 = vsel %vm138, %v122, 0
  %v158 = vsel %vm138, %v123, 0
  %v161 = vsel %vm138, %v124, 0
  %v164 = vsel %vm138, %v125, 0
  %v167 = vsel %vm138, %v126, 0
  %v170 = vsel %vm138, %v127, 0
  %v173 = vsel %vm138, %v128, 0
  %v176 = vsel %vm138, %v129, 0
  %v179 = vsel %vm138, %v130, 0
  %v182 = vsel %vm138, %v131, 0
  %v185 = vsel %vm138, %v132, 0
  %v188 = vsel %vm138, %v133, 0
  %v191 = vsel %vm138, %v115, 0
  %193 = vmatpush.bf16.msra.mxu0 0
  %194 = vmatpush.bf16.msra.mxu0 0
  %195 = vmatpush.bf16.msra.mxu0 0
  %196 = vmatpush.bf16.msra.mxu0 0
  %197 = vmatpush.bf16.msra.mxu0 0
  %198 = vmatpush.bf16.msra.mxu0 0
  %199 = vmatpush.bf16.msra.mxu0 0
  %200 = vmatpush.bf16.msra.mxu0 %v140
  %201 = vmatmul.bf16.gmra.mxu0 %v136
  %v202 = vpop.f32.mrf.mxu0
  %v203 = vadd.f32 0.0, %v202
  %v204 = vpop.f32.mrf.mxu0
  %v205 = vadd.f32 0.0, %v204
  %206 = vdwg.mxu0
  %207 = vmatpush.bf16.msra.mxu0 0
  %208 = vmatpush.bf16.msra.mxu0 0
  %209 = vmatpush.bf16.msra.mxu0 0
  %210 = vmatpush.bf16.msra.mxu0 0
  %211 = vmatpush.bf16.msra.mxu0 0
  %212 = vmatpush.bf16.msra.mxu0 0
  %213 = vmatpush.bf16.msra.mxu0 0
  %214 = vmatpush.bf16.msra.mxu0 %v143
  %215 = vmatmul.bf16.gmra.mxu0 %v136
  %v216 = vpop.f32.mrf.mxu0
  %v217 = vadd.f32 0.0, %v216
  %v218 = vpop.f32.mrf.mxu0
  %v219 = vadd.f32 0.0, %v218
  %220 = vdwg.mxu0
  %221 = vmatpush.bf16.msra.mxu0 0
  %222 = vmatpush.bf16.msra.mxu0 0
  %223 = vmatpush.bf16.msra.mxu0 0
  %224 = vmatpush.bf16.msra.mxu0 0
  %225 = vmatpush.bf16.msra.mxu0 0
  %226 = vmatpush.bf16.msra.mxu0 0
  %227 = vmatpush.bf16.msra.mxu0 0
  %228 = vmatpush.bf16.msra.mxu0 %v146
  %229 = vmatmul.bf16.gmra.mxu0 %v136
  %v230 = vpop.f32.mrf.mxu0
  %v231 = vadd.f32 0.0, %v230
  %v232 = vpop.f32.mrf.mxu0
  %v233 = vadd.f32 0.0, %v232
  %234 = vdwg.mxu0
  %235 = vmatpush.bf16.msra.mxu0 0
  %236 = vmatpush.bf16.msra.mxu0 0
  %237 = vmatpush.bf16.msra.mxu0 0
  %238 = vmatpush.bf16.msra.mxu0 0
  %239 = vmatpush.bf16.msra.mxu0 0
  %240 = vmatpush.bf16.msra.mxu0 0
  %241 = vmatpush.bf16.msra.mxu0 0
  %242 = vmatpush.bf16.msra.mxu0 %v149
  %243 = vmatmul.bf16.gmra.mxu0 %v136
  %v244 = vpop.f32.mrf.mxu0
  %v245 = vadd.f32 0.0, %v244
  %v246 = vpop.f32.mrf.mxu0
  %v247 = vadd.f32 0.0, %v246
  %248 = vdwg.mxu0
  %249 = vmatpush.bf16.msra.mxu0 0
  %250 = vmatpush.bf16.msra.mxu0 0
  %251 = vmatpush.bf16.msra.mxu0 0
  %252 = vmatpush.bf16.msra.mxu0 0
  %253 = vmatpush.bf16.msra.mxu0 0
  %254 = vmatpush.bf16.msra.mxu0 0
  %255 = vmatpush.bf16.msra.mxu0 0
  %256 = vmatpush.bf16.msra.mxu0 %v152
  %257 = vmatmul.bf16.gmra.mxu0 %v136
  %v258 = vpop.f32.mrf.mxu0
  %v259 = vadd.f32 0.0, %v258
  %v260 = vpop.f32.mrf.mxu0
  %v261 = vadd.f32 0.0, %v260
  %262 = vdwg.mxu0
  %263 = vmatpush.bf16.msra.mxu0 0
  %264 = vmatpush.bf16.msra.mxu0 0
  %265 = vmatpush.bf16.msra.mxu0 0
  %266 = vmatpush.bf16.msra.mxu0 0
  %267 = vmatpush.bf16.msra.mxu0 0
  %268 = vmatpush.bf16.msra.mxu0 0
  %269 = vmatpush.bf16.msra.mxu0 0
  %270 = vmatpush.bf16.msra.mxu0 %v155
  %271 = vmatmul.bf16.gmra.mxu0 %v136
  %v272 = vpop.f32.mrf.mxu0
  %v273 = vadd.f32 0.0, %v272
  %v274 = vpop.f32.mrf.mxu0
  %v275 = vadd.f32 0.0, %v274
  %276 = vdwg.mxu0
  %277 = vmatpush.bf16.msra.mxu0 0
  %278 = vmatpush.bf16.msra.mxu0 0
  %279 = vmatpush.bf16.msra.mxu0 0
  %280 = vmatpush.bf16.msra.mxu0 0
  %281 = vmatpush.bf16.msra.mxu0 0
  %282 = vmatpush.bf16.msra.mxu0 0
  %283 = vmatpush.bf16.msra.mxu0 0
  %284 = vmatpush.bf16.msra.mxu0 %v158
  %285 = vmatmul.bf16.gmra.mxu0 %v136
  %v286 = vpop.f32.mrf.mxu0
  %v287 = vadd.f32 0.0, %v286
  %v288 = vpop.f32.mrf.mxu0
  %v289 = vadd.f32 0.0, %v288
  %290 = vdwg.mxu0
  %291 = vmatpush.bf16.msra.mxu0 0
  %292 = vmatpush.bf16.msra.mxu0 0
  %293 = vmatpush.bf16.msra.mxu0 0
  %294 = vmatpush.bf16.msra.mxu0 0
  %295 = vmatpush.bf16.msra.mxu0 0
  %296 = vmatpush.bf16.msra.mxu0 0
  %297 = vmatpush.bf16.msra.mxu0 0
  %298 = vmatpush.bf16.msra.mxu0 %v161
  %299 = vmatmul.bf16.gmra.mxu0 %v136
  %v300 = vpop.f32.mrf.mxu0
  %v301 = vadd.f32 0.0, %v300
  %v302 = vpop.f32.mrf.mxu0
  %v303 = vadd.f32 0.0, %v302
  %304 = vdwg.mxu0
  %305 = vmatpush.bf16.msra.mxu0 0
  %306 = vmatpush.bf16.msra.mxu0 0
  %307 = vmatpush.bf16.msra.mxu0 0
  %308 = vmatpush.bf16.msra.mxu0 0
  %309 = vmatpush.bf16.msra.mxu0 0
  %310 = vmatpush.bf16.msra.mxu0 0
  %311 = vmatpush.bf16.msra.mxu0 0
  %312 = vmatpush.bf16.msra.mxu0 %v164
  %313 = vmatmul.bf16.gmra.mxu0 %v136
  %v314 = vpop.f32.mrf.mxu0
  %v315 = vadd.f32 0.0, %v314
  %v316 = vpop.f32.mrf.mxu0
  %v317 = vadd.f32 0.0, %v316
  %318 = vdwg.mxu0
  %319 = vmatpush.bf16.msra.mxu0 0
  %320 = vmatpush.bf16.msra.mxu0 0
  %321 = vmatpush.bf16.msra.mxu0 0
  %322 = vmatpush.bf16.msra.mxu0 0
  %323 = vmatpush.bf16.msra.mxu0 0
  %324 = vmatpush.bf16.msra.mxu0 0
  %325 = vmatpush.bf16.msra.mxu0 0
  %326 = vmatpush.bf16.msra.mxu0 %v167
  %327 = vmatmul.bf16.gmra.mxu0 %v136
  %v328 = vpop.f32.mrf.mxu0
  %v329 = vadd.f32 0.0, %v328
  %v330 = vpop.f32.mrf.mxu0
  %v331 = vadd.f32 0.0, %v330
  %332 = vdwg.mxu0
  %333 = vmatpush.bf16.msra.mxu0 0
  %334 = vmatpush.bf16.msra.mxu0 0
  %335 = vmatpush.bf16.msra.mxu0 0
  %336 = vmatpush.bf16.msra.mxu0 0
  %337 = vmatpush.bf16.msra.mxu0 0
  %338 = vmatpush.bf16.msra.mxu0 0
  %339 = vmatpush.bf16.msra.mxu0 0
  %340 = vmatpush.bf16.msra.mxu0 %v170
  %341 = vmatmul.bf16.gmra.mxu0 %v136
  %v342 = vpop.f32.mrf.mxu0
  %v343 = vadd.f32 0.0, %v342
  %v344 = vpop.f32.mrf.mxu0
  %v345 = vadd.f32 0.0, %v344
  %346 = vdwg.mxu0
  %347 = vmatpush.bf16.msra.mxu0 0
  %348 = vmatpush.bf16.msra.mxu0 0
  %349 = vmatpush.bf16.msra.mxu0 0
  %350 = vmatpush.bf16.msra.mxu0 0
  %351 = vmatpush.bf16.msra.mxu0 0
  %352 = vmatpush.bf16.msra.mxu0 0
  %353 = vmatpush.bf16.msra.mxu0 0
  %354 = vmatpush.bf16.msra.mxu0 %v173
  %355 = vmatmul.bf16.gmra.mxu0 %v136
  %v356 = vpop.f32.mrf.mxu0
  %v357 = vadd.f32 0.0, %v356
  %v358 = vpop.f32.mrf.mxu0
  %v359 = vadd.f32 0.0, %v358
  %360 = vdwg.mxu0
  %361 = vmatpush.bf16.msra.mxu0 0
  %362 = vmatpush.bf16.msra.mxu0 0
  %363 = vmatpush.bf16.msra.mxu0 0
  %364 = vmatpush.bf16.msra.mxu0 0
  %365 = vmatpush.bf16.msra.mxu0 0
  %366 = vmatpush.bf16.msra.mxu0 0
  %367 = vmatpush.bf16.msra.mxu0 0
  %368 = vmatpush.bf16.msra.mxu0 %v176
  %369 = vmatmul.bf16.gmra.mxu0 %v136
  %v370 = vpop.f32.mrf.mxu0
  %v371 = vadd.f32 0.0, %v370
  %v372 = vpop.f32.mrf.mxu0
  %v373 = vadd.f32 0.0, %v372
  %374 = vdwg.mxu0
  %375 = vmatpush.bf16.msra.mxu0 0
  %376 = vmatpush.bf16.msra.mxu0 0
  %377 = vmatpush.bf16.msra.mxu0 0
  %378 = vmatpush.bf16.msra.mxu0 0
  %379 = vmatpush.bf16.msra.mxu0 0
  %380 = vmatpush.bf16.msra.mxu0 0
  %381 = vmatpush.bf16.msra.mxu0 0
  %382 = vmatpush.bf16.msra.mxu0 %v179
  %383 = vmatmul.bf16.gmra.mxu0 %v136
  %v384 = vpop.f32.mrf.mxu0
  %v385 = vadd.f32 0.0, %v384
  %v386 = vpop.f32.mrf.mxu0
  %v387 = vadd.f32 0.0, %v386
  %388 = vdwg.mxu0
  %389 = vmatpush.bf16.msra.mxu0 0
  %390 = vmatpush.bf16.msra.mxu0 0
  %391 = vmatpush.bf16.msra.mxu0 0
  %392 = vmatpush.bf16.msra.mxu0 0
  %393 = vmatpush.bf16.msra.mxu0 0
  %394 = vmatpush.bf16.msra.mxu0 0
  %395 = vmatpush.bf16.msra.mxu0 0
  %396 = vmatpush.bf16.msra.mxu0 %v182
  %397 = vmatmul.bf16.gmra.mxu0 %v136
  %v398 = vpop.f32.mrf.mxu0
  %v399 = vadd.f32 0.0, %v398
  %v400 = vpop.f32.mrf.mxu0
  %v401 = vadd.f32 0.0, %v400
  %402 = vdwg.mxu0
  %403 = vmatpush.bf16.msra.mxu0 0
  %404 = vmatpush.bf16.msra.mxu0 0
  %405 = vmatpush.bf16.msra.mxu0 0
  %406 = vmatpush.bf16.msra.mxu0 0
  %407 = vmatpush.bf16.msra.mxu0 0
  %408 = vmatpush.bf16.msra.mxu0 0
  %409 = vmatpush.bf16.msra.mxu0 0
  %410 = vmatpush.bf16.msra.mxu0 %v185
  %411 = vmatmul.bf16.gmra.mxu0 %v136
  %v412 = vpop.f32.mrf.mxu0
  %v413 = vadd.f32 0.0, %v412
  %v414 = vpop.f32.mrf.mxu0
  %v415 = vadd.f32 0.0, %v414
  %416 = vdwg.mxu0
  %417 = vmatpush.bf16.msra.mxu0 0
  %418 = vmatpush.bf16.msra.mxu0 0
  %419 = vmatpush.bf16.msra.mxu0 0
  %420 = vmatpush.bf16.msra.mxu0 0
  %421 = vmatpush.bf16.msra.mxu0 0
  %422 = vmatpush.bf16.msra.mxu0 0
  %423 = vmatpush.bf16.msra.mxu0 0
  %424 = vmatpush.bf16.msra.mxu0 %v188
  %425 = vmatmul.bf16.gmra.mxu0 %v136
  %v426 = vpop.f32.mrf.mxu0
  %v427 = vadd.f32 0.0, %v426
  %v428 = vpop.f32.mrf.mxu0
  %v429 = vadd.f32 0.0, %v428
  %430 = vdwg.mxu0
  %431 = vmatpush.bf16.msra.mxu0 0
  %432 = vmatpush.bf16.msra.mxu0 0
  %433 = vmatpush.bf16.msra.mxu0 0
  %434 = vmatpush.bf16.msra.mxu0 0
  %435 = vmatpush.bf16.msra.mxu0 0
  %436 = vmatpush.bf16.msra.mxu0 0
  %437 = vmatpush.bf16.msra.mxu0 0
  %438 = vmatpush.bf16.msra.mxu0 %v191
  %439 = vmatmul.bf16.gmra.mxu0 %v136
  %v440 = vpop.f32.mrf.mxu0
  %v441 = vadd.f32 0.0, %v440
  %v442 = vpop.f32.mrf.mxu0
  %v443 = vadd.f32 0.0, %v442
  %444 = vdwg.mxu0
  %v447 = vunpack.c.l.b16 %v25
  %v448 = vunpack.c.l.b16 %v26
  %v449 = vpack.c.b16 %v448, %v447
  %v451 = vsel %vm134, %v449, 0
  %v454 = vsel %vm138, %v62, 0
  %v457 = vsel %vm138, %v63, 0
  %v460 = vsel %vm138, %v64, 0
  %v463 = vsel %vm138, %v65, 0
  %v466 = vsel %vm138, %v66, 0
  %v469 = vsel %vm138, %v67, 0
  %v472 = vsel %vm138, %v68, 0
  %v475 = vsel %vm138, %v69, 0
  %v478 = vsel %vm138, %v70, 0
  %v481 = vsel %vm138, %v71, 0
  %v484 = vsel %vm138, %v72, 0
  %v487 = vsel %vm138, %v73, 0
  %v490 = vsel %vm138, %v74, 0
  %v493 = vsel %vm138, %v75, 0
  %v496 = vsel %vm138, %v76, 0
  %v499 = vsel %vm138, %v77, 0
  %v502 = vsel %vm138, %v78, 0
  %v505 = vsel %vm138, %v79, 0
  %507 = vmatpush.bf16.msra.mxu0 0
  %508 = vmatpush.bf16.msra.mxu0 0
  %509 = vmatpush.bf16.msra.mxu0 0
  %510 = vmatpush.bf16.msra.mxu0 0
  %511 = vmatpush.bf16.msra.mxu0 0
  %512 = vmatpush.bf16.msra.mxu0 0
  %513 = vmatpush.bf16.msra.mxu0 0
  %514 = vmatpush.bf16.msra.mxu0 %v454
  %515 = vmatmul.bf16.gmra.mxu0 %v451
  %v516 = vpop.f32.mrf.mxu0
  %v517 = vadd.f32 %v203, %v516
  %v518 = vpop.f32.mrf.mxu0
  %v519 = vadd.f32 %v205, %v518
  %520 = vdwg.mxu0
  %521 = vmatpush.bf16.msra.mxu0 0
  %522 = vmatpush.bf16.msra.mxu0 0
  %523 = vmatpush.bf16.msra.mxu0 0
  %524 = vmatpush.bf16.msra.mxu0 0
  %525 = vmatpush.bf16.msra.mxu0 0
  %526 = vmatpush.bf16.msra.mxu0 0
  %527 = vmatpush.bf16.msra.mxu0 0
  %528 = vmatpush.bf16.msra.mxu0 %v457
  %529 = vmatmul.bf16.gmra.mxu0 %v451
  %v530 = vpop.f32.mrf.mxu0
  %v531 = vadd.f32 %v217, %v530
  %v532 = vpop.f32.mrf.mxu0
  %v533 = vadd.f32 %v219, %v532
  %534 = vdwg.mxu0
  %535 = vmatpush.bf16.msra.mxu0 0
  %536 = vmatpush.bf16.msra.mxu0 0
  %537 = vmatpush.bf16.msra.mxu0 0
  %538 = vmatpush.bf16.msra.mxu0 0
  %539 = vmatpush.bf16.msra.mxu0 0
  %540 = vmatpush.bf16.msra.mxu0 0
  %541 = vmatpush.bf16.msra.mxu0 0
  %542 = vmatpush.bf16.msra.mxu0 %v460
  %543 = vmatmul.bf16.gmra.mxu0 %v451
  %v544 = vpop.f32.mrf.mxu0
  %v545 = vadd.f32 %v231, %v544
  %v546 = vpop.f32.mrf.mxu0
  %v547 = vadd.f32 %v233, %v546
  %548 = vdwg.mxu0
  %549 = vmatpush.bf16.msra.mxu0 0
  %550 = vmatpush.bf16.msra.mxu0 0
  %551 = vmatpush.bf16.msra.mxu0 0
  %552 = vmatpush.bf16.msra.mxu0 0
  %553 = vmatpush.bf16.msra.mxu0 0
  %554 = vmatpush.bf16.msra.mxu0 0
  %555 = vmatpush.bf16.msra.mxu0 0
  %556 = vmatpush.bf16.msra.mxu0 %v463
  %557 = vmatmul.bf16.gmra.mxu0 %v451
  %v558 = vpop.f32.mrf.mxu0
  %v559 = vadd.f32 %v245, %v558
  %v560 = vpop.f32.mrf.mxu0
  %v561 = vadd.f32 %v247, %v560
  %562 = vdwg.mxu0
  %563 = vmatpush.bf16.msra.mxu0 0
  %564 = vmatpush.bf16.msra.mxu0 0
  %565 = vmatpush.bf16.msra.mxu0 0
  %566 = vmatpush.bf16.msra.mxu0 0
  %567 = vmatpush.bf16.msra.mxu0 0
  %568 = vmatpush.bf16.msra.mxu0 0
  %569 = vmatpush.bf16.msra.mxu0 0
  %570 = vmatpush.bf16.msra.mxu0 %v466
  %571 = vmatmul.bf16.gmra.mxu0 %v451
  %v572 = vpop.f32.mrf.mxu0
  %v573 = vadd.f32 %v259, %v572
  %v574 = vpop.f32.mrf.mxu0
  %v575 = vadd.f32 %v261, %v574
  %576 = vdwg.mxu0
  %577 = vmatpush.bf16.msra.mxu0 0
  %578 = vmatpush.bf16.msra.mxu0 0
  %579 = vmatpush.bf16.msra.mxu0 0
  %580 = vmatpush.bf16.msra.mxu0 0
  %581 = vmatpush.bf16.msra.mxu0 0
  %582 = vmatpush.bf16.msra.mxu0 0
  %583 = vmatpush.bf16.msra.mxu0 0
  %584 = vmatpush.bf16.msra.mxu0 %v469
  %585 = vmatmul.bf16.gmra.mxu0 %v451
  %v586 = vpop.f32.mrf.mxu0
  %v587 = vadd.f32 %v273, %v586
  %v588 = vpop.f32.mrf.mxu0
  %v589 = vadd.f32 %v275, %v588
  %590 = vdwg.mxu0
  %591 = vmatpush.bf16.msra.mxu0 0
  %592 = vmatpush.bf16.msra.mxu0 0
  %593 = vmatpush.bf16.msra.mxu0 0
  %594 = vmatpush.bf16.msra.mxu0 0
  %595 = vmatpush.bf16.msra.mxu0 0
  %596 = vmatpush.bf16.msra.mxu0 0
  %597 = vmatpush.bf16.msra.mxu0 0
  %598 = vmatpush.bf16.msra.mxu0 %v472
  %599 = vmatmul.bf16.gmra.mxu0 %v451
  %v600 = vpop.f32.mrf.mxu0
  %v601 = vadd.f32 %v287, %v600
  %v602 = vpop.f32.mrf.mxu0
  %v603 = vadd.f32 %v289, %v602
  %604 = vdwg.mxu0
  %605 = vmatpush.bf16.msra.mxu0 0
  %606 = vmatpush.bf16.msra.mxu0 0
  %607 = vmatpush.bf16.msra.mxu0 0
  %608 = vmatpush.bf16.msra.mxu0 0
  %609 = vmatpush.bf16.msra.mxu0 0
  %610 = vmatpush.bf16.msra.mxu0 0
  %611 = vmatpush.bf16.msra.mxu0 0
  %612 = vmatpush.bf16.msra.mxu0 %v475
  %613 = vmatmul.bf16.gmra.mxu0 %v451
  %v614 = vpop.f32.mrf.mxu0
  %v615 = vadd.f32 %v301, %v614
  %v616 = vpop.f32.mrf.mxu0
  %v617 = vadd.f32 %v303, %v616
  %618 = vdwg.mxu0
  %619 = vmatpush.bf16.msra.mxu0 0
  %620 = vmatpush.bf16.msra.mxu0 0
  %621 = vmatpush.bf16.msra.mxu0 0
  %622 = vmatpush.bf16.msra.mxu0 0
  %623 = vmatpush.bf16.msra.mxu0 0
  %624 = vmatpush.bf16.msra.mxu0 0
  %625 = vmatpush.bf16.msra.mxu0 0
  %626 = vmatpush.bf16.msra.mxu0 %v478
  %627 = vmatmul.bf16.gmra.mxu0 %v451
  %v628 = vpop.f32.mrf.mxu0
  %v629 = vadd.f32 %v315, %v628
  %v630 = vpop.f32.mrf.mxu0
  %v631 = vadd.f32 %v317, %v630
  %632 = vdwg.mxu0
  %633 = vmatpush.bf16.msra.mxu0 0
  %634 = vmatpush.bf16.msra.mxu0 0
  %635 = vmatpush.bf16.msra.mxu0 0
  %636 = vmatpush.bf16.msra.mxu0 0
  %637 = vmatpush.bf16.msra.mxu0 0
  %638 = vmatpush.bf16.msra.mxu0 0
  %639 = vmatpush.bf16.msra.mxu0 0
  %640 = vmatpush.bf16.msra.mxu0 %v481
  %641 = vmatmul.bf16.gmra.mxu0 %v451
  %v642 = vpop.f32.mrf.mxu0
  %v643 = vadd.f32 %v329, %v642
  %v644 = vpop.f32.mrf.mxu0
  %v645 = vadd.f32 %v331, %v644
  %646 = vdwg.mxu0
  %647 = vmatpush.bf16.msra.mxu0 0
  %648 = vmatpush.bf16.msra.mxu0 0
  %649 = vmatpush.bf16.msra.mxu0 0
  %650 = vmatpush.bf16.msra.mxu0 0
  %651 = vmatpush.bf16.msra.mxu0 0
  %652 = vmatpush.bf16.msra.mxu0 0
  %653 = vmatpush.bf16.msra.mxu0 0
  %654 = vmatpush.bf16.msra.mxu0 %v484
  %655 = vmatmul.bf16.gmra.mxu0 %v451
  %v656 = vpop.f32.mrf.mxu0
  %v657 = vadd.f32 %v343, %v656
  %v658 = vpop.f32.mrf.mxu0
  %v659 = vadd.f32 %v345, %v658
  %660 = vdwg.mxu0
  %661 = vmatpush.bf16.msra.mxu0 0
  %662 = vmatpush.bf16.msra.mxu0 0
  %663 = vmatpush.bf16.msra.mxu0 0
  %664 = vmatpush.bf16.msra.mxu0 0
  %665 = vmatpush.bf16.msra.mxu0 0
  %666 = vmatpush.bf16.msra.mxu0 0
  %667 = vmatpush.bf16.msra.mxu0 0
  %668 = vmatpush.bf16.msra.mxu0 %v487
  %669 = vmatmul.bf16.gmra.mxu0 %v451
  %v670 = vpop.f32.mrf.mxu0
  %v671 = vadd.f32 %v357, %v670
  %v672 = vpop.f32.mrf.mxu0
  %v673 = vadd.f32 %v359, %v672
  %674 = vdwg.mxu0
  %675 = vmatpush.bf16.msra.mxu0 0
  %676 = vmatpush.bf16.msra.mxu0 0
  %677 = vmatpush.bf16.msra.mxu0 0
  %678 = vmatpush.bf16.msra.mxu0 0
  %679 = vmatpush.bf16.msra.mxu0 0
  %680 = vmatpush.bf16.msra.mxu0 0
  %681 = vmatpush.bf16.msra.mxu0 0
  %682 = vmatpush.bf16.msra.mxu0 %v490
  %683 = vmatmul.bf16.gmra.mxu0 %v451
  %v684 = vpop.f32.mrf.mxu0
  %v685 = vadd.f32 %v371, %v684
  %v686 = vpop.f32.mrf.mxu0
  %v687 = vadd.f32 %v373, %v686
  %688 = vdwg.mxu0
  %689 = vmatpush.bf16.msra.mxu0 0
  %690 = vmatpush.bf16.msra.mxu0 0
  %691 = vmatpush.bf16.msra.mxu0 0
  %692 = vmatpush.bf16.msra.mxu0 0
  %693 = vmatpush.bf16.msra.mxu0 0
  %694 = vmatpush.bf16.msra.mxu0 0
  %695 = vmatpush.bf16.msra.mxu0 0
  %696 = vmatpush.bf16.msra.mxu0 %v493
  %697 = vmatmul.bf16.gmra.mxu0 %v451
  %v698 = vpop.f32.mrf.mxu0
  %v699 = vadd.f32 %v385, %v698
  %v700 = vpop.f32.mrf.mxu0
  %v701 = vadd.f32 %v387, %v700
  %702 = vdwg.mxu0
  %703 = vmatpush.bf16.msra.mxu0 0
  %704 = vmatpush.bf16.msra.mxu0 0
  %705 = vmatpush.bf16.msra.mxu0 0
  %706 = vmatpush.bf16.msra.mxu0 0
  %707 = vmatpush.bf16.msra.mxu0 0
  %708 = vmatpush.bf16.msra.mxu0 0
  %709 = vmatpush.bf16.msra.mxu0 0
  %710 = vmatpush.bf16.msra.mxu0 %v496
  %711 = vmatmul.bf16.gmra.mxu0 %v451
  %v712 = vpop.f32.mrf.mxu0
  %v713 = vadd.f32 %v399, %v712
  %v714 = vpop.f32.mrf.mxu0
  %v715 = vadd.f32 %v401, %v714
  %716 = vdwg.mxu0
  %717 = vmatpush.bf16.msra.mxu0 0
  %718 = vmatpush.bf16.msra.mxu0 0
  %719 = vmatpush.bf16.msra.mxu0 0
  %720 = vmatpush.bf16.msra.mxu0 0
  %721 = vmatpush.bf16.msra.mxu0 0
  %722 = vmatpush.bf16.msra.mxu0 0
  %723 = vmatpush.bf16.msra.mxu0 0
  %724 = vmatpush.bf16.msra.mxu0 %v499
  %725 = vmatmul.bf16.gmra.mxu0 %v451
  %v726 = vpop.f32.mrf.mxu0
  %v727 = vadd.f32 %v413, %v726
  %v728 = vpop.f32.mrf.mxu0
  %v729 = vadd.f32 %v415, %v728
  %730 = vdwg.mxu0
  %731 = vmatpush.bf16.msra.mxu0 0
  %732 = vmatpush.bf16.msra.mxu0 0
  %733 = vmatpush.bf16.msra.mxu0 0
  %734 = vmatpush.bf16.msra.mxu0 0
  %735 = vmatpush.bf16.msra.mxu0 0
  %736 = vmatpush.bf16.msra.mxu0 0
  %737 = vmatpush.bf16.msra.mxu0 0
  %738 = vmatpush.bf16.msra.mxu0 %v502
  %739 = vmatmul.bf16.gmra.mxu0 %v451
  %v740 = vpop.f32.mrf.mxu0
  %v741 = vadd.f32 %v427, %v740
  %v742 = vpop.f32.mrf.mxu0
  %v743 = vadd.f32 %v429, %v742
  %744 = vdwg.mxu0
  %745 = vmatpush.bf16.msra.mxu0 0
  %746 = vmatpush.bf16.msra.mxu0 0
  %747 = vmatpush.bf16.msra.mxu0 0
  %748 = vmatpush.bf16.msra.mxu0 0
  %749 = vmatpush.bf16.msra.mxu0 0
  %750 = vmatpush.bf16.msra.mxu0 0
  %751 = vmatpush.bf16.msra.mxu0 0
  %752 = vmatpush.bf16.msra.mxu0 %v505
  %753 = vmatmul.bf16.gmra.mxu0 %v451
  %v754 = vpop.f32.mrf.mxu0
  %v755 = vadd.f32 %v441, %v754
  %v756 = vpop.f32.mrf.mxu0
  %v757 = vadd.f32 %v443, %v756
  %758 = vdwg.mxu0
  %s759 = scalar_lea.vmem %s1, 16
  %v760 = vld [vmem:[%s759] sm:$0xf]
  %v761 = vld [vmem:[%s759 + $0x4] sm:$0x3]
  %v764 = vunpack.c.l.b16 %v760
  %v765 = vunpack.c.l.b16 %v761
  %v766 = vpack.c.b16 %v765, %v764
  %767 = vrot.lane.b32.xlu0 %v62, 126
  %v768 = vpop.permute.xlu0 %767
  %769 = vrot.lane.b32.xlu0 %v63, 126
  %v770 = vpop.permute.xlu0 %769
  %771 = vrot.lane.b32.xlu0 %v64, 126
  %v772 = vpop.permute.xlu0 %771
  %773 = vrot.lane.b32.xlu0 %v65, 126
  %v774 = vpop.permute.xlu0 %773
  %775 = vrot.lane.b32.xlu0 %v66, 126
  %v776 = vpop.permute.xlu0 %775
  %777 = vrot.lane.b32.xlu0 %v67, 126
  %v778 = vpop.permute.xlu0 %777
  %779 = vrot.lane.b32.xlu0 %v68, 126
  %v780 = vpop.permute.xlu0 %779
  %781 = vrot.lane.b32.xlu0 %v69, 126
  %v782 = vpop.permute.xlu0 %781
  %783 = vrot.lane.b32.xlu0 %v70, 126
  %v784 = vpop.permute.xlu0 %783
  %785 = vrot.lane.b32.xlu0 %v71, 126
  %v786 = vpop.permute.xlu0 %785
  %787 = vrot.lane.b32.xlu0 %v72, 126
  %v788 = vpop.permute.xlu0 %787
  %789 = vrot.lane.b32.xlu0 %v73, 126
  %v790 = vpop.permute.xlu0 %789
  %791 = vrot.lane.b32.xlu0 %v74, 126
  %v792 = vpop.permute.xlu0 %791
  %793 = vrot.lane.b32.xlu0 %v75, 126
  %v794 = vpop.permute.xlu0 %793
  %795 = vrot.lane.b32.xlu0 %v76, 126
  %v796 = vpop.permute.xlu0 %795
  %797 = vrot.lane.b32.xlu0 %v77, 126
  %v798 = vpop.permute.xlu0 %797
  %799 = vrot.lane.b32.xlu0 %v78, 126
  %v800 = vpop.permute.xlu0 %799
  %801 = vrot.lane.b32.xlu0 %v79, 126
  %v802 = vpop.permute.xlu0 %801
  %vm803 = vcmask 1031168
  %v804 = vsel %vm803, %v768, %v770
  %v805 = vsel %vm803, %v770, %v772
  %v806 = vsel %vm803, %v772, %v774
  %v807 = vsel %vm803, %v774, %v776
  %v808 = vsel %vm803, %v776, %v778
  %v809 = vsel %vm803, %v778, %v780
  %v810 = vsel %vm803, %v780, %v782
  %v811 = vsel %vm803, %v782, %v784
  %v812 = vsel %vm803, %v784, %v786
  %v813 = vsel %vm803, %v786, %v788
  %v814 = vsel %vm803, %v788, %v790
  %v815 = vsel %vm803, %v790, %v792
  %v816 = vsel %vm803, %v792, %v794
  %v817 = vsel %vm803, %v794, %v796
  %v818 = vsel %vm803, %v796, %v798
  %v819 = vsel %vm803, %v798, %v800
  %v820 = vsel %vm803, %v800, %v802
  %v822 = vsel %vm134, %v766, 0
  %v825 = vsel %vm138, %v804, 0
  %v828 = vsel %vm138, %v805, 0
  %v831 = vsel %vm138, %v806, 0
  %v834 = vsel %vm138, %v807, 0
  %v837 = vsel %vm138, %v808, 0
  %v840 = vsel %vm138, %v809, 0
  %v843 = vsel %vm138, %v810, 0
  %v846 = vsel %vm138, %v811, 0
  %v849 = vsel %vm138, %v812, 0
  %v852 = vsel %vm138, %v813, 0
  %v855 = vsel %vm138, %v814, 0
  %v858 = vsel %vm138, %v815, 0
  %v861 = vsel %vm138, %v816, 0
  %v864 = vsel %vm138, %v817, 0
  %v867 = vsel %vm138, %v818, 0
  %v870 = vsel %vm138, %v819, 0
  %v873 = vsel %vm138, %v820, 0
  %v876 = vsel %vm138, %v802, 0
  %878 = vmatpush.bf16.msra.mxu0 0
  %879 = vmatpush.bf16.msra.mxu0 0
  %880 = vmatpush.bf16.msra.mxu0 0
  %881 = vmatpush.bf16.msra.mxu0 0
  %882 = vmatpush.bf16.msra.mxu0 0
  %883 = vmatpush.bf16.msra.mxu0 0
  %884 = vmatpush.bf16.msra.mxu0 0
  %885 = vmatpush.bf16.msra.mxu0 %v825
  %886 = vmatmul.bf16.gmra.mxu0 %v822
  %v887 = vpop.f32.mrf.mxu0
  %v888 = vadd.f32 0.0, %v887
  %v889 = vpop.f32.mrf.mxu0
  %v890 = vadd.f32 0.0, %v889
  %891 = vdwg.mxu0
  %892 = vmatpush.bf16.msra.mxu0 0
  %893 = vmatpush.bf16.msra.mxu0 0
  %894 = vmatpush.bf16.msra.mxu0 0
  %895 = vmatpush.bf16.msra.mxu0 0
  %896 = vmatpush.bf16.msra.mxu0 0
  %897 = vmatpush.bf16.msra.mxu0 0
  %898 = vmatpush.bf16.msra.mxu0 0
  %899 = vmatpush.bf16.msra.mxu0 %v828
  %900 = vmatmul.bf16.gmra.mxu0 %v822
  %v901 = vpop.f32.mrf.mxu0
  %v902 = vadd.f32 0.0, %v901
  %v903 = vpop.f32.mrf.mxu0
  %v904 = vadd.f32 0.0, %v903
  %905 = vdwg.mxu0
  %906 = vmatpush.bf16.msra.mxu0 0
  %907 = vmatpush.bf16.msra.mxu0 0
  %908 = vmatpush.bf16.msra.mxu0 0
  %909 = vmatpush.bf16.msra.mxu0 0
  %910 = vmatpush.bf16.msra.mxu0 0
  %911 = vmatpush.bf16.msra.mxu0 0
  %912 = vmatpush.bf16.msra.mxu0 0
  %913 = vmatpush.bf16.msra.mxu0 %v831
  %914 = vmatmul.bf16.gmra.mxu0 %v822
  %v915 = vpop.f32.mrf.mxu0
  %v916 = vadd.f32 0.0, %v915
  %v917 = vpop.f32.mrf.mxu0
  %v918 = vadd.f32 0.0, %v917
  %919 = vdwg.mxu0
  %920 = vmatpush.bf16.msra.mxu0 0
  %921 = vmatpush.bf16.msra.mxu0 0
  %922 = vmatpush.bf16.msra.mxu0 0
  %923 = vmatpush.bf16.msra.mxu0 0
  %924 = vmatpush.bf16.msra.mxu0 0
  %925 = vmatpush.bf16.msra.mxu0 0
  %926 = vmatpush.bf16.msra.mxu0 0
  %927 = vmatpush.bf16.msra.mxu0 %v834
  %928 = vmatmul.bf16.gmra.mxu0 %v822
  %v929 = vpop.f32.mrf.mxu0
  %v930 = vadd.f32 0.0, %v929
  %v931 = vpop.f32.mrf.mxu0
  %v932 = vadd.f32 0.0, %v931
  %933 = vdwg.mxu0
  %934 = vmatpush.bf16.msra.mxu0 0
  %935 = vmatpush.bf16.msra.mxu0 0
  %936 = vmatpush.bf16.msra.mxu0 0
  %937 = vmatpush.bf16.msra.mxu0 0
  %938 = vmatpush.bf16.msra.mxu0 0
  %939 = vmatpush.bf16.msra.mxu0 0
  %940 = vmatpush.bf16.msra.mxu0 0
  %941 = vmatpush.bf16.msra.mxu0 %v837
  %942 = vmatmul.bf16.gmra.mxu0 %v822
  %v943 = vpop.f32.mrf.mxu0
  %v944 = vadd.f32 0.0, %v943
  %v945 = vpop.f32.mrf.mxu0
  %v946 = vadd.f32 0.0, %v945
  %947 = vdwg.mxu0
  %948 = vmatpush.bf16.msra.mxu0 0
  %949 = vmatpush.bf16.msra.mxu0 0
  %950 = vmatpush.bf16.msra.mxu0 0
  %951 = vmatpush.bf16.msra.mxu0 0
  %952 = vmatpush.bf16.msra.mxu0 0
  %953 = vmatpush.bf16.msra.mxu0 0
  %954 = vmatpush.bf16.msra.mxu0 0
  %955 = vmatpush.bf16.msra.mxu0 %v840
  %956 = vmatmul.bf16.gmra.mxu0 %v822
  %v957 = vpop.f32.mrf.mxu0
  %v958 = vadd.f32 0.0, %v957
  %v959 = vpop.f32.mrf.mxu0
  %v960 = vadd.f32 0.0, %v959
  %961 = vdwg.mxu0
  %962 = vmatpush.bf16.msra.mxu0 0
  %963 = vmatpush.bf16.msra.mxu0 0
  %964 = vmatpush.bf16.msra.mxu0 0
  %965 = vmatpush.bf16.msra.mxu0 0
  %966 = vmatpush.bf16.msra.mxu0 0
  %967 = vmatpush.bf16.msra.mxu0 0
  %968 = vmatpush.bf16.msra.mxu0 0
  %969 = vmatpush.bf16.msra.mxu0 %v843
  %970 = vmatmul.bf16.gmra.mxu0 %v822
  %v971 = vpop.f32.mrf.mxu0
  %v972 = vadd.f32 0.0, %v971
  %v973 = vpop.f32.mrf.mxu0
  %v974 = vadd.f32 0.0, %v973
  %975 = vdwg.mxu0
  %976 = vmatpush.bf16.msra.mxu0 0
  %977 = vmatpush.bf16.msra.mxu0 0
  %978 = vmatpush.bf16.msra.mxu0 0
  %979 = vmatpush.bf16.msra.mxu0 0
  %980 = vmatpush.bf16.msra.mxu0 0
  %981 = vmatpush.bf16.msra.mxu0 0
  %982 = vmatpush.bf16.msra.mxu0 0
  %983 = vmatpush.bf16.msra.mxu0 %v846
  %984 = vmatmul.bf16.gmra.mxu0 %v822
  %v985 = vpop.f32.mrf.mxu0
  %v986 = vadd.f32 0.0, %v985
  %v987 = vpop.f32.mrf.mxu0
  %v988 = vadd.f32 0.0, %v987
  %989 = vdwg.mxu0
  %990 = vmatpush.bf16.msra.mxu0 0
  %991 = vmatpush.bf16.msra.mxu0 0
  %992 = vmatpush.bf16.msra.mxu0 0
  %993 = vmatpush.bf16.msra.mxu0 0
  %994 = vmatpush.bf16.msra.mxu0 0
  %995 = vmatpush.bf16.msra.mxu0 0
  %996 = vmatpush.bf16.msra.mxu0 0
  %997 = vmatpush.bf16.msra.mxu0 %v849
  %998 = vmatmul.bf16.gmra.mxu0 %v822
  %v999 = vpop.f32.mrf.mxu0
  %v1000 = vadd.f32 0.0, %v999
  %v1001 = vpop.f32.mrf.mxu0
  %v1002 = vadd.f32 0.0, %v1001
  %1003 = vdwg.mxu0
  %1004 = vmatpush.bf16.msra.mxu0 0
  %1005 = vmatpush.bf16.msra.mxu0 0
  %1006 = vmatpush.bf16.msra.mxu0 0
  %1007 = vmatpush.bf16.msra.mxu0 0
  %1008 = vmatpush.bf16.msra.mxu0 0
  %1009 = vmatpush.bf16.msra.mxu0 0
  %1010 = vmatpush.bf16.msra.mxu0 0
  %1011 = vmatpush.bf16.msra.mxu0 %v852
  %1012 = vmatmul.bf16.gmra.mxu0 %v822
  %v1013 = vpop.f32.mrf.mxu0
  %v1014 = vadd.f32 0.0, %v1013
  %v1015 = vpop.f32.mrf.mxu0
  %v1016 = vadd.f32 0.0, %v1015
  %1017 = vdwg.mxu0
  %1018 = vmatpush.bf16.msra.mxu0 0
  %1019 = vmatpush.bf16.msra.mxu0 0
  %1020 = vmatpush.bf16.msra.mxu0 0
  %1021 = vmatpush.bf16.msra.mxu0 0
  %1022 = vmatpush.bf16.msra.mxu0 0
  %1023 = vmatpush.bf16.msra.mxu0 0
  %1024 = vmatpush.bf16.msra.mxu0 0
  %1025 = vmatpush.bf16.msra.mxu0 %v855
  %1026 = vmatmul.bf16.gmra.mxu0 %v822
  %v1027 = vpop.f32.mrf.mxu0
  %v1028 = vadd.f32 0.0, %v1027
  %v1029 = vpop.f32.mrf.mxu0
  %v1030 = vadd.f32 0.0, %v1029
  %1031 = vdwg.mxu0
  %1032 = vmatpush.bf16.msra.mxu0 0
  %1033 = vmatpush.bf16.msra.mxu0 0
  %1034 = vmatpush.bf16.msra.mxu0 0
  %1035 = vmatpush.bf16.msra.mxu0 0
  %1036 = vmatpush.bf16.msra.mxu0 0
  %1037 = vmatpush.bf16.msra.mxu0 0
  %1038 = vmatpush.bf16.msra.mxu0 0
  %1039 = vmatpush.bf16.msra.mxu0 %v858
  %1040 = vmatmul.bf16.gmra.mxu0 %v822
  %v1041 = vpop.f32.mrf.mxu0
  %v1042 = vadd.f32 0.0, %v1041
  %v1043 = vpop.f32.mrf.mxu0
  %v1044 = vadd.f32 0.0, %v1043
  %1045 = vdwg.mxu0
  %1046 = vmatpush.bf16.msra.mxu0 0
  %1047 = vmatpush.bf16.msra.mxu0 0
  %1048 = vmatpush.bf16.msra.mxu0 0
  %1049 = vmatpush.bf16.msra.mxu0 0
  %1050 = vmatpush.bf16.msra.mxu0 0
  %1051 = vmatpush.bf16.msra.mxu0 0
  %1052 = vmatpush.bf16.msra.mxu0 0
  %1053 = vmatpush.bf16.msra.mxu0 %v861
  %1054 = vmatmul.bf16.gmra.mxu0 %v822
  %v1055 = vpop.f32.mrf.mxu0
  %v1056 = vadd.f32 0.0, %v1055
  %v1057 = vpop.f32.mrf.mxu0
  %v1058 = vadd.f32 0.0, %v1057
  %1059 = vdwg.mxu0
  %1060 = vmatpush.bf16.msra.mxu0 0
  %1061 = vmatpush.bf16.msra.mxu0 0
  %1062 = vmatpush.bf16.msra.mxu0 0
  %1063 = vmatpush.bf16.msra.mxu0 0
  %1064 = vmatpush.bf16.msra.mxu0 0
  %1065 = vmatpush.bf16.msra.mxu0 0
  %1066 = vmatpush.bf16.msra.mxu0 0
  %1067 = vmatpush.bf16.msra.mxu0 %v864
  %1068 = vmatmul.bf16.gmra.mxu0 %v822
  %v1069 = vpop.f32.mrf.mxu0
  %v1070 = vadd.f32 0.0, %v1069
  %v1071 = vpop.f32.mrf.mxu0
  %v1072 = vadd.f32 0.0, %v1071
  %1073 = vdwg.mxu0
  %1074 = vmatpush.bf16.msra.mxu0 0
  %1075 = vmatpush.bf16.msra.mxu0 0
  %1076 = vmatpush.bf16.msra.mxu0 0
  %1077 = vmatpush.bf16.msra.mxu0 0
  %1078 = vmatpush.bf16.msra.mxu0 0
  %1079 = vmatpush.bf16.msra.mxu0 0
  %1080 = vmatpush.bf16.msra.mxu0 0
  %1081 = vmatpush.bf16.msra.mxu0 %v867
  %1082 = vmatmul.bf16.gmra.mxu0 %v822
  %v1083 = vpop.f32.mrf.mxu0
  %v1084 = vadd.f32 0.0, %v1083
  %v1085 = vpop.f32.mrf.mxu0
  %v1086 = vadd.f32 0.0, %v1085
  %1087 = vdwg.mxu0
  %1088 = vmatpush.bf16.msra.mxu0 0
  %1089 = vmatpush.bf16.msra.mxu0 0
  %1090 = vmatpush.bf16.msra.mxu0 0
  %1091 = vmatpush.bf16.msra.mxu0 0
  %1092 = vmatpush.bf16.msra.mxu0 0
  %1093 = vmatpush.bf16.msra.mxu0 0
  %1094 = vmatpush.bf16.msra.mxu0 0
  %1095 = vmatpush.bf16.msra.mxu0 %v870
  %1096 = vmatmul.bf16.gmra.mxu0 %v822
  %v1097 = vpop.f32.mrf.mxu0
  %v1098 = vadd.f32 0.0, %v1097
  %v1099 = vpop.f32.mrf.mxu0
  %v1100 = vadd.f32 0.0, %v1099
  %1101 = vdwg.mxu0
  %1102 = vmatpush.bf16.msra.mxu0 0
  %1103 = vmatpush.bf16.msra.mxu0 0
  %1104 = vmatpush.bf16.msra.mxu0 0
  %1105 = vmatpush.bf16.msra.mxu0 0
  %1106 = vmatpush.bf16.msra.mxu0 0
  %1107 = vmatpush.bf16.msra.mxu0 0
  %1108 = vmatpush.bf16.msra.mxu0 0
  %1109 = vmatpush.bf16.msra.mxu0 %v873
  %1110 = vmatmul.bf16.gmra.mxu0 %v822
  %v1111 = vpop.f32.mrf.mxu0
  %v1112 = vadd.f32 0.0, %v1111
  %v1113 = vpop.f32.mrf.mxu0
  %v1114 = vadd.f32 0.0, %v1113
  %1115 = vdwg.mxu0
  %1116 = vmatpush.bf16.msra.mxu0 0
  %1117 = vmatpush.bf16.msra.mxu0 0
  %1118 = vmatpush.bf16.msra.mxu0 0
  %1119 = vmatpush.bf16.msra.mxu0 0
  %1120 = vmatpush.bf16.msra.mxu0 0
  %1121 = vmatpush.bf16.msra.mxu0 0
  %1122 = vmatpush.bf16.msra.mxu0 0
  %1123 = vmatpush.bf16.msra.mxu0 %v876
  %1124 = vmatmul.bf16.gmra.mxu0 %v822
  %v1125 = vpop.f32.mrf.mxu0
  %v1126 = vadd.f32 0.0, %v1125
  %v1127 = vpop.f32.mrf.mxu0
  %v1128 = vadd.f32 0.0, %v1127
  %1129 = vdwg.mxu0
  %v1130 = vadd.f32 %v517, %v888
  %v1131 = vadd.f32 %v531, %v902
  %v1132 = vadd.f32 %v545, %v916
  %v1133 = vadd.f32 %v559, %v930
  %v1134 = vadd.f32 %v573, %v944
  %v1135 = vadd.f32 %v587, %v958
  %v1136 = vadd.f32 %v601, %v972
  %v1137 = vadd.f32 %v615, %v986
  %v1138 = vadd.f32 %v629, %v1000
  %v1139 = vadd.f32 %v643, %v1014
  %v1140 = vadd.f32 %v657, %v1028
  %v1141 = vadd.f32 %v671, %v1042
  %v1142 = vadd.f32 %v685, %v1056
  %v1143 = vadd.f32 %v699, %v1070
  %v1144 = vadd.f32 %v713, %v1084
  %v1145 = vadd.f32 %v727, %v1098
  %v1146 = vadd.f32 %v741, %v1112
  %v1147 = vadd.f32 %v755, %v1126
  %v1148 = vadd.f32 %v519, %v890
  %v1149 = vadd.f32 %v533, %v904
  %v1150 = vadd.f32 %v547, %v918
  %v1151 = vadd.f32 %v561, %v932
  %v1152 = vadd.f32 %v575, %v946
  %v1153 = vadd.f32 %v589, %v960
  %v1154 = vadd.f32 %v603, %v974
  %v1155 = vadd.f32 %v617, %v988
  %v1156 = vadd.f32 %v631, %v1002
  %v1157 = vadd.f32 %v645, %v1016
  %v1158 = vadd.f32 %v659, %v1030
  %v1159 = vadd.f32 %v673, %v1044
  %v1160 = vadd.f32 %v687, %v1058
  %v1161 = vadd.f32 %v701, %v1072
  %v1162 = vadd.f32 %v715, %v1086
  %v1163 = vadd.f32 %v729, %v1100
  %v1164 = vadd.f32 %v743, %v1114
  %v1165 = vadd.f32 %v757, %v1128
  %s1166 = scalar_lea.vmem %s1, 24
  %v1167 = vld [vmem:[%s1166] sm:$0xf]
  %v1168 = vld [vmem:[%s1166 + $0x4] sm:$0x3]
  %v1171 = vunpack.c.l.b16 %v1167
  %v1172 = vunpack.c.l.b16 %v1168
  %v1173 = vpack.c.b16 %v1172, %v1171
  %1174 = vrot.lane.b32.xlu0 %v62, 94
  %v1175 = vpop.permute.xlu0 %1174
  %1176 = vrot.lane.b32.xlu0 %v63, 94
  %v1177 = vpop.permute.xlu0 %1176
  %1178 = vrot.lane.b32.xlu0 %v64, 94
  %v1179 = vpop.permute.xlu0 %1178
  %1180 = vrot.lane.b32.xlu0 %v65, 94
  %v1181 = vpop.permute.xlu0 %1180
  %1182 = vrot.lane.b32.xlu0 %v66, 94
  %v1183 = vpop.permute.xlu0 %1182
  %1184 = vrot.lane.b32.xlu0 %v67, 94
  %v1185 = vpop.permute.xlu0 %1184
  %1186 = vrot.lane.b32.xlu0 %v68, 94
  %v1187 = vpop.permute.xlu0 %1186
  %1188 = vrot.lane.b32.xlu0 %v69, 94
  %v1189 = vpop.permute.xlu0 %1188
  %1190 = vrot.lane.b32.xlu0 %v70, 94
  %v1191 = vpop.permute.xlu0 %1190
  %1192 = vrot.lane.b32.xlu0 %v71, 94
  %v1193 = vpop.permute.xlu0 %1192
  %1194 = vrot.lane.b32.xlu0 %v72, 94
  %v1195 = vpop.permute.xlu0 %1194
  %1196 = vrot.lane.b32.xlu0 %v73, 94
  %v1197 = vpop.permute.xlu0 %1196
  %1198 = vrot.lane.b32.xlu0 %v74, 94
  %v1199 = vpop.permute.xlu0 %1198
  %1200 = vrot.lane.b32.xlu0 %v75, 94
  %v1201 = vpop.permute.xlu0 %1200
  %1202 = vrot.lane.b32.xlu0 %v76, 94
  %v1203 = vpop.permute.xlu0 %1202
  %1204 = vrot.lane.b32.xlu0 %v77, 94
  %v1205 = vpop.permute.xlu0 %1204
  %1206 = vrot.lane.b32.xlu0 %v78, 94
  %v1207 = vpop.permute.xlu0 %1206
  %1208 = vrot.lane.b32.xlu0 %v79, 94
  %v1209 = vpop.permute.xlu0 %1208
  %vm1210 = vcmask 769024
  %v1211 = vsel %vm1210, %v1175, %v1177
  %v1212 = vsel %vm1210, %v1177, %v1179
  %v1213 = vsel %vm1210, %v1179, %v1181
  %v1214 = vsel %vm1210, %v1181, %v1183
  %v1215 = vsel %vm1210, %v1183, %v1185
  %v1216 = vsel %vm1210, %v1185, %v1187
  %v1217 = vsel %vm1210, %v1187, %v1189
  %v1218 = vsel %vm1210, %v1189, %v1191
  %v1219 = vsel %vm1210, %v1191, %v1193
  %v1220 = vsel %vm1210, %v1193, %v1195
  %v1221 = vsel %vm1210, %v1195, %v1197
  %v1222 = vsel %vm1210, %v1197, %v1199
  %v1223 = vsel %vm1210, %v1199, %v1201
  %v1224 = vsel %vm1210, %v1201, %v1203
  %v1225 = vsel %vm1210, %v1203, %v1205
  %v1226 = vsel %vm1210, %v1205, %v1207
  %v1227 = vsel %vm1210, %v1207, %v1209
  %v1229 = vsel %vm134, %v1173, 0
  %v1232 = vsel %vm138, %v1211, 0
  %v1235 = vsel %vm138, %v1212, 0
  %v1238 = vsel %vm138, %v1213, 0
  %v1241 = vsel %vm138, %v1214, 0
  %v1244 = vsel %vm138, %v1215, 0
  %v1247 = vsel %vm138, %v1216, 0
  %v1250 = vsel %vm138, %v1217, 0
  %v1253 = vsel %vm138, %v1218, 0
  %v1256 = vsel %vm138, %v1219, 0
  %v1259 = vsel %vm138, %v1220, 0
  %v1262 = vsel %vm138, %v1221, 0
  %v1265 = vsel %vm138, %v1222, 0
  %v1268 = vsel %vm138, %v1223, 0
  %v1271 = vsel %vm138, %v1224, 0
  %v1274 = vsel %vm138, %v1225, 0
  %v1277 = vsel %vm138, %v1226, 0
  %v1280 = vsel %vm138, %v1227, 0
  %v1283 = vsel %vm138, %v1209, 0
  %1285 = vmatpush.bf16.msra.mxu0 0
  %1286 = vmatpush.bf16.msra.mxu0 0
  %1287 = vmatpush.bf16.msra.mxu0 0
  %1288 = vmatpush.bf16.msra.mxu0 0
  %1289 = vmatpush.bf16.msra.mxu0 0
  %1290 = vmatpush.bf16.msra.mxu0 0
  %1291 = vmatpush.bf16.msra.mxu0 0
  %1292 = vmatpush.bf16.msra.mxu0 %v1232
  %1293 = vmatmul.bf16.gmra.mxu0 %v1229
  %v1294 = vpop.f32.mrf.mxu0
  %v1295 = vadd.f32 0.0, %v1294
  %v1296 = vpop.f32.mrf.mxu0
  %v1297 = vadd.f32 0.0, %v1296
  %1298 = vdwg.mxu0
  %1299 = vmatpush.bf16.msra.mxu0 0
  %1300 = vmatpush.bf16.msra.mxu0 0
  %1301 = vmatpush.bf16.msra.mxu0 0
  %1302 = vmatpush.bf16.msra.mxu0 0
  %1303 = vmatpush.bf16.msra.mxu0 0
  %1304 = vmatpush.bf16.msra.mxu0 0
  %1305 = vmatpush.bf16.msra.mxu0 0
  %1306 = vmatpush.bf16.msra.mxu0 %v1235
  %1307 = vmatmul.bf16.gmra.mxu0 %v1229
  %v1308 = vpop.f32.mrf.mxu0
  %v1309 = vadd.f32 0.0, %v1308
  %v1310 = vpop.f32.mrf.mxu0
  %v1311 = vadd.f32 0.0, %v1310
  %1312 = vdwg.mxu0
  %1313 = vmatpush.bf16.msra.mxu0 0
  %1314 = vmatpush.bf16.msra.mxu0 0
  %1315 = vmatpush.bf16.msra.mxu0 0
  %1316 = vmatpush.bf16.msra.mxu0 0
  %1317 = vmatpush.bf16.msra.mxu0 0
  %1318 = vmatpush.bf16.msra.mxu0 0
  %1319 = vmatpush.bf16.msra.mxu0 0
  %1320 = vmatpush.bf16.msra.mxu0 %v1238
  %1321 = vmatmul.bf16.gmra.mxu0 %v1229
  %v1322 = vpop.f32.mrf.mxu0
  %v1323 = vadd.f32 0.0, %v1322
  %v1324 = vpop.f32.mrf.mxu0
  %v1325 = vadd.f32 0.0, %v1324
  %1326 = vdwg.mxu0
  %1327 = vmatpush.bf16.msra.mxu0 0
  %1328 = vmatpush.bf16.msra.mxu0 0
  %1329 = vmatpush.bf16.msra.mxu0 0
  %1330 = vmatpush.bf16.msra.mxu0 0
  %1331 = vmatpush.bf16.msra.mxu0 0
  %1332 = vmatpush.bf16.msra.mxu0 0
  %1333 = vmatpush.bf16.msra.mxu0 0
  %1334 = vmatpush.bf16.msra.mxu0 %v1241
  %1335 = vmatmul.bf16.gmra.mxu0 %v1229
  %v1336 = vpop.f32.mrf.mxu0
  %v1337 = vadd.f32 0.0, %v1336
  %v1338 = vpop.f32.mrf.mxu0
  %v1339 = vadd.f32 0.0, %v1338
  %1340 = vdwg.mxu0
  %1341 = vmatpush.bf16.msra.mxu0 0
  %1342 = vmatpush.bf16.msra.mxu0 0
  %1343 = vmatpush.bf16.msra.mxu0 0
  %1344 = vmatpush.bf16.msra.mxu0 0
  %1345 = vmatpush.bf16.msra.mxu0 0
  %1346 = vmatpush.bf16.msra.mxu0 0
  %1347 = vmatpush.bf16.msra.mxu0 0
  %1348 = vmatpush.bf16.msra.mxu0 %v1244
  %1349 = vmatmul.bf16.gmra.mxu0 %v1229
  %v1350 = vpop.f32.mrf.mxu0
  %v1351 = vadd.f32 0.0, %v1350
  %v1352 = vpop.f32.mrf.mxu0
  %v1353 = vadd.f32 0.0, %v1352
  %1354 = vdwg.mxu0
  %1355 = vmatpush.bf16.msra.mxu0 0
  %1356 = vmatpush.bf16.msra.mxu0 0
  %1357 = vmatpush.bf16.msra.mxu0 0
  %1358 = vmatpush.bf16.msra.mxu0 0
  %1359 = vmatpush.bf16.msra.mxu0 0
  %1360 = vmatpush.bf16.msra.mxu0 0
  %1361 = vmatpush.bf16.msra.mxu0 0
  %1362 = vmatpush.bf16.msra.mxu0 %v1247
  %1363 = vmatmul.bf16.gmra.mxu0 %v1229
  %v1364 = vpop.f32.mrf.mxu0
  %v1365 = vadd.f32 0.0, %v1364
  %v1366 = vpop.f32.mrf.mxu0
  %v1367 = vadd.f32 0.0, %v1366
  %1368 = vdwg.mxu0
  %1369 = vmatpush.bf16.msra.mxu0 0
  %1370 = vmatpush.bf16.msra.mxu0 0
  %1371 = vmatpush.bf16.msra.mxu0 0
  %1372 = vmatpush.bf16.msra.mxu0 0
  %1373 = vmatpush.bf16.msra.mxu0 0
  %1374 = vmatpush.bf16.msra.mxu0 0
  %1375 = vmatpush.bf16.msra.mxu0 0
  %1376 = vmatpush.bf16.msra.mxu0 %v1250
  %1377 = vmatmul.bf16.gmra.mxu0 %v1229
  %v1378 = vpop.f32.mrf.mxu0
  %v1379 = vadd.f32 0.0, %v1378
  %v1380 = vpop.f32.mrf.mxu0
  %v1381 = vadd.f32 0.0, %v1380
  %1382 = vdwg.mxu0
  %1383 = vmatpush.bf16.msra.mxu0 0
  %1384 = vmatpush.bf16.msra.mxu0 0
  %1385 = vmatpush.bf16.msra.mxu0 0
  %1386 = vmatpush.bf16.msra.mxu0 0
  %1387 = vmatpush.bf16.msra.mxu0 0
  %1388 = vmatpush.bf16.msra.mxu0 0
  %1389 = vmatpush.bf16.msra.mxu0 0
  %1390 = vmatpush.bf16.msra.mxu0 %v1253
  %1391 = vmatmul.bf16.gmra.mxu0 %v1229
  %v1392 = vpop.f32.mrf.mxu0
  %v1393 = vadd.f32 0.0, %v1392
  %v1394 = vpop.f32.mrf.mxu0
  %v1395 = vadd.f32 0.0, %v1394
  %1396 = vdwg.mxu0
  %1397 = vmatpush.bf16.msra.mxu0 0
  %1398 = vmatpush.bf16.msra.mxu0 0
  %1399 = vmatpush.bf16.msra.mxu0 0
  %1400 = vmatpush.bf16.msra.mxu0 0
  %1401 = vmatpush.bf16.msra.mxu0 0
  %1402 = vmatpush.bf16.msra.mxu0 0
  %1403 = vmatpush.bf16.msra.mxu0 0
  %1404 = vmatpush.bf16.msra.mxu0 %v1256
  %1405 = vmatmul.bf16.gmra.mxu0 %v1229
  %v1406 = vpop.f32.mrf.mxu0
  %v1407 = vadd.f32 0.0, %v1406
  %v1408 = vpop.f32.mrf.mxu0
  %v1409 = vadd.f32 0.0, %v1408
  %1410 = vdwg.mxu0
  %1411 = vmatpush.bf16.msra.mxu0 0
  %1412 = vmatpush.bf16.msra.mxu0 0
  %1413 = vmatpush.bf16.msra.mxu0 0
  %1414 = vmatpush.bf16.msra.mxu0 0
  %1415 = vmatpush.bf16.msra.mxu0 0
  %1416 = vmatpush.bf16.msra.mxu0 0
  %1417 = vmatpush.bf16.msra.mxu0 0
  %1418 = vmatpush.bf16.msra.mxu0 %v1259
  %1419 = vmatmul.bf16.gmra.mxu0 %v1229
  %v1420 = vpop.f32.mrf.mxu0
  %v1421 = vadd.f32 0.0, %v1420
  %v1422 = vpop.f32.mrf.mxu0
  %v1423 = vadd.f32 0.0, %v1422
  %1424 = vdwg.mxu0
  %1425 = vmatpush.bf16.msra.mxu0 0
  %1426 = vmatpush.bf16.msra.mxu0 0
  %1427 = vmatpush.bf16.msra.mxu0 0
  %1428 = vmatpush.bf16.msra.mxu0 0
  %1429 = vmatpush.bf16.msra.mxu0 0
  %1430 = vmatpush.bf16.msra.mxu0 0
  %1431 = vmatpush.bf16.msra.mxu0 0
  %1432 = vmatpush.bf16.msra.mxu0 %v1262
  %1433 = vmatmul.bf16.gmra.mxu0 %v1229
  %v1434 = vpop.f32.mrf.mxu0
  %v1435 = vadd.f32 0.0, %v1434
  %v1436 = vpop.f32.mrf.mxu0
  %v1437 = vadd.f32 0.0, %v1436
  %1438 = vdwg.mxu0
  %1439 = vmatpush.bf16.msra.mxu0 0
  %1440 = vmatpush.bf16.msra.mxu0 0
  %1441 = vmatpush.bf16.msra.mxu0 0
  %1442 = vmatpush.bf16.msra.mxu0 0
  %1443 = vmatpush.bf16.msra.mxu0 0
  %1444 = vmatpush.bf16.msra.mxu0 0
  %1445 = vmatpush.bf16.msra.mxu0 0
  %1446 = vmatpush.bf16.msra.mxu0 %v1265
  %1447 = vmatmul.bf16.gmra.mxu0 %v1229
  %v1448 = vpop.f32.mrf.mxu0
  %v1449 = vadd.f32 0.0, %v1448
  %v1450 = vpop.f32.mrf.mxu0
  %v1451 = vadd.f32 0.0, %v1450
  %1452 = vdwg.mxu0
  %1453 = vmatpush.bf16.msra.mxu0 0
  %1454 = vmatpush.bf16.msra.mxu0 0
  %1455 = vmatpush.bf16.msra.mxu0 0
  %1456 = vmatpush.bf16.msra.mxu0 0
  %1457 = vmatpush.bf16.msra.mxu0 0
  %1458 = vmatpush.bf16.msra.mxu0 0
  %1459 = vmatpush.bf16.msra.mxu0 0
  %1460 = vmatpush.bf16.msra.mxu0 %v1268
  %1461 = vmatmul.bf16.gmra.mxu0 %v1229
  %v1462 = vpop.f32.mrf.mxu0
  %v1463 = vadd.f32 0.0, %v1462
  %v1464 = vpop.f32.mrf.mxu0
  %v1465 = vadd.f32 0.0, %v1464
  %1466 = vdwg.mxu0
  %1467 = vmatpush.bf16.msra.mxu0 0
  %1468 = vmatpush.bf16.msra.mxu0 0
  %1469 = vmatpush.bf16.msra.mxu0 0
  %1470 = vmatpush.bf16.msra.mxu0 0
  %1471 = vmatpush.bf16.msra.mxu0 0
  %1472 = vmatpush.bf16.msra.mxu0 0
  %1473 = vmatpush.bf16.msra.mxu0 0
  %1474 = vmatpush.bf16.msra.mxu0 %v1271
  %1475 = vmatmul.bf16.gmra.mxu0 %v1229
  %v1476 = vpop.f32.mrf.mxu0
  %v1477 = vadd.f32 0.0, %v1476
  %v1478 = vpop.f32.mrf.mxu0
  %v1479 = vadd.f32 0.0, %v1478
  %1480 = vdwg.mxu0
  %1481 = vmatpush.bf16.msra.mxu0 0
  %1482 = vmatpush.bf16.msra.mxu0 0
  %1483 = vmatpush.bf16.msra.mxu0 0
  %1484 = vmatpush.bf16.msra.mxu0 0
  %1485 = vmatpush.bf16.msra.mxu0 0
  %1486 = vmatpush.bf16.msra.mxu0 0
  %1487 = vmatpush.bf16.msra.mxu0 0
  %1488 = vmatpush.bf16.msra.mxu0 %v1274
  %1489 = vmatmul.bf16.gmra.mxu0 %v1229
  %v1490 = vpop.f32.mrf.mxu0
  %v1491 = vadd.f32 0.0, %v1490
  %v1492 = vpop.f32.mrf.mxu0
  %v1493 = vadd.f32 0.0, %v1492
  %1494 = vdwg.mxu0
  %1495 = vmatpush.bf16.msra.mxu0 0
  %1496 = vmatpush.bf16.msra.mxu0 0
  %1497 = vmatpush.bf16.msra.mxu0 0
  %1498 = vmatpush.bf16.msra.mxu0 0
  %1499 = vmatpush.bf16.msra.mxu0 0
  %1500 = vmatpush.bf16.msra.mxu0 0
  %1501 = vmatpush.bf16.msra.mxu0 0
  %1502 = vmatpush.bf16.msra.mxu0 %v1277
  %1503 = vmatmul.bf16.gmra.mxu0 %v1229
  %v1504 = vpop.f32.mrf.mxu0
  %v1505 = vadd.f32 0.0, %v1504
  %v1506 = vpop.f32.mrf.mxu0
  %v1507 = vadd.f32 0.0, %v1506
  %1508 = vdwg.mxu0
  %1509 = vmatpush.bf16.msra.mxu0 0
  %1510 = vmatpush.bf16.msra.mxu0 0
  %1511 = vmatpush.bf16.msra.mxu0 0
  %1512 = vmatpush.bf16.msra.mxu0 0
  %1513 = vmatpush.bf16.msra.mxu0 0
  %1514 = vmatpush.bf16.msra.mxu0 0
  %1515 = vmatpush.bf16.msra.mxu0 0
  %1516 = vmatpush.bf16.msra.mxu0 %v1280
  %1517 = vmatmul.bf16.gmra.mxu0 %v1229
  %v1518 = vpop.f32.mrf.mxu0
  %v1519 = vadd.f32 0.0, %v1518
  %v1520 = vpop.f32.mrf.mxu0
  %v1521 = vadd.f32 0.0, %v1520
  %1522 = vdwg.mxu0
  %1523 = vmatpush.bf16.msra.mxu0 0
  %1524 = vmatpush.bf16.msra.mxu0 0
  %1525 = vmatpush.bf16.msra.mxu0 0
  %1526 = vmatpush.bf16.msra.mxu0 0
  %1527 = vmatpush.bf16.msra.mxu0 0
  %1528 = vmatpush.bf16.msra.mxu0 0
  %1529 = vmatpush.bf16.msra.mxu0 0
  %1530 = vmatpush.bf16.msra.mxu0 %v1283
  %1531 = vmatmul.bf16.gmra.mxu0 %v1229
  %v1532 = vpop.f32.mrf.mxu0
  %v1533 = vadd.f32 0.0, %v1532
  %v1534 = vpop.f32.mrf.mxu0
  %v1535 = vadd.f32 0.0, %v1534
  %1536 = vdwg.mxu0
  %v1537 = vadd.f32 %v1130, %v1295
  %v1538 = vadd.f32 %v1131, %v1309
  %v1539 = vadd.f32 %v1132, %v1323
  %v1540 = vadd.f32 %v1133, %v1337
  %v1541 = vadd.f32 %v1134, %v1351
  %v1542 = vadd.f32 %v1135, %v1365
  %v1543 = vadd.f32 %v1136, %v1379
  %v1544 = vadd.f32 %v1137, %v1393
  %v1545 = vadd.f32 %v1138, %v1407
  %v1546 = vadd.f32 %v1139, %v1421
  %v1547 = vadd.f32 %v1140, %v1435
  %v1548 = vadd.f32 %v1141, %v1449
  %v1549 = vadd.f32 %v1142, %v1463
  %v1550 = vadd.f32 %v1143, %v1477
  %v1551 = vadd.f32 %v1144, %v1491
  %v1552 = vadd.f32 %v1145, %v1505
  %v1553 = vadd.f32 %v1146, %v1519
  %v1554 = vadd.f32 %v1147, %v1533
  %v1555 = vadd.f32 %v1148, %v1297
  %v1556 = vadd.f32 %v1149, %v1311
  %v1557 = vadd.f32 %v1150, %v1325
  %v1558 = vadd.f32 %v1151, %v1339
  %v1559 = vadd.f32 %v1152, %v1353
  %v1560 = vadd.f32 %v1153, %v1367
  %v1561 = vadd.f32 %v1154, %v1381
  %v1562 = vadd.f32 %v1155, %v1395
  %v1563 = vadd.f32 %v1156, %v1409
  %v1564 = vadd.f32 %v1157, %v1423
  %v1565 = vadd.f32 %v1158, %v1437
  %v1566 = vadd.f32 %v1159, %v1451
  %v1567 = vadd.f32 %v1160, %v1465
  %v1568 = vadd.f32 %v1161, %v1479
  %v1569 = vadd.f32 %v1162, %v1493
  %v1570 = vadd.f32 %v1163, %v1507
  %v1571 = vadd.f32 %v1164, %v1521
  %v1572 = vadd.f32 %v1165, %v1535
  %s1573 = scalar_lea.vmem %s1, 32
  %v1574 = vld [vmem:[%s1573] sm:$0xf]
  %v1575 = vld [vmem:[%s1573 + $0x4] sm:$0x3]
  %v1578 = vunpack.c.l.b16 %v1574
  %v1579 = vunpack.c.l.b16 %v1575
  %v1580 = vpack.c.b16 %v1579, %v1578
  %1581 = vrot.lane.b32.xlu0 %v62, 93
  %v1582 = vpop.permute.xlu0 %1581
  %1583 = vrot.lane.b32.xlu0 %v63, 93
  %v1584 = vpop.permute.xlu0 %1583
  %1585 = vrot.lane.b32.xlu0 %v64, 93
  %v1586 = vpop.permute.xlu0 %1585
  %1587 = vrot.lane.b32.xlu0 %v65, 93
  %v1588 = vpop.permute.xlu0 %1587
  %1589 = vrot.lane.b32.xlu0 %v66, 93
  %v1590 = vpop.permute.xlu0 %1589
  %1591 = vrot.lane.b32.xlu0 %v67, 93
  %v1592 = vpop.permute.xlu0 %1591
  %1593 = vrot.lane.b32.xlu0 %v68, 93
  %v1594 = vpop.permute.xlu0 %1593
  %1595 = vrot.lane.b32.xlu0 %v69, 93
  %v1596 = vpop.permute.xlu0 %1595
  %1597 = vrot.lane.b32.xlu0 %v70, 93
  %v1598 = vpop.permute.xlu0 %1597
  %1599 = vrot.lane.b32.xlu0 %v71, 93
  %v1600 = vpop.permute.xlu0 %1599
  %1601 = vrot.lane.b32.xlu0 %v72, 93
  %v1602 = vpop.permute.xlu0 %1601
  %1603 = vrot.lane.b32.xlu0 %v73, 93
  %v1604 = vpop.permute.xlu0 %1603
  %1605 = vrot.lane.b32.xlu0 %v74, 93
  %v1606 = vpop.permute.xlu0 %1605
  %1607 = vrot.lane.b32.xlu0 %v75, 93
  %v1608 = vpop.permute.xlu0 %1607
  %1609 = vrot.lane.b32.xlu0 %v76, 93
  %v1610 = vpop.permute.xlu0 %1609
  %1611 = vrot.lane.b32.xlu0 %v77, 93
  %v1612 = vpop.permute.xlu0 %1611
  %1613 = vrot.lane.b32.xlu0 %v78, 93
  %v1614 = vpop.permute.xlu0 %1613
  %1615 = vrot.lane.b32.xlu0 %v79, 93
  %v1616 = vpop.permute.xlu0 %1615
  %vm1617 = vcmask 760832
  %v1618 = vsel %vm1617, %v1582, %v1584
  %v1619 = vsel %vm1617, %v1584, %v1586
  %v1620 = vsel %vm1617, %v1586, %v1588
  %v1621 = vsel %vm1617, %v1588, %v1590
  %v1622 = vsel %vm1617, %v1590, %v1592
  %v1623 = vsel %vm1617, %v1592, %v1594
  %v1624 = vsel %vm1617, %v1594, %v1596
  %v1625 = vsel %vm1617, %v1596, %v1598
  %v1626 = vsel %vm1617, %v1598, %v1600
  %v1627 = vsel %vm1617, %v1600, %v1602
  %v1628 = vsel %vm1617, %v1602, %v1604
  %v1629 = vsel %vm1617, %v1604, %v1606
  %v1630 = vsel %vm1617, %v1606, %v1608
  %v1631 = vsel %vm1617, %v1608, %v1610
  %v1632 = vsel %vm1617, %v1610, %v1612
  %v1633 = vsel %vm1617, %v1612, %v1614
  %v1634 = vsel %vm1617, %v1614, %v1616
  %v1636 = vsel %vm134, %v1580, 0
  %v1639 = vsel %vm138, %v1618, 0
  %v1642 = vsel %vm138, %v1619, 0
  %v1645 = vsel %vm138, %v1620, 0
  %v1648 = vsel %vm138, %v1621, 0
  %v1651 = vsel %vm138, %v1622, 0
  %v1654 = vsel %vm138, %v1623, 0
  %v1657 = vsel %vm138, %v1624, 0
  %v1660 = vsel %vm138, %v1625, 0
  %v1663 = vsel %vm138, %v1626, 0
  %v1666 = vsel %vm138, %v1627, 0
  %v1669 = vsel %vm138, %v1628, 0
  %v1672 = vsel %vm138, %v1629, 0
  %v1675 = vsel %vm138, %v1630, 0
  %v1678 = vsel %vm138, %v1631, 0
  %v1681 = vsel %vm138, %v1632, 0
  %v1684 = vsel %vm138, %v1633, 0
  %v1687 = vsel %vm138, %v1634, 0
  %v1690 = vsel %vm138, %v1616, 0
  %1692 = vmatpush.bf16.msra.mxu0 0
  %1693 = vmatpush.bf16.msra.mxu0 0
  %1694 = vmatpush.bf16.msra.mxu0 0
  %1695 = vmatpush.bf16.msra.mxu0 0
  %1696 = vmatpush.bf16.msra.mxu0 0
  %1697 = vmatpush.bf16.msra.mxu0 0
  %1698 = vmatpush.bf16.msra.mxu0 0
  %1699 = vmatpush.bf16.msra.mxu0 %v1639
  %1700 = vmatmul.bf16.gmra.mxu0 %v1636
  %v1701 = vpop.f32.mrf.mxu0
  %v1702 = vadd.f32 0.0, %v1701
  %v1703 = vpop.f32.mrf.mxu0
  %v1704 = vadd.f32 0.0, %v1703
  %1705 = vdwg.mxu0
  %1706 = vmatpush.bf16.msra.mxu0 0
  %1707 = vmatpush.bf16.msra.mxu0 0
  %1708 = vmatpush.bf16.msra.mxu0 0
  %1709 = vmatpush.bf16.msra.mxu0 0
  %1710 = vmatpush.bf16.msra.mxu0 0
  %1711 = vmatpush.bf16.msra.mxu0 0
  %1712 = vmatpush.bf16.msra.mxu0 0
  %1713 = vmatpush.bf16.msra.mxu0 %v1642
  %1714 = vmatmul.bf16.gmra.mxu0 %v1636
  %v1715 = vpop.f32.mrf.mxu0
  %v1716 = vadd.f32 0.0, %v1715
  %v1717 = vpop.f32.mrf.mxu0
  %v1718 = vadd.f32 0.0, %v1717
  %1719 = vdwg.mxu0
  %1720 = vmatpush.bf16.msra.mxu0 0
  %1721 = vmatpush.bf16.msra.mxu0 0
  %1722 = vmatpush.bf16.msra.mxu0 0
  %1723 = vmatpush.bf16.msra.mxu0 0
  %1724 = vmatpush.bf16.msra.mxu0 0
  %1725 = vmatpush.bf16.msra.mxu0 0
  %1726 = vmatpush.bf16.msra.mxu0 0
  %1727 = vmatpush.bf16.msra.mxu0 %v1645
  %1728 = vmatmul.bf16.gmra.mxu0 %v1636
  %v1729 = vpop.f32.mrf.mxu0
  %v1730 = vadd.f32 0.0, %v1729
  %v1731 = vpop.f32.mrf.mxu0
  %v1732 = vadd.f32 0.0, %v1731
  %1733 = vdwg.mxu0
  %1734 = vmatpush.bf16.msra.mxu0 0
  %1735 = vmatpush.bf16.msra.mxu0 0
  %1736 = vmatpush.bf16.msra.mxu0 0
  %1737 = vmatpush.bf16.msra.mxu0 0
  %1738 = vmatpush.bf16.msra.mxu0 0
  %1739 = vmatpush.bf16.msra.mxu0 0
  %1740 = vmatpush.bf16.msra.mxu0 0
  %1741 = vmatpush.bf16.msra.mxu0 %v1648
  %1742 = vmatmul.bf16.gmra.mxu0 %v1636
  %v1743 = vpop.f32.mrf.mxu0
  %v1744 = vadd.f32 0.0, %v1743
  %v1745 = vpop.f32.mrf.mxu0
  %v1746 = vadd.f32 0.0, %v1745
  %1747 = vdwg.mxu0
  %1748 = vmatpush.bf16.msra.mxu0 0
  %1749 = vmatpush.bf16.msra.mxu0 0
  %1750 = vmatpush.bf16.msra.mxu0 0
  %1751 = vmatpush.bf16.msra.mxu0 0
  %1752 = vmatpush.bf16.msra.mxu0 0
  %1753 = vmatpush.bf16.msra.mxu0 0
  %1754 = vmatpush.bf16.msra.mxu0 0
  %1755 = vmatpush.bf16.msra.mxu0 %v1651
  %1756 = vmatmul.bf16.gmra.mxu0 %v1636
  %v1757 = vpop.f32.mrf.mxu0
  %v1758 = vadd.f32 0.0, %v1757
  %v1759 = vpop.f32.mrf.mxu0
  %v1760 = vadd.f32 0.0, %v1759
  %1761 = vdwg.mxu0
  %1762 = vmatpush.bf16.msra.mxu0 0
  %1763 = vmatpush.bf16.msra.mxu0 0
  %1764 = vmatpush.bf16.msra.mxu0 0
  %1765 = vmatpush.bf16.msra.mxu0 0
  %1766 = vmatpush.bf16.msra.mxu0 0
  %1767 = vmatpush.bf16.msra.mxu0 0
  %1768 = vmatpush.bf16.msra.mxu0 0
  %1769 = vmatpush.bf16.msra.mxu0 %v1654
  %1770 = vmatmul.bf16.gmra.mxu0 %v1636
  %v1771 = vpop.f32.mrf.mxu0
  %v1772 = vadd.f32 0.0, %v1771
  %v1773 = vpop.f32.mrf.mxu0
  %v1774 = vadd.f32 0.0, %v1773
  %1775 = vdwg.mxu0
  %1776 = vmatpush.bf16.msra.mxu0 0
  %1777 = vmatpush.bf16.msra.mxu0 0
  %1778 = vmatpush.bf16.msra.mxu0 0
  %1779 = vmatpush.bf16.msra.mxu0 0
  %1780 = vmatpush.bf16.msra.mxu0 0
  %1781 = vmatpush.bf16.msra.mxu0 0
  %1782 = vmatpush.bf16.msra.mxu0 0
  %1783 = vmatpush.bf16.msra.mxu0 %v1657
  %1784 = vmatmul.bf16.gmra.mxu0 %v1636
  %v1785 = vpop.f32.mrf.mxu0
  %v1786 = vadd.f32 0.0, %v1785
  %v1787 = vpop.f32.mrf.mxu0
  %v1788 = vadd.f32 0.0, %v1787
  %1789 = vdwg.mxu0
  %1790 = vmatpush.bf16.msra.mxu0 0
  %1791 = vmatpush.bf16.msra.mxu0 0
  %1792 = vmatpush.bf16.msra.mxu0 0
  %1793 = vmatpush.bf16.msra.mxu0 0
  %1794 = vmatpush.bf16.msra.mxu0 0
  %1795 = vmatpush.bf16.msra.mxu0 0
  %1796 = vmatpush.bf16.msra.mxu0 0
  %1797 = vmatpush.bf16.msra.mxu0 %v1660
  %1798 = vmatmul.bf16.gmra.mxu0 %v1636
  %v1799 = vpop.f32.mrf.mxu0
  %v1800 = vadd.f32 0.0, %v1799
  %v1801 = vpop.f32.mrf.mxu0
  %v1802 = vadd.f32 0.0, %v1801
  %1803 = vdwg.mxu0
  %1804 = vmatpush.bf16.msra.mxu0 0
  %1805 = vmatpush.bf16.msra.mxu0 0
  %1806 = vmatpush.bf16.msra.mxu0 0
  %1807 = vmatpush.bf16.msra.mxu0 0
  %1808 = vmatpush.bf16.msra.mxu0 0
  %1809 = vmatpush.bf16.msra.mxu0 0
  %1810 = vmatpush.bf16.msra.mxu0 0
  %1811 = vmatpush.bf16.msra.mxu0 %v1663
  %1812 = vmatmul.bf16.gmra.mxu0 %v1636
  %v1813 = vpop.f32.mrf.mxu0
  %v1814 = vadd.f32 0.0, %v1813
  %v1815 = vpop.f32.mrf.mxu0
  %v1816 = vadd.f32 0.0, %v1815
  %1817 = vdwg.mxu0
  %1818 = vmatpush.bf16.msra.mxu0 0
  %1819 = vmatpush.bf16.msra.mxu0 0
  %1820 = vmatpush.bf16.msra.mxu0 0
  %1821 = vmatpush.bf16.msra.mxu0 0
  %1822 = vmatpush.bf16.msra.mxu0 0
  %1823 = vmatpush.bf16.msra.mxu0 0
  %1824 = vmatpush.bf16.msra.mxu0 0
  %1825 = vmatpush.bf16.msra.mxu0 %v1666
  %1826 = vmatmul.bf16.gmra.mxu0 %v1636
  %v1827 = vpop.f32.mrf.mxu0
  %v1828 = vadd.f32 0.0, %v1827
  %v1829 = vpop.f32.mrf.mxu0
  %v1830 = vadd.f32 0.0, %v1829
  %1831 = vdwg.mxu0
  %1832 = vmatpush.bf16.msra.mxu0 0
  %1833 = vmatpush.bf16.msra.mxu0 0
  %1834 = vmatpush.bf16.msra.mxu0 0
  %1835 = vmatpush.bf16.msra.mxu0 0
  %1836 = vmatpush.bf16.msra.mxu0 0
  %1837 = vmatpush.bf16.msra.mxu0 0
  %1838 = vmatpush.bf16.msra.mxu0 0
  %1839 = vmatpush.bf16.msra.mxu0 %v1669
  %1840 = vmatmul.bf16.gmra.mxu0 %v1636
  %v1841 = vpop.f32.mrf.mxu0
  %v1842 = vadd.f32 0.0, %v1841
  %v1843 = vpop.f32.mrf.mxu0
  %v1844 = vadd.f32 0.0, %v1843
  %1845 = vdwg.mxu0
  %1846 = vmatpush.bf16.msra.mxu0 0
  %1847 = vmatpush.bf16.msra.mxu0 0
  %1848 = vmatpush.bf16.msra.mxu0 0
  %1849 = vmatpush.bf16.msra.mxu0 0
  %1850 = vmatpush.bf16.msra.mxu0 0
  %1851 = vmatpush.bf16.msra.mxu0 0
  %1852 = vmatpush.bf16.msra.mxu0 0
  %1853 = vmatpush.bf16.msra.mxu0 %v1672
  %1854 = vmatmul.bf16.gmra.mxu0 %v1636
  %v1855 = vpop.f32.mrf.mxu0
  %v1856 = vadd.f32 0.0, %v1855
  %v1857 = vpop.f32.mrf.mxu0
  %v1858 = vadd.f32 0.0, %v1857
  %1859 = vdwg.mxu0
  %1860 = vmatpush.bf16.msra.mxu0 0
  %1861 = vmatpush.bf16.msra.mxu0 0
  %1862 = vmatpush.bf16.msra.mxu0 0
  %1863 = vmatpush.bf16.msra.mxu0 0
  %1864 = vmatpush.bf16.msra.mxu0 0
  %1865 = vmatpush.bf16.msra.mxu0 0
  %1866 = vmatpush.bf16.msra.mxu0 0
  %1867 = vmatpush.bf16.msra.mxu0 %v1675
  %1868 = vmatmul.bf16.gmra.mxu0 %v1636
  %v1869 = vpop.f32.mrf.mxu0
  %v1870 = vadd.f32 0.0, %v1869
  %v1871 = vpop.f32.mrf.mxu0
  %v1872 = vadd.f32 0.0, %v1871
  %1873 = vdwg.mxu0
  %1874 = vmatpush.bf16.msra.mxu0 0
  %1875 = vmatpush.bf16.msra.mxu0 0
  %1876 = vmatpush.bf16.msra.mxu0 0
  %1877 = vmatpush.bf16.msra.mxu0 0
  %1878 = vmatpush.bf16.msra.mxu0 0
  %1879 = vmatpush.bf16.msra.mxu0 0
  %1880 = vmatpush.bf16.msra.mxu0 0
  %1881 = vmatpush.bf16.msra.mxu0 %v1678
  %1882 = vmatmul.bf16.gmra.mxu0 %v1636
  %v1883 = vpop.f32.mrf.mxu0
  %v1884 = vadd.f32 0.0, %v1883
  %v1885 = vpop.f32.mrf.mxu0
  %v1886 = vadd.f32 0.0, %v1885
  %1887 = vdwg.mxu0
  %1888 = vmatpush.bf16.msra.mxu0 0
  %1889 = vmatpush.bf16.msra.mxu0 0
  %1890 = vmatpush.bf16.msra.mxu0 0
  %1891 = vmatpush.bf16.msra.mxu0 0
  %1892 = vmatpush.bf16.msra.mxu0 0
  %1893 = vmatpush.bf16.msra.mxu0 0
  %1894 = vmatpush.bf16.msra.mxu0 0
  %1895 = vmatpush.bf16.msra.mxu0 %v1681
  %1896 = vmatmul.bf16.gmra.mxu0 %v1636
  %v1897 = vpop.f32.mrf.mxu0
  %v1898 = vadd.f32 0.0, %v1897
  %v1899 = vpop.f32.mrf.mxu0
  %v1900 = vadd.f32 0.0, %v1899
  %1901 = vdwg.mxu0
  %1902 = vmatpush.bf16.msra.mxu0 0
  %1903 = vmatpush.bf16.msra.mxu0 0
  %1904 = vmatpush.bf16.msra.mxu0 0
  %1905 = vmatpush.bf16.msra.mxu0 0
  %1906 = vmatpush.bf16.msra.mxu0 0
  %1907 = vmatpush.bf16.msra.mxu0 0
  %1908 = vmatpush.bf16.msra.mxu0 0
  %1909 = vmatpush.bf16.msra.mxu0 %v1684
  %1910 = vmatmul.bf16.gmra.mxu0 %v1636
  %v1911 = vpop.f32.mrf.mxu0
  %v1912 = vadd.f32 0.0, %v1911
  %v1913 = vpop.f32.mrf.mxu0
  %v1914 = vadd.f32 0.0, %v1913
  %1915 = vdwg.mxu0
  %1916 = vmatpush.bf16.msra.mxu0 0
  %1917 = vmatpush.bf16.msra.mxu0 0
  %1918 = vmatpush.bf16.msra.mxu0 0
  %1919 = vmatpush.bf16.msra.mxu0 0
  %1920 = vmatpush.bf16.msra.mxu0 0
  %1921 = vmatpush.bf16.msra.mxu0 0
  %1922 = vmatpush.bf16.msra.mxu0 0
  %1923 = vmatpush.bf16.msra.mxu0 %v1687
  %1924 = vmatmul.bf16.gmra.mxu0 %v1636
  %v1925 = vpop.f32.mrf.mxu0
  %v1926 = vadd.f32 0.0, %v1925
  %v1927 = vpop.f32.mrf.mxu0
  %v1928 = vadd.f32 0.0, %v1927
  %1929 = vdwg.mxu0
  %1930 = vmatpush.bf16.msra.mxu0 0
  %1931 = vmatpush.bf16.msra.mxu0 0
  %1932 = vmatpush.bf16.msra.mxu0 0
  %1933 = vmatpush.bf16.msra.mxu0 0
  %1934 = vmatpush.bf16.msra.mxu0 0
  %1935 = vmatpush.bf16.msra.mxu0 0
  %1936 = vmatpush.bf16.msra.mxu0 0
  %1937 = vmatpush.bf16.msra.mxu0 %v1690
  %1938 = vmatmul.bf16.gmra.mxu0 %v1636
  %v1939 = vpop.f32.mrf.mxu0
  %v1940 = vadd.f32 0.0, %v1939
  %v1941 = vpop.f32.mrf.mxu0
  %v1942 = vadd.f32 0.0, %v1941
  %1943 = vdwg.mxu0
  %v1944 = vadd.f32 %v1537, %v1702
  %v1945 = vadd.f32 %v1538, %v1716
  %v1946 = vadd.f32 %v1539, %v1730
  %v1947 = vadd.f32 %v1540, %v1744
  %v1948 = vadd.f32 %v1541, %v1758
  %v1949 = vadd.f32 %v1542, %v1772
  %v1950 = vadd.f32 %v1543, %v1786
  %v1951 = vadd.f32 %v1544, %v1800
  %v1952 = vadd.f32 %v1545, %v1814
  %v1953 = vadd.f32 %v1546, %v1828
  %v1954 = vadd.f32 %v1547, %v1842
  %v1955 = vadd.f32 %v1548, %v1856
  %v1956 = vadd.f32 %v1549, %v1870
  %v1957 = vadd.f32 %v1550, %v1884
  %v1958 = vadd.f32 %v1551, %v1898
  %v1959 = vadd.f32 %v1552, %v1912
  %v1960 = vadd.f32 %v1553, %v1926
  %v1961 = vadd.f32 %v1554, %v1940
  %v1962 = vadd.f32 %v1555, %v1704
  %v1963 = vadd.f32 %v1556, %v1718
  %v1964 = vadd.f32 %v1557, %v1732
  %v1965 = vadd.f32 %v1558, %v1746
  %v1966 = vadd.f32 %v1559, %v1760
  %v1967 = vadd.f32 %v1560, %v1774
  %v1968 = vadd.f32 %v1561, %v1788
  %v1969 = vadd.f32 %v1562, %v1802
  %v1970 = vadd.f32 %v1563, %v1816
  %v1971 = vadd.f32 %v1564, %v1830
  %v1972 = vadd.f32 %v1565, %v1844
  %v1973 = vadd.f32 %v1566, %v1858
  %v1974 = vadd.f32 %v1567, %v1872
  %v1975 = vadd.f32 %v1568, %v1886
  %v1976 = vadd.f32 %v1569, %v1900
  %v1977 = vadd.f32 %v1570, %v1914
  %v1978 = vadd.f32 %v1571, %v1928
  %v1979 = vadd.f32 %v1572, %v1942
  %s1980 = scalar_lea.vmem %s1, 40
  %v1981 = vld [vmem:[%s1980] sm:$0xf]
  %v1982 = vld [vmem:[%s1980 + $0x4] sm:$0x3]
  %v1985 = vunpack.c.l.b16 %v1981
  %v1986 = vunpack.c.l.b16 %v1982
  %v1987 = vpack.c.b16 %v1986, %v1985
  %1988 = vrot.lane.b32.xlu0 %v62, 92
  %v1989 = vpop.permute.xlu0 %1988
  %1990 = vrot.lane.b32.xlu0 %v63, 92
  %v1991 = vpop.permute.xlu0 %1990
  %1992 = vrot.lane.b32.xlu0 %v64, 92
  %v1993 = vpop.permute.xlu0 %1992
  %1994 = vrot.lane.b32.xlu0 %v65, 92
  %v1995 = vpop.permute.xlu0 %1994
  %1996 = vrot.lane.b32.xlu0 %v66, 92
  %v1997 = vpop.permute.xlu0 %1996
  %1998 = vrot.lane.b32.xlu0 %v67, 92
  %v1999 = vpop.permute.xlu0 %1998
  %2000 = vrot.lane.b32.xlu0 %v68, 92
  %v2001 = vpop.permute.xlu0 %2000
  %2002 = vrot.lane.b32.xlu0 %v69, 92
  %v2003 = vpop.permute.xlu0 %2002
  %2004 = vrot.lane.b32.xlu0 %v70, 92
  %v2005 = vpop.permute.xlu0 %2004
  %2006 = vrot.lane.b32.xlu0 %v71, 92
  %v2007 = vpop.permute.xlu0 %2006
  %2008 = vrot.lane.b32.xlu0 %v72, 92
  %v2009 = vpop.permute.xlu0 %2008
  %2010 = vrot.lane.b32.xlu0 %v73, 92
  %v2011 = vpop.permute.xlu0 %2010
  %2012 = vrot.lane.b32.xlu0 %v74, 92
  %v2013 = vpop.permute.xlu0 %2012
  %2014 = vrot.lane.b32.xlu0 %v75, 92
  %v2015 = vpop.permute.xlu0 %2014
  %2016 = vrot.lane.b32.xlu0 %v76, 92
  %v2017 = vpop.permute.xlu0 %2016
  %2018 = vrot.lane.b32.xlu0 %v77, 92
  %v2019 = vpop.permute.xlu0 %2018
  %2020 = vrot.lane.b32.xlu0 %v78, 92
  %v2021 = vpop.permute.xlu0 %2020
  %2022 = vrot.lane.b32.xlu0 %v79, 92
  %v2023 = vpop.permute.xlu0 %2022
  %vm2024 = vcmask 752640
  %v2025 = vsel %vm2024, %v1989, %v1991
  %v2026 = vsel %vm2024, %v1991, %v1993
  %v2027 = vsel %vm2024, %v1993, %v1995
  %v2028 = vsel %vm2024, %v1995, %v1997
  %v2029 = vsel %vm2024, %v1997, %v1999
  %v2030 = vsel %vm2024, %v1999, %v2001
  %v2031 = vsel %vm2024, %v2001, %v2003
  %v2032 = vsel %vm2024, %v2003, %v2005
  %v2033 = vsel %vm2024, %v2005, %v2007
  %v2034 = vsel %vm2024, %v2007, %v2009
  %v2035 = vsel %vm2024, %v2009, %v2011
  %v2036 = vsel %vm2024, %v2011, %v2013
  %v2037 = vsel %vm2024, %v2013, %v2015
  %v2038 = vsel %vm2024, %v2015, %v2017
  %v2039 = vsel %vm2024, %v2017, %v2019
  %v2040 = vsel %vm2024, %v2019, %v2021
  %v2041 = vsel %vm2024, %v2021, %v2023
  %v2043 = vsel %vm134, %v1987, 0
  %v2046 = vsel %vm138, %v2025, 0
  %v2049 = vsel %vm138, %v2026, 0
  %v2052 = vsel %vm138, %v2027, 0
  %v2055 = vsel %vm138, %v2028, 0
  %v2058 = vsel %vm138, %v2029, 0
  %v2061 = vsel %vm138, %v2030, 0
  %v2064 = vsel %vm138, %v2031, 0
  %v2067 = vsel %vm138, %v2032, 0
  %v2070 = vsel %vm138, %v2033, 0
  %v2073 = vsel %vm138, %v2034, 0
  %v2076 = vsel %vm138, %v2035, 0
  %v2079 = vsel %vm138, %v2036, 0
  %v2082 = vsel %vm138, %v2037, 0
  %v2085 = vsel %vm138, %v2038, 0
  %v2088 = vsel %vm138, %v2039, 0
  %v2091 = vsel %vm138, %v2040, 0
  %v2094 = vsel %vm138, %v2041, 0
  %v2097 = vsel %vm138, %v2023, 0
  %2099 = vmatpush.bf16.msra.mxu0 0
  %2100 = vmatpush.bf16.msra.mxu0 0
  %2101 = vmatpush.bf16.msra.mxu0 0
  %2102 = vmatpush.bf16.msra.mxu0 0
  %2103 = vmatpush.bf16.msra.mxu0 0
  %2104 = vmatpush.bf16.msra.mxu0 0
  %2105 = vmatpush.bf16.msra.mxu0 0
  %2106 = vmatpush.bf16.msra.mxu0 %v2046
  %2107 = vmatmul.bf16.gmra.mxu0 %v2043
  %v2108 = vpop.f32.mrf.mxu0
  %v2109 = vadd.f32 0.0, %v2108
  %v2110 = vpop.f32.mrf.mxu0
  %v2111 = vadd.f32 0.0, %v2110
  %2112 = vdwg.mxu0
  %2113 = vmatpush.bf16.msra.mxu0 0
  %2114 = vmatpush.bf16.msra.mxu0 0
  %2115 = vmatpush.bf16.msra.mxu0 0
  %2116 = vmatpush.bf16.msra.mxu0 0
  %2117 = vmatpush.bf16.msra.mxu0 0
  %2118 = vmatpush.bf16.msra.mxu0 0
  %2119 = vmatpush.bf16.msra.mxu0 0
  %2120 = vmatpush.bf16.msra.mxu0 %v2049
  %2121 = vmatmul.bf16.gmra.mxu0 %v2043
  %v2122 = vpop.f32.mrf.mxu0
  %v2123 = vadd.f32 0.0, %v2122
  %v2124 = vpop.f32.mrf.mxu0
  %v2125 = vadd.f32 0.0, %v2124
  %2126 = vdwg.mxu0
  %2127 = vmatpush.bf16.msra.mxu0 0
  %2128 = vmatpush.bf16.msra.mxu0 0
  %2129 = vmatpush.bf16.msra.mxu0 0
  %2130 = vmatpush.bf16.msra.mxu0 0
  %2131 = vmatpush.bf16.msra.mxu0 0
  %2132 = vmatpush.bf16.msra.mxu0 0
  %2133 = vmatpush.bf16.msra.mxu0 0
  %2134 = vmatpush.bf16.msra.mxu0 %v2052
  %2135 = vmatmul.bf16.gmra.mxu0 %v2043
  %v2136 = vpop.f32.mrf.mxu0
  %v2137 = vadd.f32 0.0, %v2136
  %v2138 = vpop.f32.mrf.mxu0
  %v2139 = vadd.f32 0.0, %v2138
  %2140 = vdwg.mxu0
  %2141 = vmatpush.bf16.msra.mxu0 0
  %2142 = vmatpush.bf16.msra.mxu0 0
  %2143 = vmatpush.bf16.msra.mxu0 0
  %2144 = vmatpush.bf16.msra.mxu0 0
  %2145 = vmatpush.bf16.msra.mxu0 0
  %2146 = vmatpush.bf16.msra.mxu0 0
  %2147 = vmatpush.bf16.msra.mxu0 0
  %2148 = vmatpush.bf16.msra.mxu0 %v2055
  %2149 = vmatmul.bf16.gmra.mxu0 %v2043
  %v2150 = vpop.f32.mrf.mxu0
  %v2151 = vadd.f32 0.0, %v2150
  %v2152 = vpop.f32.mrf.mxu0
  %v2153 = vadd.f32 0.0, %v2152
  %2154 = vdwg.mxu0
  %2155 = vmatpush.bf16.msra.mxu0 0
  %2156 = vmatpush.bf16.msra.mxu0 0
  %2157 = vmatpush.bf16.msra.mxu0 0
  %2158 = vmatpush.bf16.msra.mxu0 0
  %2159 = vmatpush.bf16.msra.mxu0 0
  %2160 = vmatpush.bf16.msra.mxu0 0
  %2161 = vmatpush.bf16.msra.mxu0 0
  %2162 = vmatpush.bf16.msra.mxu0 %v2058
  %2163 = vmatmul.bf16.gmra.mxu0 %v2043
  %v2164 = vpop.f32.mrf.mxu0
  %v2165 = vadd.f32 0.0, %v2164
  %v2166 = vpop.f32.mrf.mxu0
  %v2167 = vadd.f32 0.0, %v2166
  %2168 = vdwg.mxu0
  %2169 = vmatpush.bf16.msra.mxu0 0
  %2170 = vmatpush.bf16.msra.mxu0 0
  %2171 = vmatpush.bf16.msra.mxu0 0
  %2172 = vmatpush.bf16.msra.mxu0 0
  %2173 = vmatpush.bf16.msra.mxu0 0
  %2174 = vmatpush.bf16.msra.mxu0 0
  %2175 = vmatpush.bf16.msra.mxu0 0
  %2176 = vmatpush.bf16.msra.mxu0 %v2061
  %2177 = vmatmul.bf16.gmra.mxu0 %v2043
  %v2178 = vpop.f32.mrf.mxu0
  %v2179 = vadd.f32 0.0, %v2178
  %v2180 = vpop.f32.mrf.mxu0
  %v2181 = vadd.f32 0.0, %v2180
  %2182 = vdwg.mxu0
  %2183 = vmatpush.bf16.msra.mxu0 0
  %2184 = vmatpush.bf16.msra.mxu0 0
  %2185 = vmatpush.bf16.msra.mxu0 0
  %2186 = vmatpush.bf16.msra.mxu0 0
  %2187 = vmatpush.bf16.msra.mxu0 0
  %2188 = vmatpush.bf16.msra.mxu0 0
  %2189 = vmatpush.bf16.msra.mxu0 0
  %2190 = vmatpush.bf16.msra.mxu0 %v2064
  %2191 = vmatmul.bf16.gmra.mxu0 %v2043
  %v2192 = vpop.f32.mrf.mxu0
  %v2193 = vadd.f32 0.0, %v2192
  %v2194 = vpop.f32.mrf.mxu0
  %v2195 = vadd.f32 0.0, %v2194
  %2196 = vdwg.mxu0
  %2197 = vmatpush.bf16.msra.mxu0 0
  %2198 = vmatpush.bf16.msra.mxu0 0
  %2199 = vmatpush.bf16.msra.mxu0 0
  %2200 = vmatpush.bf16.msra.mxu0 0
  %2201 = vmatpush.bf16.msra.mxu0 0
  %2202 = vmatpush.bf16.msra.mxu0 0
  %2203 = vmatpush.bf16.msra.mxu0 0
  %2204 = vmatpush.bf16.msra.mxu0 %v2067
  %2205 = vmatmul.bf16.gmra.mxu0 %v2043
  %v2206 = vpop.f32.mrf.mxu0
  %v2207 = vadd.f32 0.0, %v2206
  %v2208 = vpop.f32.mrf.mxu0
  %v2209 = vadd.f32 0.0, %v2208
  %2210 = vdwg.mxu0
  %2211 = vmatpush.bf16.msra.mxu0 0
  %2212 = vmatpush.bf16.msra.mxu0 0
  %2213 = vmatpush.bf16.msra.mxu0 0
  %2214 = vmatpush.bf16.msra.mxu0 0
  %2215 = vmatpush.bf16.msra.mxu0 0
  %2216 = vmatpush.bf16.msra.mxu0 0
  %2217 = vmatpush.bf16.msra.mxu0 0
  %2218 = vmatpush.bf16.msra.mxu0 %v2070
  %2219 = vmatmul.bf16.gmra.mxu0 %v2043
  %v2220 = vpop.f32.mrf.mxu0
  %v2221 = vadd.f32 0.0, %v2220
  %v2222 = vpop.f32.mrf.mxu0
  %v2223 = vadd.f32 0.0, %v2222
  %2224 = vdwg.mxu0
  %2225 = vmatpush.bf16.msra.mxu0 0
  %2226 = vmatpush.bf16.msra.mxu0 0
  %2227 = vmatpush.bf16.msra.mxu0 0
  %2228 = vmatpush.bf16.msra.mxu0 0
  %2229 = vmatpush.bf16.msra.mxu0 0
  %2230 = vmatpush.bf16.msra.mxu0 0
  %2231 = vmatpush.bf16.msra.mxu0 0
  %2232 = vmatpush.bf16.msra.mxu0 %v2073
  %2233 = vmatmul.bf16.gmra.mxu0 %v2043
  %v2234 = vpop.f32.mrf.mxu0
  %v2235 = vadd.f32 0.0, %v2234
  %v2236 = vpop.f32.mrf.mxu0
  %v2237 = vadd.f32 0.0, %v2236
  %2238 = vdwg.mxu0
  %2239 = vmatpush.bf16.msra.mxu0 0
  %2240 = vmatpush.bf16.msra.mxu0 0
  %2241 = vmatpush.bf16.msra.mxu0 0
  %2242 = vmatpush.bf16.msra.mxu0 0
  %2243 = vmatpush.bf16.msra.mxu0 0
  %2244 = vmatpush.bf16.msra.mxu0 0
  %2245 = vmatpush.bf16.msra.mxu0 0
  %2246 = vmatpush.bf16.msra.mxu0 %v2076
  %2247 = vmatmul.bf16.gmra.mxu0 %v2043
  %v2248 = vpop.f32.mrf.mxu0
  %v2249 = vadd.f32 0.0, %v2248
  %v2250 = vpop.f32.mrf.mxu0
  %v2251 = vadd.f32 0.0, %v2250
  %2252 = vdwg.mxu0
  %2253 = vmatpush.bf16.msra.mxu0 0
  %2254 = vmatpush.bf16.msra.mxu0 0
  %2255 = vmatpush.bf16.msra.mxu0 0
  %2256 = vmatpush.bf16.msra.mxu0 0
  %2257 = vmatpush.bf16.msra.mxu0 0
  %2258 = vmatpush.bf16.msra.mxu0 0
  %2259 = vmatpush.bf16.msra.mxu0 0
  %2260 = vmatpush.bf16.msra.mxu0 %v2079
  %2261 = vmatmul.bf16.gmra.mxu0 %v2043
  %v2262 = vpop.f32.mrf.mxu0
  %v2263 = vadd.f32 0.0, %v2262
  %v2264 = vpop.f32.mrf.mxu0
  %v2265 = vadd.f32 0.0, %v2264
  %2266 = vdwg.mxu0
  %2267 = vmatpush.bf16.msra.mxu0 0
  %2268 = vmatpush.bf16.msra.mxu0 0
  %2269 = vmatpush.bf16.msra.mxu0 0
  %2270 = vmatpush.bf16.msra.mxu0 0
  %2271 = vmatpush.bf16.msra.mxu0 0
  %2272 = vmatpush.bf16.msra.mxu0 0
  %2273 = vmatpush.bf16.msra.mxu0 0
  %2274 = vmatpush.bf16.msra.mxu0 %v2082
  %2275 = vmatmul.bf16.gmra.mxu0 %v2043
  %v2276 = vpop.f32.mrf.mxu0
  %v2277 = vadd.f32 0.0, %v2276
  %v2278 = vpop.f32.mrf.mxu0
  %v2279 = vadd.f32 0.0, %v2278
  %2280 = vdwg.mxu0
  %2281 = vmatpush.bf16.msra.mxu0 0
  %2282 = vmatpush.bf16.msra.mxu0 0
  %2283 = vmatpush.bf16.msra.mxu0 0
  %2284 = vmatpush.bf16.msra.mxu0 0
  %2285 = vmatpush.bf16.msra.mxu0 0
  %2286 = vmatpush.bf16.msra.mxu0 0
  %2287 = vmatpush.bf16.msra.mxu0 0
  %2288 = vmatpush.bf16.msra.mxu0 %v2085
  %2289 = vmatmul.bf16.gmra.mxu0 %v2043
  %v2290 = vpop.f32.mrf.mxu0
  %v2291 = vadd.f32 0.0, %v2290
  %v2292 = vpop.f32.mrf.mxu0
  %v2293 = vadd.f32 0.0, %v2292
  %2294 = vdwg.mxu0
  %2295 = vmatpush.bf16.msra.mxu0 0
  %2296 = vmatpush.bf16.msra.mxu0 0
  %2297 = vmatpush.bf16.msra.mxu0 0
  %2298 = vmatpush.bf16.msra.mxu0 0
  %2299 = vmatpush.bf16.msra.mxu0 0
  %2300 = vmatpush.bf16.msra.mxu0 0
  %2301 = vmatpush.bf16.msra.mxu0 0
  %2302 = vmatpush.bf16.msra.mxu0 %v2088
  %2303 = vmatmul.bf16.gmra.mxu0 %v2043
  %v2304 = vpop.f32.mrf.mxu0
  %v2305 = vadd.f32 0.0, %v2304
  %v2306 = vpop.f32.mrf.mxu0
  %v2307 = vadd.f32 0.0, %v2306
  %2308 = vdwg.mxu0
  %2309 = vmatpush.bf16.msra.mxu0 0
  %2310 = vmatpush.bf16.msra.mxu0 0
  %2311 = vmatpush.bf16.msra.mxu0 0
  %2312 = vmatpush.bf16.msra.mxu0 0
  %2313 = vmatpush.bf16.msra.mxu0 0
  %2314 = vmatpush.bf16.msra.mxu0 0
  %2315 = vmatpush.bf16.msra.mxu0 0
  %2316 = vmatpush.bf16.msra.mxu0 %v2091
  %2317 = vmatmul.bf16.gmra.mxu0 %v2043
  %v2318 = vpop.f32.mrf.mxu0
  %v2319 = vadd.f32 0.0, %v2318
  %v2320 = vpop.f32.mrf.mxu0
  %v2321 = vadd.f32 0.0, %v2320
  %2322 = vdwg.mxu0
  %2323 = vmatpush.bf16.msra.mxu0 0
  %2324 = vmatpush.bf16.msra.mxu0 0
  %2325 = vmatpush.bf16.msra.mxu0 0
  %2326 = vmatpush.bf16.msra.mxu0 0
  %2327 = vmatpush.bf16.msra.mxu0 0
  %2328 = vmatpush.bf16.msra.mxu0 0
  %2329 = vmatpush.bf16.msra.mxu0 0
  %2330 = vmatpush.bf16.msra.mxu0 %v2094
  %2331 = vmatmul.bf16.gmra.mxu0 %v2043
  %v2332 = vpop.f32.mrf.mxu0
  %v2333 = vadd.f32 0.0, %v2332
  %v2334 = vpop.f32.mrf.mxu0
  %v2335 = vadd.f32 0.0, %v2334
  %2336 = vdwg.mxu0
  %2337 = vmatpush.bf16.msra.mxu0 0
  %2338 = vmatpush.bf16.msra.mxu0 0
  %2339 = vmatpush.bf16.msra.mxu0 0
  %2340 = vmatpush.bf16.msra.mxu0 0
  %2341 = vmatpush.bf16.msra.mxu0 0
  %2342 = vmatpush.bf16.msra.mxu0 0
  %2343 = vmatpush.bf16.msra.mxu0 0
  %2344 = vmatpush.bf16.msra.mxu0 %v2097
  %2345 = vmatmul.bf16.gmra.mxu0 %v2043
  %v2346 = vpop.f32.mrf.mxu0
  %v2347 = vadd.f32 0.0, %v2346
  %v2348 = vpop.f32.mrf.mxu0
  %v2349 = vadd.f32 0.0, %v2348
  %2350 = vdwg.mxu0
  %v2351 = vadd.f32 %v1944, %v2109
  %v2352 = vadd.f32 %v1945, %v2123
  %v2353 = vadd.f32 %v1946, %v2137
  %v2354 = vadd.f32 %v1947, %v2151
  %v2355 = vadd.f32 %v1948, %v2165
  %v2356 = vadd.f32 %v1949, %v2179
  %v2357 = vadd.f32 %v1950, %v2193
  %v2358 = vadd.f32 %v1951, %v2207
  %v2359 = vadd.f32 %v1952, %v2221
  %v2360 = vadd.f32 %v1953, %v2235
  %v2361 = vadd.f32 %v1954, %v2249
  %v2362 = vadd.f32 %v1955, %v2263
  %v2363 = vadd.f32 %v1956, %v2277
  %v2364 = vadd.f32 %v1957, %v2291
  %v2365 = vadd.f32 %v1958, %v2305
  %v2366 = vadd.f32 %v1959, %v2319
  %v2367 = vadd.f32 %v1960, %v2333
  %v2368 = vadd.f32 %v1961, %v2347
  %v2369 = vadd.f32 %v1962, %v2111
  %v2370 = vadd.f32 %v1963, %v2125
  %v2371 = vadd.f32 %v1964, %v2139
  %v2372 = vadd.f32 %v1965, %v2153
  %v2373 = vadd.f32 %v1966, %v2167
  %v2374 = vadd.f32 %v1967, %v2181
  %v2375 = vadd.f32 %v1968, %v2195
  %v2376 = vadd.f32 %v1969, %v2209
  %v2377 = vadd.f32 %v1970, %v2223
  %v2378 = vadd.f32 %v1971, %v2237
  %v2379 = vadd.f32 %v1972, %v2251
  %v2380 = vadd.f32 %v1973, %v2265
  %v2381 = vadd.f32 %v1974, %v2279
  %v2382 = vadd.f32 %v1975, %v2293
  %v2383 = vadd.f32 %v1976, %v2307
  %v2384 = vadd.f32 %v1977, %v2321
  %v2385 = vadd.f32 %v1978, %v2335
  %v2386 = vadd.f32 %v1979, %v2349
  %s2387 = scalar_lea.vmem %s1, 48
  %v2388 = vld [vmem:[%s2387] sm:$0xf]
  %v2389 = vld [vmem:[%s2387 + $0x4] sm:$0x3]
  %v2392 = vunpack.c.l.b16 %v2388
  %v2393 = vunpack.c.l.b16 %v2389
  %v2394 = vpack.c.b16 %v2393, %v2392
  %v2396 = vunpack.c.l.b16 %v24
  %v2397 = vpack.c.b16 %v2396, %v2396
  %2398 = vrot.lane.b32.xlu0 %v62, 60
  %v2399 = vpop.permute.xlu0 %2398
  %2400 = vrot.lane.b32.xlu0 %v63, 60
  %v2401 = vpop.permute.xlu0 %2400
  %2402 = vrot.lane.b32.xlu0 %v64, 60
  %v2403 = vpop.permute.xlu0 %2402
  %2404 = vrot.lane.b32.xlu0 %v65, 60
  %v2405 = vpop.permute.xlu0 %2404
  %2406 = vrot.lane.b32.xlu0 %v66, 60
  %v2407 = vpop.permute.xlu0 %2406
  %2408 = vrot.lane.b32.xlu0 %v67, 60
  %v2409 = vpop.permute.xlu0 %2408
  %2410 = vrot.lane.b32.xlu0 %v68, 60
  %v2411 = vpop.permute.xlu0 %2410
  %2412 = vrot.lane.b32.xlu0 %v69, 60
  %v2413 = vpop.permute.xlu0 %2412
  %2414 = vrot.lane.b32.xlu0 %v70, 60
  %v2415 = vpop.permute.xlu0 %2414
  %2416 = vrot.lane.b32.xlu0 %v71, 60
  %v2417 = vpop.permute.xlu0 %2416
  %2418 = vrot.lane.b32.xlu0 %v72, 60
  %v2419 = vpop.permute.xlu0 %2418
  %2420 = vrot.lane.b32.xlu0 %v73, 60
  %v2421 = vpop.permute.xlu0 %2420
  %2422 = vrot.lane.b32.xlu0 %v74, 60
  %v2423 = vpop.permute.xlu0 %2422
  %2424 = vrot.lane.b32.xlu0 %v75, 60
  %v2425 = vpop.permute.xlu0 %2424
  %2426 = vrot.lane.b32.xlu0 %v76, 60
  %v2427 = vpop.permute.xlu0 %2426
  %2428 = vrot.lane.b32.xlu0 %v77, 60
  %v2429 = vpop.permute.xlu0 %2428
  %2430 = vrot.lane.b32.xlu0 %v78, 60
  %v2431 = vpop.permute.xlu0 %2430
  %2432 = vrot.lane.b32.xlu0 %v79, 60
  %v2433 = vpop.permute.xlu0 %2432
  %2434 = vrot.lane.b32.xlu0 %v2397, 60
  %v2435 = vpop.permute.xlu0 %2434
  %vm2436 = vcmask 490496
  %v2437 = vsel %vm2436, %v2399, %v2401
  %v2438 = vsel %vm2436, %v2401, %v2403
  %v2439 = vsel %vm2436, %v2403, %v2405
  %v2440 = vsel %vm2436, %v2405, %v2407
  %v2441 = vsel %vm2436, %v2407, %v2409
  %v2442 = vsel %vm2436, %v2409, %v2411
  %v2443 = vsel %vm2436, %v2411, %v2413
  %v2444 = vsel %vm2436, %v2413, %v2415
  %v2445 = vsel %vm2436, %v2415, %v2417
  %v2446 = vsel %vm2436, %v2417, %v2419
  %v2447 = vsel %vm2436, %v2419, %v2421
  %v2448 = vsel %vm2436, %v2421, %v2423
  %v2449 = vsel %vm2436, %v2423, %v2425
  %v2450 = vsel %vm2436, %v2425, %v2427
  %v2451 = vsel %vm2436, %v2427, %v2429
  %v2452 = vsel %vm2436, %v2429, %v2431
  %v2453 = vsel %vm2436, %v2431, %v2433
  %v2454 = vsel %vm2436, %v2433, %v2435
  %v2456 = vsel %vm134, %v2394, 0
  %v2459 = vsel %vm138, %v2437, 0
  %v2462 = vsel %vm138, %v2438, 0
  %v2465 = vsel %vm138, %v2439, 0
  %v2468 = vsel %vm138, %v2440, 0
  %v2471 = vsel %vm138, %v2441, 0
  %v2474 = vsel %vm138, %v2442, 0
  %v2477 = vsel %vm138, %v2443, 0
  %v2480 = vsel %vm138, %v2444, 0
  %v2483 = vsel %vm138, %v2445, 0
  %v2486 = vsel %vm138, %v2446, 0
  %v2489 = vsel %vm138, %v2447, 0
  %v2492 = vsel %vm138, %v2448, 0
  %v2495 = vsel %vm138, %v2449, 0
  %v2498 = vsel %vm138, %v2450, 0
  %v2501 = vsel %vm138, %v2451, 0
  %v2504 = vsel %vm138, %v2452, 0
  %v2507 = vsel %vm138, %v2453, 0
  %v2510 = vsel %vm138, %v2454, 0
  %2512 = vmatpush.bf16.msra.mxu0 0
  %2513 = vmatpush.bf16.msra.mxu0 0
  %2514 = vmatpush.bf16.msra.mxu0 0
  %2515 = vmatpush.bf16.msra.mxu0 0
  %2516 = vmatpush.bf16.msra.mxu0 0
  %2517 = vmatpush.bf16.msra.mxu0 0
  %2518 = vmatpush.bf16.msra.mxu0 0
  %2519 = vmatpush.bf16.msra.mxu0 %v2459
  %2520 = vmatmul.bf16.gmra.mxu0 %v2456
  %v2521 = vpop.f32.mrf.mxu0
  %v2522 = vadd.f32 0.0, %v2521
  %v2523 = vpop.f32.mrf.mxu0
  %v2524 = vadd.f32 0.0, %v2523
  %2525 = vdwg.mxu0
  %2526 = vmatpush.bf16.msra.mxu0 0
  %2527 = vmatpush.bf16.msra.mxu0 0
  %2528 = vmatpush.bf16.msra.mxu0 0
  %2529 = vmatpush.bf16.msra.mxu0 0
  %2530 = vmatpush.bf16.msra.mxu0 0
  %2531 = vmatpush.bf16.msra.mxu0 0
  %2532 = vmatpush.bf16.msra.mxu0 0
  %2533 = vmatpush.bf16.msra.mxu0 %v2462
  %2534 = vmatmul.bf16.gmra.mxu0 %v2456
  %v2535 = vpop.f32.mrf.mxu0
  %v2536 = vadd.f32 0.0, %v2535
  %v2537 = vpop.f32.mrf.mxu0
  %v2538 = vadd.f32 0.0, %v2537
  %2539 = vdwg.mxu0
  %2540 = vmatpush.bf16.msra.mxu0 0
  %2541 = vmatpush.bf16.msra.mxu0 0
  %2542 = vmatpush.bf16.msra.mxu0 0
  %2543 = vmatpush.bf16.msra.mxu0 0
  %2544 = vmatpush.bf16.msra.mxu0 0
  %2545 = vmatpush.bf16.msra.mxu0 0
  %2546 = vmatpush.bf16.msra.mxu0 0
  %2547 = vmatpush.bf16.msra.mxu0 %v2465
  %2548 = vmatmul.bf16.gmra.mxu0 %v2456
  %v2549 = vpop.f32.mrf.mxu0
  %v2550 = vadd.f32 0.0, %v2549
  %v2551 = vpop.f32.mrf.mxu0
  %v2552 = vadd.f32 0.0, %v2551
  %2553 = vdwg.mxu0
  %2554 = vmatpush.bf16.msra.mxu0 0
  %2555 = vmatpush.bf16.msra.mxu0 0
  %2556 = vmatpush.bf16.msra.mxu0 0
  %2557 = vmatpush.bf16.msra.mxu0 0
  %2558 = vmatpush.bf16.msra.mxu0 0
  %2559 = vmatpush.bf16.msra.mxu0 0
  %2560 = vmatpush.bf16.msra.mxu0 0
  %2561 = vmatpush.bf16.msra.mxu0 %v2468
  %2562 = vmatmul.bf16.gmra.mxu0 %v2456
  %v2563 = vpop.f32.mrf.mxu0
  %v2564 = vadd.f32 0.0, %v2563
  %v2565 = vpop.f32.mrf.mxu0
  %v2566 = vadd.f32 0.0, %v2565
  %2567 = vdwg.mxu0
  %2568 = vmatpush.bf16.msra.mxu0 0
  %2569 = vmatpush.bf16.msra.mxu0 0
  %2570 = vmatpush.bf16.msra.mxu0 0
  %2571 = vmatpush.bf16.msra.mxu0 0
  %2572 = vmatpush.bf16.msra.mxu0 0
  %2573 = vmatpush.bf16.msra.mxu0 0
  %2574 = vmatpush.bf16.msra.mxu0 0
  %2575 = vmatpush.bf16.msra.mxu0 %v2471
  %2576 = vmatmul.bf16.gmra.mxu0 %v2456
  %v2577 = vpop.f32.mrf.mxu0
  %v2578 = vadd.f32 0.0, %v2577
  %v2579 = vpop.f32.mrf.mxu0
  %v2580 = vadd.f32 0.0, %v2579
  %2581 = vdwg.mxu0
  %2582 = vmatpush.bf16.msra.mxu0 0
  %2583 = vmatpush.bf16.msra.mxu0 0
  %2584 = vmatpush.bf16.msra.mxu0 0
  %2585 = vmatpush.bf16.msra.mxu0 0
  %2586 = vmatpush.bf16.msra.mxu0 0
  %2587 = vmatpush.bf16.msra.mxu0 0
  %2588 = vmatpush.bf16.msra.mxu0 0
  %2589 = vmatpush.bf16.msra.mxu0 %v2474
  %2590 = vmatmul.bf16.gmra.mxu0 %v2456
  %v2591 = vpop.f32.mrf.mxu0
  %v2592 = vadd.f32 0.0, %v2591
  %v2593 = vpop.f32.mrf.mxu0
  %v2594 = vadd.f32 0.0, %v2593
  %2595 = vdwg.mxu0
  %2596 = vmatpush.bf16.msra.mxu0 0
  %2597 = vmatpush.bf16.msra.mxu0 0
  %2598 = vmatpush.bf16.msra.mxu0 0
  %2599 = vmatpush.bf16.msra.mxu0 0
  %2600 = vmatpush.bf16.msra.mxu0 0
  %2601 = vmatpush.bf16.msra.mxu0 0
  %2602 = vmatpush.bf16.msra.mxu0 0
  %2603 = vmatpush.bf16.msra.mxu0 %v2477
  %2604 = vmatmul.bf16.gmra.mxu0 %v2456
  %v2605 = vpop.f32.mrf.mxu0
  %v2606 = vadd.f32 0.0, %v2605
  %v2607 = vpop.f32.mrf.mxu0
  %v2608 = vadd.f32 0.0, %v2607
  %2609 = vdwg.mxu0
  %2610 = vmatpush.bf16.msra.mxu0 0
  %2611 = vmatpush.bf16.msra.mxu0 0
  %2612 = vmatpush.bf16.msra.mxu0 0
  %2613 = vmatpush.bf16.msra.mxu0 0
  %2614 = vmatpush.bf16.msra.mxu0 0
  %2615 = vmatpush.bf16.msra.mxu0 0
  %2616 = vmatpush.bf16.msra.mxu0 0
  %2617 = vmatpush.bf16.msra.mxu0 %v2480
  %2618 = vmatmul.bf16.gmra.mxu0 %v2456
  %v2619 = vpop.f32.mrf.mxu0
  %v2620 = vadd.f32 0.0, %v2619
  %v2621 = vpop.f32.mrf.mxu0
  %v2622 = vadd.f32 0.0, %v2621
  %2623 = vdwg.mxu0
  %2624 = vmatpush.bf16.msra.mxu0 0
  %2625 = vmatpush.bf16.msra.mxu0 0
  %2626 = vmatpush.bf16.msra.mxu0 0
  %2627 = vmatpush.bf16.msra.mxu0 0
  %2628 = vmatpush.bf16.msra.mxu0 0
  %2629 = vmatpush.bf16.msra.mxu0 0
  %2630 = vmatpush.bf16.msra.mxu0 0
  %2631 = vmatpush.bf16.msra.mxu0 %v2483
  %2632 = vmatmul.bf16.gmra.mxu0 %v2456
  %v2633 = vpop.f32.mrf.mxu0
  %v2634 = vadd.f32 0.0, %v2633
  %v2635 = vpop.f32.mrf.mxu0
  %v2636 = vadd.f32 0.0, %v2635
  %2637 = vdwg.mxu0
  %2638 = vmatpush.bf16.msra.mxu0 0
  %2639 = vmatpush.bf16.msra.mxu0 0
  %2640 = vmatpush.bf16.msra.mxu0 0
  %2641 = vmatpush.bf16.msra.mxu0 0
  %2642 = vmatpush.bf16.msra.mxu0 0
  %2643 = vmatpush.bf16.msra.mxu0 0
  %2644 = vmatpush.bf16.msra.mxu0 0
  %2645 = vmatpush.bf16.msra.mxu0 %v2486
  %2646 = vmatmul.bf16.gmra.mxu0 %v2456
  %v2647 = vpop.f32.mrf.mxu0
  %v2648 = vadd.f32 0.0, %v2647
  %v2649 = vpop.f32.mrf.mxu0
  %v2650 = vadd.f32 0.0, %v2649
  %2651 = vdwg.mxu0
  %2652 = vmatpush.bf16.msra.mxu0 0
  %2653 = vmatpush.bf16.msra.mxu0 0
  %2654 = vmatpush.bf16.msra.mxu0 0
  %2655 = vmatpush.bf16.msra.mxu0 0
  %2656 = vmatpush.bf16.msra.mxu0 0
  %2657 = vmatpush.bf16.msra.mxu0 0
  %2658 = vmatpush.bf16.msra.mxu0 0
  %2659 = vmatpush.bf16.msra.mxu0 %v2489
  %2660 = vmatmul.bf16.gmra.mxu0 %v2456
  %v2661 = vpop.f32.mrf.mxu0
  %v2662 = vadd.f32 0.0, %v2661
  %v2663 = vpop.f32.mrf.mxu0
  %v2664 = vadd.f32 0.0, %v2663
  %2665 = vdwg.mxu0
  %2666 = vmatpush.bf16.msra.mxu0 0
  %2667 = vmatpush.bf16.msra.mxu0 0
  %2668 = vmatpush.bf16.msra.mxu0 0
  %2669 = vmatpush.bf16.msra.mxu0 0
  %2670 = vmatpush.bf16.msra.mxu0 0
  %2671 = vmatpush.bf16.msra.mxu0 0
  %2672 = vmatpush.bf16.msra.mxu0 0
  %2673 = vmatpush.bf16.msra.mxu0 %v2492
  %2674 = vmatmul.bf16.gmra.mxu0 %v2456
  %v2675 = vpop.f32.mrf.mxu0
  %v2676 = vadd.f32 0.0, %v2675
  %v2677 = vpop.f32.mrf.mxu0
  %v2678 = vadd.f32 0.0, %v2677
  %2679 = vdwg.mxu0
  %2680 = vmatpush.bf16.msra.mxu0 0
  %2681 = vmatpush.bf16.msra.mxu0 0
  %2682 = vmatpush.bf16.msra.mxu0 0
  %2683 = vmatpush.bf16.msra.mxu0 0
  %2684 = vmatpush.bf16.msra.mxu0 0
  %2685 = vmatpush.bf16.msra.mxu0 0
  %2686 = vmatpush.bf16.msra.mxu0 0
  %2687 = vmatpush.bf16.msra.mxu0 %v2495
  %2688 = vmatmul.bf16.gmra.mxu0 %v2456
  %v2689 = vpop.f32.mrf.mxu0
  %v2690 = vadd.f32 0.0, %v2689
  %v2691 = vpop.f32.mrf.mxu0
  %v2692 = vadd.f32 0.0, %v2691
  %2693 = vdwg.mxu0
  %2694 = vmatpush.bf16.msra.mxu0 0
  %2695 = vmatpush.bf16.msra.mxu0 0
  %2696 = vmatpush.bf16.msra.mxu0 0
  %2697 = vmatpush.bf16.msra.mxu0 0
  %2698 = vmatpush.bf16.msra.mxu0 0
  %2699 = vmatpush.bf16.msra.mxu0 0
  %2700 = vmatpush.bf16.msra.mxu0 0
  %2701 = vmatpush.bf16.msra.mxu0 %v2498
  %2702 = vmatmul.bf16.gmra.mxu0 %v2456
  %v2703 = vpop.f32.mrf.mxu0
  %v2704 = vadd.f32 0.0, %v2703
  %v2705 = vpop.f32.mrf.mxu0
  %v2706 = vadd.f32 0.0, %v2705
  %2707 = vdwg.mxu0
  %2708 = vmatpush.bf16.msra.mxu0 0
  %2709 = vmatpush.bf16.msra.mxu0 0
  %2710 = vmatpush.bf16.msra.mxu0 0
  %2711 = vmatpush.bf16.msra.mxu0 0
  %2712 = vmatpush.bf16.msra.mxu0 0
  %2713 = vmatpush.bf16.msra.mxu0 0
  %2714 = vmatpush.bf16.msra.mxu0 0
  %2715 = vmatpush.bf16.msra.mxu0 %v2501
  %2716 = vmatmul.bf16.gmra.mxu0 %v2456
  %v2717 = vpop.f32.mrf.mxu0
  %v2718 = vadd.f32 0.0, %v2717
  %v2719 = vpop.f32.mrf.mxu0
  %v2720 = vadd.f32 0.0, %v2719
  %2721 = vdwg.mxu0
  %2722 = vmatpush.bf16.msra.mxu0 0
  %2723 = vmatpush.bf16.msra.mxu0 0
  %2724 = vmatpush.bf16.msra.mxu0 0
  %2725 = vmatpush.bf16.msra.mxu0 0
  %2726 = vmatpush.bf16.msra.mxu0 0
  %2727 = vmatpush.bf16.msra.mxu0 0
  %2728 = vmatpush.bf16.msra.mxu0 0
  %2729 = vmatpush.bf16.msra.mxu0 %v2504
  %2730 = vmatmul.bf16.gmra.mxu0 %v2456
  %v2731 = vpop.f32.mrf.mxu0
  %v2732 = vadd.f32 0.0, %v2731
  %v2733 = vpop.f32.mrf.mxu0
  %v2734 = vadd.f32 0.0, %v2733
  %2735 = vdwg.mxu0
  %2736 = vmatpush.bf16.msra.mxu0 0
  %2737 = vmatpush.bf16.msra.mxu0 0
  %2738 = vmatpush.bf16.msra.mxu0 0
  %2739 = vmatpush.bf16.msra.mxu0 0
  %2740 = vmatpush.bf16.msra.mxu0 0
  %2741 = vmatpush.bf16.msra.mxu0 0
  %2742 = vmatpush.bf16.msra.mxu0 0
  %2743 = vmatpush.bf16.msra.mxu0 %v2507
  %2744 = vmatmul.bf16.gmra.mxu0 %v2456
  %v2745 = vpop.f32.mrf.mxu0
  %v2746 = vadd.f32 0.0, %v2745
  %v2747 = vpop.f32.mrf.mxu0
  %v2748 = vadd.f32 0.0, %v2747
  %2749 = vdwg.mxu0
  %2750 = vmatpush.bf16.msra.mxu0 0
  %2751 = vmatpush.bf16.msra.mxu0 0
  %2752 = vmatpush.bf16.msra.mxu0 0
  %2753 = vmatpush.bf16.msra.mxu0 0
  %2754 = vmatpush.bf16.msra.mxu0 0
  %2755 = vmatpush.bf16.msra.mxu0 0
  %2756 = vmatpush.bf16.msra.mxu0 0
  %2757 = vmatpush.bf16.msra.mxu0 %v2510
  %2758 = vmatmul.bf16.gmra.mxu0 %v2456
  %v2759 = vpop.f32.mrf.mxu0
  %v2760 = vadd.f32 0.0, %v2759
  %v2761 = vpop.f32.mrf.mxu0
  %v2762 = vadd.f32 0.0, %v2761
  %2763 = vdwg.mxu0
  %v2764 = vadd.f32 %v2351, %v2522
  %v2765 = vadd.f32 %v2352, %v2536
  %v2766 = vadd.f32 %v2353, %v2550
  %v2767 = vadd.f32 %v2354, %v2564
  %v2768 = vadd.f32 %v2355, %v2578
  %v2769 = vadd.f32 %v2356, %v2592
  %v2770 = vadd.f32 %v2357, %v2606
  %v2771 = vadd.f32 %v2358, %v2620
  %v2772 = vadd.f32 %v2359, %v2634
  %v2773 = vadd.f32 %v2360, %v2648
  %v2774 = vadd.f32 %v2361, %v2662
  %v2775 = vadd.f32 %v2362, %v2676
  %v2776 = vadd.f32 %v2363, %v2690
  %v2777 = vadd.f32 %v2364, %v2704
  %v2778 = vadd.f32 %v2365, %v2718
  %v2779 = vadd.f32 %v2366, %v2732
  %v2780 = vadd.f32 %v2367, %v2746
  %v2781 = vadd.f32 %v2368, %v2760
  %v2782 = vadd.f32 %v2369, %v2524
  %v2783 = vadd.f32 %v2370, %v2538
  %v2784 = vadd.f32 %v2371, %v2552
  %v2785 = vadd.f32 %v2372, %v2566
  %v2786 = vadd.f32 %v2373, %v2580
  %v2787 = vadd.f32 %v2374, %v2594
  %v2788 = vadd.f32 %v2375, %v2608
  %v2789 = vadd.f32 %v2376, %v2622
  %v2790 = vadd.f32 %v2377, %v2636
  %v2791 = vadd.f32 %v2378, %v2650
  %v2792 = vadd.f32 %v2379, %v2664
  %v2793 = vadd.f32 %v2380, %v2678
  %v2794 = vadd.f32 %v2381, %v2692
  %v2795 = vadd.f32 %v2382, %v2706
  %v2796 = vadd.f32 %v2383, %v2720
  %v2797 = vadd.f32 %v2384, %v2734
  %v2798 = vadd.f32 %v2385, %v2748
  %v2799 = vadd.f32 %v2386, %v2762
  %s2800 = scalar_lea.vmem %s1, 56
  %v2801 = vld [vmem:[%s2800] sm:$0xf]
  %v2802 = vld [vmem:[%s2800 + $0x4] sm:$0x3]
  %v2805 = vunpack.c.l.b16 %v2801
  %v2806 = vunpack.c.l.b16 %v2802
  %v2807 = vpack.c.b16 %v2806, %v2805
  %2808 = vrot.lane.b32.xlu0 %v62, 59
  %v2809 = vpop.permute.xlu0 %2808
  %2810 = vrot.lane.b32.xlu0 %v63, 59
  %v2811 = vpop.permute.xlu0 %2810
  %2812 = vrot.lane.b32.xlu0 %v64, 59
  %v2813 = vpop.permute.xlu0 %2812
  %2814 = vrot.lane.b32.xlu0 %v65, 59
  %v2815 = vpop.permute.xlu0 %2814
  %2816 = vrot.lane.b32.xlu0 %v66, 59
  %v2817 = vpop.permute.xlu0 %2816
  %2818 = vrot.lane.b32.xlu0 %v67, 59
  %v2819 = vpop.permute.xlu0 %2818
  %2820 = vrot.lane.b32.xlu0 %v68, 59
  %v2821 = vpop.permute.xlu0 %2820
  %2822 = vrot.lane.b32.xlu0 %v69, 59
  %v2823 = vpop.permute.xlu0 %2822
  %2824 = vrot.lane.b32.xlu0 %v70, 59
  %v2825 = vpop.permute.xlu0 %2824
  %2826 = vrot.lane.b32.xlu0 %v71, 59
  %v2827 = vpop.permute.xlu0 %2826
  %2828 = vrot.lane.b32.xlu0 %v72, 59
  %v2829 = vpop.permute.xlu0 %2828
  %2830 = vrot.lane.b32.xlu0 %v73, 59
  %v2831 = vpop.permute.xlu0 %2830
  %2832 = vrot.lane.b32.xlu0 %v74, 59
  %v2833 = vpop.permute.xlu0 %2832
  %2834 = vrot.lane.b32.xlu0 %v75, 59
  %v2835 = vpop.permute.xlu0 %2834
  %2836 = vrot.lane.b32.xlu0 %v76, 59
  %v2837 = vpop.permute.xlu0 %2836
  %2838 = vrot.lane.b32.xlu0 %v77, 59
  %v2839 = vpop.permute.xlu0 %2838
  %2840 = vrot.lane.b32.xlu0 %v78, 59
  %v2841 = vpop.permute.xlu0 %2840
  %2842 = vrot.lane.b32.xlu0 %v79, 59
  %v2843 = vpop.permute.xlu0 %2842
  %2844 = vrot.lane.b32.xlu0 %v2397, 59
  %v2845 = vpop.permute.xlu0 %2844
  %vm2846 = vcmask 482304
  %v2847 = vsel %vm2846, %v2809, %v2811
  %v2848 = vsel %vm2846, %v2811, %v2813
  %v2849 = vsel %vm2846, %v2813, %v2815
  %v2850 = vsel %vm2846, %v2815, %v2817
  %v2851 = vsel %vm2846, %v2817, %v2819
  %v2852 = vsel %vm2846, %v2819, %v2821
  %v2853 = vsel %vm2846, %v2821, %v2823
  %v2854 = vsel %vm2846, %v2823, %v2825
  %v2855 = vsel %vm2846, %v2825, %v2827
  %v2856 = vsel %vm2846, %v2827, %v2829
  %v2857 = vsel %vm2846, %v2829, %v2831
  %v2858 = vsel %vm2846, %v2831, %v2833
  %v2859 = vsel %vm2846, %v2833, %v2835
  %v2860 = vsel %vm2846, %v2835, %v2837
  %v2861 = vsel %vm2846, %v2837, %v2839
  %v2862 = vsel %vm2846, %v2839, %v2841
  %v2863 = vsel %vm2846, %v2841, %v2843
  %v2864 = vsel %vm2846, %v2843, %v2845
  %v2866 = vsel %vm134, %v2807, 0
  %v2869 = vsel %vm138, %v2847, 0
  %v2872 = vsel %vm138, %v2848, 0
  %v2875 = vsel %vm138, %v2849, 0
  %v2878 = vsel %vm138, %v2850, 0
  %v2881 = vsel %vm138, %v2851, 0
  %v2884 = vsel %vm138, %v2852, 0
  %v2887 = vsel %vm138, %v2853, 0
  %v2890 = vsel %vm138, %v2854, 0
  %v2893 = vsel %vm138, %v2855, 0
  %v2896 = vsel %vm138, %v2856, 0
  %v2899 = vsel %vm138, %v2857, 0
  %v2902 = vsel %vm138, %v2858, 0
  %v2905 = vsel %vm138, %v2859, 0
  %v2908 = vsel %vm138, %v2860, 0
  %v2911 = vsel %vm138, %v2861, 0
  %v2914 = vsel %vm138, %v2862, 0
  %v2917 = vsel %vm138, %v2863, 0
  %v2920 = vsel %vm138, %v2864, 0
  %2922 = vmatpush.bf16.msra.mxu0 0
  %2923 = vmatpush.bf16.msra.mxu0 0
  %2924 = vmatpush.bf16.msra.mxu0 0
  %2925 = vmatpush.bf16.msra.mxu0 0
  %2926 = vmatpush.bf16.msra.mxu0 0
  %2927 = vmatpush.bf16.msra.mxu0 0
  %2928 = vmatpush.bf16.msra.mxu0 0
  %2929 = vmatpush.bf16.msra.mxu0 %v2869
  %2930 = vmatmul.bf16.gmra.mxu0 %v2866
  %v2931 = vpop.f32.mrf.mxu0
  %v2932 = vadd.f32 0.0, %v2931
  %v2933 = vpop.f32.mrf.mxu0
  %v2934 = vadd.f32 0.0, %v2933
  %2935 = vdwg.mxu0
  %2936 = vmatpush.bf16.msra.mxu0 0
  %2937 = vmatpush.bf16.msra.mxu0 0
  %2938 = vmatpush.bf16.msra.mxu0 0
  %2939 = vmatpush.bf16.msra.mxu0 0
  %2940 = vmatpush.bf16.msra.mxu0 0
  %2941 = vmatpush.bf16.msra.mxu0 0
  %2942 = vmatpush.bf16.msra.mxu0 0
  %2943 = vmatpush.bf16.msra.mxu0 %v2872
  %2944 = vmatmul.bf16.gmra.mxu0 %v2866
  %v2945 = vpop.f32.mrf.mxu0
  %v2946 = vadd.f32 0.0, %v2945
  %v2947 = vpop.f32.mrf.mxu0
  %v2948 = vadd.f32 0.0, %v2947
  %2949 = vdwg.mxu0
  %2950 = vmatpush.bf16.msra.mxu0 0
  %2951 = vmatpush.bf16.msra.mxu0 0
  %2952 = vmatpush.bf16.msra.mxu0 0
  %2953 = vmatpush.bf16.msra.mxu0 0
  %2954 = vmatpush.bf16.msra.mxu0 0
  %2955 = vmatpush.bf16.msra.mxu0 0
  %2956 = vmatpush.bf16.msra.mxu0 0
  %2957 = vmatpush.bf16.msra.mxu0 %v2875
  %2958 = vmatmul.bf16.gmra.mxu0 %v2866
  %v2959 = vpop.f32.mrf.mxu0
  %v2960 = vadd.f32 0.0, %v2959
  %v2961 = vpop.f32.mrf.mxu0
  %v2962 = vadd.f32 0.0, %v2961
  %2963 = vdwg.mxu0
  %2964 = vmatpush.bf16.msra.mxu0 0
  %2965 = vmatpush.bf16.msra.mxu0 0
  %2966 = vmatpush.bf16.msra.mxu0 0
  %2967 = vmatpush.bf16.msra.mxu0 0
  %2968 = vmatpush.bf16.msra.mxu0 0
  %2969 = vmatpush.bf16.msra.mxu0 0
  %2970 = vmatpush.bf16.msra.mxu0 0
  %2971 = vmatpush.bf16.msra.mxu0 %v2878
  %2972 = vmatmul.bf16.gmra.mxu0 %v2866
  %v2973 = vpop.f32.mrf.mxu0
  %v2974 = vadd.f32 0.0, %v2973
  %v2975 = vpop.f32.mrf.mxu0
  %v2976 = vadd.f32 0.0, %v2975
  %2977 = vdwg.mxu0
  %2978 = vmatpush.bf16.msra.mxu0 0
  %2979 = vmatpush.bf16.msra.mxu0 0
  %2980 = vmatpush.bf16.msra.mxu0 0
  %2981 = vmatpush.bf16.msra.mxu0 0
  %2982 = vmatpush.bf16.msra.mxu0 0
  %2983 = vmatpush.bf16.msra.mxu0 0
  %2984 = vmatpush.bf16.msra.mxu0 0
  %2985 = vmatpush.bf16.msra.mxu0 %v2881
  %2986 = vmatmul.bf16.gmra.mxu0 %v2866
  %v2987 = vpop.f32.mrf.mxu0
  %v2988 = vadd.f32 0.0, %v2987
  %v2989 = vpop.f32.mrf.mxu0
  %v2990 = vadd.f32 0.0, %v2989
  %2991 = vdwg.mxu0
  %2992 = vmatpush.bf16.msra.mxu0 0
  %2993 = vmatpush.bf16.msra.mxu0 0
  %2994 = vmatpush.bf16.msra.mxu0 0
  %2995 = vmatpush.bf16.msra.mxu0 0
  %2996 = vmatpush.bf16.msra.mxu0 0
  %2997 = vmatpush.bf16.msra.mxu0 0
  %2998 = vmatpush.bf16.msra.mxu0 0
  %2999 = vmatpush.bf16.msra.mxu0 %v2884
  %3000 = vmatmul.bf16.gmra.mxu0 %v2866
  %v3001 = vpop.f32.mrf.mxu0
  %v3002 = vadd.f32 0.0, %v3001
  %v3003 = vpop.f32.mrf.mxu0
  %v3004 = vadd.f32 0.0, %v3003
  %3005 = vdwg.mxu0
  %3006 = vmatpush.bf16.msra.mxu0 0
  %3007 = vmatpush.bf16.msra.mxu0 0
  %3008 = vmatpush.bf16.msra.mxu0 0
  %3009 = vmatpush.bf16.msra.mxu0 0
  %3010 = vmatpush.bf16.msra.mxu0 0
  %3011 = vmatpush.bf16.msra.mxu0 0
  %3012 = vmatpush.bf16.msra.mxu0 0
  %3013 = vmatpush.bf16.msra.mxu0 %v2887
  %3014 = vmatmul.bf16.gmra.mxu0 %v2866
  %v3015 = vpop.f32.mrf.mxu0
  %v3016 = vadd.f32 0.0, %v3015
  %v3017 = vpop.f32.mrf.mxu0
  %v3018 = vadd.f32 0.0, %v3017
  %3019 = vdwg.mxu0
  %3020 = vmatpush.bf16.msra.mxu0 0
  %3021 = vmatpush.bf16.msra.mxu0 0
  %3022 = vmatpush.bf16.msra.mxu0 0
  %3023 = vmatpush.bf16.msra.mxu0 0
  %3024 = vmatpush.bf16.msra.mxu0 0
  %3025 = vmatpush.bf16.msra.mxu0 0
  %3026 = vmatpush.bf16.msra.mxu0 0
  %3027 = vmatpush.bf16.msra.mxu0 %v2890
  %3028 = vmatmul.bf16.gmra.mxu0 %v2866
  %v3029 = vpop.f32.mrf.mxu0
  %v3030 = vadd.f32 0.0, %v3029
  %v3031 = vpop.f32.mrf.mxu0
  %v3032 = vadd.f32 0.0, %v3031
  %3033 = vdwg.mxu0
  %3034 = vmatpush.bf16.msra.mxu0 0
  %3035 = vmatpush.bf16.msra.mxu0 0
  %3036 = vmatpush.bf16.msra.mxu0 0
  %3037 = vmatpush.bf16.msra.mxu0 0
  %3038 = vmatpush.bf16.msra.mxu0 0
  %3039 = vmatpush.bf16.msra.mxu0 0
  %3040 = vmatpush.bf16.msra.mxu0 0
  %3041 = vmatpush.bf16.msra.mxu0 %v2893
  %3042 = vmatmul.bf16.gmra.mxu0 %v2866
  %v3043 = vpop.f32.mrf.mxu0
  %v3044 = vadd.f32 0.0, %v3043
  %v3045 = vpop.f32.mrf.mxu0
  %v3046 = vadd.f32 0.0, %v3045
  %3047 = vdwg.mxu0
  %3048 = vmatpush.bf16.msra.mxu0 0
  %3049 = vmatpush.bf16.msra.mxu0 0
  %3050 = vmatpush.bf16.msra.mxu0 0
  %3051 = vmatpush.bf16.msra.mxu0 0
  %3052 = vmatpush.bf16.msra.mxu0 0
  %3053 = vmatpush.bf16.msra.mxu0 0
  %3054 = vmatpush.bf16.msra.mxu0 0
  %3055 = vmatpush.bf16.msra.mxu0 %v2896
  %3056 = vmatmul.bf16.gmra.mxu0 %v2866
  %v3057 = vpop.f32.mrf.mxu0
  %v3058 = vadd.f32 0.0, %v3057
  %v3059 = vpop.f32.mrf.mxu0
  %v3060 = vadd.f32 0.0, %v3059
  %3061 = vdwg.mxu0
  %3062 = vmatpush.bf16.msra.mxu0 0
  %3063 = vmatpush.bf16.msra.mxu0 0
  %3064 = vmatpush.bf16.msra.mxu0 0
  %3065 = vmatpush.bf16.msra.mxu0 0
  %3066 = vmatpush.bf16.msra.mxu0 0
  %3067 = vmatpush.bf16.msra.mxu0 0
  %3068 = vmatpush.bf16.msra.mxu0 0
  %3069 = vmatpush.bf16.msra.mxu0 %v2899
  %3070 = vmatmul.bf16.gmra.mxu0 %v2866
  %v3071 = vpop.f32.mrf.mxu0
  %v3072 = vadd.f32 0.0, %v3071
  %v3073 = vpop.f32.mrf.mxu0
  %v3074 = vadd.f32 0.0, %v3073
  %3075 = vdwg.mxu0
  %3076 = vmatpush.bf16.msra.mxu0 0
  %3077 = vmatpush.bf16.msra.mxu0 0
  %3078 = vmatpush.bf16.msra.mxu0 0
  %3079 = vmatpush.bf16.msra.mxu0 0
  %3080 = vmatpush.bf16.msra.mxu0 0
  %3081 = vmatpush.bf16.msra.mxu0 0
  %3082 = vmatpush.bf16.msra.mxu0 0
  %3083 = vmatpush.bf16.msra.mxu0 %v2902
  %3084 = vmatmul.bf16.gmra.mxu0 %v2866
  %v3085 = vpop.f32.mrf.mxu0
  %v3086 = vadd.f32 0.0, %v3085
  %v3087 = vpop.f32.mrf.mxu0
  %v3088 = vadd.f32 0.0, %v3087
  %3089 = vdwg.mxu0
  %3090 = vmatpush.bf16.msra.mxu0 0
  %3091 = vmatpush.bf16.msra.mxu0 0
  %3092 = vmatpush.bf16.msra.mxu0 0
  %3093 = vmatpush.bf16.msra.mxu0 0
  %3094 = vmatpush.bf16.msra.mxu0 0
  %3095 = vmatpush.bf16.msra.mxu0 0
  %3096 = vmatpush.bf16.msra.mxu0 0
  %3097 = vmatpush.bf16.msra.mxu0 %v2905
  %3098 = vmatmul.bf16.gmra.mxu0 %v2866
  %v3099 = vpop.f32.mrf.mxu0
  %v3100 = vadd.f32 0.0, %v3099
  %v3101 = vpop.f32.mrf.mxu0
  %v3102 = vadd.f32 0.0, %v3101
  %3103 = vdwg.mxu0
  %3104 = vmatpush.bf16.msra.mxu0 0
  %3105 = vmatpush.bf16.msra.mxu0 0
  %3106 = vmatpush.bf16.msra.mxu0 0
  %3107 = vmatpush.bf16.msra.mxu0 0
  %3108 = vmatpush.bf16.msra.mxu0 0
  %3109 = vmatpush.bf16.msra.mxu0 0
  %3110 = vmatpush.bf16.msra.mxu0 0
  %3111 = vmatpush.bf16.msra.mxu0 %v2908
  %3112 = vmatmul.bf16.gmra.mxu0 %v2866
  %v3113 = vpop.f32.mrf.mxu0
  %v3114 = vadd.f32 0.0, %v3113
  %v3115 = vpop.f32.mrf.mxu0
  %v3116 = vadd.f32 0.0, %v3115
  %3117 = vdwg.mxu0
  %3118 = vmatpush.bf16.msra.mxu0 0
  %3119 = vmatpush.bf16.msra.mxu0 0
  %3120 = vmatpush.bf16.msra.mxu0 0
  %3121 = vmatpush.bf16.msra.mxu0 0
  %3122 = vmatpush.bf16.msra.mxu0 0
  %3123 = vmatpush.bf16.msra.mxu0 0
  %3124 = vmatpush.bf16.msra.mxu0 0
  %3125 = vmatpush.bf16.msra.mxu0 %v2911
  %3126 = vmatmul.bf16.gmra.mxu0 %v2866
  %v3127 = vpop.f32.mrf.mxu0
  %v3128 = vadd.f32 0.0, %v3127
  %v3129 = vpop.f32.mrf.mxu0
  %v3130 = vadd.f32 0.0, %v3129
  %3131 = vdwg.mxu0
  %3132 = vmatpush.bf16.msra.mxu0 0
  %3133 = vmatpush.bf16.msra.mxu0 0
  %3134 = vmatpush.bf16.msra.mxu0 0
  %3135 = vmatpush.bf16.msra.mxu0 0
  %3136 = vmatpush.bf16.msra.mxu0 0
  %3137 = vmatpush.bf16.msra.mxu0 0
  %3138 = vmatpush.bf16.msra.mxu0 0
  %3139 = vmatpush.bf16.msra.mxu0 %v2914
  %3140 = vmatmul.bf16.gmra.mxu0 %v2866
  %v3141 = vpop.f32.mrf.mxu0
  %v3142 = vadd.f32 0.0, %v3141
  %v3143 = vpop.f32.mrf.mxu0
  %v3144 = vadd.f32 0.0, %v3143
  %3145 = vdwg.mxu0
  %3146 = vmatpush.bf16.msra.mxu0 0
  %3147 = vmatpush.bf16.msra.mxu0 0
  %3148 = vmatpush.bf16.msra.mxu0 0
  %3149 = vmatpush.bf16.msra.mxu0 0
  %3150 = vmatpush.bf16.msra.mxu0 0
  %3151 = vmatpush.bf16.msra.mxu0 0
  %3152 = vmatpush.bf16.msra.mxu0 0
  %3153 = vmatpush.bf16.msra.mxu0 %v2917
  %3154 = vmatmul.bf16.gmra.mxu0 %v2866
  %v3155 = vpop.f32.mrf.mxu0
  %v3156 = vadd.f32 0.0, %v3155
  %v3157 = vpop.f32.mrf.mxu0
  %v3158 = vadd.f32 0.0, %v3157
  %3159 = vdwg.mxu0
  %3160 = vmatpush.bf16.msra.mxu0 0
  %3161 = vmatpush.bf16.msra.mxu0 0
  %3162 = vmatpush.bf16.msra.mxu0 0
  %3163 = vmatpush.bf16.msra.mxu0 0
  %3164 = vmatpush.bf16.msra.mxu0 0
  %3165 = vmatpush.bf16.msra.mxu0 0
  %3166 = vmatpush.bf16.msra.mxu0 0
  %3167 = vmatpush.bf16.msra.mxu0 %v2920
  %3168 = vmatmul.bf16.gmra.mxu0 %v2866
  %v3169 = vpop.f32.mrf.mxu0
  %v3170 = vadd.f32 0.0, %v3169
  %v3171 = vpop.f32.mrf.mxu0
  %v3172 = vadd.f32 0.0, %v3171
  %3173 = vdwg.mxu0
  %v3174 = vadd.f32 %v2764, %v2932
  %v3175 = vadd.f32 %v2765, %v2946
  %v3176 = vadd.f32 %v2766, %v2960
  %v3177 = vadd.f32 %v2767, %v2974
  %v3178 = vadd.f32 %v2768, %v2988
  %v3179 = vadd.f32 %v2769, %v3002
  %v3180 = vadd.f32 %v2770, %v3016
  %v3181 = vadd.f32 %v2771, %v3030
  %v3182 = vadd.f32 %v2772, %v3044
  %v3183 = vadd.f32 %v2773, %v3058
  %v3184 = vadd.f32 %v2774, %v3072
  %v3185 = vadd.f32 %v2775, %v3086
  %v3186 = vadd.f32 %v2776, %v3100
  %v3187 = vadd.f32 %v2777, %v3114
  %v3188 = vadd.f32 %v2778, %v3128
  %v3189 = vadd.f32 %v2779, %v3142
  %v3190 = vadd.f32 %v2780, %v3156
  %v3191 = vadd.f32 %v2781, %v3170
  %v3192 = vadd.f32 %v2782, %v2934
  %v3193 = vadd.f32 %v2783, %v2948
  %v3194 = vadd.f32 %v2784, %v2962
  %v3195 = vadd.f32 %v2785, %v2976
  %v3196 = vadd.f32 %v2786, %v2990
  %v3197 = vadd.f32 %v2787, %v3004
  %v3198 = vadd.f32 %v2788, %v3018
  %v3199 = vadd.f32 %v2789, %v3032
  %v3200 = vadd.f32 %v2790, %v3046
  %v3201 = vadd.f32 %v2791, %v3060
  %v3202 = vadd.f32 %v2792, %v3074
  %v3203 = vadd.f32 %v2793, %v3088
  %v3204 = vadd.f32 %v2794, %v3102
  %v3205 = vadd.f32 %v2795, %v3116
  %v3206 = vadd.f32 %v2796, %v3130
  %v3207 = vadd.f32 %v2797, %v3144
  %v3208 = vadd.f32 %v2798, %v3158
  %v3209 = vadd.f32 %v2799, %v3172
  %s3210 = scalar_lea.vmem %s1, 64
  %v3211 = vld [vmem:[%s3210] sm:$0xf]
  %v3212 = vld [vmem:[%s3210 + $0x4] sm:$0x3]
  %v3215 = vunpack.c.l.b16 %v3211
  %v3216 = vunpack.c.l.b16 %v3212
  %v3217 = vpack.c.b16 %v3216, %v3215
  %3218 = vrot.lane.b32.xlu0 %v62, 58
  %v3219 = vpop.permute.xlu0 %3218
  %3220 = vrot.lane.b32.xlu0 %v63, 58
  %v3221 = vpop.permute.xlu0 %3220
  %3222 = vrot.lane.b32.xlu0 %v64, 58
  %v3223 = vpop.permute.xlu0 %3222
  %3224 = vrot.lane.b32.xlu0 %v65, 58
  %v3225 = vpop.permute.xlu0 %3224
  %3226 = vrot.lane.b32.xlu0 %v66, 58
  %v3227 = vpop.permute.xlu0 %3226
  %3228 = vrot.lane.b32.xlu0 %v67, 58
  %v3229 = vpop.permute.xlu0 %3228
  %3230 = vrot.lane.b32.xlu0 %v68, 58
  %v3231 = vpop.permute.xlu0 %3230
  %3232 = vrot.lane.b32.xlu0 %v69, 58
  %v3233 = vpop.permute.xlu0 %3232
  %3234 = vrot.lane.b32.xlu0 %v70, 58
  %v3235 = vpop.permute.xlu0 %3234
  %3236 = vrot.lane.b32.xlu0 %v71, 58
  %v3237 = vpop.permute.xlu0 %3236
  %3238 = vrot.lane.b32.xlu0 %v72, 58
  %v3239 = vpop.permute.xlu0 %3238
  %3240 = vrot.lane.b32.xlu0 %v73, 58
  %v3241 = vpop.permute.xlu0 %3240
  %3242 = vrot.lane.b32.xlu0 %v74, 58
  %v3243 = vpop.permute.xlu0 %3242
  %3244 = vrot.lane.b32.xlu0 %v75, 58
  %v3245 = vpop.permute.xlu0 %3244
  %3246 = vrot.lane.b32.xlu0 %v76, 58
  %v3247 = vpop.permute.xlu0 %3246
  %3248 = vrot.lane.b32.xlu0 %v77, 58
  %v3249 = vpop.permute.xlu0 %3248
  %3250 = vrot.lane.b32.xlu0 %v78, 58
  %v3251 = vpop.permute.xlu0 %3250
  %3252 = vrot.lane.b32.xlu0 %v79, 58
  %v3253 = vpop.permute.xlu0 %3252
  %3254 = vrot.lane.b32.xlu0 %v2397, 58
  %v3255 = vpop.permute.xlu0 %3254
  %vm3256 = vcmask 474112
  %v3257 = vsel %vm3256, %v3219, %v3221
  %v3258 = vsel %vm3256, %v3221, %v3223
  %v3259 = vsel %vm3256, %v3223, %v3225
  %v3260 = vsel %vm3256, %v3225, %v3227
  %v3261 = vsel %vm3256, %v3227, %v3229
  %v3262 = vsel %vm3256, %v3229, %v3231
  %v3263 = vsel %vm3256, %v3231, %v3233
  %v3264 = vsel %vm3256, %v3233, %v3235
  %v3265 = vsel %vm3256, %v3235, %v3237
  %v3266 = vsel %vm3256, %v3237, %v3239
  %v3267 = vsel %vm3256, %v3239, %v3241
  %v3268 = vsel %vm3256, %v3241, %v3243
  %v3269 = vsel %vm3256, %v3243, %v3245
  %v3270 = vsel %vm3256, %v3245, %v3247
  %v3271 = vsel %vm3256, %v3247, %v3249
  %v3272 = vsel %vm3256, %v3249, %v3251
  %v3273 = vsel %vm3256, %v3251, %v3253
  %v3274 = vsel %vm3256, %v3253, %v3255
  %v3276 = vsel %vm134, %v3217, 0
  %v3279 = vsel %vm138, %v3257, 0
  %v3282 = vsel %vm138, %v3258, 0
  %v3285 = vsel %vm138, %v3259, 0
  %v3288 = vsel %vm138, %v3260, 0
  %v3291 = vsel %vm138, %v3261, 0
  %v3294 = vsel %vm138, %v3262, 0
  %v3297 = vsel %vm138, %v3263, 0
  %v3300 = vsel %vm138, %v3264, 0
  %v3303 = vsel %vm138, %v3265, 0
  %v3306 = vsel %vm138, %v3266, 0
  %v3309 = vsel %vm138, %v3267, 0
  %v3312 = vsel %vm138, %v3268, 0
  %v3315 = vsel %vm138, %v3269, 0
  %v3318 = vsel %vm138, %v3270, 0
  %v3321 = vsel %vm138, %v3271, 0
  %v3324 = vsel %vm138, %v3272, 0
  %v3327 = vsel %vm138, %v3273, 0
  %v3330 = vsel %vm138, %v3274, 0
  %3332 = vmatpush.bf16.msra.mxu0 0
  %3333 = vmatpush.bf16.msra.mxu0 0
  %3334 = vmatpush.bf16.msra.mxu0 0
  %3335 = vmatpush.bf16.msra.mxu0 0
  %3336 = vmatpush.bf16.msra.mxu0 0
  %3337 = vmatpush.bf16.msra.mxu0 0
  %3338 = vmatpush.bf16.msra.mxu0 0
  %3339 = vmatpush.bf16.msra.mxu0 %v3279
  %3340 = vmatmul.bf16.gmra.mxu0 %v3276
  %v3341 = vpop.f32.mrf.mxu0
  %v3342 = vadd.f32 0.0, %v3341
  %v3343 = vpop.f32.mrf.mxu0
  %v3344 = vadd.f32 0.0, %v3343
  %3345 = vdwg.mxu0
  %3346 = vmatpush.bf16.msra.mxu0 0
  %3347 = vmatpush.bf16.msra.mxu0 0
  %3348 = vmatpush.bf16.msra.mxu0 0
  %3349 = vmatpush.bf16.msra.mxu0 0
  %3350 = vmatpush.bf16.msra.mxu0 0
  %3351 = vmatpush.bf16.msra.mxu0 0
  %3352 = vmatpush.bf16.msra.mxu0 0
  %3353 = vmatpush.bf16.msra.mxu0 %v3282
  %3354 = vmatmul.bf16.gmra.mxu0 %v3276
  %v3355 = vpop.f32.mrf.mxu0
  %v3356 = vadd.f32 0.0, %v3355
  %v3357 = vpop.f32.mrf.mxu0
  %v3358 = vadd.f32 0.0, %v3357
  %3359 = vdwg.mxu0
  %3360 = vmatpush.bf16.msra.mxu0 0
  %3361 = vmatpush.bf16.msra.mxu0 0
  %3362 = vmatpush.bf16.msra.mxu0 0
  %3363 = vmatpush.bf16.msra.mxu0 0
  %3364 = vmatpush.bf16.msra.mxu0 0
  %3365 = vmatpush.bf16.msra.mxu0 0
  %3366 = vmatpush.bf16.msra.mxu0 0
  %3367 = vmatpush.bf16.msra.mxu0 %v3285
  %3368 = vmatmul.bf16.gmra.mxu0 %v3276
  %v3369 = vpop.f32.mrf.mxu0
  %v3370 = vadd.f32 0.0, %v3369
  %v3371 = vpop.f32.mrf.mxu0
  %v3372 = vadd.f32 0.0, %v3371
  %3373 = vdwg.mxu0
  %3374 = vmatpush.bf16.msra.mxu0 0
  %3375 = vmatpush.bf16.msra.mxu0 0
  %3376 = vmatpush.bf16.msra.mxu0 0
  %3377 = vmatpush.bf16.msra.mxu0 0
  %3378 = vmatpush.bf16.msra.mxu0 0
  %3379 = vmatpush.bf16.msra.mxu0 0
  %3380 = vmatpush.bf16.msra.mxu0 0
  %3381 = vmatpush.bf16.msra.mxu0 %v3288
  %3382 = vmatmul.bf16.gmra.mxu0 %v3276
  %v3383 = vpop.f32.mrf.mxu0
  %v3384 = vadd.f32 0.0, %v3383
  %v3385 = vpop.f32.mrf.mxu0
  %v3386 = vadd.f32 0.0, %v3385
  %3387 = vdwg.mxu0
  %3388 = vmatpush.bf16.msra.mxu0 0
  %3389 = vmatpush.bf16.msra.mxu0 0
  %3390 = vmatpush.bf16.msra.mxu0 0
  %3391 = vmatpush.bf16.msra.mxu0 0
  %3392 = vmatpush.bf16.msra.mxu0 0
  %3393 = vmatpush.bf16.msra.mxu0 0
  %3394 = vmatpush.bf16.msra.mxu0 0
  %3395 = vmatpush.bf16.msra.mxu0 %v3291
  %3396 = vmatmul.bf16.gmra.mxu0 %v3276
  %v3397 = vpop.f32.mrf.mxu0
  %v3398 = vadd.f32 0.0, %v3397
  %v3399 = vpop.f32.mrf.mxu0
  %v3400 = vadd.f32 0.0, %v3399
  %3401 = vdwg.mxu0
  %3402 = vmatpush.bf16.msra.mxu0 0
  %3403 = vmatpush.bf16.msra.mxu0 0
  %3404 = vmatpush.bf16.msra.mxu0 0
  %3405 = vmatpush.bf16.msra.mxu0 0
  %3406 = vmatpush.bf16.msra.mxu0 0
  %3407 = vmatpush.bf16.msra.mxu0 0
  %3408 = vmatpush.bf16.msra.mxu0 0
  %3409 = vmatpush.bf16.msra.mxu0 %v3294
  %3410 = vmatmul.bf16.gmra.mxu0 %v3276
  %v3411 = vpop.f32.mrf.mxu0
  %v3412 = vadd.f32 0.0, %v3411
  %v3413 = vpop.f32.mrf.mxu0
  %v3414 = vadd.f32 0.0, %v3413
  %3415 = vdwg.mxu0
  %3416 = vmatpush.bf16.msra.mxu0 0
  %3417 = vmatpush.bf16.msra.mxu0 0
  %3418 = vmatpush.bf16.msra.mxu0 0
  %3419 = vmatpush.bf16.msra.mxu0 0
  %3420 = vmatpush.bf16.msra.mxu0 0
  %3421 = vmatpush.bf16.msra.mxu0 0
  %3422 = vmatpush.bf16.msra.mxu0 0
  %3423 = vmatpush.bf16.msra.mxu0 %v3297
  %3424 = vmatmul.bf16.gmra.mxu0 %v3276
  %v3425 = vpop.f32.mrf.mxu0
  %v3426 = vadd.f32 0.0, %v3425
  %v3427 = vpop.f32.mrf.mxu0
  %v3428 = vadd.f32 0.0, %v3427
  %3429 = vdwg.mxu0
  %3430 = vmatpush.bf16.msra.mxu0 0
  %3431 = vmatpush.bf16.msra.mxu0 0
  %3432 = vmatpush.bf16.msra.mxu0 0
  %3433 = vmatpush.bf16.msra.mxu0 0
  %3434 = vmatpush.bf16.msra.mxu0 0
  %3435 = vmatpush.bf16.msra.mxu0 0
  %3436 = vmatpush.bf16.msra.mxu0 0
  %3437 = vmatpush.bf16.msra.mxu0 %v3300
  %3438 = vmatmul.bf16.gmra.mxu0 %v3276
  %v3439 = vpop.f32.mrf.mxu0
  %v3440 = vadd.f32 0.0, %v3439
  %v3441 = vpop.f32.mrf.mxu0
  %v3442 = vadd.f32 0.0, %v3441
  %3443 = vdwg.mxu0
  %3444 = vmatpush.bf16.msra.mxu0 0
  %3445 = vmatpush.bf16.msra.mxu0 0
  %3446 = vmatpush.bf16.msra.mxu0 0
  %3447 = vmatpush.bf16.msra.mxu0 0
  %3448 = vmatpush.bf16.msra.mxu0 0
  %3449 = vmatpush.bf16.msra.mxu0 0
  %3450 = vmatpush.bf16.msra.mxu0 0
  %3451 = vmatpush.bf16.msra.mxu0 %v3303
  %3452 = vmatmul.bf16.gmra.mxu0 %v3276
  %v3453 = vpop.f32.mrf.mxu0
  %v3454 = vadd.f32 0.0, %v3453
  %v3455 = vpop.f32.mrf.mxu0
  %v3456 = vadd.f32 0.0, %v3455
  %3457 = vdwg.mxu0
  %3458 = vmatpush.bf16.msra.mxu0 0
  %3459 = vmatpush.bf16.msra.mxu0 0
  %3460 = vmatpush.bf16.msra.mxu0 0
  %3461 = vmatpush.bf16.msra.mxu0 0
  %3462 = vmatpush.bf16.msra.mxu0 0
  %3463 = vmatpush.bf16.msra.mxu0 0
  %3464 = vmatpush.bf16.msra.mxu0 0
  %3465 = vmatpush.bf16.msra.mxu0 %v3306
  %3466 = vmatmul.bf16.gmra.mxu0 %v3276
  %v3467 = vpop.f32.mrf.mxu0
  %v3468 = vadd.f32 0.0, %v3467
  %v3469 = vpop.f32.mrf.mxu0
  %v3470 = vadd.f32 0.0, %v3469
  %3471 = vdwg.mxu0
  %3472 = vmatpush.bf16.msra.mxu0 0
  %3473 = vmatpush.bf16.msra.mxu0 0
  %3474 = vmatpush.bf16.msra.mxu0 0
  %3475 = vmatpush.bf16.msra.mxu0 0
  %3476 = vmatpush.bf16.msra.mxu0 0
  %3477 = vmatpush.bf16.msra.mxu0 0
  %3478 = vmatpush.bf16.msra.mxu0 0
  %3479 = vmatpush.bf16.msra.mxu0 %v3309
  %3480 = vmatmul.bf16.gmra.mxu0 %v3276
  %v3481 = vpop.f32.mrf.mxu0
  %v3482 = vadd.f32 0.0, %v3481
  %v3483 = vpop.f32.mrf.mxu0
  %v3484 = vadd.f32 0.0, %v3483
  %3485 = vdwg.mxu0
  %3486 = vmatpush.bf16.msra.mxu0 0
  %3487 = vmatpush.bf16.msra.mxu0 0
  %3488 = vmatpush.bf16.msra.mxu0 0
  %3489 = vmatpush.bf16.msra.mxu0 0
  %3490 = vmatpush.bf16.msra.mxu0 0
  %3491 = vmatpush.bf16.msra.mxu0 0
  %3492 = vmatpush.bf16.msra.mxu0 0
  %3493 = vmatpush.bf16.msra.mxu0 %v3312
  %3494 = vmatmul.bf16.gmra.mxu0 %v3276
  %v3495 = vpop.f32.mrf.mxu0
  %v3496 = vadd.f32 0.0, %v3495
  %v3497 = vpop.f32.mrf.mxu0
  %v3498 = vadd.f32 0.0, %v3497
  %3499 = vdwg.mxu0
  %3500 = vmatpush.bf16.msra.mxu0 0
  %3501 = vmatpush.bf16.msra.mxu0 0
  %3502 = vmatpush.bf16.msra.mxu0 0
  %3503 = vmatpush.bf16.msra.mxu0 0
  %3504 = vmatpush.bf16.msra.mxu0 0
  %3505 = vmatpush.bf16.msra.mxu0 0
  %3506 = vmatpush.bf16.msra.mxu0 0
  %3507 = vmatpush.bf16.msra.mxu0 %v3315
  %3508 = vmatmul.bf16.gmra.mxu0 %v3276
  %v3509 = vpop.f32.mrf.mxu0
  %v3510 = vadd.f32 0.0, %v3509
  %v3511 = vpop.f32.mrf.mxu0
  %v3512 = vadd.f32 0.0, %v3511
  %3513 = vdwg.mxu0
  %3514 = vmatpush.bf16.msra.mxu0 0
  %3515 = vmatpush.bf16.msra.mxu0 0
  %3516 = vmatpush.bf16.msra.mxu0 0
  %3517 = vmatpush.bf16.msra.mxu0 0
  %3518 = vmatpush.bf16.msra.mxu0 0
  %3519 = vmatpush.bf16.msra.mxu0 0
  %3520 = vmatpush.bf16.msra.mxu0 0
  %3521 = vmatpush.bf16.msra.mxu0 %v3318
  %3522 = vmatmul.bf16.gmra.mxu0 %v3276
  %v3523 = vpop.f32.mrf.mxu0
  %v3524 = vadd.f32 0.0, %v3523
  %v3525 = vpop.f32.mrf.mxu0
  %v3526 = vadd.f32 0.0, %v3525
  %3527 = vdwg.mxu0
  %3528 = vmatpush.bf16.msra.mxu0 0
  %3529 = vmatpush.bf16.msra.mxu0 0
  %3530 = vmatpush.bf16.msra.mxu0 0
  %3531 = vmatpush.bf16.msra.mxu0 0
  %3532 = vmatpush.bf16.msra.mxu0 0
  %3533 = vmatpush.bf16.msra.mxu0 0
  %3534 = vmatpush.bf16.msra.mxu0 0
  %3535 = vmatpush.bf16.msra.mxu0 %v3321
  %3536 = vmatmul.bf16.gmra.mxu0 %v3276
  %v3537 = vpop.f32.mrf.mxu0
  %v3538 = vadd.f32 0.0, %v3537
  %v3539 = vpop.f32.mrf.mxu0
  %v3540 = vadd.f32 0.0, %v3539
  %3541 = vdwg.mxu0
  %3542 = vmatpush.bf16.msra.mxu0 0
  %3543 = vmatpush.bf16.msra.mxu0 0
  %3544 = vmatpush.bf16.msra.mxu0 0
  %3545 = vmatpush.bf16.msra.mxu0 0
  %3546 = vmatpush.bf16.msra.mxu0 0
  %3547 = vmatpush.bf16.msra.mxu0 0
  %3548 = vmatpush.bf16.msra.mxu0 0
  %3549 = vmatpush.bf16.msra.mxu0 %v3324
  %3550 = vmatmul.bf16.gmra.mxu0 %v3276
  %v3551 = vpop.f32.mrf.mxu0
  %v3552 = vadd.f32 0.0, %v3551
  %v3553 = vpop.f32.mrf.mxu0
  %v3554 = vadd.f32 0.0, %v3553
  %3555 = vdwg.mxu0
  %3556 = vmatpush.bf16.msra.mxu0 0
  %3557 = vmatpush.bf16.msra.mxu0 0
  %3558 = vmatpush.bf16.msra.mxu0 0
  %3559 = vmatpush.bf16.msra.mxu0 0
  %3560 = vmatpush.bf16.msra.mxu0 0
  %3561 = vmatpush.bf16.msra.mxu0 0
  %3562 = vmatpush.bf16.msra.mxu0 0
  %3563 = vmatpush.bf16.msra.mxu0 %v3327
  %3564 = vmatmul.bf16.gmra.mxu0 %v3276
  %v3565 = vpop.f32.mrf.mxu0
  %v3566 = vadd.f32 0.0, %v3565
  %v3567 = vpop.f32.mrf.mxu0
  %v3568 = vadd.f32 0.0, %v3567
  %3569 = vdwg.mxu0
  %3570 = vmatpush.bf16.msra.mxu0 0
  %3571 = vmatpush.bf16.msra.mxu0 0
  %3572 = vmatpush.bf16.msra.mxu0 0
  %3573 = vmatpush.bf16.msra.mxu0 0
  %3574 = vmatpush.bf16.msra.mxu0 0
  %3575 = vmatpush.bf16.msra.mxu0 0
  %3576 = vmatpush.bf16.msra.mxu0 0
  %3577 = vmatpush.bf16.msra.mxu0 %v3330
  %3578 = vmatmul.bf16.gmra.mxu0 %v3276
  %v3579 = vpop.f32.mrf.mxu0
  %v3580 = vadd.f32 0.0, %v3579
  %v3581 = vpop.f32.mrf.mxu0
  %v3582 = vadd.f32 0.0, %v3581
  %3583 = vdwg.mxu0
  %v3584 = vadd.f32 %v3174, %v3342
  %v3585 = vadd.f32 %v3175, %v3356
  %v3586 = vadd.f32 %v3176, %v3370
  %v3587 = vadd.f32 %v3177, %v3384
  %v3588 = vadd.f32 %v3178, %v3398
  %v3589 = vadd.f32 %v3179, %v3412
  %v3590 = vadd.f32 %v3180, %v3426
  %v3591 = vadd.f32 %v3181, %v3440
  %v3592 = vadd.f32 %v3182, %v3454
  %v3593 = vadd.f32 %v3183, %v3468
  %v3594 = vadd.f32 %v3184, %v3482
  %v3595 = vadd.f32 %v3185, %v3496
  %v3596 = vadd.f32 %v3186, %v3510
  %v3597 = vadd.f32 %v3187, %v3524
  %v3598 = vadd.f32 %v3188, %v3538
  %v3599 = vadd.f32 %v3189, %v3552
  %v3600 = vadd.f32 %v3190, %v3566
  %v3601 = vadd.f32 %v3191, %v3580
  %v3602 = vadd.f32 %v3192, %v3344
  %v3603 = vadd.f32 %v3193, %v3358
  %v3604 = vadd.f32 %v3194, %v3372
  %v3605 = vadd.f32 %v3195, %v3386
  %v3606 = vadd.f32 %v3196, %v3400
  %v3607 = vadd.f32 %v3197, %v3414
  %v3608 = vadd.f32 %v3198, %v3428
  %v3609 = vadd.f32 %v3199, %v3442
  %v3610 = vadd.f32 %v3200, %v3456
  %v3611 = vadd.f32 %v3201, %v3470
  %v3612 = vadd.f32 %v3202, %v3484
  %v3613 = vadd.f32 %v3203, %v3498
  %v3614 = vadd.f32 %v3204, %v3512
  %v3615 = vadd.f32 %v3205, %v3526
  %v3616 = vadd.f32 %v3206, %v3540
  %v3617 = vadd.f32 %v3207, %v3554
  %v3618 = vadd.f32 %v3208, %v3568
  %v3619 = vadd.f32 %v3209, %v3582
  %v3620 = vld [vmem:[%s2] sm:$0xff]
  %v3621 = vld [vmem:[%s2 + $0x8] sm:$0xf]
  %3623 = vset.pattern.permute.xlu0 0
  %3624 = vperm.xlu0 %3623, %v3620
  %v3625 = vpop.permute.xlu0 %3624
  %3628 = vset.pattern.permute.xlu0 0
  %3629 = vperm.xlu0 %3628, %v3621
  %v3630 = vpop.permute.xlu0 %3629
  %v3632 = vadd.f32 %v3584, %v3625
  %v3633 = vadd.f32 %v3585, %v3625
  %v3634 = vadd.f32 %v3586, %v3625
  %v3635 = vadd.f32 %v3587, %v3625
  %v3636 = vadd.f32 %v3588, %v3625
  %v3637 = vadd.f32 %v3589, %v3625
  %v3638 = vadd.f32 %v3590, %v3625
  %v3639 = vadd.f32 %v3591, %v3625
  %v3640 = vadd.f32 %v3592, %v3625
  %v3641 = vadd.f32 %v3593, %v3625
  %v3642 = vadd.f32 %v3594, %v3625
  %v3643 = vadd.f32 %v3595, %v3625
  %v3644 = vadd.f32 %v3596, %v3625
  %v3645 = vadd.f32 %v3597, %v3625
  %v3646 = vadd.f32 %v3598, %v3625
  %v3647 = vadd.f32 %v3599, %v3625
  %v3648 = vadd.f32 %v3600, %v3625
  %v3649 = vadd.f32 %v3601, %v3625
  %v3650 = vadd.f32 %v3602, %v3630
  %v3651 = vadd.f32 %v3603, %v3630
  %v3652 = vadd.f32 %v3604, %v3630
  %v3653 = vadd.f32 %v3605, %v3630
  %v3654 = vadd.f32 %v3606, %v3630
  %v3655 = vadd.f32 %v3607, %v3630
  %v3656 = vadd.f32 %v3608, %v3630
  %v3657 = vadd.f32 %v3609, %v3630
  %v3658 = vadd.f32 %v3610, %v3630
  %v3659 = vadd.f32 %v3611, %v3630
  %v3660 = vadd.f32 %v3612, %v3630
  %v3661 = vadd.f32 %v3613, %v3630
  %v3662 = vadd.f32 %v3614, %v3630
  %v3663 = vadd.f32 %v3615, %v3630
  %v3664 = vadd.f32 %v3616, %v3630
  %v3665 = vadd.f32 %v3617, %v3630
  %v3666 = vadd.f32 %v3618, %v3630
  %v3667 = vadd.f32 %v3619, %v3630
  %v3668 = vtanh.pop %v3632
  %v3669 = vtanh.pop %v3633
  %v3670 = vtanh.pop %v3634
  %v3671 = vtanh.pop %v3635
  %v3672 = vtanh.pop %v3636
  %v3673 = vtanh.pop %v3637
  %v3674 = vtanh.pop %v3638
  %v3675 = vtanh.pop %v3639
  %v3676 = vtanh.pop %v3640
  %v3677 = vtanh.pop %v3641
  %v3678 = vtanh.pop %v3642
  %v3679 = vtanh.pop %v3643
  %v3680 = vtanh.pop %v3644
  %v3681 = vtanh.pop %v3645
  %v3682 = vtanh.pop %v3646
  %v3683 = vtanh.pop %v3647
  %v3684 = vtanh.pop %v3648
  %v3685 = vtanh.pop %v3649
  %v3686 = vtanh.pop %v3650
  %v3687 = vtanh.pop %v3651
  %v3688 = vtanh.pop %v3652
  %v3689 = vtanh.pop %v3653
  %v3690 = vtanh.pop %v3654
  %v3691 = vtanh.pop %v3655
  %v3692 = vtanh.pop %v3656
  %v3693 = vtanh.pop %v3657
  %v3694 = vtanh.pop %v3658
  %v3695 = vtanh.pop %v3659
  %v3696 = vtanh.pop %v3660
  %v3697 = vtanh.pop %v3661
  %v3698 = vtanh.pop %v3662
  %v3699 = vtanh.pop %v3663
  %v3700 = vtanh.pop %v3664
  %v3701 = vtanh.pop %v3665
  %v3702 = vtanh.pop %v3666
  %v3703 = vtanh.pop %v3667
  %3704 = vst [vmem:[%s3] sm:$0xff] %v3668
  %3705 = vst [vmem:[%s3 + $0x8] sm:$0xff] %v3669
  %3706 = vst [vmem:[%s3 + $0x10] sm:$0xff] %v3670
  %3707 = vst [vmem:[%s3 + $0x18] sm:$0xff] %v3671
  %3708 = vst [vmem:[%s3 + $0x20] sm:$0xff] %v3672
  %3709 = vst [vmem:[%s3 + $0x28] sm:$0xff] %v3673
  %3710 = vst [vmem:[%s3 + $0x30] sm:$0xff] %v3674
  %3711 = vst [vmem:[%s3 + $0x38] sm:$0xff] %v3675
  %3712 = vst [vmem:[%s3 + $0x40] sm:$0xff] %v3676
  %3713 = vst [vmem:[%s3 + $0x48] sm:$0xff] %v3677
  %3714 = vst [vmem:[%s3 + $0x50] sm:$0xff] %v3678
  %3715 = vst [vmem:[%s3 + $0x58] sm:$0xff] %v3679
  %3716 = vst [vmem:[%s3 + $0x60] sm:$0xff] %v3680
  %3717 = vst [vmem:[%s3 + $0x68] sm:$0xff] %v3681
  %3718 = vst [vmem:[%s3 + $0x70] sm:$0xff] %v3682
  %3719 = vst [vmem:[%s3 + $0x78] sm:$0xff] %v3683
  %3720 = vst [vmem:[%s3 + $0x80] sm:$0xff] %v3684
  %vm3721 = vcmask 539648
  %3722 = vst.msk [vmem:[%s3 + $0x88] sm:$0xff] %vm3721, %v3685
  %3723 = vst [vmem:[%s3 + $0x90] sm:$0xf] %v3686
  %3724 = vst [vmem:[%s3 + $0x98] sm:$0xf] %v3687
  %3725 = vst [vmem:[%s3 + $0xa0] sm:$0xf] %v3688
  %3726 = vst [vmem:[%s3 + $0xa8] sm:$0xf] %v3689
  %3727 = vst [vmem:[%s3 + $0xb0] sm:$0xf] %v3690
  %3728 = vst [vmem:[%s3 + $0xb8] sm:$0xf] %v3691
  %3729 = vst [vmem:[%s3 + $0xc0] sm:$0xf] %v3692
  %3730 = vst [vmem:[%s3 + $0xc8] sm:$0xf] %v3693
  %3731 = vst [vmem:[%s3 + $0xd0] sm:$0xf] %v3694
  %3732 = vst [vmem:[%s3 + $0xd8] sm:$0xf] %v3695
  %3733 = vst [vmem:[%s3 + $0xe0] sm:$0xf] %v3696
  %3734 = vst [vmem:[%s3 + $0xe8] sm:$0xf] %v3697
  %3735 = vst [vmem:[%s3 + $0xf0] sm:$0xf] %v3698
  %3736 = vst [vmem:[%s3 + $0xf8] sm:$0xf] %v3699
  %3737 = vst [vmem:[%s3 + $0x100] sm:$0xf] %v3700
  %3738 = vst [vmem:[%s3 + $0x108] sm:$0xf] %v3701
  %3739 = vst [vmem:[%s3 + $0x110] sm:$0xf] %v3702
  %vm3740 = vcmask 535552
  %3741 = vst.msk [vmem:[%s3 + $0x118] sm:$0xf] %vm3740, %v3703
  // Predicated region
  $region14: #{generator_forward.9} parent=0 // pred_check
    _
  $region15: #{generator_forward.9} parent=0 // pred_check_branch
    %3743 = sbr.rel (0) target = $region17
  $region16: #{generator_forward.9} parent=0 // pred_region
    _
  $region17: #{generator_forward.9} parent=0 // pred_fallthru
    _
  // Predicated region
  $region18: #{generator_forward.9} parent=0 // pred_check
    _
  $region19: #{generator_forward.9} parent=0 // pred_check_branch
    %3745 = sbr.rel (0) target = $region21
  $region20: #{generator_forward.9} parent=0 // pred_region
    _
  $region21: #{generator_forward.9} parent=0 // pred_fallthru
    _

</llo_original>
